<compile_context>
chip_gen: v5e
topology: v5e:2x2
jax: 0.10.0
libtpu: 0.0.40
codegen_flags: <defaults>
</compile_context>

<pallas_src>
from types import SimpleNamespace

import jax
import jax.numpy as jnp
from jax.experimental import pallas as pl
from jax.experimental.pallas import tpu as pltpu


_LANE = 128
_SUBLANE = 8
_TARGET_TILE_ELEMS = 1 << 20           # ~4 MiB of f32 per streamed input tile
_PALLAS_MIN_ELEMS = 1 << 16            # below this, pallas_call overhead dominates
_VMEM_LIMIT_BYTES = 32 * 1024 * 1024   # raises v5e's 16 MiB scoped default


def _round_up(x, m):
    return ((x + m - 1) // m) * m


def _as_2d(x):
    # Row-major collapse of leading dims -> free (metadata-only) reshape.
    if x.ndim >= 2:
        return x.reshape(-1, x.shape[-1])
    return x.reshape(1, -1)


def _sq_frobenius_pallas(target, prediction):
    """sum((target - prediction)**2) as an f32 scalar, streamed via Pallas."""
    tgt = _as_2d(target)
    pred = _as_2d(prediction)
    M, N = tgt.shape

    # ---- static tiling decisions -----------------------------------------
    if N <= 4 * _LANE:
        tile_n = N                       # full column extent (any N allowed)
    else:
        tile_n = 4 * _LANE               # 512 lanes, multiple of 128
    grid_n = pl.cdiv(N, tile_n)
    needs_col_mask = (N % tile_n) != 0

    tile_n_padded = _round_up(tile_n, _LANE)         # lane-padded VMEM width
    tile_m_cap = max(32, (_TARGET_TILE_ELEMS // tile_n_padded) // 32 * 32)
    if M <= tile_m_cap:
        tile_m = M                       # full row extent (any M allowed)
    else:
        tile_m = tile_m_cap              # multiple of 32 (packed-dtype friendly)
    grid_m = pl.cdiv(M, tile_m)
    needs_row_mask = (M % tile_m) != 0

    grouped = (tile_m % _SUBLANE) == 0   # VPU-only leading-axis reduce path
    acc_rows = _SUBLANE if grouped else 1

    def kernel(tgt_ref, pred_ref, out_ref, acc_ref):
        i = pl.program_id(0)
        j = pl.program_id(1)

        @pl.when((i == 0) & (j == 0))
        def _init():
            acc_ref[...] = jnp.zeros_like(acc_ref)

        # Stream native dtype; cast after the load (keeps HBM traffic minimal).
        t = tgt_ref[...].astype(jnp.float32)
        p = pred_ref[...].astype(jnp.float32)
        d = t - p

        if needs_row_mask or needs_col_mask:
            valid = None
            if needs_row_mask:
                rows = jax.lax.broadcasted_iota(jnp.int32, (tile_m, tile_n), 0)
                valid = (rows + i * tile_m) < M
            if needs_col_mask:
                cols = jax.lax.broadcasted_iota(jnp.int32, (tile_m, tile_n), 1)
                cmask = (cols + j * tile_n) < N
                valid = cmask if valid is None else (valid & cmask)
            d = jnp.where(valid, d, 0.0)

        sq = d * d
        if grouped:
            # Leading-axis reduce (elementwise VPU adds) into an (8, tile_n)
            # accumulator: no per-step cross-lane reduction, no 3rd big vld.
            acc_ref[...] += jnp.sum(
                sq.reshape(tile_m // _SUBLANE, _SUBLANE, tile_n), axis=0)
        else:
            # Rare path: tile_m == M with M % 8 != 0 (single row block), so this
            # cross-sublane reduce happens at most once per column block.
            acc_ref[...] += jnp.sum(sq, axis=0, keepdims=True)

        @pl.when((i == grid_m - 1) & (j == grid_n - 1))
        def _finalize():
            out_ref[0, 0] = jnp.sum(acc_ref[...])

    bytes_in = tgt.size * tgt.dtype.itemsize + pred.size * pred.dtype.itemsize
    res = pl.pallas_call(
        kernel,
        out_shape=jax.ShapeDtypeStruct((1, 1), jnp.float32),
        grid=(grid_m, grid_n),
        in_specs=[
            pl.BlockSpec((tile_m, tile_n), lambda i, j: (i, j)),
            pl.BlockSpec((tile_m, tile_n), lambda i, j: (i, j)),
        ],
        out_specs=pl.BlockSpec((1, 1), lambda i, j: (0, 0),
                               memory_space=pltpu.MemorySpace.SMEM),
        scratch_shapes=[pltpu.VMEM((acc_rows, tile_n), jnp.float32)],
        compiler_params=pltpu.CompilerParams(
            dimension_semantics=("arbitrary", "arbitrary"),
            vmem_limit_bytes=_VMEM_LIMIT_BYTES),
        cost_estimate=pl.CostEstimate(flops=3 * M * N, transcendentals=0,
                                      bytes_accessed=bytes_in + 4),
    )(tgt, pred)
    return res[0, 0]


def myloss(target, prediction, drug_k, dis_k, drug_lap, dis_lap,
           alpha1, alpha2, sizes, weight_decay):
    """JAX/Pallas equivalent of Myloss.forward. Returns a scalar float32."""
    # These inputs do not affect the returned value in the reference module.
    del drug_k, dis_k, drug_lap, dis_lap, sizes

    # Tiny alpha penalty: plain jnp in the wrapper (negligible cost, removes
    # the resident alpha VMEM blocks / duplicated finalize work from the kernel).
    a1 = alpha1.astype(jnp.float32)
    a2 = alpha2.astype(jnp.float32)
    alpha_term = jnp.float32(weight_decay) * (jnp.sum(a1 * a1) + jnp.sum(a2 * a2))

    total = int(target.size)
    if total < _PALLAS_MIN_ELEMS:
        # pallas_call fixed pipeline overhead dominates for tiny inputs.
        d = target.astype(jnp.float32) - prediction.astype(jnp.float32)
        return jnp.sum(d * d) + alpha_term

    return _sq_frobenius_pallas(target, prediction) + alpha_term


def _myloss_ref(target, prediction, alpha1, alpha2, weight_decay):
    t = target.astype(jnp.float32)
    p = prediction.astype(jnp.float32)
    loss_ls = jnp.sum((t - p) ** 2)
    a_sq = jnp.sum(alpha1.astype(jnp.float32) ** 2) + jnp.sum(alpha2.astype(jnp.float32) ** 2)
    return loss_ls + weight_decay * a_sq


if __name__ == "__main__":
    key = jax.random.PRNGKey(0)
    k = jax.random.split(key, 8)

    # Shapes chosen so the Pallas path is exercised with a (2, 2) grid:
    # row tiles of 2048 (ragged last block: 2056 % 2048 != 0) and column tiles
    # of 512 (ragged last block: 640 % 512 != 0), i.e. both masks + multi-step
    # accumulation + init/finalize are all covered.
    n_drug, n_dis = 2056, 640

    target     = jax.random.normal(k[0], (n_drug, n_dis), dtype=jnp.float32)
    prediction = jax.random.normal(k[1], (n_drug, n_dis), dtype=jnp.float32)
    drug_k     = jax.random.normal(k[2], (n_drug, n_drug), dtype=jnp.float32)
    dis_k      = jax.random.normal(k[3], (n_dis, n_dis), dtype=jnp.float32)
    drug_lap   = jax.random.normal(k[4], (n_drug, n_drug), dtype=jnp.float32)
    dis_lap    = jax.random.normal(k[5], (n_dis, n_dis), dtype=jnp.float32)
    alpha1     = jax.random.normal(k[6], (n_drug, n_dis), dtype=jnp.float32)
    alpha2     = jax.random.normal(k[7], (n_dis, n_drug), dtype=jnp.float32)

    sizes = SimpleNamespace(lambda1=0.5, lambda2=0.5)
    weight_decay = 0.01

    loss = myloss(target, prediction, drug_k, dis_k, drug_lap, dis_lap,
                  alpha1, alpha2, sizes, weight_decay)
    loss = jax.block_until_ready(loss)

    ref = _myloss_ref(target, prediction, alpha1, alpha2, weight_decay)
    assert jnp.allclose(loss, ref, rtol=1e-5, atol=1e-2), (loss, ref)

    print("KERNEL_OK")
</pallas_src>

<mosaic_0001>
module attributes {stable_mosaic.version = 11 : i64} {
  func.func @kernel(%arg0: i32, %arg1: i32, %arg2: memref<2048x512xf32, #tpu.memory_space<vmem>>, %arg3: memref<2048x512xf32, #tpu.memory_space<vmem>>, %arg4: memref<1x1xf32, #tpu.memory_space<smem>>, %arg5: memref<8x512xf32, #tpu.memory_space<vmem>>) attributes {dimension_semantics = [#tpu.dimension_semantics<arbitrary>, #tpu.dimension_semantics<arbitrary>], iteration_bounds = array<i64: 2, 2>, scalar_prefetch = 0 : i64, scratch_operands = 1 : i64, tpu.core_type = #tpu.core_type<tc>, window_params = [{transform_indices = @transform_0, window_bounds = array<i64: 2048, 512>}, {transform_indices = @transform_1, window_bounds = array<i64: 2048, 512>}, {transform_indices = @transform_2, window_bounds = array<i64: 1, 1>}]} {
    %c0_i32 = arith.constant 0 : i32
    %0 = arith.cmpi eq, %arg0, %c0_i32 : i32
    %c0_i32_0 = arith.constant 0 : i32
    %1 = arith.cmpi eq, %arg1, %c0_i32_0 : i32
    %2 = arith.andi %0, %1 : i1
    %3 = arith.extui %2 : i1 to i32
    %c0_i32_1 = arith.constant 0 : i32
    %4 = arith.cmpi ne, %3, %c0_i32_1 : i32
    scf.if %4 {
      %cst_12 = arith.constant 0.000000e+00 : f32
      %34 = vector.broadcast %cst_12 : f32 to vector<8x512xf32>
      %c0_13 = arith.constant 0 : index
      %c0_14 = arith.constant 0 : index
      %35 = vector.load %arg5[%c0_13, %c0_14] : memref<8x512xf32, #tpu.memory_space<vmem>>, vector<8x512xf32>
      tpu.vector_store %arg5[%c0_13, %c0_14], %34 {strides = array<i32>} : memref<8x512xf32, #tpu.memory_space<vmem>>, vector<8x512xf32>,
    } else {
    }
    %c0 = arith.constant 0 : index
    %c0_2 = arith.constant 0 : index
    %5 = vector.load %arg2[%c0, %c0_2] : memref<2048x512xf32, #tpu.memory_space<vmem>>, vector<2048x512xf32>
    %c0_3 = arith.constant 0 : index
    %c0_4 = arith.constant 0 : index
    %6 = vector.load %arg3[%c0_3, %c0_4] : memref<2048x512xf32, #tpu.memory_space<vmem>>, vector<2048x512xf32>
    %7 = arith.subf %5, %6 : vector<2048x512xf32>
    %8 = tpu.iota {dimensions = array<i32: 0>} : vector<2048x512xi32>
    %c2048_i32 = arith.constant 2048 : i32
    %9 = arith.muli %arg0, %c2048_i32 : i32
    %10 = vector.broadcast %9 : i32 to vector<2048x512xi32>
    %11 = arith.addi %8, %10 : vector<2048x512xi32>
    %c2056_i32 = arith.constant 2056 : i32
    %12 = vector.broadcast %c2056_i32 : i32 to vector<2048x512xi32>
    %13 = arith.cmpi slt, %11, %12 : vector<2048x512xi32>
    %14 = tpu.iota {dimensions = array<i32: 1>} : vector<2048x512xi32>
    %c512_i32 = arith.constant 512 : i32
    %15 = arith.muli %arg1, %c512_i32 : i32
    %16 = vector.broadcast %15 : i32 to vector<2048x512xi32>
    %17 = arith.addi %14, %16 : vector<2048x512xi32>
    %c640_i32 = arith.constant 640 : i32
    %18 = vector.broadcast %c640_i32 : i32 to vector<2048x512xi32>
    %19 = arith.cmpi slt, %17, %18 : vector<2048x512xi32>
    %20 = arith.andi %13, %19 : vector<2048x512xi1>
    %cst = arith.constant 0.000000e+00 : f32
    %21 = vector.broadcast %cst : f32 to vector<2048x512xf32>
    %22 = arith.select %20, %7, %21 : vector<2048x512xi1>, vector<2048x512xf32>
    %23 = arith.mulf %22, %22 : vector<2048x512xf32>
    %c0_5 = arith.constant 0 : index
    %c0_6 = arith.constant 0 : index
    %24 = vector.load %arg5[%c0_5, %c0_6] : memref<8x512xf32, #tpu.memory_space<vmem>>, vector<8x512xf32>
    %25 = vector.shape_cast %23 : vector<2048x512xf32> to vector<256x8x512xf32>
    %cst_7 = arith.constant dense<0.000000e+00> : vector<8x512xf32>
    %26 = vector.multi_reduction <add>, %25, %cst_7 [0] : vector<256x8x512xf32> to vector<8x512xf32>
    %27 = arith.addf %24, %26 : vector<8x512xf32>
    %c0_8 = arith.constant 0 : index
    %c0_9 = arith.constant 0 : index
    %28 = vector.load %arg5[%c0_8, %c0_9] : memref<8x512xf32, #tpu.memory_space<vmem>>, vector<8x512xf32>
    tpu.vector_store %arg5[%c0_8, %c0_9], %27 {strides = array<i32>} : memref<8x512xf32, #tpu.memory_space<vmem>>, vector<8x512xf32>,
    %c1_i32 = arith.constant 1 : i32
    %29 = arith.cmpi eq, %arg0, %c1_i32 : i32
    %c1_i32_10 = arith.constant 1 : i32
    %30 = arith.cmpi eq, %arg1, %c1_i32_10 : i32
    %31 = arith.andi %29, %30 : i1
    %32 = arith.extui %31 : i1 to i32
    %c0_i32_11 = arith.constant 0 : i32
    %33 = arith.cmpi ne, %32, %c0_i32_11 : i32
    scf.if %33 {
      %c0_12 = arith.constant 0 : index
      %c0_13 = arith.constant 0 : index
      %34 = vector.load %arg5[%c0_12, %c0_13] : memref<8x512xf32, #tpu.memory_space<vmem>>, vector<8x512xf32>
      %35 = vector.shape_cast %34 : vector<8x512xf32> to vector<1x8x512xf32>
      %cst_14 = arith.constant dense<0.000000e+00> : vector<1xf32>
      %36 = vector.multi_reduction <add>, %35, %cst_14 [1, 2] : vector<1x8x512xf32> to vector<1xf32>
      %37 = vector.shape_cast %36 : vector<1xf32> to vector<1x1x1xf32>
      %38 = vector.extract %37[0, 0, 0] : f32 from vector<1x1x1xf32>
      %c0_15 = arith.constant 0 : index
      %c0_16 = arith.constant 0 : index
      %39 = memref.load %arg4[%c0_15, %c0_16] : memref<1x1xf32, #tpu.memory_space<smem>>
      memref.store %38, %arg4[%c0_15, %c0_16] : memref<1x1xf32, #tpu.memory_space<smem>>
    } else {
    }
    return
  }
  func.func @transform_0(%arg0: i32, %arg1: i32) -> (i32, i32) {
    %c0_i32 = arith.constant 0 : i32
    return %arg0, %arg1 : i32, i32
  }
  func.func @transform_1(%arg0: i32, %arg1: i32) -> (i32, i32) {
    %c0_i32 = arith.constant 0 : i32
    return %arg0, %arg1 : i32, i32
  }
  func.func @transform_2(%arg0: i32, %arg1: i32) -> (i32, i32) {
    %c0_i32 = arith.constant 0 : i32
    %c0_i32_0 = arith.constant 0 : i32
    %c0_i32_1 = arith.constant 0 : i32
    return %c0_i32, %c0_i32_0 : i32, i32
  }
}

</mosaic_0001>

<llo_original>
// kernel: tpu_custom_call.1
$region0: #{tpu_custom_call.1}
  #allocation0 [shape = 'u32[]', space=smem, size = 0x4, offset = 0x4, fixed_abs, tag = 'smem constant byte address 0x4 - core index']
  #allocation1 [shape = 'u32[72,128]{1,0:T(1,128)}', space=vmem, size = 0x9000, scoped, tag = 'internal scratch']
  #allocation2 [shape = 'f32[8,512]{1,0:T(8,128)}', space=vmem, size = 0x4000, scoped, tag = 'scratch operand']
  %s0 = inlined_call_operand.hbm [shape: f32[2056,640], index: 0, kind: input, shape index: {}]
  %s1 = inlined_call_operand.hbm [shape: f32[2056,640], index: 1, kind: input, shape index: {}]
  %s2 = inlined_call_operand.hbm [shape: f32[1,1], index: 2, kind: output, shape index: {}]
  %s3 = sld [smem:[#allocation0]]
  $region57: #{tpu_custom_call.1} parent=0
    _
  %s5 = ssub.s32 1, %s3
  %s6 = scalar_select 0, %s5, %s3
  $region1: #{tpu_custom_call.1} parent=0
    #allocation3 [shape = 'u8[8388608]{0}', space=vmem, size = 0x800000, scoped, tag = 'input window, operand 0']
    #allocation4 [shape = 's32[2]{0}', space=sflag, size = 0x8, scoped, tag = 'scoped memory for tpu_custom_call.1']
    #allocation5 [shape = 's32[2]{0}', space=sflag, size = 0x8, scoped, tag = 'scoped memory for tpu_custom_call.1']
    #allocation6 [shape = 'u8[8388608]{0}', space=vmem, size = 0x800000, scoped, tag = 'input window, operand 1']
    #allocation7 [shape = 's32[2]{0}', space=sflag, size = 0x8, scoped, tag = 'scoped memory for tpu_custom_call.1']
    #allocation8 [shape = 'u8[512]{0}', space=smem, size = 0x200, scoped, tag = 'output window, operand 0, single buffered']
    %7 = vsyncpa [#allocation4], 0
    %s8 = scalar_lea.sflag [#allocation4], 1
    %9 = vsyncpa %s8, 0
    %10 = vsyncpa [#allocation7], 0
    %s11 = scalar_lea.sflag [#allocation7], 1
    %12 = vsyncpa %s11, 0
    %13 = vsyncpa [#allocation5], 0
    loop: start=0, step=1, limit=6
    $region2: #{tpu_custom_call.1} parent=1 // loop_pre_header
      _
    $region3: #{tpu_custom_call.1} parent=1 // loop_header
      %s15 = sphi 0, %s19
      %p16 = scmp.ge.s32.totalorder %s15, 6
      %s22 = sphi 0, %s34
      %s23 = sphi 0, %s30
      %s24 = sphi 0, %s22
      %s25 = sphi 0, %s23
      %s26 = sphi 0, %s24
      %s27 = sphi 0, %s25
      %s39 = sphi 0, %s41
      %s42 = sphi 0, %s39
      %s43 = sphi 0, %s42
      %s59 = sphi 0, %s43
      %s67 = sphi 0, %s69
      %s70 = sphi 0, %s67
      %s71 = sphi 0, %s70
      %s87 = sphi 0, %s71
      %s91 = sphi 0, %s91
      %s93 = sphi 0, %s91
      %s94 = sphi 0, %s93
      %s108 = sphi 0, %s94
    $region4: #{tpu_custom_call.1} parent=1 // loop_header_branch
      %18 = sbr.rel (%p16) target = $region8
    $region5: #{tpu_custom_call.1} parent=1 // loop_body
      %s20 = ssub.s32 %s15, 1
      %s21 = ssub.s32 %s15, 2
      %s28 = sadd.s32 1, %s23
      %p29 = scmp.ge.s32.totalorder %s28, 2
      %s30 = scalar_select %p29, 0, %s28
      %s31 = sadd.s32 1, %s22
      %s32 = scalar_select %p29, %s31, %s22
      %p33 = scmp.ge.s32.totalorder %s32, 2
      %s34 = scalar_select %p33, 0, %s32
      %s35 = ssub.s32 %s22, %s34
      %s36 = ssub.s32 %s23, %s30
      %s37 = sor.u32 %s35, %s36
      %p38 = scmp.eq.s32.totalorder %s37, 0
      %s40 = sadd.s32 %s39, 1
      %s41 = scalar_select %p38, %s39, %s40
      %p44 = pneg %p38
      %p45 = scmp.eq.s32.totalorder %s15, 3
      %p46 = por %p44, %p45
      %p47 = scmp.ne.s32.totalorder %s39, %s42
      %p48 = scmp.eq.s32.totalorder %s15, 0
      %p49 = por %p47, %p48
      %p50 = scmp.ne.s32.totalorder %s39, %s42
      %p51 = scmp.eq.s32.totalorder %s20, 3
      %p52 = por %p50, %p51
      %p53 = scmp.ne.s32.totalorder %s42, %s43
      %p54 = scmp.eq.s32.totalorder %s20, 0
      %p55 = por %p53, %p54
      %p56 = scmp.ne.s32.totalorder %s42, %s43
      %p57 = scmp.eq.s32.totalorder %s21, 3
      %p58 = por %p56, %p57
      %p60 = scmp.ne.s32.totalorder %s43, %s59
      %p61 = scmp.eq.s32.totalorder %s21, 0
      %p62 = por %p60, %p61
      %s63 = ssub.s32 %s22, %s34
      %s64 = ssub.s32 %s23, %s30
      %s65 = sor.u32 %s63, %s64
      %p66 = scmp.eq.s32.totalorder %s65, 0
      %s68 = sadd.s32 %s67, 1
      %s69 = scalar_select %p66, %s67, %s68
      %p72 = pneg %p66
      %p73 = scmp.eq.s32.totalorder %s15, 3
      %p74 = por %p72, %p73
      %p75 = scmp.ne.s32.totalorder %s67, %s70
      %p76 = scmp.eq.s32.totalorder %s15, 0
      %p77 = por %p75, %p76
      %p78 = scmp.ne.s32.totalorder %s67, %s70
      %p79 = scmp.eq.s32.totalorder %s20, 3
      %p80 = por %p78, %p79
      %p81 = scmp.ne.s32.totalorder %s70, %s71
      %p82 = scmp.eq.s32.totalorder %s20, 0
      %p83 = por %p81, %p82
      %p84 = scmp.ne.s32.totalorder %s70, %s71
      %p85 = scmp.eq.s32.totalorder %s21, 3
      %p86 = por %p84, %p85
      %p88 = scmp.ne.s32.totalorder %s71, %s87
      %p89 = scmp.eq.s32.totalorder %s21, 0
      %p90 = por %p88, %p89
      %s92 = sadd.s32 %s91, 1
      %p95 = scmp.eq.s32.totalorder %s15, 3
      %p96 = scmp.ne.s32.totalorder %s91, %s93
      %p97 = scmp.eq.s32.totalorder %s15, 0
      %p98 = por %p96, %p97
      %p99 = scmp.ne.s32.totalorder %s91, %s93
      %p100 = scmp.eq.s32.totalorder %s20, 3
      %p101 = por %p99, %p100
      %p102 = scmp.ne.s32.totalorder %s93, %s94
      %p103 = scmp.eq.s32.totalorder %s20, 0
      %p104 = por %p102, %p103
      %p105 = scmp.ne.s32.totalorder %s93, %s94
      %p106 = scmp.eq.s32.totalorder %s21, 3
      %p107 = por %p105, %p106
      %p109 = scmp.ne.s32.totalorder %s94, %s108
      %p110 = scmp.eq.s32.totalorder %s21, 0
      %p111 = por %p109, %p110
      %p112 = scmp.le.s32.totalorder 1, %s15
      %p113 = scmp.lt.s32.totalorder %s15, 5
      %p114 = pnand %p112, %p113
      %p115 = pneg %p114
      // Predicated region
      $region9: #{tpu_custom_call.1} parent=5 // pred_check
        _
      $region10: #{tpu_custom_call.1} parent=5 // pred_check_branch
        %117 = sbr.rel (%p114) target = $region12
      $region11: #{tpu_custom_call.1} parent=5 // pred_region
        %s118 = ssub.s32 %s15, 1
      $region12: #{tpu_custom_call.1} parent=5 // pred_fallthru
        _
      %p119 = scmp.lt.s32.totalorder %s15, 4
      // Predicated region
      $region13: #{tpu_custom_call.1} parent=5 // pred_check
        %p120 = pneg %p119
      $region14: #{tpu_custom_call.1} parent=5 // pred_check_branch
        %122 = sbr.rel (%p120) target = $region16
      $region15: #{tpu_custom_call.1} parent=5 // pred_region
        // Predicated region
        $region17: #{tpu_custom_call.1} parent=15 // pred_check
          %p123 = pneg %p49
        $region18: #{tpu_custom_call.1} parent=15 // pred_check_branch
          %125 = sbr.rel (%p123) target = $region20
        $region19: #{tpu_custom_call.1} parent=15 // pred_region
          %s126 = sand.u32 %s39, 1
          %s127 = scalar_lea.sflag [#allocation4], %s126
          %s128 = sand.u32 %s39, 1
          %s129 = smul.addr %s128, 8192
          %s130 = scalar_lea.vmem [#allocation3], %s129
          %s131 = smul.u32 256, %s22
          %s132 = smul.u32 4, %s23
          %s133 = ssub.s32 257, %s131
          %p134 = scmp.lt.s32.totalorder %s133, 256
          %s135 = scalar_select %p134, %s133, 256
          %s136 = smul.u32 8, %s135
          %s137 = ssub.s32 5, %s132
          %p138 = scmp.lt.s32.totalorder %s137, 4
          %s139 = scalar_select %p138, %s137, 4
          %s140 = smul.u32 %s136, %s139
          %s141 = ssub.s32 8192, %s140
          %s142 = sshll.u32 %s141, 4
          %143 = vsyncadd %s127, %s142
          %p144 = scmp.ne.s32.totalorder 0, %s140
          %s145 = smul.addr %s131, 5
          %s146 = sadd.s32 %s132, %s145
          %s147 = smul.addr %s146, 8
          %s148 = scalar_lea.hbm %s0, %s147
          %s149 = smul.u32 %s139, 8
          %s150 = smul.u32 %s149, %s135
          %s151 = sshll.u32 %s148, 4
          %s152 = int_to_ptr.hbm [resolvable:$true] %s151
          %s153 = sshll.u32 %s130, 4
          %s154 = int_to_ptr.vmem [resolvable:$true] %s153
          %s155 = sshll.u32 %s150, 4
          %159 = dma.hbm_to_vmem [thread:$0]  (%p144), %s152, %s155, %s154, %s127, 640, 512, %s149
        $region20: #{tpu_custom_call.1} parent=15 // pred_fallthru
          _
        // Predicated region
        $region21: #{tpu_custom_call.1} parent=15 // pred_check
          %p160 = pneg %p77
        $region22: #{tpu_custom_call.1} parent=15 // pred_check_branch
          %162 = sbr.rel (%p160) target = $region24
        $region23: #{tpu_custom_call.1} parent=15 // pred_region
          %s163 = sand.u32 %s67, 1
          %s164 = scalar_lea.sflag [#allocation7], %s163
          %s165 = sand.u32 %s67, 1
          %s166 = smul.addr %s165, 8192
          %s167 = scalar_lea.vmem [#allocation6], %s166
          %s168 = smul.u32 256, %s22
          %s169 = smul.u32 4, %s23
          %s170 = ssub.s32 257, %s168
          %p171 = scmp.lt.s32.totalorder %s170, 256
          %s172 = scalar_select %p171, %s170, 256
          %s173 = smul.u32 8, %s172
          %s174 = ssub.s32 5, %s169
          %p175 = scmp.lt.s32.totalorder %s174, 4
          %s176 = scalar_select %p175, %s174, 4
          %s177 = smul.u32 %s173, %s176
          %s178 = ssub.s32 8192, %s177
          %s179 = sshll.u32 %s178, 4
          %180 = vsyncadd %s164, %s179
          %p181 = scmp.ne.s32.totalorder 0, %s177
          %s182 = smul.addr %s168, 5
          %s183 = sadd.s32 %s169, %s182
          %s184 = smul.addr %s183, 8
          %s185 = scalar_lea.hbm %s1, %s184
          %s186 = smul.u32 %s176, 8
          %s187 = smul.u32 %s186, %s172
          %s188 = sshll.u32 %s185, 4
          %s189 = int_to_ptr.hbm [resolvable:$true] %s188
          %s190 = sshll.u32 %s167, 4
          %s191 = int_to_ptr.vmem [resolvable:$true] %s190
          %s192 = sshll.u32 %s187, 4
          %196 = dma.hbm_to_vmem [thread:$0]  (%p181), %s189, %s192, %s191, %s164, 640, 512, %s186
        $region24: #{tpu_custom_call.1} parent=15 // pred_fallthru
          _
      $region16: #{tpu_custom_call.1} parent=5 // pred_fallthru
        _
      %p197 = scmp.le.s32.totalorder 1, %s15
      %p198 = scmp.lt.s32.totalorder %s15, 5
      %p199 = pnand %p197, %p198
      %p200 = pneg %p199
      // Predicated region
      $region25: #{tpu_custom_call.1} parent=5 // pred_check
        _
      $region26: #{tpu_custom_call.1} parent=5 // pred_check_branch
        %202 = sbr.rel (%p199) target = $region28
      $region27: #{tpu_custom_call.1} parent=5 // pred_region
        %s203 = ssub.s32 %s15, 1
        %s204 = sand.u32 %s42, 1
        %s205 = scalar_lea.sflag [#allocation4], %s204
        %s206 = sand.u32 %s42, 1
        %s207 = smul.addr %s206, 8192
        %s208 = scalar_lea.vmem [#allocation3], %s207
        // Predicated region
        $region29: #{tpu_custom_call.1} parent=27 // pred_check
          %p209 = pneg %p55
        $region30: #{tpu_custom_call.1} parent=27 // pred_check_branch
          %211 = sbr.rel (%p209) target = $region32
        $region31: #{tpu_custom_call.1} parent=27 // pred_region
          %213 = dma.done %s205, 131072
        $region32: #{tpu_custom_call.1} parent=27 // pred_fallthru
          _
        %s214 = sand.u32 %s70, 1
        %s215 = scalar_lea.sflag [#allocation7], %s214
        %s216 = sand.u32 %s70, 1
        %s217 = smul.addr %s216, 8192
        %s218 = scalar_lea.vmem [#allocation6], %s217
        // Predicated region
        $region33: #{tpu_custom_call.1} parent=27 // pred_check
          %p219 = pneg %p83
        $region34: #{tpu_custom_call.1} parent=27 // pred_check_branch
          %221 = sbr.rel (%p219) target = $region36
        $region35: #{tpu_custom_call.1} parent=27 // pred_region
          %223 = dma.done %s215, 131072
        $region36: #{tpu_custom_call.1} parent=27 // pred_fallthru
          _
        %s224 = sand.u32 %s42, 1
        %s225 = scalar_lea.sflag [#allocation4], %s224
        %s226 = sand.u32 %s42, 1
        %s227 = smul.addr %s226, 8192
        %s228 = scalar_lea.vmem [#allocation3], %s227
        %p229 = pneg %p55
        %p230 = pneg %p52
        %s231 = sand.u32 %s70, 1
        %s232 = scalar_lea.sflag [#allocation7], %s231
        %s233 = sand.u32 %s70, 1
        %s234 = smul.addr %s233, 8192
        %s235 = scalar_lea.vmem [#allocation6], %s234
        %p236 = pneg %p83
        %p237 = pneg %p80
        %p238 = pneg %p104
        %p239 = pneg %p101
        %s240 = smul.u32 256, %s24
        %s241 = smul.u32 4, %s25
        %s242 = ssub.s32 257, %s240
        %p243 = scmp.lt.s32.totalorder %s242, 256
        %s244 = scalar_select %p243, %s242, 256
        %s245 = smul.u32 8, %s244
        %s246 = ssub.s32 5, %s241
        %p247 = scmp.lt.s32.totalorder %s246, 4
        %s248 = scalar_select %p247, %s246, 4
        %s249 = smul.u32 %s245, %s248
        %s250 = smul.u32 256, %s24
        %s251 = smul.u32 4, %s25
        %s252 = ssub.s32 257, %s250
        %p253 = scmp.lt.s32.totalorder %s252, 256
        %s254 = scalar_select %p253, %s252, 256
        %s255 = smul.u32 8, %s254
        %s256 = ssub.s32 5, %s251
        %p257 = scmp.lt.s32.totalorder %s256, 4
        %s258 = scalar_select %p257, %s256, 4
        %s259 = smul.u32 %s255, %s258
        %p260 = scmp.eq.s32.totalorder %s24, 0
        %p261 = scmp.eq.s32.totalorder %s25, 0
        %p262 = pnand %p260, %p261
        %p263 = pneg %p262
        // Predicated region
        $region37: #{tpu_custom_call.1} parent=27 // pred_check
          _
        $region38: #{tpu_custom_call.1} parent=27 // pred_check_branch
          %265 = sbr.rel (%p262) target = $region40
        $region39: #{tpu_custom_call.1} parent=27 // pred_region
          %266 = vst [vmem:[#allocation2] sm:$0xff] 0.0
          %267 = vst [vmem:[#allocation2 + $0x8] sm:$0xff] 0.0
          %268 = vst [vmem:[#allocation2 + $0x10] sm:$0xff] 0.0
          %269 = vst [vmem:[#allocation2 + $0x18] sm:$0xff] 0.0
        $region40: #{tpu_custom_call.1} parent=27 // pred_fallthru
          _
        %v270 = vld [vmem:[%s208] sm:$0xff]
        %v271 = vld [vmem:[%s208 + $0x8] sm:$0xff]
        %v272 = vld [vmem:[%s208 + $0x10] sm:$0xff]
        %v273 = vld [vmem:[%s208 + $0x18] sm:$0xff]
        %v274 = vld [vmem:[%s208 + $0x20] sm:$0xff]
        %v275 = vld [vmem:[%s208 + $0x28] sm:$0xff]
        %v276 = vld [vmem:[%s208 + $0x30] sm:$0xff]
        %v277 = vld [vmem:[%s208 + $0x38] sm:$0xff]
        %v278 = vld [vmem:[%s208 + $0x40] sm:$0xff]
        %v279 = vld [vmem:[%s208 + $0x48] sm:$0xff]
        %v280 = vld [vmem:[%s208 + $0x50] sm:$0xff]
        %v281 = vld [vmem:[%s208 + $0x58] sm:$0xff]
        %v282 = vld [vmem:[%s208 + $0x60] sm:$0xff]
        %v283 = vld [vmem:[%s208 + $0x68] sm:$0xff]
        %v284 = vld [vmem:[%s208 + $0x70] sm:$0xff]
        %v285 = vld [vmem:[%s208 + $0x78] sm:$0xff]
        %v286 = vld [vmem:[%s208 + $0x80] sm:$0xff]
        %v287 = vld [vmem:[%s208 + $0x88] sm:$0xff]
        %v288 = vld [vmem:[%s208 + $0x90] sm:$0xff]
        %v289 = vld [vmem:[%s208 + $0x98] sm:$0xff]
        %v290 = vld [vmem:[%s208 + $0xa0] sm:$0xff]
        %v291 = vld [vmem:[%s208 + $0xa8] sm:$0xff]
        %v292 = vld [vmem:[%s208 + $0xb0] sm:$0xff]
        %v293 = vld [vmem:[%s208 + $0xb8] sm:$0xff]
        %v294 = vld [vmem:[%s208 + $0xc0] sm:$0xff]
        %v295 = vld [vmem:[%s208 + $0xc8] sm:$0xff]
        %v296 = vld [vmem:[%s208 + $0xd0] sm:$0xff]
        %v297 = vld [vmem:[%s208 + $0xd8] sm:$0xff]
        %v298 = vld [vmem:[%s208 + $0xe0] sm:$0xff]
        %v299 = vld [vmem:[%s208 + $0xe8] sm:$0xff]
        %v300 = vld [vmem:[%s208 + $0xf0] sm:$0xff]
        %v301 = vld [vmem:[%s208 + $0xf8] sm:$0xff]
        %v302 = vld [vmem:[%s208 + $0x100] sm:$0xff]
        %v303 = vld [vmem:[%s208 + $0x108] sm:$0xff]
        %v304 = vld [vmem:[%s208 + $0x110] sm:$0xff]
        %v305 = vld [vmem:[%s208 + $0x118] sm:$0xff]
        %v306 = vld [vmem:[%s208 + $0x120] sm:$0xff]
        %v307 = vld [vmem:[%s208 + $0x128] sm:$0xff]
        %v308 = vld [vmem:[%s208 + $0x130] sm:$0xff]
        %v309 = vld [vmem:[%s208 + $0x138] sm:$0xff]
        %v310 = vld [vmem:[%s208 + $0x140] sm:$0xff]
        %v311 = vld [vmem:[%s208 + $0x148] sm:$0xff]
        %v312 = vld [vmem:[%s208 + $0x150] sm:$0xff]
        %v313 = vld [vmem:[%s208 + $0x158] sm:$0xff]
        %v314 = vld [vmem:[%s208 + $0x160] sm:$0xff]
        %v315 = vld [vmem:[%s208 + $0x168] sm:$0xff]
        %v316 = vld [vmem:[%s208 + $0x170] sm:$0xff]
        %v317 = vld [vmem:[%s208 + $0x178] sm:$0xff]
        %v318 = vld [vmem:[%s208 + $0x180] sm:$0xff]
        %v319 = vld [vmem:[%s208 + $0x188] sm:$0xff]
        %v320 = vld [vmem:[%s208 + $0x190] sm:$0xff]
        %v321 = vld [vmem:[%s208 + $0x198] sm:$0xff]
        %v322 = vld [vmem:[%s208 + $0x1a0] sm:$0xff]
        %v323 = vld [vmem:[%s208 + $0x1a8] sm:$0xff]
        %v324 = vld [vmem:[%s208 + $0x1b0] sm:$0xff]
        %v325 = vld [vmem:[%s208 + $0x1b8] sm:$0xff]
        %v326 = vld [vmem:[%s208 + $0x1c0] sm:$0xff]
        %v327 = vld [vmem:[%s208 + $0x1c8] sm:$0xff]
        %v328 = vld [vmem:[%s208 + $0x1d0] sm:$0xff]
        %v329 = vld [vmem:[%s208 + $0x1d8] sm:$0xff]
        %v330 = vld [vmem:[%s208 + $0x1e0] sm:$0xff]
        %v331 = vld [vmem:[%s208 + $0x1e8] sm:$0xff]
        %v332 = vld [vmem:[%s208 + $0x1f0] sm:$0xff]
        %v333 = vld [vmem:[%s208 + $0x1f8] sm:$0xff]
        %v334 = vld [vmem:[%s208 + $0x200] sm:$0xff]
        %v335 = vld [vmem:[%s208 + $0x208] sm:$0xff]
        %v336 = vld [vmem:[%s208 + $0x210] sm:$0xff]
        %v337 = vld [vmem:[%s208 + $0x218] sm:$0xff]
        %v338 = vld [vmem:[%s208 + $0x220] sm:$0xff]
        %v339 = vld [vmem:[%s208 + $0x228] sm:$0xff]
        %v340 = vld [vmem:[%s208 + $0x230] sm:$0xff]
        %v341 = vld [vmem:[%s208 + $0x238] sm:$0xff]
        %v342 = vld [vmem:[%s208 + $0x240] sm:$0xff]
        %v343 = vld [vmem:[%s208 + $0x248] sm:$0xff]
        %v344 = vld [vmem:[%s208 + $0x250] sm:$0xff]
        %v345 = vld [vmem:[%s208 + $0x258] sm:$0xff]
        %v346 = vld [vmem:[%s208 + $0x260] sm:$0xff]
        %v347 = vld [vmem:[%s208 + $0x268] sm:$0xff]
        %v348 = vld [vmem:[%s208 + $0x270] sm:$0xff]
        %v349 = vld [vmem:[%s208 + $0x278] sm:$0xff]
        %v350 = vld [vmem:[%s208 + $0x280] sm:$0xff]
        %v351 = vld [vmem:[%s208 + $0x288] sm:$0xff]
        %v352 = vld [vmem:[%s208 + $0x290] sm:$0xff]
        %v353 = vld [vmem:[%s208 + $0x298] sm:$0xff]
        %v354 = vld [vmem:[%s208 + $0x2a0] sm:$0xff]
        %v355 = vld [vmem:[%s208 + $0x2a8] sm:$0xff]
        %v356 = vld [vmem:[%s208 + $0x2b0] sm:$0xff]
        %v357 = vld [vmem:[%s208 + $0x2b8] sm:$0xff]
        %v358 = vld [vmem:[%s208 + $0x2c0] sm:$0xff]
        %v359 = vld [vmem:[%s208 + $0x2c8] sm:$0xff]
        %v360 = vld [vmem:[%s208 + $0x2d0] sm:$0xff]
        %v361 = vld [vmem:[%s208 + $0x2d8] sm:$0xff]
        %v362 = vld [vmem:[%s208 + $0x2e0] sm:$0xff]
        %v363 = vld [vmem:[%s208 + $0x2e8] sm:$0xff]
        %v364 = vld [vmem:[%s208 + $0x2f0] sm:$0xff]
        %v365 = vld [vmem:[%s208 + $0x2f8] sm:$0xff]
        %v366 = vld [vmem:[%s208 + $0x300] sm:$0xff]
        %v367 = vld [vmem:[%s208 + $0x308] sm:$0xff]
        %v368 = vld [vmem:[%s208 + $0x310] sm:$0xff]
        %v369 = vld [vmem:[%s208 + $0x318] sm:$0xff]
        %v370 = vld [vmem:[%s208 + $0x320] sm:$0xff]
        %v371 = vld [vmem:[%s208 + $0x328] sm:$0xff]
        %v372 = vld [vmem:[%s208 + $0x330] sm:$0xff]
        %v373 = vld [vmem:[%s208 + $0x338] sm:$0xff]
        %v374 = vld [vmem:[%s208 + $0x340] sm:$0xff]
        %v375 = vld [vmem:[%s208 + $0x348] sm:$0xff]
        %v376 = vld [vmem:[%s208 + $0x350] sm:$0xff]
        %v377 = vld [vmem:[%s208 + $0x358] sm:$0xff]
        %v378 = vld [vmem:[%s208 + $0x360] sm:$0xff]
        %v379 = vld [vmem:[%s208 + $0x368] sm:$0xff]
        %v380 = vld [vmem:[%s208 + $0x370] sm:$0xff]
        %v381 = vld [vmem:[%s208 + $0x378] sm:$0xff]
        %v382 = vld [vmem:[%s208 + $0x380] sm:$0xff]
        %v383 = vld [vmem:[%s208 + $0x388] sm:$0xff]
        %v384 = vld [vmem:[%s208 + $0x390] sm:$0xff]
        %v385 = vld [vmem:[%s208 + $0x398] sm:$0xff]
        %v386 = vld [vmem:[%s208 + $0x3a0] sm:$0xff]
        %v387 = vld [vmem:[%s208 + $0x3a8] sm:$0xff]
        %v388 = vld [vmem:[%s208 + $0x3b0] sm:$0xff]
        %v389 = vld [vmem:[%s208 + $0x3b8] sm:$0xff]
        %v390 = vld [vmem:[%s208 + $0x3c0] sm:$0xff]
        %v391 = vld [vmem:[%s208 + $0x3c8] sm:$0xff]
        %v392 = vld [vmem:[%s208 + $0x3d0] sm:$0xff]
        %v393 = vld [vmem:[%s208 + $0x3d8] sm:$0xff]
        %v394 = vld [vmem:[%s208 + $0x3e0] sm:$0xff]
        %v395 = vld [vmem:[%s208 + $0x3e8] sm:$0xff]
        %v396 = vld [vmem:[%s208 + $0x3f0] sm:$0xff]
        %v397 = vld [vmem:[%s208 + $0x3f8] sm:$0xff]
        %v398 = vld [vmem:[%s208 + $0x400] sm:$0xff]
        %v399 = vld [vmem:[%s208 + $0x408] sm:$0xff]
        %v400 = vld [vmem:[%s208 + $0x410] sm:$0xff]
        %v401 = vld [vmem:[%s208 + $0x418] sm:$0xff]
        %v402 = vld [vmem:[%s208 + $0x420] sm:$0xff]
        %v403 = vld [vmem:[%s208 + $0x428] sm:$0xff]
        %v404 = vld [vmem:[%s208 + $0x430] sm:$0xff]
        %v405 = vld [vmem:[%s208 + $0x438] sm:$0xff]
        %v406 = vld [vmem:[%s208 + $0x440] sm:$0xff]
        %v407 = vld [vmem:[%s208 + $0x448] sm:$0xff]
        %v408 = vld [vmem:[%s208 + $0x450] sm:$0xff]
        %v409 = vld [vmem:[%s208 + $0x458] sm:$0xff]
        %v410 = vld [vmem:[%s208 + $0x460] sm:$0xff]
        %v411 = vld [vmem:[%s208 + $0x468] sm:$0xff]
        %v412 = vld [vmem:[%s208 + $0x470] sm:$0xff]
        %v413 = vld [vmem:[%s208 + $0x478] sm:$0xff]
        %v414 = vld [vmem:[%s208 + $0x480] sm:$0xff]
        %v415 = vld [vmem:[%s208 + $0x488] sm:$0xff]
        %v416 = vld [vmem:[%s208 + $0x490] sm:$0xff]
        %v417 = vld [vmem:[%s208 + $0x498] sm:$0xff]
        %v418 = vld [vmem:[%s208 + $0x4a0] sm:$0xff]
        %v419 = vld [vmem:[%s208 + $0x4a8] sm:$0xff]
        %v420 = vld [vmem:[%s208 + $0x4b0] sm:$0xff]
        %v421 = vld [vmem:[%s208 + $0x4b8] sm:$0xff]
        %v422 = vld [vmem:[%s208 + $0x4c0] sm:$0xff]
        %v423 = vld [vmem:[%s208 + $0x4c8] sm:$0xff]
        %v424 = vld [vmem:[%s208 + $0x4d0] sm:$0xff]
        %v425 = vld [vmem:[%s208 + $0x4d8] sm:$0xff]
        %v426 = vld [vmem:[%s208 + $0x4e0] sm:$0xff]
        %v427 = vld [vmem:[%s208 + $0x4e8] sm:$0xff]
        %v428 = vld [vmem:[%s208 + $0x4f0] sm:$0xff]
        %v429 = vld [vmem:[%s208 + $0x4f8] sm:$0xff]
        %v430 = vld [vmem:[%s208 + $0x500] sm:$0xff]
        %v431 = vld [vmem:[%s208 + $0x508] sm:$0xff]
        %v432 = vld [vmem:[%s208 + $0x510] sm:$0xff]
        %v433 = vld [vmem:[%s208 + $0x518] sm:$0xff]
        %v434 = vld [vmem:[%s208 + $0x520] sm:$0xff]
        %v435 = vld [vmem:[%s208 + $0x528] sm:$0xff]
        %v436 = vld [vmem:[%s208 + $0x530] sm:$0xff]
        %v437 = vld [vmem:[%s208 + $0x538] sm:$0xff]
        %v438 = vld [vmem:[%s208 + $0x540] sm:$0xff]
        %v439 = vld [vmem:[%s208 + $0x548] sm:$0xff]
        %v440 = vld [vmem:[%s208 + $0x550] sm:$0xff]
        %v441 = vld [vmem:[%s208 + $0x558] sm:$0xff]
        %v442 = vld [vmem:[%s208 + $0x560] sm:$0xff]
        %v443 = vld [vmem:[%s208 + $0x568] sm:$0xff]
        %v444 = vld [vmem:[%s208 + $0x570] sm:$0xff]
        %v445 = vld [vmem:[%s208 + $0x578] sm:$0xff]
        %v446 = vld [vmem:[%s208 + $0x580] sm:$0xff]
        %v447 = vld [vmem:[%s208 + $0x588] sm:$0xff]
        %v448 = vld [vmem:[%s208 + $0x590] sm:$0xff]
        %v449 = vld [vmem:[%s208 + $0x598] sm:$0xff]
        %v450 = vld [vmem:[%s208 + $0x5a0] sm:$0xff]
        %v451 = vld [vmem:[%s208 + $0x5a8] sm:$0xff]
        %v452 = vld [vmem:[%s208 + $0x5b0] sm:$0xff]
        %v453 = vld [vmem:[%s208 + $0x5b8] sm:$0xff]
        %v454 = vld [vmem:[%s208 + $0x5c0] sm:$0xff]
        %v455 = vld [vmem:[%s208 + $0x5c8] sm:$0xff]
        %v456 = vld [vmem:[%s208 + $0x5d0] sm:$0xff]
        %v457 = vld [vmem:[%s208 + $0x5d8] sm:$0xff]
        %v458 = vld [vmem:[%s208 + $0x5e0] sm:$0xff]
        %v459 = vld [vmem:[%s208 + $0x5e8] sm:$0xff]
        %v460 = vld [vmem:[%s208 + $0x5f0] sm:$0xff]
        %v461 = vld [vmem:[%s208 + $0x5f8] sm:$0xff]
        %v462 = vld [vmem:[%s208 + $0x600] sm:$0xff]
        %v463 = vld [vmem:[%s208 + $0x608] sm:$0xff]
        %v464 = vld [vmem:[%s208 + $0x610] sm:$0xff]
        %v465 = vld [vmem:[%s208 + $0x618] sm:$0xff]
        %v466 = vld [vmem:[%s208 + $0x620] sm:$0xff]
        %v467 = vld [vmem:[%s208 + $0x628] sm:$0xff]
        %v468 = vld [vmem:[%s208 + $0x630] sm:$0xff]
        %v469 = vld [vmem:[%s208 + $0x638] sm:$0xff]
        %v470 = vld [vmem:[%s208 + $0x640] sm:$0xff]
        %v471 = vld [vmem:[%s208 + $0x648] sm:$0xff]
        %v472 = vld [vmem:[%s208 + $0x650] sm:$0xff]
        %v473 = vld [vmem:[%s208 + $0x658] sm:$0xff]
        %v474 = vld [vmem:[%s208 + $0x660] sm:$0xff]
        %v475 = vld [vmem:[%s208 + $0x668] sm:$0xff]
        %v476 = vld [vmem:[%s208 + $0x670] sm:$0xff]
        %v477 = vld [vmem:[%s208 + $0x678] sm:$0xff]
        %v478 = vld [vmem:[%s208 + $0x680] sm:$0xff]
        %v479 = vld [vmem:[%s208 + $0x688] sm:$0xff]
        %v480 = vld [vmem:[%s208 + $0x690] sm:$0xff]
        %v481 = vld [vmem:[%s208 + $0x698] sm:$0xff]
        %v482 = vld [vmem:[%s208 + $0x6a0] sm:$0xff]
        %v483 = vld [vmem:[%s208 + $0x6a8] sm:$0xff]
        %v484 = vld [vmem:[%s208 + $0x6b0] sm:$0xff]
        %v485 = vld [vmem:[%s208 + $0x6b8] sm:$0xff]
        %v486 = vld [vmem:[%s208 + $0x6c0] sm:$0xff]
        %v487 = vld [vmem:[%s208 + $0x6c8] sm:$0xff]
        %v488 = vld [vmem:[%s208 + $0x6d0] sm:$0xff]
        %v489 = vld [vmem:[%s208 + $0x6d8] sm:$0xff]
        %v490 = vld [vmem:[%s208 + $0x6e0] sm:$0xff]
        %v491 = vld [vmem:[%s208 + $0x6e8] sm:$0xff]
        %v492 = vld [vmem:[%s208 + $0x6f0] sm:$0xff]
        %v493 = vld [vmem:[%s208 + $0x6f8] sm:$0xff]
        %v494 = vld [vmem:[%s208 + $0x700] sm:$0xff]
        %v495 = vld [vmem:[%s208 + $0x708] sm:$0xff]
        %v496 = vld [vmem:[%s208 + $0x710] sm:$0xff]
        %v497 = vld [vmem:[%s208 + $0x718] sm:$0xff]
        %v498 = vld [vmem:[%s208 + $0x720] sm:$0xff]
        %v499 = vld [vmem:[%s208 + $0x728] sm:$0xff]
        %v500 = vld [vmem:[%s208 + $0x730] sm:$0xff]
        %v501 = vld [vmem:[%s208 + $0x738] sm:$0xff]
        %v502 = vld [vmem:[%s208 + $0x740] sm:$0xff]
        %v503 = vld [vmem:[%s208 + $0x748] sm:$0xff]
        %v504 = vld [vmem:[%s208 + $0x750] sm:$0xff]
        %v505 = vld [vmem:[%s208 + $0x758] sm:$0xff]
        %v506 = vld [vmem:[%s208 + $0x760] sm:$0xff]
        %v507 = vld [vmem:[%s208 + $0x768] sm:$0xff]
        %v508 = vld [vmem:[%s208 + $0x770] sm:$0xff]
        %v509 = vld [vmem:[%s208 + $0x778] sm:$0xff]
        %v510 = vld [vmem:[%s208 + $0x780] sm:$0xff]
        %v511 = vld [vmem:[%s208 + $0x788] sm:$0xff]
        %v512 = vld [vmem:[%s208 + $0x790] sm:$0xff]
        %v513 = vld [vmem:[%s208 + $0x798] sm:$0xff]
        %v514 = vld [vmem:[%s208 + $0x7a0] sm:$0xff]
        %v515 = vld [vmem:[%s208 + $0x7a8] sm:$0xff]
        %v516 = vld [vmem:[%s208 + $0x7b0] sm:$0xff]
        %v517 = vld [vmem:[%s208 + $0x7b8] sm:$0xff]
        %v518 = vld [vmem:[%s208 + $0x7c0] sm:$0xff]
        %v519 = vld [vmem:[%s208 + $0x7c8] sm:$0xff]
        %v520 = vld [vmem:[%s208 + $0x7d0] sm:$0xff]
        %v521 = vld [vmem:[%s208 + $0x7d8] sm:$0xff]
        %v522 = vld [vmem:[%s208 + $0x7e0] sm:$0xff]
        %v523 = vld [vmem:[%s208 + $0x7e8] sm:$0xff]
        %v524 = vld [vmem:[%s208 + $0x7f0] sm:$0xff]
        %v525 = vld [vmem:[%s208 + $0x7f8] sm:$0xff]
        %v526 = vld [vmem:[%s208 + $0x800] sm:$0xff]
        %v527 = vld [vmem:[%s208 + $0x808] sm:$0xff]
        %v528 = vld [vmem:[%s208 + $0x810] sm:$0xff]
        %v529 = vld [vmem:[%s208 + $0x818] sm:$0xff]
        %v530 = vld [vmem:[%s208 + $0x820] sm:$0xff]
        %v531 = vld [vmem:[%s208 + $0x828] sm:$0xff]
        %v532 = vld [vmem:[%s208 + $0x830] sm:$0xff]
        %v533 = vld [vmem:[%s208 + $0x838] sm:$0xff]
        %v534 = vld [vmem:[%s208 + $0x840] sm:$0xff]
        %v535 = vld [vmem:[%s208 + $0x848] sm:$0xff]
        %v536 = vld [vmem:[%s208 + $0x850] sm:$0xff]
        %v537 = vld [vmem:[%s208 + $0x858] sm:$0xff]
        %v538 = vld [vmem:[%s208 + $0x860] sm:$0xff]
        %v539 = vld [vmem:[%s208 + $0x868] sm:$0xff]
        %v540 = vld [vmem:[%s208 + $0x870] sm:$0xff]
        %v541 = vld [vmem:[%s208 + $0x878] sm:$0xff]
        %v542 = vld [vmem:[%s208 + $0x880] sm:$0xff]
        %v543 = vld [vmem:[%s208 + $0x888] sm:$0xff]
        %v544 = vld [vmem:[%s208 + $0x890] sm:$0xff]
        %v545 = vld [vmem:[%s208 + $0x898] sm:$0xff]
        %v546 = vld [vmem:[%s208 + $0x8a0] sm:$0xff]
        %v547 = vld [vmem:[%s208 + $0x8a8] sm:$0xff]
        %v548 = vld [vmem:[%s208 + $0x8b0] sm:$0xff]
        %v549 = vld [vmem:[%s208 + $0x8b8] sm:$0xff]
        %v550 = vld [vmem:[%s208 + $0x8c0] sm:$0xff]
        %v551 = vld [vmem:[%s208 + $0x8c8] sm:$0xff]
        %v552 = vld [vmem:[%s208 + $0x8d0] sm:$0xff]
        %v553 = vld [vmem:[%s208 + $0x8d8] sm:$0xff]
        %v554 = vld [vmem:[%s208 + $0x8e0] sm:$0xff]
        %v555 = vld [vmem:[%s208 + $0x8e8] sm:$0xff]
        %v556 = vld [vmem:[%s208 + $0x8f0] sm:$0xff]
        %v557 = vld [vmem:[%s208 + $0x8f8] sm:$0xff]
        %v558 = vld [vmem:[%s208 + $0x900] sm:$0xff]
        %v559 = vld [vmem:[%s208 + $0x908] sm:$0xff]
        %v560 = vld [vmem:[%s208 + $0x910] sm:$0xff]
        %v561 = vld [vmem:[%s208 + $0x918] sm:$0xff]
        %v562 = vld [vmem:[%s208 + $0x920] sm:$0xff]
        %v563 = vld [vmem:[%s208 + $0x928] sm:$0xff]
        %v564 = vld [vmem:[%s208 + $0x930] sm:$0xff]
        %v565 = vld [vmem:[%s208 + $0x938] sm:$0xff]
        %v566 = vld [vmem:[%s208 + $0x940] sm:$0xff]
        %v567 = vld [vmem:[%s208 + $0x948] sm:$0xff]
        %v568 = vld [vmem:[%s208 + $0x950] sm:$0xff]
        %v569 = vld [vmem:[%s208 + $0x958] sm:$0xff]
        %v570 = vld [vmem:[%s208 + $0x960] sm:$0xff]
        %v571 = vld [vmem:[%s208 + $0x968] sm:$0xff]
        %v572 = vld [vmem:[%s208 + $0x970] sm:$0xff]
        %v573 = vld [vmem:[%s208 + $0x978] sm:$0xff]
        %v574 = vld [vmem:[%s208 + $0x980] sm:$0xff]
        %v575 = vld [vmem:[%s208 + $0x988] sm:$0xff]
        %v576 = vld [vmem:[%s208 + $0x990] sm:$0xff]
        %v577 = vld [vmem:[%s208 + $0x998] sm:$0xff]
        %v578 = vld [vmem:[%s208 + $0x9a0] sm:$0xff]
        %v579 = vld [vmem:[%s208 + $0x9a8] sm:$0xff]
        %v580 = vld [vmem:[%s208 + $0x9b0] sm:$0xff]
        %v581 = vld [vmem:[%s208 + $0x9b8] sm:$0xff]
        %v582 = vld [vmem:[%s208 + $0x9c0] sm:$0xff]
        %v583 = vld [vmem:[%s208 + $0x9c8] sm:$0xff]
        %v584 = vld [vmem:[%s208 + $0x9d0] sm:$0xff]
        %v585 = vld [vmem:[%s208 + $0x9d8] sm:$0xff]
        %v586 = vld [vmem:[%s208 + $0x9e0] sm:$0xff]
        %v587 = vld [vmem:[%s208 + $0x9e8] sm:$0xff]
        %v588 = vld [vmem:[%s208 + $0x9f0] sm:$0xff]
        %v589 = vld [vmem:[%s208 + $0x9f8] sm:$0xff]
        %v590 = vld [vmem:[%s208 + $0xa00] sm:$0xff]
        %v591 = vld [vmem:[%s208 + $0xa08] sm:$0xff]
        %v592 = vld [vmem:[%s208 + $0xa10] sm:$0xff]
        %v593 = vld [vmem:[%s208 + $0xa18] sm:$0xff]
        %v594 = vld [vmem:[%s208 + $0xa20] sm:$0xff]
        %v595 = vld [vmem:[%s208 + $0xa28] sm:$0xff]
        %v596 = vld [vmem:[%s208 + $0xa30] sm:$0xff]
        %v597 = vld [vmem:[%s208 + $0xa38] sm:$0xff]
        %v598 = vld [vmem:[%s208 + $0xa40] sm:$0xff]
        %v599 = vld [vmem:[%s208 + $0xa48] sm:$0xff]
        %v600 = vld [vmem:[%s208 + $0xa50] sm:$0xff]
        %v601 = vld [vmem:[%s208 + $0xa58] sm:$0xff]
        %v602 = vld [vmem:[%s208 + $0xa60] sm:$0xff]
        %v603 = vld [vmem:[%s208 + $0xa68] sm:$0xff]
        %v604 = vld [vmem:[%s208 + $0xa70] sm:$0xff]
        %v605 = vld [vmem:[%s208 + $0xa78] sm:$0xff]
        %v606 = vld [vmem:[%s208 + $0xa80] sm:$0xff]
        %v607 = vld [vmem:[%s208 + $0xa88] sm:$0xff]
        %v608 = vld [vmem:[%s208 + $0xa90] sm:$0xff]
        %v609 = vld [vmem:[%s208 + $0xa98] sm:$0xff]
        %v610 = vld [vmem:[%s208 + $0xaa0] sm:$0xff]
        %v611 = vld [vmem:[%s208 + $0xaa8] sm:$0xff]
        %v612 = vld [vmem:[%s208 + $0xab0] sm:$0xff]
        %v613 = vld [vmem:[%s208 + $0xab8] sm:$0xff]
        %v614 = vld [vmem:[%s208 + $0xac0] sm:$0xff]
        %v615 = vld [vmem:[%s208 + $0xac8] sm:$0xff]
        %v616 = vld [vmem:[%s208 + $0xad0] sm:$0xff]
        %v617 = vld [vmem:[%s208 + $0xad8] sm:$0xff]
        %v618 = vld [vmem:[%s208 + $0xae0] sm:$0xff]
        %v619 = vld [vmem:[%s208 + $0xae8] sm:$0xff]
        %v620 = vld [vmem:[%s208 + $0xaf0] sm:$0xff]
        %v621 = vld [vmem:[%s208 + $0xaf8] sm:$0xff]
        %v622 = vld [vmem:[%s208 + $0xb00] sm:$0xff]
        %v623 = vld [vmem:[%s208 + $0xb08] sm:$0xff]
        %v624 = vld [vmem:[%s208 + $0xb10] sm:$0xff]
        %v625 = vld [vmem:[%s208 + $0xb18] sm:$0xff]
        %v626 = vld [vmem:[%s208 + $0xb20] sm:$0xff]
        %v627 = vld [vmem:[%s208 + $0xb28] sm:$0xff]
        %v628 = vld [vmem:[%s208 + $0xb30] sm:$0xff]
        %v629 = vld [vmem:[%s208 + $0xb38] sm:$0xff]
        %v630 = vld [vmem:[%s208 + $0xb40] sm:$0xff]
        %v631 = vld [vmem:[%s208 + $0xb48] sm:$0xff]
        %v632 = vld [vmem:[%s208 + $0xb50] sm:$0xff]
        %v633 = vld [vmem:[%s208 + $0xb58] sm:$0xff]
        %v634 = vld [vmem:[%s208 + $0xb60] sm:$0xff]
        %v635 = vld [vmem:[%s208 + $0xb68] sm:$0xff]
        %v636 = vld [vmem:[%s208 + $0xb70] sm:$0xff]
        %v637 = vld [vmem:[%s208 + $0xb78] sm:$0xff]
        %v638 = vld [vmem:[%s208 + $0xb80] sm:$0xff]
        %v639 = vld [vmem:[%s208 + $0xb88] sm:$0xff]
        %v640 = vld [vmem:[%s208 + $0xb90] sm:$0xff]
        %v641 = vld [vmem:[%s208 + $0xb98] sm:$0xff]
        %v642 = vld [vmem:[%s208 + $0xba0] sm:$0xff]
        %v643 = vld [vmem:[%s208 + $0xba8] sm:$0xff]
        %v644 = vld [vmem:[%s208 + $0xbb0] sm:$0xff]
        %v645 = vld [vmem:[%s208 + $0xbb8] sm:$0xff]
        %v646 = vld [vmem:[%s208 + $0xbc0] sm:$0xff]
        %v647 = vld [vmem:[%s208 + $0xbc8] sm:$0xff]
        %v648 = vld [vmem:[%s208 + $0xbd0] sm:$0xff]
        %v649 = vld [vmem:[%s208 + $0xbd8] sm:$0xff]
        %v650 = vld [vmem:[%s208 + $0xbe0] sm:$0xff]
        %v651 = vld [vmem:[%s208 + $0xbe8] sm:$0xff]
        %v652 = vld [vmem:[%s208 + $0xbf0] sm:$0xff]
        %v653 = vld [vmem:[%s208 + $0xbf8] sm:$0xff]
        %v654 = vld [vmem:[%s208 + $0xc00] sm:$0xff]
        %v655 = vld [vmem:[%s208 + $0xc08] sm:$0xff]
        %v656 = vld [vmem:[%s208 + $0xc10] sm:$0xff]
        %v657 = vld [vmem:[%s208 + $0xc18] sm:$0xff]
        %v658 = vld [vmem:[%s208 + $0xc20] sm:$0xff]
        %v659 = vld [vmem:[%s208 + $0xc28] sm:$0xff]
        %v660 = vld [vmem:[%s208 + $0xc30] sm:$0xff]
        %v661 = vld [vmem:[%s208 + $0xc38] sm:$0xff]
        %v662 = vld [vmem:[%s208 + $0xc40] sm:$0xff]
        %v663 = vld [vmem:[%s208 + $0xc48] sm:$0xff]
        %v664 = vld [vmem:[%s208 + $0xc50] sm:$0xff]
        %v665 = vld [vmem:[%s208 + $0xc58] sm:$0xff]
        %v666 = vld [vmem:[%s208 + $0xc60] sm:$0xff]
        %v667 = vld [vmem:[%s208 + $0xc68] sm:$0xff]
        %v668 = vld [vmem:[%s208 + $0xc70] sm:$0xff]
        %v669 = vld [vmem:[%s208 + $0xc78] sm:$0xff]
        %v670 = vld [vmem:[%s208 + $0xc80] sm:$0xff]
        %v671 = vld [vmem:[%s208 + $0xc88] sm:$0xff]
        %v672 = vld [vmem:[%s208 + $0xc90] sm:$0xff]
        %v673 = vld [vmem:[%s208 + $0xc98] sm:$0xff]
        %v674 = vld [vmem:[%s208 + $0xca0] sm:$0xff]
        %v675 = vld [vmem:[%s208 + $0xca8] sm:$0xff]
        %v676 = vld [vmem:[%s208 + $0xcb0] sm:$0xff]
        %v677 = vld [vmem:[%s208 + $0xcb8] sm:$0xff]
        %v678 = vld [vmem:[%s208 + $0xcc0] sm:$0xff]
        %v679 = vld [vmem:[%s208 + $0xcc8] sm:$0xff]
        %v680 = vld [vmem:[%s208 + $0xcd0] sm:$0xff]
        %v681 = vld [vmem:[%s208 + $0xcd8] sm:$0xff]
        %v682 = vld [vmem:[%s208 + $0xce0] sm:$0xff]
        %v683 = vld [vmem:[%s208 + $0xce8] sm:$0xff]
        %v684 = vld [vmem:[%s208 + $0xcf0] sm:$0xff]
        %v685 = vld [vmem:[%s208 + $0xcf8] sm:$0xff]
        %v686 = vld [vmem:[%s208 + $0xd00] sm:$0xff]
        %v687 = vld [vmem:[%s208 + $0xd08] sm:$0xff]
        %v688 = vld [vmem:[%s208 + $0xd10] sm:$0xff]
        %v689 = vld [vmem:[%s208 + $0xd18] sm:$0xff]
        %v690 = vld [vmem:[%s208 + $0xd20] sm:$0xff]
        %v691 = vld [vmem:[%s208 + $0xd28] sm:$0xff]
        %v692 = vld [vmem:[%s208 + $0xd30] sm:$0xff]
        %v693 = vld [vmem:[%s208 + $0xd38] sm:$0xff]
        %v694 = vld [vmem:[%s208 + $0xd40] sm:$0xff]
        %v695 = vld [vmem:[%s208 + $0xd48] sm:$0xff]
        %v696 = vld [vmem:[%s208 + $0xd50] sm:$0xff]
        %v697 = vld [vmem:[%s208 + $0xd58] sm:$0xff]
        %v698 = vld [vmem:[%s208 + $0xd60] sm:$0xff]
        %v699 = vld [vmem:[%s208 + $0xd68] sm:$0xff]
        %v700 = vld [vmem:[%s208 + $0xd70] sm:$0xff]
        %v701 = vld [vmem:[%s208 + $0xd78] sm:$0xff]
        %v702 = vld [vmem:[%s208 + $0xd80] sm:$0xff]
        %v703 = vld [vmem:[%s208 + $0xd88] sm:$0xff]
        %v704 = vld [vmem:[%s208 + $0xd90] sm:$0xff]
        %v705 = vld [vmem:[%s208 + $0xd98] sm:$0xff]
        %v706 = vld [vmem:[%s208 + $0xda0] sm:$0xff]
        %v707 = vld [vmem:[%s208 + $0xda8] sm:$0xff]
        %v708 = vld [vmem:[%s208 + $0xdb0] sm:$0xff]
        %v709 = vld [vmem:[%s208 + $0xdb8] sm:$0xff]
        %v710 = vld [vmem:[%s208 + $0xdc0] sm:$0xff]
        %v711 = vld [vmem:[%s208 + $0xdc8] sm:$0xff]
        %v712 = vld [vmem:[%s208 + $0xdd0] sm:$0xff]
        %v713 = vld [vmem:[%s208 + $0xdd8] sm:$0xff]
        %v714 = vld [vmem:[%s208 + $0xde0] sm:$0xff]
        %v715 = vld [vmem:[%s208 + $0xde8] sm:$0xff]
        %v716 = vld [vmem:[%s208 + $0xdf0] sm:$0xff]
        %v717 = vld [vmem:[%s208 + $0xdf8] sm:$0xff]
        %v718 = vld [vmem:[%s208 + $0xe00] sm:$0xff]
        %v719 = vld [vmem:[%s208 + $0xe08] sm:$0xff]
        %v720 = vld [vmem:[%s208 + $0xe10] sm:$0xff]
        %v721 = vld [vmem:[%s208 + $0xe18] sm:$0xff]
        %v722 = vld [vmem:[%s208 + $0xe20] sm:$0xff]
        %v723 = vld [vmem:[%s208 + $0xe28] sm:$0xff]
        %v724 = vld [vmem:[%s208 + $0xe30] sm:$0xff]
        %v725 = vld [vmem:[%s208 + $0xe38] sm:$0xff]
        %v726 = vld [vmem:[%s208 + $0xe40] sm:$0xff]
        %v727 = vld [vmem:[%s208 + $0xe48] sm:$0xff]
        %v728 = vld [vmem:[%s208 + $0xe50] sm:$0xff]
        %v729 = vld [vmem:[%s208 + $0xe58] sm:$0xff]
        %v730 = vld [vmem:[%s208 + $0xe60] sm:$0xff]
        %v731 = vld [vmem:[%s208 + $0xe68] sm:$0xff]
        %v732 = vld [vmem:[%s208 + $0xe70] sm:$0xff]
        %v733 = vld [vmem:[%s208 + $0xe78] sm:$0xff]
        %v734 = vld [vmem:[%s208 + $0xe80] sm:$0xff]
        %v735 = vld [vmem:[%s208 + $0xe88] sm:$0xff]
        %v736 = vld [vmem:[%s208 + $0xe90] sm:$0xff]
        %v737 = vld [vmem:[%s208 + $0xe98] sm:$0xff]
        %v738 = vld [vmem:[%s208 + $0xea0] sm:$0xff]
        %v739 = vld [vmem:[%s208 + $0xea8] sm:$0xff]
        %v740 = vld [vmem:[%s208 + $0xeb0] sm:$0xff]
        %v741 = vld [vmem:[%s208 + $0xeb8] sm:$0xff]
        %v742 = vld [vmem:[%s208 + $0xec0] sm:$0xff]
        %v743 = vld [vmem:[%s208 + $0xec8] sm:$0xff]
        %v744 = vld [vmem:[%s208 + $0xed0] sm:$0xff]
        %v745 = vld [vmem:[%s208 + $0xed8] sm:$0xff]
        %v746 = vld [vmem:[%s208 + $0xee0] sm:$0xff]
        %v747 = vld [vmem:[%s208 + $0xee8] sm:$0xff]
        %v748 = vld [vmem:[%s208 + $0xef0] sm:$0xff]
        %v749 = vld [vmem:[%s208 + $0xef8] sm:$0xff]
        %v750 = vld [vmem:[%s208 + $0xf00] sm:$0xff]
        %v751 = vld [vmem:[%s208 + $0xf08] sm:$0xff]
        %v752 = vld [vmem:[%s208 + $0xf10] sm:$0xff]
        %v753 = vld [vmem:[%s208 + $0xf18] sm:$0xff]
        %v754 = vld [vmem:[%s208 + $0xf20] sm:$0xff]
        %v755 = vld [vmem:[%s208 + $0xf28] sm:$0xff]
        %v756 = vld [vmem:[%s208 + $0xf30] sm:$0xff]
        %v757 = vld [vmem:[%s208 + $0xf38] sm:$0xff]
        %v758 = vld [vmem:[%s208 + $0xf40] sm:$0xff]
        %v759 = vld [vmem:[%s208 + $0xf48] sm:$0xff]
        %v760 = vld [vmem:[%s208 + $0xf50] sm:$0xff]
        %v761 = vld [vmem:[%s208 + $0xf58] sm:$0xff]
        %v762 = vld [vmem:[%s208 + $0xf60] sm:$0xff]
        %v763 = vld [vmem:[%s208 + $0xf68] sm:$0xff]
        %v764 = vld [vmem:[%s208 + $0xf70] sm:$0xff]
        %v765 = vld [vmem:[%s208 + $0xf78] sm:$0xff]
        %v766 = vld [vmem:[%s208 + $0xf80] sm:$0xff]
        %v767 = vld [vmem:[%s208 + $0xf88] sm:$0xff]
        %v768 = vld [vmem:[%s208 + $0xf90] sm:$0xff]
        %v769 = vld [vmem:[%s208 + $0xf98] sm:$0xff]
        %v770 = vld [vmem:[%s208 + $0xfa0] sm:$0xff]
        %v771 = vld [vmem:[%s208 + $0xfa8] sm:$0xff]
        %v772 = vld [vmem:[%s208 + $0xfb0] sm:$0xff]
        %v773 = vld [vmem:[%s208 + $0xfb8] sm:$0xff]
        %v774 = vld [vmem:[%s208 + $0xfc0] sm:$0xff]
        %v775 = vld [vmem:[%s208 + $0xfc8] sm:$0xff]
        %v776 = vld [vmem:[%s208 + $0xfd0] sm:$0xff]
        %v777 = vld [vmem:[%s208 + $0xfd8] sm:$0xff]
        %v778 = vld [vmem:[%s208 + $0xfe0] sm:$0xff]
        %v779 = vld [vmem:[%s208 + $0xfe8] sm:$0xff]
        %v780 = vld [vmem:[%s208 + $0xff0] sm:$0xff]
        %v781 = vld [vmem:[%s208 + $0xff8] sm:$0xff]
        %v782 = vld [vmem:[%s208 + $0x1000] sm:$0xff]
        %v783 = vld [vmem:[%s208 + $0x1008] sm:$0xff]
        %v784 = vld [vmem:[%s208 + $0x1010] sm:$0xff]
        %v785 = vld [vmem:[%s208 + $0x1018] sm:$0xff]
        %v786 = vld [vmem:[%s208 + $0x1020] sm:$0xff]
        %v787 = vld [vmem:[%s208 + $0x1028] sm:$0xff]
        %v788 = vld [vmem:[%s208 + $0x1030] sm:$0xff]
        %v789 = vld [vmem:[%s208 + $0x1038] sm:$0xff]
        %v790 = vld [vmem:[%s208 + $0x1040] sm:$0xff]
        %v791 = vld [vmem:[%s208 + $0x1048] sm:$0xff]
        %v792 = vld [vmem:[%s208 + $0x1050] sm:$0xff]
        %v793 = vld [vmem:[%s208 + $0x1058] sm:$0xff]
        %v794 = vld [vmem:[%s208 + $0x1060] sm:$0xff]
        %v795 = vld [vmem:[%s208 + $0x1068] sm:$0xff]
        %v796 = vld [vmem:[%s208 + $0x1070] sm:$0xff]
        %v797 = vld [vmem:[%s208 + $0x1078] sm:$0xff]
        %v798 = vld [vmem:[%s208 + $0x1080] sm:$0xff]
        %v799 = vld [vmem:[%s208 + $0x1088] sm:$0xff]
        %v800 = vld [vmem:[%s208 + $0x1090] sm:$0xff]
        %v801 = vld [vmem:[%s208 + $0x1098] sm:$0xff]
        %v802 = vld [vmem:[%s208 + $0x10a0] sm:$0xff]
        %v803 = vld [vmem:[%s208 + $0x10a8] sm:$0xff]
        %v804 = vld [vmem:[%s208 + $0x10b0] sm:$0xff]
        %v805 = vld [vmem:[%s208 + $0x10b8] sm:$0xff]
        %v806 = vld [vmem:[%s208 + $0x10c0] sm:$0xff]
        %v807 = vld [vmem:[%s208 + $0x10c8] sm:$0xff]
        %v808 = vld [vmem:[%s208 + $0x10d0] sm:$0xff]
        %v809 = vld [vmem:[%s208 + $0x10d8] sm:$0xff]
        %v810 = vld [vmem:[%s208 + $0x10e0] sm:$0xff]
        %v811 = vld [vmem:[%s208 + $0x10e8] sm:$0xff]
        %v812 = vld [vmem:[%s208 + $0x10f0] sm:$0xff]
        %v813 = vld [vmem:[%s208 + $0x10f8] sm:$0xff]
        %v814 = vld [vmem:[%s208 + $0x1100] sm:$0xff]
        %v815 = vld [vmem:[%s208 + $0x1108] sm:$0xff]
        %v816 = vld [vmem:[%s208 + $0x1110] sm:$0xff]
        %v817 = vld [vmem:[%s208 + $0x1118] sm:$0xff]
        %v818 = vld [vmem:[%s208 + $0x1120] sm:$0xff]
        %v819 = vld [vmem:[%s208 + $0x1128] sm:$0xff]
        %v820 = vld [vmem:[%s208 + $0x1130] sm:$0xff]
        %v821 = vld [vmem:[%s208 + $0x1138] sm:$0xff]
        %v822 = vld [vmem:[%s208 + $0x1140] sm:$0xff]
        %v823 = vld [vmem:[%s208 + $0x1148] sm:$0xff]
        %v824 = vld [vmem:[%s208 + $0x1150] sm:$0xff]
        %v825 = vld [vmem:[%s208 + $0x1158] sm:$0xff]
        %v826 = vld [vmem:[%s208 + $0x1160] sm:$0xff]
        %v827 = vld [vmem:[%s208 + $0x1168] sm:$0xff]
        %v828 = vld [vmem:[%s208 + $0x1170] sm:$0xff]
        %v829 = vld [vmem:[%s208 + $0x1178] sm:$0xff]
        %v830 = vld [vmem:[%s208 + $0x1180] sm:$0xff]
        %v831 = vld [vmem:[%s208 + $0x1188] sm:$0xff]
        %v832 = vld [vmem:[%s208 + $0x1190] sm:$0xff]
        %v833 = vld [vmem:[%s208 + $0x1198] sm:$0xff]
        %v834 = vld [vmem:[%s208 + $0x11a0] sm:$0xff]
        %v835 = vld [vmem:[%s208 + $0x11a8] sm:$0xff]
        %v836 = vld [vmem:[%s208 + $0x11b0] sm:$0xff]
        %v837 = vld [vmem:[%s208 + $0x11b8] sm:$0xff]
        %v838 = vld [vmem:[%s208 + $0x11c0] sm:$0xff]
        %v839 = vld [vmem:[%s208 + $0x11c8] sm:$0xff]
        %v840 = vld [vmem:[%s208 + $0x11d0] sm:$0xff]
        %v841 = vld [vmem:[%s208 + $0x11d8] sm:$0xff]
        %v842 = vld [vmem:[%s208 + $0x11e0] sm:$0xff]
        %v843 = vld [vmem:[%s208 + $0x11e8] sm:$0xff]
        %v844 = vld [vmem:[%s208 + $0x11f0] sm:$0xff]
        %v845 = vld [vmem:[%s208 + $0x11f8] sm:$0xff]
        %v846 = vld [vmem:[%s208 + $0x1200] sm:$0xff]
        %v847 = vld [vmem:[%s208 + $0x1208] sm:$0xff]
        %v848 = vld [vmem:[%s208 + $0x1210] sm:$0xff]
        %v849 = vld [vmem:[%s208 + $0x1218] sm:$0xff]
        %v850 = vld [vmem:[%s208 + $0x1220] sm:$0xff]
        %v851 = vld [vmem:[%s208 + $0x1228] sm:$0xff]
        %v852 = vld [vmem:[%s208 + $0x1230] sm:$0xff]
        %v853 = vld [vmem:[%s208 + $0x1238] sm:$0xff]
        %v854 = vld [vmem:[%s208 + $0x1240] sm:$0xff]
        %v855 = vld [vmem:[%s208 + $0x1248] sm:$0xff]
        %v856 = vld [vmem:[%s208 + $0x1250] sm:$0xff]
        %v857 = vld [vmem:[%s208 + $0x1258] sm:$0xff]
        %v858 = vld [vmem:[%s208 + $0x1260] sm:$0xff]
        %v859 = vld [vmem:[%s208 + $0x1268] sm:$0xff]
        %v860 = vld [vmem:[%s208 + $0x1270] sm:$0xff]
        %v861 = vld [vmem:[%s208 + $0x1278] sm:$0xff]
        %v862 = vld [vmem:[%s208 + $0x1280] sm:$0xff]
        %v863 = vld [vmem:[%s208 + $0x1288] sm:$0xff]
        %v864 = vld [vmem:[%s208 + $0x1290] sm:$0xff]
        %v865 = vld [vmem:[%s208 + $0x1298] sm:$0xff]
        %v866 = vld [vmem:[%s208 + $0x12a0] sm:$0xff]
        %v867 = vld [vmem:[%s208 + $0x12a8] sm:$0xff]
        %v868 = vld [vmem:[%s208 + $0x12b0] sm:$0xff]
        %v869 = vld [vmem:[%s208 + $0x12b8] sm:$0xff]
        %v870 = vld [vmem:[%s208 + $0x12c0] sm:$0xff]
        %v871 = vld [vmem:[%s208 + $0x12c8] sm:$0xff]
        %v872 = vld [vmem:[%s208 + $0x12d0] sm:$0xff]
        %v873 = vld [vmem:[%s208 + $0x12d8] sm:$0xff]
        %v874 = vld [vmem:[%s208 + $0x12e0] sm:$0xff]
        %v875 = vld [vmem:[%s208 + $0x12e8] sm:$0xff]
        %v876 = vld [vmem:[%s208 + $0x12f0] sm:$0xff]
        %v877 = vld [vmem:[%s208 + $0x12f8] sm:$0xff]
        %v878 = vld [vmem:[%s208 + $0x1300] sm:$0xff]
        %v879 = vld [vmem:[%s208 + $0x1308] sm:$0xff]
        %v880 = vld [vmem:[%s208 + $0x1310] sm:$0xff]
        %v881 = vld [vmem:[%s208 + $0x1318] sm:$0xff]
        %v882 = vld [vmem:[%s208 + $0x1320] sm:$0xff]
        %v883 = vld [vmem:[%s208 + $0x1328] sm:$0xff]
        %v884 = vld [vmem:[%s208 + $0x1330] sm:$0xff]
        %v885 = vld [vmem:[%s208 + $0x1338] sm:$0xff]
        %v886 = vld [vmem:[%s208 + $0x1340] sm:$0xff]
        %v887 = vld [vmem:[%s208 + $0x1348] sm:$0xff]
        %v888 = vld [vmem:[%s208 + $0x1350] sm:$0xff]
        %v889 = vld [vmem:[%s208 + $0x1358] sm:$0xff]
        %v890 = vld [vmem:[%s208 + $0x1360] sm:$0xff]
        %v891 = vld [vmem:[%s208 + $0x1368] sm:$0xff]
        %v892 = vld [vmem:[%s208 + $0x1370] sm:$0xff]
        %v893 = vld [vmem:[%s208 + $0x1378] sm:$0xff]
        %v894 = vld [vmem:[%s208 + $0x1380] sm:$0xff]
        %v895 = vld [vmem:[%s208 + $0x1388] sm:$0xff]
        %v896 = vld [vmem:[%s208 + $0x1390] sm:$0xff]
        %v897 = vld [vmem:[%s208 + $0x1398] sm:$0xff]
        %v898 = vld [vmem:[%s208 + $0x13a0] sm:$0xff]
        %v899 = vld [vmem:[%s208 + $0x13a8] sm:$0xff]
        %v900 = vld [vmem:[%s208 + $0x13b0] sm:$0xff]
        %v901 = vld [vmem:[%s208 + $0x13b8] sm:$0xff]
        %v902 = vld [vmem:[%s208 + $0x13c0] sm:$0xff]
        %v903 = vld [vmem:[%s208 + $0x13c8] sm:$0xff]
        %v904 = vld [vmem:[%s208 + $0x13d0] sm:$0xff]
        %v905 = vld [vmem:[%s208 + $0x13d8] sm:$0xff]
        %v906 = vld [vmem:[%s208 + $0x13e0] sm:$0xff]
        %v907 = vld [vmem:[%s208 + $0x13e8] sm:$0xff]
        %v908 = vld [vmem:[%s208 + $0x13f0] sm:$0xff]
        %v909 = vld [vmem:[%s208 + $0x13f8] sm:$0xff]
        %v910 = vld [vmem:[%s208 + $0x1400] sm:$0xff]
        %v911 = vld [vmem:[%s208 + $0x1408] sm:$0xff]
        %v912 = vld [vmem:[%s208 + $0x1410] sm:$0xff]
        %v913 = vld [vmem:[%s208 + $0x1418] sm:$0xff]
        %v914 = vld [vmem:[%s208 + $0x1420] sm:$0xff]
        %v915 = vld [vmem:[%s208 + $0x1428] sm:$0xff]
        %v916 = vld [vmem:[%s208 + $0x1430] sm:$0xff]
        %v917 = vld [vmem:[%s208 + $0x1438] sm:$0xff]
        %v918 = vld [vmem:[%s208 + $0x1440] sm:$0xff]
        %v919 = vld [vmem:[%s208 + $0x1448] sm:$0xff]
        %v920 = vld [vmem:[%s208 + $0x1450] sm:$0xff]
        %v921 = vld [vmem:[%s208 + $0x1458] sm:$0xff]
        %v922 = vld [vmem:[%s208 + $0x1460] sm:$0xff]
        %v923 = vld [vmem:[%s208 + $0x1468] sm:$0xff]
        %v924 = vld [vmem:[%s208 + $0x1470] sm:$0xff]
        %v925 = vld [vmem:[%s208 + $0x1478] sm:$0xff]
        %v926 = vld [vmem:[%s208 + $0x1480] sm:$0xff]
        %v927 = vld [vmem:[%s208 + $0x1488] sm:$0xff]
        %v928 = vld [vmem:[%s208 + $0x1490] sm:$0xff]
        %v929 = vld [vmem:[%s208 + $0x1498] sm:$0xff]
        %v930 = vld [vmem:[%s208 + $0x14a0] sm:$0xff]
        %v931 = vld [vmem:[%s208 + $0x14a8] sm:$0xff]
        %v932 = vld [vmem:[%s208 + $0x14b0] sm:$0xff]
        %v933 = vld [vmem:[%s208 + $0x14b8] sm:$0xff]
        %v934 = vld [vmem:[%s208 + $0x14c0] sm:$0xff]
        %v935 = vld [vmem:[%s208 + $0x14c8] sm:$0xff]
        %v936 = vld [vmem:[%s208 + $0x14d0] sm:$0xff]
        %v937 = vld [vmem:[%s208 + $0x14d8] sm:$0xff]
        %v938 = vld [vmem:[%s208 + $0x14e0] sm:$0xff]
        %v939 = vld [vmem:[%s208 + $0x14e8] sm:$0xff]
        %v940 = vld [vmem:[%s208 + $0x14f0] sm:$0xff]
        %v941 = vld [vmem:[%s208 + $0x14f8] sm:$0xff]
        %v942 = vld [vmem:[%s208 + $0x1500] sm:$0xff]
        %v943 = vld [vmem:[%s208 + $0x1508] sm:$0xff]
        %v944 = vld [vmem:[%s208 + $0x1510] sm:$0xff]
        %v945 = vld [vmem:[%s208 + $0x1518] sm:$0xff]
        %v946 = vld [vmem:[%s208 + $0x1520] sm:$0xff]
        %v947 = vld [vmem:[%s208 + $0x1528] sm:$0xff]
        %v948 = vld [vmem:[%s208 + $0x1530] sm:$0xff]
        %v949 = vld [vmem:[%s208 + $0x1538] sm:$0xff]
        %v950 = vld [vmem:[%s208 + $0x1540] sm:$0xff]
        %v951 = vld [vmem:[%s208 + $0x1548] sm:$0xff]
        %v952 = vld [vmem:[%s208 + $0x1550] sm:$0xff]
        %v953 = vld [vmem:[%s208 + $0x1558] sm:$0xff]
        %v954 = vld [vmem:[%s208 + $0x1560] sm:$0xff]
        %v955 = vld [vmem:[%s208 + $0x1568] sm:$0xff]
        %v956 = vld [vmem:[%s208 + $0x1570] sm:$0xff]
        %v957 = vld [vmem:[%s208 + $0x1578] sm:$0xff]
        %v958 = vld [vmem:[%s208 + $0x1580] sm:$0xff]
        %v959 = vld [vmem:[%s208 + $0x1588] sm:$0xff]
        %v960 = vld [vmem:[%s208 + $0x1590] sm:$0xff]
        %v961 = vld [vmem:[%s208 + $0x1598] sm:$0xff]
        %v962 = vld [vmem:[%s208 + $0x15a0] sm:$0xff]
        %v963 = vld [vmem:[%s208 + $0x15a8] sm:$0xff]
        %v964 = vld [vmem:[%s208 + $0x15b0] sm:$0xff]
        %v965 = vld [vmem:[%s208 + $0x15b8] sm:$0xff]
        %v966 = vld [vmem:[%s208 + $0x15c0] sm:$0xff]
        %v967 = vld [vmem:[%s208 + $0x15c8] sm:$0xff]
        %v968 = vld [vmem:[%s208 + $0x15d0] sm:$0xff]
        %v969 = vld [vmem:[%s208 + $0x15d8] sm:$0xff]
        %v970 = vld [vmem:[%s208 + $0x15e0] sm:$0xff]
        %v971 = vld [vmem:[%s208 + $0x15e8] sm:$0xff]
        %v972 = vld [vmem:[%s208 + $0x15f0] sm:$0xff]
        %v973 = vld [vmem:[%s208 + $0x15f8] sm:$0xff]
        %v974 = vld [vmem:[%s208 + $0x1600] sm:$0xff]
        %v975 = vld [vmem:[%s208 + $0x1608] sm:$0xff]
        %v976 = vld [vmem:[%s208 + $0x1610] sm:$0xff]
        %v977 = vld [vmem:[%s208 + $0x1618] sm:$0xff]
        %v978 = vld [vmem:[%s208 + $0x1620] sm:$0xff]
        %v979 = vld [vmem:[%s208 + $0x1628] sm:$0xff]
        %v980 = vld [vmem:[%s208 + $0x1630] sm:$0xff]
        %v981 = vld [vmem:[%s208 + $0x1638] sm:$0xff]
        %v982 = vld [vmem:[%s208 + $0x1640] sm:$0xff]
        %v983 = vld [vmem:[%s208 + $0x1648] sm:$0xff]
        %v984 = vld [vmem:[%s208 + $0x1650] sm:$0xff]
        %v985 = vld [vmem:[%s208 + $0x1658] sm:$0xff]
        %v986 = vld [vmem:[%s208 + $0x1660] sm:$0xff]
        %v987 = vld [vmem:[%s208 + $0x1668] sm:$0xff]
        %v988 = vld [vmem:[%s208 + $0x1670] sm:$0xff]
        %v989 = vld [vmem:[%s208 + $0x1678] sm:$0xff]
        %v990 = vld [vmem:[%s208 + $0x1680] sm:$0xff]
        %v991 = vld [vmem:[%s208 + $0x1688] sm:$0xff]
        %v992 = vld [vmem:[%s208 + $0x1690] sm:$0xff]
        %v993 = vld [vmem:[%s208 + $0x1698] sm:$0xff]
        %v994 = vld [vmem:[%s208 + $0x16a0] sm:$0xff]
        %v995 = vld [vmem:[%s208 + $0x16a8] sm:$0xff]
        %v996 = vld [vmem:[%s208 + $0x16b0] sm:$0xff]
        %v997 = vld [vmem:[%s208 + $0x16b8] sm:$0xff]
        %v998 = vld [vmem:[%s208 + $0x16c0] sm:$0xff]
        %v999 = vld [vmem:[%s208 + $0x16c8] sm:$0xff]
        %v1000 = vld [vmem:[%s208 + $0x16d0] sm:$0xff]
        %v1001 = vld [vmem:[%s208 + $0x16d8] sm:$0xff]
        %v1002 = vld [vmem:[%s208 + $0x16e0] sm:$0xff]
        %v1003 = vld [vmem:[%s208 + $0x16e8] sm:$0xff]
        %v1004 = vld [vmem:[%s208 + $0x16f0] sm:$0xff]
        %v1005 = vld [vmem:[%s208 + $0x16f8] sm:$0xff]
        %v1006 = vld [vmem:[%s208 + $0x1700] sm:$0xff]
        %v1007 = vld [vmem:[%s208 + $0x1708] sm:$0xff]
        %v1008 = vld [vmem:[%s208 + $0x1710] sm:$0xff]
        %v1009 = vld [vmem:[%s208 + $0x1718] sm:$0xff]
        %v1010 = vld [vmem:[%s208 + $0x1720] sm:$0xff]
        %v1011 = vld [vmem:[%s208 + $0x1728] sm:$0xff]
        %v1012 = vld [vmem:[%s208 + $0x1730] sm:$0xff]
        %v1013 = vld [vmem:[%s208 + $0x1738] sm:$0xff]
        %v1014 = vld [vmem:[%s208 + $0x1740] sm:$0xff]
        %v1015 = vld [vmem:[%s208 + $0x1748] sm:$0xff]
        %v1016 = vld [vmem:[%s208 + $0x1750] sm:$0xff]
        %v1017 = vld [vmem:[%s208 + $0x1758] sm:$0xff]
        %v1018 = vld [vmem:[%s208 + $0x1760] sm:$0xff]
        %v1019 = vld [vmem:[%s208 + $0x1768] sm:$0xff]
        %v1020 = vld [vmem:[%s208 + $0x1770] sm:$0xff]
        %v1021 = vld [vmem:[%s208 + $0x1778] sm:$0xff]
        %v1022 = vld [vmem:[%s208 + $0x1780] sm:$0xff]
        %v1023 = vld [vmem:[%s208 + $0x1788] sm:$0xff]
        %v1024 = vld [vmem:[%s208 + $0x1790] sm:$0xff]
        %v1025 = vld [vmem:[%s208 + $0x1798] sm:$0xff]
        %v1026 = vld [vmem:[%s208 + $0x17a0] sm:$0xff]
        %v1027 = vld [vmem:[%s208 + $0x17a8] sm:$0xff]
        %v1028 = vld [vmem:[%s208 + $0x17b0] sm:$0xff]
        %v1029 = vld [vmem:[%s208 + $0x17b8] sm:$0xff]
        %v1030 = vld [vmem:[%s208 + $0x17c0] sm:$0xff]
        %v1031 = vld [vmem:[%s208 + $0x17c8] sm:$0xff]
        %v1032 = vld [vmem:[%s208 + $0x17d0] sm:$0xff]
        %v1033 = vld [vmem:[%s208 + $0x17d8] sm:$0xff]
        %v1034 = vld [vmem:[%s208 + $0x17e0] sm:$0xff]
        %v1035 = vld [vmem:[%s208 + $0x17e8] sm:$0xff]
        %v1036 = vld [vmem:[%s208 + $0x17f0] sm:$0xff]
        %v1037 = vld [vmem:[%s208 + $0x17f8] sm:$0xff]
        %v1038 = vld [vmem:[%s208 + $0x1800] sm:$0xff]
        %v1039 = vld [vmem:[%s208 + $0x1808] sm:$0xff]
        %v1040 = vld [vmem:[%s208 + $0x1810] sm:$0xff]
        %v1041 = vld [vmem:[%s208 + $0x1818] sm:$0xff]
        %v1042 = vld [vmem:[%s208 + $0x1820] sm:$0xff]
        %v1043 = vld [vmem:[%s208 + $0x1828] sm:$0xff]
        %v1044 = vld [vmem:[%s208 + $0x1830] sm:$0xff]
        %v1045 = vld [vmem:[%s208 + $0x1838] sm:$0xff]
        %v1046 = vld [vmem:[%s208 + $0x1840] sm:$0xff]
        %v1047 = vld [vmem:[%s208 + $0x1848] sm:$0xff]
        %v1048 = vld [vmem:[%s208 + $0x1850] sm:$0xff]
        %v1049 = vld [vmem:[%s208 + $0x1858] sm:$0xff]
        %v1050 = vld [vmem:[%s208 + $0x1860] sm:$0xff]
        %v1051 = vld [vmem:[%s208 + $0x1868] sm:$0xff]
        %v1052 = vld [vmem:[%s208 + $0x1870] sm:$0xff]
        %v1053 = vld [vmem:[%s208 + $0x1878] sm:$0xff]
        %v1054 = vld [vmem:[%s208 + $0x1880] sm:$0xff]
        %v1055 = vld [vmem:[%s208 + $0x1888] sm:$0xff]
        %v1056 = vld [vmem:[%s208 + $0x1890] sm:$0xff]
        %v1057 = vld [vmem:[%s208 + $0x1898] sm:$0xff]
        %v1058 = vld [vmem:[%s208 + $0x18a0] sm:$0xff]
        %v1059 = vld [vmem:[%s208 + $0x18a8] sm:$0xff]
        %v1060 = vld [vmem:[%s208 + $0x18b0] sm:$0xff]
        %v1061 = vld [vmem:[%s208 + $0x18b8] sm:$0xff]
        %v1062 = vld [vmem:[%s208 + $0x18c0] sm:$0xff]
        %v1063 = vld [vmem:[%s208 + $0x18c8] sm:$0xff]
        %v1064 = vld [vmem:[%s208 + $0x18d0] sm:$0xff]
        %v1065 = vld [vmem:[%s208 + $0x18d8] sm:$0xff]
        %v1066 = vld [vmem:[%s208 + $0x18e0] sm:$0xff]
        %v1067 = vld [vmem:[%s208 + $0x18e8] sm:$0xff]
        %v1068 = vld [vmem:[%s208 + $0x18f0] sm:$0xff]
        %v1069 = vld [vmem:[%s208 + $0x18f8] sm:$0xff]
        %v1070 = vld [vmem:[%s208 + $0x1900] sm:$0xff]
        %v1071 = vld [vmem:[%s208 + $0x1908] sm:$0xff]
        %v1072 = vld [vmem:[%s208 + $0x1910] sm:$0xff]
        %v1073 = vld [vmem:[%s208 + $0x1918] sm:$0xff]
        %v1074 = vld [vmem:[%s208 + $0x1920] sm:$0xff]
        %v1075 = vld [vmem:[%s208 + $0x1928] sm:$0xff]
        %v1076 = vld [vmem:[%s208 + $0x1930] sm:$0xff]
        %v1077 = vld [vmem:[%s208 + $0x1938] sm:$0xff]
        %v1078 = vld [vmem:[%s208 + $0x1940] sm:$0xff]
        %v1079 = vld [vmem:[%s208 + $0x1948] sm:$0xff]
        %v1080 = vld [vmem:[%s208 + $0x1950] sm:$0xff]
        %v1081 = vld [vmem:[%s208 + $0x1958] sm:$0xff]
        %v1082 = vld [vmem:[%s208 + $0x1960] sm:$0xff]
        %v1083 = vld [vmem:[%s208 + $0x1968] sm:$0xff]
        %v1084 = vld [vmem:[%s208 + $0x1970] sm:$0xff]
        %v1085 = vld [vmem:[%s208 + $0x1978] sm:$0xff]
        %v1086 = vld [vmem:[%s208 + $0x1980] sm:$0xff]
        %v1087 = vld [vmem:[%s208 + $0x1988] sm:$0xff]
        %v1088 = vld [vmem:[%s208 + $0x1990] sm:$0xff]
        %v1089 = vld [vmem:[%s208 + $0x1998] sm:$0xff]
        %v1090 = vld [vmem:[%s208 + $0x19a0] sm:$0xff]
        %v1091 = vld [vmem:[%s208 + $0x19a8] sm:$0xff]
        %v1092 = vld [vmem:[%s208 + $0x19b0] sm:$0xff]
        %v1093 = vld [vmem:[%s208 + $0x19b8] sm:$0xff]
        %v1094 = vld [vmem:[%s208 + $0x19c0] sm:$0xff]
        %v1095 = vld [vmem:[%s208 + $0x19c8] sm:$0xff]
        %v1096 = vld [vmem:[%s208 + $0x19d0] sm:$0xff]
        %v1097 = vld [vmem:[%s208 + $0x19d8] sm:$0xff]
        %v1098 = vld [vmem:[%s208 + $0x19e0] sm:$0xff]
        %v1099 = vld [vmem:[%s208 + $0x19e8] sm:$0xff]
        %v1100 = vld [vmem:[%s208 + $0x19f0] sm:$0xff]
        %v1101 = vld [vmem:[%s208 + $0x19f8] sm:$0xff]
        %v1102 = vld [vmem:[%s208 + $0x1a00] sm:$0xff]
        %v1103 = vld [vmem:[%s208 + $0x1a08] sm:$0xff]
        %v1104 = vld [vmem:[%s208 + $0x1a10] sm:$0xff]
        %v1105 = vld [vmem:[%s208 + $0x1a18] sm:$0xff]
        %v1106 = vld [vmem:[%s208 + $0x1a20] sm:$0xff]
        %v1107 = vld [vmem:[%s208 + $0x1a28] sm:$0xff]
        %v1108 = vld [vmem:[%s208 + $0x1a30] sm:$0xff]
        %v1109 = vld [vmem:[%s208 + $0x1a38] sm:$0xff]
        %v1110 = vld [vmem:[%s208 + $0x1a40] sm:$0xff]
        %v1111 = vld [vmem:[%s208 + $0x1a48] sm:$0xff]
        %v1112 = vld [vmem:[%s208 + $0x1a50] sm:$0xff]
        %v1113 = vld [vmem:[%s208 + $0x1a58] sm:$0xff]
        %v1114 = vld [vmem:[%s208 + $0x1a60] sm:$0xff]
        %v1115 = vld [vmem:[%s208 + $0x1a68] sm:$0xff]
        %v1116 = vld [vmem:[%s208 + $0x1a70] sm:$0xff]
        %v1117 = vld [vmem:[%s208 + $0x1a78] sm:$0xff]
        %v1118 = vld [vmem:[%s208 + $0x1a80] sm:$0xff]
        %v1119 = vld [vmem:[%s208 + $0x1a88] sm:$0xff]
        %v1120 = vld [vmem:[%s208 + $0x1a90] sm:$0xff]
        %v1121 = vld [vmem:[%s208 + $0x1a98] sm:$0xff]
        %v1122 = vld [vmem:[%s208 + $0x1aa0] sm:$0xff]
        %v1123 = vld [vmem:[%s208 + $0x1aa8] sm:$0xff]
        %v1124 = vld [vmem:[%s208 + $0x1ab0] sm:$0xff]
        %v1125 = vld [vmem:[%s208 + $0x1ab8] sm:$0xff]
        %v1126 = vld [vmem:[%s208 + $0x1ac0] sm:$0xff]
        %v1127 = vld [vmem:[%s208 + $0x1ac8] sm:$0xff]
        %v1128 = vld [vmem:[%s208 + $0x1ad0] sm:$0xff]
        %v1129 = vld [vmem:[%s208 + $0x1ad8] sm:$0xff]
        %v1130 = vld [vmem:[%s208 + $0x1ae0] sm:$0xff]
        %v1131 = vld [vmem:[%s208 + $0x1ae8] sm:$0xff]
        %v1132 = vld [vmem:[%s208 + $0x1af0] sm:$0xff]
        %v1133 = vld [vmem:[%s208 + $0x1af8] sm:$0xff]
        %v1134 = vld [vmem:[%s208 + $0x1b00] sm:$0xff]
        %v1135 = vld [vmem:[%s208 + $0x1b08] sm:$0xff]
        %v1136 = vld [vmem:[%s208 + $0x1b10] sm:$0xff]
        %v1137 = vld [vmem:[%s208 + $0x1b18] sm:$0xff]
        %v1138 = vld [vmem:[%s208 + $0x1b20] sm:$0xff]
        %v1139 = vld [vmem:[%s208 + $0x1b28] sm:$0xff]
        %v1140 = vld [vmem:[%s208 + $0x1b30] sm:$0xff]
        %v1141 = vld [vmem:[%s208 + $0x1b38] sm:$0xff]
        %v1142 = vld [vmem:[%s208 + $0x1b40] sm:$0xff]
        %v1143 = vld [vmem:[%s208 + $0x1b48] sm:$0xff]
        %v1144 = vld [vmem:[%s208 + $0x1b50] sm:$0xff]
        %v1145 = vld [vmem:[%s208 + $0x1b58] sm:$0xff]
        %v1146 = vld [vmem:[%s208 + $0x1b60] sm:$0xff]
        %v1147 = vld [vmem:[%s208 + $0x1b68] sm:$0xff]
        %v1148 = vld [vmem:[%s208 + $0x1b70] sm:$0xff]
        %v1149 = vld [vmem:[%s208 + $0x1b78] sm:$0xff]
        %v1150 = vld [vmem:[%s208 + $0x1b80] sm:$0xff]
        %v1151 = vld [vmem:[%s208 + $0x1b88] sm:$0xff]
        %v1152 = vld [vmem:[%s208 + $0x1b90] sm:$0xff]
        %v1153 = vld [vmem:[%s208 + $0x1b98] sm:$0xff]
        %v1154 = vld [vmem:[%s208 + $0x1ba0] sm:$0xff]
        %v1155 = vld [vmem:[%s208 + $0x1ba8] sm:$0xff]
        %v1156 = vld [vmem:[%s208 + $0x1bb0] sm:$0xff]
        %v1157 = vld [vmem:[%s208 + $0x1bb8] sm:$0xff]
        %v1158 = vld [vmem:[%s208 + $0x1bc0] sm:$0xff]
        %v1159 = vld [vmem:[%s208 + $0x1bc8] sm:$0xff]
        %v1160 = vld [vmem:[%s208 + $0x1bd0] sm:$0xff]
        %v1161 = vld [vmem:[%s208 + $0x1bd8] sm:$0xff]
        %v1162 = vld [vmem:[%s208 + $0x1be0] sm:$0xff]
        %v1163 = vld [vmem:[%s208 + $0x1be8] sm:$0xff]
        %v1164 = vld [vmem:[%s208 + $0x1bf0] sm:$0xff]
        %v1165 = vld [vmem:[%s208 + $0x1bf8] sm:$0xff]
        %v1166 = vld [vmem:[%s208 + $0x1c00] sm:$0xff]
        %v1167 = vld [vmem:[%s208 + $0x1c08] sm:$0xff]
        %v1168 = vld [vmem:[%s208 + $0x1c10] sm:$0xff]
        %v1169 = vld [vmem:[%s208 + $0x1c18] sm:$0xff]
        %v1170 = vld [vmem:[%s208 + $0x1c20] sm:$0xff]
        %v1171 = vld [vmem:[%s208 + $0x1c28] sm:$0xff]
        %v1172 = vld [vmem:[%s208 + $0x1c30] sm:$0xff]
        %v1173 = vld [vmem:[%s208 + $0x1c38] sm:$0xff]
        %v1174 = vld [vmem:[%s208 + $0x1c40] sm:$0xff]
        %v1175 = vld [vmem:[%s208 + $0x1c48] sm:$0xff]
        %v1176 = vld [vmem:[%s208 + $0x1c50] sm:$0xff]
        %v1177 = vld [vmem:[%s208 + $0x1c58] sm:$0xff]
        %v1178 = vld [vmem:[%s208 + $0x1c60] sm:$0xff]
        %v1179 = vld [vmem:[%s208 + $0x1c68] sm:$0xff]
        %v1180 = vld [vmem:[%s208 + $0x1c70] sm:$0xff]
        %v1181 = vld [vmem:[%s208 + $0x1c78] sm:$0xff]
        %v1182 = vld [vmem:[%s208 + $0x1c80] sm:$0xff]
        %v1183 = vld [vmem:[%s208 + $0x1c88] sm:$0xff]
        %v1184 = vld [vmem:[%s208 + $0x1c90] sm:$0xff]
        %v1185 = vld [vmem:[%s208 + $0x1c98] sm:$0xff]
        %v1186 = vld [vmem:[%s208 + $0x1ca0] sm:$0xff]
        %v1187 = vld [vmem:[%s208 + $0x1ca8] sm:$0xff]
        %v1188 = vld [vmem:[%s208 + $0x1cb0] sm:$0xff]
        %v1189 = vld [vmem:[%s208 + $0x1cb8] sm:$0xff]
        %v1190 = vld [vmem:[%s208 + $0x1cc0] sm:$0xff]
        %v1191 = vld [vmem:[%s208 + $0x1cc8] sm:$0xff]
        %v1192 = vld [vmem:[%s208 + $0x1cd0] sm:$0xff]
        %v1193 = vld [vmem:[%s208 + $0x1cd8] sm:$0xff]
        %v1194 = vld [vmem:[%s208 + $0x1ce0] sm:$0xff]
        %v1195 = vld [vmem:[%s208 + $0x1ce8] sm:$0xff]
        %v1196 = vld [vmem:[%s208 + $0x1cf0] sm:$0xff]
        %v1197 = vld [vmem:[%s208 + $0x1cf8] sm:$0xff]
        %v1198 = vld [vmem:[%s208 + $0x1d00] sm:$0xff]
        %v1199 = vld [vmem:[%s208 + $0x1d08] sm:$0xff]
        %v1200 = vld [vmem:[%s208 + $0x1d10] sm:$0xff]
        %v1201 = vld [vmem:[%s208 + $0x1d18] sm:$0xff]
        %v1202 = vld [vmem:[%s208 + $0x1d20] sm:$0xff]
        %v1203 = vld [vmem:[%s208 + $0x1d28] sm:$0xff]
        %v1204 = vld [vmem:[%s208 + $0x1d30] sm:$0xff]
        %v1205 = vld [vmem:[%s208 + $0x1d38] sm:$0xff]
        %v1206 = vld [vmem:[%s208 + $0x1d40] sm:$0xff]
        %v1207 = vld [vmem:[%s208 + $0x1d48] sm:$0xff]
        %v1208 = vld [vmem:[%s208 + $0x1d50] sm:$0xff]
        %v1209 = vld [vmem:[%s208 + $0x1d58] sm:$0xff]
        %v1210 = vld [vmem:[%s208 + $0x1d60] sm:$0xff]
        %v1211 = vld [vmem:[%s208 + $0x1d68] sm:$0xff]
        %v1212 = vld [vmem:[%s208 + $0x1d70] sm:$0xff]
        %v1213 = vld [vmem:[%s208 + $0x1d78] sm:$0xff]
        %v1214 = vld [vmem:[%s208 + $0x1d80] sm:$0xff]
        %v1215 = vld [vmem:[%s208 + $0x1d88] sm:$0xff]
        %v1216 = vld [vmem:[%s208 + $0x1d90] sm:$0xff]
        %v1217 = vld [vmem:[%s208 + $0x1d98] sm:$0xff]
        %v1218 = vld [vmem:[%s208 + $0x1da0] sm:$0xff]
        %v1219 = vld [vmem:[%s208 + $0x1da8] sm:$0xff]
        %v1220 = vld [vmem:[%s208 + $0x1db0] sm:$0xff]
        %v1221 = vld [vmem:[%s208 + $0x1db8] sm:$0xff]
        %v1222 = vld [vmem:[%s208 + $0x1dc0] sm:$0xff]
        %v1223 = vld [vmem:[%s208 + $0x1dc8] sm:$0xff]
        %v1224 = vld [vmem:[%s208 + $0x1dd0] sm:$0xff]
        %v1225 = vld [vmem:[%s208 + $0x1dd8] sm:$0xff]
        %v1226 = vld [vmem:[%s208 + $0x1de0] sm:$0xff]
        %v1227 = vld [vmem:[%s208 + $0x1de8] sm:$0xff]
        %v1228 = vld [vmem:[%s208 + $0x1df0] sm:$0xff]
        %v1229 = vld [vmem:[%s208 + $0x1df8] sm:$0xff]
        %v1230 = vld [vmem:[%s208 + $0x1e00] sm:$0xff]
        %v1231 = vld [vmem:[%s208 + $0x1e08] sm:$0xff]
        %v1232 = vld [vmem:[%s208 + $0x1e10] sm:$0xff]
        %v1233 = vld [vmem:[%s208 + $0x1e18] sm:$0xff]
        %v1234 = vld [vmem:[%s208 + $0x1e20] sm:$0xff]
        %v1235 = vld [vmem:[%s208 + $0x1e28] sm:$0xff]
        %v1236 = vld [vmem:[%s208 + $0x1e30] sm:$0xff]
        %v1237 = vld [vmem:[%s208 + $0x1e38] sm:$0xff]
        %v1238 = vld [vmem:[%s208 + $0x1e40] sm:$0xff]
        %v1239 = vld [vmem:[%s208 + $0x1e48] sm:$0xff]
        %v1240 = vld [vmem:[%s208 + $0x1e50] sm:$0xff]
        %v1241 = vld [vmem:[%s208 + $0x1e58] sm:$0xff]
        %v1242 = vld [vmem:[%s208 + $0x1e60] sm:$0xff]
        %v1243 = vld [vmem:[%s208 + $0x1e68] sm:$0xff]
        %v1244 = vld [vmem:[%s208 + $0x1e70] sm:$0xff]
        %v1245 = vld [vmem:[%s208 + $0x1e78] sm:$0xff]
        %v1246 = vld [vmem:[%s208 + $0x1e80] sm:$0xff]
        %v1247 = vld [vmem:[%s208 + $0x1e88] sm:$0xff]
        %v1248 = vld [vmem:[%s208 + $0x1e90] sm:$0xff]
        %v1249 = vld [vmem:[%s208 + $0x1e98] sm:$0xff]
        %v1250 = vld [vmem:[%s208 + $0x1ea0] sm:$0xff]
        %v1251 = vld [vmem:[%s208 + $0x1ea8] sm:$0xff]
        %v1252 = vld [vmem:[%s208 + $0x1eb0] sm:$0xff]
        %v1253 = vld [vmem:[%s208 + $0x1eb8] sm:$0xff]
        %v1254 = vld [vmem:[%s208 + $0x1ec0] sm:$0xff]
        %v1255 = vld [vmem:[%s208 + $0x1ec8] sm:$0xff]
        %v1256 = vld [vmem:[%s208 + $0x1ed0] sm:$0xff]
        %v1257 = vld [vmem:[%s208 + $0x1ed8] sm:$0xff]
        %v1258 = vld [vmem:[%s208 + $0x1ee0] sm:$0xff]
        %v1259 = vld [vmem:[%s208 + $0x1ee8] sm:$0xff]
        %v1260 = vld [vmem:[%s208 + $0x1ef0] sm:$0xff]
        %v1261 = vld [vmem:[%s208 + $0x1ef8] sm:$0xff]
        %v1262 = vld [vmem:[%s208 + $0x1f00] sm:$0xff]
        %v1263 = vld [vmem:[%s208 + $0x1f08] sm:$0xff]
        %v1264 = vld [vmem:[%s208 + $0x1f10] sm:$0xff]
        %v1265 = vld [vmem:[%s208 + $0x1f18] sm:$0xff]
        %v1266 = vld [vmem:[%s208 + $0x1f20] sm:$0xff]
        %v1267 = vld [vmem:[%s208 + $0x1f28] sm:$0xff]
        %v1268 = vld [vmem:[%s208 + $0x1f30] sm:$0xff]
        %v1269 = vld [vmem:[%s208 + $0x1f38] sm:$0xff]
        %v1270 = vld [vmem:[%s208 + $0x1f40] sm:$0xff]
        %v1271 = vld [vmem:[%s208 + $0x1f48] sm:$0xff]
        %v1272 = vld [vmem:[%s208 + $0x1f50] sm:$0xff]
        %v1273 = vld [vmem:[%s208 + $0x1f58] sm:$0xff]
        %v1274 = vld [vmem:[%s208 + $0x1f60] sm:$0xff]
        %v1275 = vld [vmem:[%s208 + $0x1f68] sm:$0xff]
        %v1276 = vld [vmem:[%s208 + $0x1f70] sm:$0xff]
        %v1277 = vld [vmem:[%s208 + $0x1f78] sm:$0xff]
        %v1278 = vld [vmem:[%s208 + $0x1f80] sm:$0xff]
        %v1279 = vld [vmem:[%s208 + $0x1f88] sm:$0xff]
        %v1280 = vld [vmem:[%s208 + $0x1f90] sm:$0xff]
        %v1281 = vld [vmem:[%s208 + $0x1f98] sm:$0xff]
        %v1282 = vld [vmem:[%s208 + $0x1fa0] sm:$0xff]
        %v1283 = vld [vmem:[%s208 + $0x1fa8] sm:$0xff]
        %v1284 = vld [vmem:[%s208 + $0x1fb0] sm:$0xff]
        %v1285 = vld [vmem:[%s208 + $0x1fb8] sm:$0xff]
        %v1286 = vld [vmem:[%s208 + $0x1fc0] sm:$0xff]
        %v1287 = vld [vmem:[%s208 + $0x1fc8] sm:$0xff]
        %v1288 = vld [vmem:[%s208 + $0x1fd0] sm:$0xff]
        %v1289 = vld [vmem:[%s208 + $0x1fd8] sm:$0xff]
        %v1290 = vld [vmem:[%s208 + $0x1fe0] sm:$0xff]
        %v1291 = vld [vmem:[%s208 + $0x1fe8] sm:$0xff]
        %v1292 = vld [vmem:[%s208 + $0x1ff0] sm:$0xff]
        %v1293 = vld [vmem:[%s208 + $0x1ff8] sm:$0xff]
        %v1294 = vld [vmem:[%s218] sm:$0xff]
        %v1295 = vld [vmem:[%s218 + $0x8] sm:$0xff]
        %v1296 = vld [vmem:[%s218 + $0x10] sm:$0xff]
        %v1297 = vld [vmem:[%s218 + $0x18] sm:$0xff]
        %v1298 = vld [vmem:[%s218 + $0x20] sm:$0xff]
        %v1299 = vld [vmem:[%s218 + $0x28] sm:$0xff]
        %v1300 = vld [vmem:[%s218 + $0x30] sm:$0xff]
        %v1301 = vld [vmem:[%s218 + $0x38] sm:$0xff]
        %v1302 = vld [vmem:[%s218 + $0x40] sm:$0xff]
        %v1303 = vld [vmem:[%s218 + $0x48] sm:$0xff]
        %v1304 = vld [vmem:[%s218 + $0x50] sm:$0xff]
        %v1305 = vld [vmem:[%s218 + $0x58] sm:$0xff]
        %v1306 = vld [vmem:[%s218 + $0x60] sm:$0xff]
        %v1307 = vld [vmem:[%s218 + $0x68] sm:$0xff]
        %v1308 = vld [vmem:[%s218 + $0x70] sm:$0xff]
        %v1309 = vld [vmem:[%s218 + $0x78] sm:$0xff]
        %v1310 = vld [vmem:[%s218 + $0x80] sm:$0xff]
        %v1311 = vld [vmem:[%s218 + $0x88] sm:$0xff]
        %v1312 = vld [vmem:[%s218 + $0x90] sm:$0xff]
        %v1313 = vld [vmem:[%s218 + $0x98] sm:$0xff]
        %v1314 = vld [vmem:[%s218 + $0xa0] sm:$0xff]
        %v1315 = vld [vmem:[%s218 + $0xa8] sm:$0xff]
        %v1316 = vld [vmem:[%s218 + $0xb0] sm:$0xff]
        %v1317 = vld [vmem:[%s218 + $0xb8] sm:$0xff]
        %v1318 = vld [vmem:[%s218 + $0xc0] sm:$0xff]
        %v1319 = vld [vmem:[%s218 + $0xc8] sm:$0xff]
        %v1320 = vld [vmem:[%s218 + $0xd0] sm:$0xff]
        %v1321 = vld [vmem:[%s218 + $0xd8] sm:$0xff]
        %v1322 = vld [vmem:[%s218 + $0xe0] sm:$0xff]
        %v1323 = vld [vmem:[%s218 + $0xe8] sm:$0xff]
        %v1324 = vld [vmem:[%s218 + $0xf0] sm:$0xff]
        %v1325 = vld [vmem:[%s218 + $0xf8] sm:$0xff]
        %v1326 = vld [vmem:[%s218 + $0x100] sm:$0xff]
        %v1327 = vld [vmem:[%s218 + $0x108] sm:$0xff]
        %v1328 = vld [vmem:[%s218 + $0x110] sm:$0xff]
        %v1329 = vld [vmem:[%s218 + $0x118] sm:$0xff]
        %v1330 = vld [vmem:[%s218 + $0x120] sm:$0xff]
        %v1331 = vld [vmem:[%s218 + $0x128] sm:$0xff]
        %v1332 = vld [vmem:[%s218 + $0x130] sm:$0xff]
        %v1333 = vld [vmem:[%s218 + $0x138] sm:$0xff]
        %v1334 = vld [vmem:[%s218 + $0x140] sm:$0xff]
        %v1335 = vld [vmem:[%s218 + $0x148] sm:$0xff]
        %v1336 = vld [vmem:[%s218 + $0x150] sm:$0xff]
        %v1337 = vld [vmem:[%s218 + $0x158] sm:$0xff]
        %v1338 = vld [vmem:[%s218 + $0x160] sm:$0xff]
        %v1339 = vld [vmem:[%s218 + $0x168] sm:$0xff]
        %v1340 = vld [vmem:[%s218 + $0x170] sm:$0xff]
        %v1341 = vld [vmem:[%s218 + $0x178] sm:$0xff]
        %v1342 = vld [vmem:[%s218 + $0x180] sm:$0xff]
        %v1343 = vld [vmem:[%s218 + $0x188] sm:$0xff]
        %v1344 = vld [vmem:[%s218 + $0x190] sm:$0xff]
        %v1345 = vld [vmem:[%s218 + $0x198] sm:$0xff]
        %v1346 = vld [vmem:[%s218 + $0x1a0] sm:$0xff]
        %v1347 = vld [vmem:[%s218 + $0x1a8] sm:$0xff]
        %v1348 = vld [vmem:[%s218 + $0x1b0] sm:$0xff]
        %v1349 = vld [vmem:[%s218 + $0x1b8] sm:$0xff]
        %v1350 = vld [vmem:[%s218 + $0x1c0] sm:$0xff]
        %v1351 = vld [vmem:[%s218 + $0x1c8] sm:$0xff]
        %v1352 = vld [vmem:[%s218 + $0x1d0] sm:$0xff]
        %v1353 = vld [vmem:[%s218 + $0x1d8] sm:$0xff]
        %v1354 = vld [vmem:[%s218 + $0x1e0] sm:$0xff]
        %v1355 = vld [vmem:[%s218 + $0x1e8] sm:$0xff]
        %v1356 = vld [vmem:[%s218 + $0x1f0] sm:$0xff]
        %v1357 = vld [vmem:[%s218 + $0x1f8] sm:$0xff]
        %v1358 = vld [vmem:[%s218 + $0x200] sm:$0xff]
        %v1359 = vld [vmem:[%s218 + $0x208] sm:$0xff]
        %v1360 = vld [vmem:[%s218 + $0x210] sm:$0xff]
        %v1361 = vld [vmem:[%s218 + $0x218] sm:$0xff]
        %v1362 = vld [vmem:[%s218 + $0x220] sm:$0xff]
        %v1363 = vld [vmem:[%s218 + $0x228] sm:$0xff]
        %v1364 = vld [vmem:[%s218 + $0x230] sm:$0xff]
        %v1365 = vld [vmem:[%s218 + $0x238] sm:$0xff]
        %v1366 = vld [vmem:[%s218 + $0x240] sm:$0xff]
        %v1367 = vld [vmem:[%s218 + $0x248] sm:$0xff]
        %v1368 = vld [vmem:[%s218 + $0x250] sm:$0xff]
        %v1369 = vld [vmem:[%s218 + $0x258] sm:$0xff]
        %v1370 = vld [vmem:[%s218 + $0x260] sm:$0xff]
        %v1371 = vld [vmem:[%s218 + $0x268] sm:$0xff]
        %v1372 = vld [vmem:[%s218 + $0x270] sm:$0xff]
        %v1373 = vld [vmem:[%s218 + $0x278] sm:$0xff]
        %v1374 = vld [vmem:[%s218 + $0x280] sm:$0xff]
        %v1375 = vld [vmem:[%s218 + $0x288] sm:$0xff]
        %v1376 = vld [vmem:[%s218 + $0x290] sm:$0xff]
        %v1377 = vld [vmem:[%s218 + $0x298] sm:$0xff]
        %v1378 = vld [vmem:[%s218 + $0x2a0] sm:$0xff]
        %v1379 = vld [vmem:[%s218 + $0x2a8] sm:$0xff]
        %v1380 = vld [vmem:[%s218 + $0x2b0] sm:$0xff]
        %v1381 = vld [vmem:[%s218 + $0x2b8] sm:$0xff]
        %v1382 = vld [vmem:[%s218 + $0x2c0] sm:$0xff]
        %v1383 = vld [vmem:[%s218 + $0x2c8] sm:$0xff]
        %v1384 = vld [vmem:[%s218 + $0x2d0] sm:$0xff]
        %v1385 = vld [vmem:[%s218 + $0x2d8] sm:$0xff]
        %v1386 = vld [vmem:[%s218 + $0x2e0] sm:$0xff]
        %v1387 = vld [vmem:[%s218 + $0x2e8] sm:$0xff]
        %v1388 = vld [vmem:[%s218 + $0x2f0] sm:$0xff]
        %v1389 = vld [vmem:[%s218 + $0x2f8] sm:$0xff]
        %v1390 = vld [vmem:[%s218 + $0x300] sm:$0xff]
        %v1391 = vld [vmem:[%s218 + $0x308] sm:$0xff]
        %v1392 = vld [vmem:[%s218 + $0x310] sm:$0xff]
        %v1393 = vld [vmem:[%s218 + $0x318] sm:$0xff]
        %v1394 = vld [vmem:[%s218 + $0x320] sm:$0xff]
        %v1395 = vld [vmem:[%s218 + $0x328] sm:$0xff]
        %v1396 = vld [vmem:[%s218 + $0x330] sm:$0xff]
        %v1397 = vld [vmem:[%s218 + $0x338] sm:$0xff]
        %v1398 = vld [vmem:[%s218 + $0x340] sm:$0xff]
        %v1399 = vld [vmem:[%s218 + $0x348] sm:$0xff]
        %v1400 = vld [vmem:[%s218 + $0x350] sm:$0xff]
        %v1401 = vld [vmem:[%s218 + $0x358] sm:$0xff]
        %v1402 = vld [vmem:[%s218 + $0x360] sm:$0xff]
        %v1403 = vld [vmem:[%s218 + $0x368] sm:$0xff]
        %v1404 = vld [vmem:[%s218 + $0x370] sm:$0xff]
        %v1405 = vld [vmem:[%s218 + $0x378] sm:$0xff]
        %v1406 = vld [vmem:[%s218 + $0x380] sm:$0xff]
        %v1407 = vld [vmem:[%s218 + $0x388] sm:$0xff]
        %v1408 = vld [vmem:[%s218 + $0x390] sm:$0xff]
        %v1409 = vld [vmem:[%s218 + $0x398] sm:$0xff]
        %v1410 = vld [vmem:[%s218 + $0x3a0] sm:$0xff]
        %v1411 = vld [vmem:[%s218 + $0x3a8] sm:$0xff]
        %v1412 = vld [vmem:[%s218 + $0x3b0] sm:$0xff]
        %v1413 = vld [vmem:[%s218 + $0x3b8] sm:$0xff]
        %v1414 = vld [vmem:[%s218 + $0x3c0] sm:$0xff]
        %v1415 = vld [vmem:[%s218 + $0x3c8] sm:$0xff]
        %v1416 = vld [vmem:[%s218 + $0x3d0] sm:$0xff]
        %v1417 = vld [vmem:[%s218 + $0x3d8] sm:$0xff]
        %v1418 = vld [vmem:[%s218 + $0x3e0] sm:$0xff]
        %v1419 = vld [vmem:[%s218 + $0x3e8] sm:$0xff]
        %v1420 = vld [vmem:[%s218 + $0x3f0] sm:$0xff]
        %v1421 = vld [vmem:[%s218 + $0x3f8] sm:$0xff]
        %v1422 = vld [vmem:[%s218 + $0x400] sm:$0xff]
        %v1423 = vld [vmem:[%s218 + $0x408] sm:$0xff]
        %v1424 = vld [vmem:[%s218 + $0x410] sm:$0xff]
        %v1425 = vld [vmem:[%s218 + $0x418] sm:$0xff]
        %v1426 = vld [vmem:[%s218 + $0x420] sm:$0xff]
        %v1427 = vld [vmem:[%s218 + $0x428] sm:$0xff]
        %v1428 = vld [vmem:[%s218 + $0x430] sm:$0xff]
        %v1429 = vld [vmem:[%s218 + $0x438] sm:$0xff]
        %v1430 = vld [vmem:[%s218 + $0x440] sm:$0xff]
        %v1431 = vld [vmem:[%s218 + $0x448] sm:$0xff]
        %v1432 = vld [vmem:[%s218 + $0x450] sm:$0xff]
        %v1433 = vld [vmem:[%s218 + $0x458] sm:$0xff]
        %v1434 = vld [vmem:[%s218 + $0x460] sm:$0xff]
        %v1435 = vld [vmem:[%s218 + $0x468] sm:$0xff]
        %v1436 = vld [vmem:[%s218 + $0x470] sm:$0xff]
        %v1437 = vld [vmem:[%s218 + $0x478] sm:$0xff]
        %v1438 = vld [vmem:[%s218 + $0x480] sm:$0xff]
        %v1439 = vld [vmem:[%s218 + $0x488] sm:$0xff]
        %v1440 = vld [vmem:[%s218 + $0x490] sm:$0xff]
        %v1441 = vld [vmem:[%s218 + $0x498] sm:$0xff]
        %v1442 = vld [vmem:[%s218 + $0x4a0] sm:$0xff]
        %v1443 = vld [vmem:[%s218 + $0x4a8] sm:$0xff]
        %v1444 = vld [vmem:[%s218 + $0x4b0] sm:$0xff]
        %v1445 = vld [vmem:[%s218 + $0x4b8] sm:$0xff]
        %v1446 = vld [vmem:[%s218 + $0x4c0] sm:$0xff]
        %v1447 = vld [vmem:[%s218 + $0x4c8] sm:$0xff]
        %v1448 = vld [vmem:[%s218 + $0x4d0] sm:$0xff]
        %v1449 = vld [vmem:[%s218 + $0x4d8] sm:$0xff]
        %v1450 = vld [vmem:[%s218 + $0x4e0] sm:$0xff]
        %v1451 = vld [vmem:[%s218 + $0x4e8] sm:$0xff]
        %v1452 = vld [vmem:[%s218 + $0x4f0] sm:$0xff]
        %v1453 = vld [vmem:[%s218 + $0x4f8] sm:$0xff]
        %v1454 = vld [vmem:[%s218 + $0x500] sm:$0xff]
        %v1455 = vld [vmem:[%s218 + $0x508] sm:$0xff]
        %v1456 = vld [vmem:[%s218 + $0x510] sm:$0xff]
        %v1457 = vld [vmem:[%s218 + $0x518] sm:$0xff]
        %v1458 = vld [vmem:[%s218 + $0x520] sm:$0xff]
        %v1459 = vld [vmem:[%s218 + $0x528] sm:$0xff]
        %v1460 = vld [vmem:[%s218 + $0x530] sm:$0xff]
        %v1461 = vld [vmem:[%s218 + $0x538] sm:$0xff]
        %v1462 = vld [vmem:[%s218 + $0x540] sm:$0xff]
        %v1463 = vld [vmem:[%s218 + $0x548] sm:$0xff]
        %v1464 = vld [vmem:[%s218 + $0x550] sm:$0xff]
        %v1465 = vld [vmem:[%s218 + $0x558] sm:$0xff]
        %v1466 = vld [vmem:[%s218 + $0x560] sm:$0xff]
        %v1467 = vld [vmem:[%s218 + $0x568] sm:$0xff]
        %v1468 = vld [vmem:[%s218 + $0x570] sm:$0xff]
        %v1469 = vld [vmem:[%s218 + $0x578] sm:$0xff]
        %v1470 = vld [vmem:[%s218 + $0x580] sm:$0xff]
        %v1471 = vld [vmem:[%s218 + $0x588] sm:$0xff]
        %v1472 = vld [vmem:[%s218 + $0x590] sm:$0xff]
        %v1473 = vld [vmem:[%s218 + $0x598] sm:$0xff]
        %v1474 = vld [vmem:[%s218 + $0x5a0] sm:$0xff]
        %v1475 = vld [vmem:[%s218 + $0x5a8] sm:$0xff]
        %v1476 = vld [vmem:[%s218 + $0x5b0] sm:$0xff]
        %v1477 = vld [vmem:[%s218 + $0x5b8] sm:$0xff]
        %v1478 = vld [vmem:[%s218 + $0x5c0] sm:$0xff]
        %v1479 = vld [vmem:[%s218 + $0x5c8] sm:$0xff]
        %v1480 = vld [vmem:[%s218 + $0x5d0] sm:$0xff]
        %v1481 = vld [vmem:[%s218 + $0x5d8] sm:$0xff]
        %v1482 = vld [vmem:[%s218 + $0x5e0] sm:$0xff]
        %v1483 = vld [vmem:[%s218 + $0x5e8] sm:$0xff]
        %v1484 = vld [vmem:[%s218 + $0x5f0] sm:$0xff]
        %v1485 = vld [vmem:[%s218 + $0x5f8] sm:$0xff]
        %v1486 = vld [vmem:[%s218 + $0x600] sm:$0xff]
        %v1487 = vld [vmem:[%s218 + $0x608] sm:$0xff]
        %v1488 = vld [vmem:[%s218 + $0x610] sm:$0xff]
        %v1489 = vld [vmem:[%s218 + $0x618] sm:$0xff]
        %v1490 = vld [vmem:[%s218 + $0x620] sm:$0xff]
        %v1491 = vld [vmem:[%s218 + $0x628] sm:$0xff]
        %v1492 = vld [vmem:[%s218 + $0x630] sm:$0xff]
        %v1493 = vld [vmem:[%s218 + $0x638] sm:$0xff]
        %v1494 = vld [vmem:[%s218 + $0x640] sm:$0xff]
        %v1495 = vld [vmem:[%s218 + $0x648] sm:$0xff]
        %v1496 = vld [vmem:[%s218 + $0x650] sm:$0xff]
        %v1497 = vld [vmem:[%s218 + $0x658] sm:$0xff]
        %v1498 = vld [vmem:[%s218 + $0x660] sm:$0xff]
        %v1499 = vld [vmem:[%s218 + $0x668] sm:$0xff]
        %v1500 = vld [vmem:[%s218 + $0x670] sm:$0xff]
        %v1501 = vld [vmem:[%s218 + $0x678] sm:$0xff]
        %v1502 = vld [vmem:[%s218 + $0x680] sm:$0xff]
        %v1503 = vld [vmem:[%s218 + $0x688] sm:$0xff]
        %v1504 = vld [vmem:[%s218 + $0x690] sm:$0xff]
        %v1505 = vld [vmem:[%s218 + $0x698] sm:$0xff]
        %v1506 = vld [vmem:[%s218 + $0x6a0] sm:$0xff]
        %v1507 = vld [vmem:[%s218 + $0x6a8] sm:$0xff]
        %v1508 = vld [vmem:[%s218 + $0x6b0] sm:$0xff]
        %v1509 = vld [vmem:[%s218 + $0x6b8] sm:$0xff]
        %v1510 = vld [vmem:[%s218 + $0x6c0] sm:$0xff]
        %v1511 = vld [vmem:[%s218 + $0x6c8] sm:$0xff]
        %v1512 = vld [vmem:[%s218 + $0x6d0] sm:$0xff]
        %v1513 = vld [vmem:[%s218 + $0x6d8] sm:$0xff]
        %v1514 = vld [vmem:[%s218 + $0x6e0] sm:$0xff]
        %v1515 = vld [vmem:[%s218 + $0x6e8] sm:$0xff]
        %v1516 = vld [vmem:[%s218 + $0x6f0] sm:$0xff]
        %v1517 = vld [vmem:[%s218 + $0x6f8] sm:$0xff]
        %v1518 = vld [vmem:[%s218 + $0x700] sm:$0xff]
        %v1519 = vld [vmem:[%s218 + $0x708] sm:$0xff]
        %v1520 = vld [vmem:[%s218 + $0x710] sm:$0xff]
        %v1521 = vld [vmem:[%s218 + $0x718] sm:$0xff]
        %v1522 = vld [vmem:[%s218 + $0x720] sm:$0xff]
        %v1523 = vld [vmem:[%s218 + $0x728] sm:$0xff]
        %v1524 = vld [vmem:[%s218 + $0x730] sm:$0xff]
        %v1525 = vld [vmem:[%s218 + $0x738] sm:$0xff]
        %v1526 = vld [vmem:[%s218 + $0x740] sm:$0xff]
        %v1527 = vld [vmem:[%s218 + $0x748] sm:$0xff]
        %v1528 = vld [vmem:[%s218 + $0x750] sm:$0xff]
        %v1529 = vld [vmem:[%s218 + $0x758] sm:$0xff]
        %v1530 = vld [vmem:[%s218 + $0x760] sm:$0xff]
        %v1531 = vld [vmem:[%s218 + $0x768] sm:$0xff]
        %v1532 = vld [vmem:[%s218 + $0x770] sm:$0xff]
        %v1533 = vld [vmem:[%s218 + $0x778] sm:$0xff]
        %v1534 = vld [vmem:[%s218 + $0x780] sm:$0xff]
        %v1535 = vld [vmem:[%s218 + $0x788] sm:$0xff]
        %v1536 = vld [vmem:[%s218 + $0x790] sm:$0xff]
        %v1537 = vld [vmem:[%s218 + $0x798] sm:$0xff]
        %v1538 = vld [vmem:[%s218 + $0x7a0] sm:$0xff]
        %v1539 = vld [vmem:[%s218 + $0x7a8] sm:$0xff]
        %v1540 = vld [vmem:[%s218 + $0x7b0] sm:$0xff]
        %v1541 = vld [vmem:[%s218 + $0x7b8] sm:$0xff]
        %v1542 = vld [vmem:[%s218 + $0x7c0] sm:$0xff]
        %v1543 = vld [vmem:[%s218 + $0x7c8] sm:$0xff]
        %v1544 = vld [vmem:[%s218 + $0x7d0] sm:$0xff]
        %v1545 = vld [vmem:[%s218 + $0x7d8] sm:$0xff]
        %v1546 = vld [vmem:[%s218 + $0x7e0] sm:$0xff]
        %v1547 = vld [vmem:[%s218 + $0x7e8] sm:$0xff]
        %v1548 = vld [vmem:[%s218 + $0x7f0] sm:$0xff]
        %v1549 = vld [vmem:[%s218 + $0x7f8] sm:$0xff]
        %v1550 = vld [vmem:[%s218 + $0x800] sm:$0xff]
        %v1551 = vld [vmem:[%s218 + $0x808] sm:$0xff]
        %v1552 = vld [vmem:[%s218 + $0x810] sm:$0xff]
        %v1553 = vld [vmem:[%s218 + $0x818] sm:$0xff]
        %v1554 = vld [vmem:[%s218 + $0x820] sm:$0xff]
        %v1555 = vld [vmem:[%s218 + $0x828] sm:$0xff]
        %v1556 = vld [vmem:[%s218 + $0x830] sm:$0xff]
        %v1557 = vld [vmem:[%s218 + $0x838] sm:$0xff]
        %v1558 = vld [vmem:[%s218 + $0x840] sm:$0xff]
        %v1559 = vld [vmem:[%s218 + $0x848] sm:$0xff]
        %v1560 = vld [vmem:[%s218 + $0x850] sm:$0xff]
        %v1561 = vld [vmem:[%s218 + $0x858] sm:$0xff]
        %v1562 = vld [vmem:[%s218 + $0x860] sm:$0xff]
        %v1563 = vld [vmem:[%s218 + $0x868] sm:$0xff]
        %v1564 = vld [vmem:[%s218 + $0x870] sm:$0xff]
        %v1565 = vld [vmem:[%s218 + $0x878] sm:$0xff]
        %v1566 = vld [vmem:[%s218 + $0x880] sm:$0xff]
        %v1567 = vld [vmem:[%s218 + $0x888] sm:$0xff]
        %v1568 = vld [vmem:[%s218 + $0x890] sm:$0xff]
        %v1569 = vld [vmem:[%s218 + $0x898] sm:$0xff]
        %v1570 = vld [vmem:[%s218 + $0x8a0] sm:$0xff]
        %v1571 = vld [vmem:[%s218 + $0x8a8] sm:$0xff]
        %v1572 = vld [vmem:[%s218 + $0x8b0] sm:$0xff]
        %v1573 = vld [vmem:[%s218 + $0x8b8] sm:$0xff]
        %v1574 = vld [vmem:[%s218 + $0x8c0] sm:$0xff]
        %v1575 = vld [vmem:[%s218 + $0x8c8] sm:$0xff]
        %v1576 = vld [vmem:[%s218 + $0x8d0] sm:$0xff]
        %v1577 = vld [vmem:[%s218 + $0x8d8] sm:$0xff]
        %v1578 = vld [vmem:[%s218 + $0x8e0] sm:$0xff]
        %v1579 = vld [vmem:[%s218 + $0x8e8] sm:$0xff]
        %v1580 = vld [vmem:[%s218 + $0x8f0] sm:$0xff]
        %v1581 = vld [vmem:[%s218 + $0x8f8] sm:$0xff]
        %v1582 = vld [vmem:[%s218 + $0x900] sm:$0xff]
        %v1583 = vld [vmem:[%s218 + $0x908] sm:$0xff]
        %v1584 = vld [vmem:[%s218 + $0x910] sm:$0xff]
        %v1585 = vld [vmem:[%s218 + $0x918] sm:$0xff]
        %v1586 = vld [vmem:[%s218 + $0x920] sm:$0xff]
        %v1587 = vld [vmem:[%s218 + $0x928] sm:$0xff]
        %v1588 = vld [vmem:[%s218 + $0x930] sm:$0xff]
        %v1589 = vld [vmem:[%s218 + $0x938] sm:$0xff]
        %v1590 = vld [vmem:[%s218 + $0x940] sm:$0xff]
        %v1591 = vld [vmem:[%s218 + $0x948] sm:$0xff]
        %v1592 = vld [vmem:[%s218 + $0x950] sm:$0xff]
        %v1593 = vld [vmem:[%s218 + $0x958] sm:$0xff]
        %v1594 = vld [vmem:[%s218 + $0x960] sm:$0xff]
        %v1595 = vld [vmem:[%s218 + $0x968] sm:$0xff]
        %v1596 = vld [vmem:[%s218 + $0x970] sm:$0xff]
        %v1597 = vld [vmem:[%s218 + $0x978] sm:$0xff]
        %v1598 = vld [vmem:[%s218 + $0x980] sm:$0xff]
        %v1599 = vld [vmem:[%s218 + $0x988] sm:$0xff]
        %v1600 = vld [vmem:[%s218 + $0x990] sm:$0xff]
        %v1601 = vld [vmem:[%s218 + $0x998] sm:$0xff]
        %v1602 = vld [vmem:[%s218 + $0x9a0] sm:$0xff]
        %v1603 = vld [vmem:[%s218 + $0x9a8] sm:$0xff]
        %v1604 = vld [vmem:[%s218 + $0x9b0] sm:$0xff]
        %v1605 = vld [vmem:[%s218 + $0x9b8] sm:$0xff]
        %v1606 = vld [vmem:[%s218 + $0x9c0] sm:$0xff]
        %v1607 = vld [vmem:[%s218 + $0x9c8] sm:$0xff]
        %v1608 = vld [vmem:[%s218 + $0x9d0] sm:$0xff]
        %v1609 = vld [vmem:[%s218 + $0x9d8] sm:$0xff]
        %v1610 = vld [vmem:[%s218 + $0x9e0] sm:$0xff]
        %v1611 = vld [vmem:[%s218 + $0x9e8] sm:$0xff]
        %v1612 = vld [vmem:[%s218 + $0x9f0] sm:$0xff]
        %v1613 = vld [vmem:[%s218 + $0x9f8] sm:$0xff]
        %v1614 = vld [vmem:[%s218 + $0xa00] sm:$0xff]
        %v1615 = vld [vmem:[%s218 + $0xa08] sm:$0xff]
        %v1616 = vld [vmem:[%s218 + $0xa10] sm:$0xff]
        %v1617 = vld [vmem:[%s218 + $0xa18] sm:$0xff]
        %v1618 = vld [vmem:[%s218 + $0xa20] sm:$0xff]
        %v1619 = vld [vmem:[%s218 + $0xa28] sm:$0xff]
        %v1620 = vld [vmem:[%s218 + $0xa30] sm:$0xff]
        %v1621 = vld [vmem:[%s218 + $0xa38] sm:$0xff]
        %v1622 = vld [vmem:[%s218 + $0xa40] sm:$0xff]
        %v1623 = vld [vmem:[%s218 + $0xa48] sm:$0xff]
        %v1624 = vld [vmem:[%s218 + $0xa50] sm:$0xff]
        %v1625 = vld [vmem:[%s218 + $0xa58] sm:$0xff]
        %v1626 = vld [vmem:[%s218 + $0xa60] sm:$0xff]
        %v1627 = vld [vmem:[%s218 + $0xa68] sm:$0xff]
        %v1628 = vld [vmem:[%s218 + $0xa70] sm:$0xff]
        %v1629 = vld [vmem:[%s218 + $0xa78] sm:$0xff]
        %v1630 = vld [vmem:[%s218 + $0xa80] sm:$0xff]
        %v1631 = vld [vmem:[%s218 + $0xa88] sm:$0xff]
        %v1632 = vld [vmem:[%s218 + $0xa90] sm:$0xff]
        %v1633 = vld [vmem:[%s218 + $0xa98] sm:$0xff]
        %v1634 = vld [vmem:[%s218 + $0xaa0] sm:$0xff]
        %v1635 = vld [vmem:[%s218 + $0xaa8] sm:$0xff]
        %v1636 = vld [vmem:[%s218 + $0xab0] sm:$0xff]
        %v1637 = vld [vmem:[%s218 + $0xab8] sm:$0xff]
        %v1638 = vld [vmem:[%s218 + $0xac0] sm:$0xff]
        %v1639 = vld [vmem:[%s218 + $0xac8] sm:$0xff]
        %v1640 = vld [vmem:[%s218 + $0xad0] sm:$0xff]
        %v1641 = vld [vmem:[%s218 + $0xad8] sm:$0xff]
        %v1642 = vld [vmem:[%s218 + $0xae0] sm:$0xff]
        %v1643 = vld [vmem:[%s218 + $0xae8] sm:$0xff]
        %v1644 = vld [vmem:[%s218 + $0xaf0] sm:$0xff]
        %v1645 = vld [vmem:[%s218 + $0xaf8] sm:$0xff]
        %v1646 = vld [vmem:[%s218 + $0xb00] sm:$0xff]
        %v1647 = vld [vmem:[%s218 + $0xb08] sm:$0xff]
        %v1648 = vld [vmem:[%s218 + $0xb10] sm:$0xff]
        %v1649 = vld [vmem:[%s218 + $0xb18] sm:$0xff]
        %v1650 = vld [vmem:[%s218 + $0xb20] sm:$0xff]
        %v1651 = vld [vmem:[%s218 + $0xb28] sm:$0xff]
        %v1652 = vld [vmem:[%s218 + $0xb30] sm:$0xff]
        %v1653 = vld [vmem:[%s218 + $0xb38] sm:$0xff]
        %v1654 = vld [vmem:[%s218 + $0xb40] sm:$0xff]
        %v1655 = vld [vmem:[%s218 + $0xb48] sm:$0xff]
        %v1656 = vld [vmem:[%s218 + $0xb50] sm:$0xff]
        %v1657 = vld [vmem:[%s218 + $0xb58] sm:$0xff]
        %v1658 = vld [vmem:[%s218 + $0xb60] sm:$0xff]
        %v1659 = vld [vmem:[%s218 + $0xb68] sm:$0xff]
        %v1660 = vld [vmem:[%s218 + $0xb70] sm:$0xff]
        %v1661 = vld [vmem:[%s218 + $0xb78] sm:$0xff]
        %v1662 = vld [vmem:[%s218 + $0xb80] sm:$0xff]
        %v1663 = vld [vmem:[%s218 + $0xb88] sm:$0xff]
        %v1664 = vld [vmem:[%s218 + $0xb90] sm:$0xff]
        %v1665 = vld [vmem:[%s218 + $0xb98] sm:$0xff]
        %v1666 = vld [vmem:[%s218 + $0xba0] sm:$0xff]
        %v1667 = vld [vmem:[%s218 + $0xba8] sm:$0xff]
        %v1668 = vld [vmem:[%s218 + $0xbb0] sm:$0xff]
        %v1669 = vld [vmem:[%s218 + $0xbb8] sm:$0xff]
        %v1670 = vld [vmem:[%s218 + $0xbc0] sm:$0xff]
        %v1671 = vld [vmem:[%s218 + $0xbc8] sm:$0xff]
        %v1672 = vld [vmem:[%s218 + $0xbd0] sm:$0xff]
        %v1673 = vld [vmem:[%s218 + $0xbd8] sm:$0xff]
        %v1674 = vld [vmem:[%s218 + $0xbe0] sm:$0xff]
        %v1675 = vld [vmem:[%s218 + $0xbe8] sm:$0xff]
        %v1676 = vld [vmem:[%s218 + $0xbf0] sm:$0xff]
        %v1677 = vld [vmem:[%s218 + $0xbf8] sm:$0xff]
        %v1678 = vld [vmem:[%s218 + $0xc00] sm:$0xff]
        %v1679 = vld [vmem:[%s218 + $0xc08] sm:$0xff]
        %v1680 = vld [vmem:[%s218 + $0xc10] sm:$0xff]
        %v1681 = vld [vmem:[%s218 + $0xc18] sm:$0xff]
        %v1682 = vld [vmem:[%s218 + $0xc20] sm:$0xff]
        %v1683 = vld [vmem:[%s218 + $0xc28] sm:$0xff]
        %v1684 = vld [vmem:[%s218 + $0xc30] sm:$0xff]
        %v1685 = vld [vmem:[%s218 + $0xc38] sm:$0xff]
        %v1686 = vld [vmem:[%s218 + $0xc40] sm:$0xff]
        %v1687 = vld [vmem:[%s218 + $0xc48] sm:$0xff]
        %v1688 = vld [vmem:[%s218 + $0xc50] sm:$0xff]
        %v1689 = vld [vmem:[%s218 + $0xc58] sm:$0xff]
        %v1690 = vld [vmem:[%s218 + $0xc60] sm:$0xff]
        %v1691 = vld [vmem:[%s218 + $0xc68] sm:$0xff]
        %v1692 = vld [vmem:[%s218 + $0xc70] sm:$0xff]
        %v1693 = vld [vmem:[%s218 + $0xc78] sm:$0xff]
        %v1694 = vld [vmem:[%s218 + $0xc80] sm:$0xff]
        %v1695 = vld [vmem:[%s218 + $0xc88] sm:$0xff]
        %v1696 = vld [vmem:[%s218 + $0xc90] sm:$0xff]
        %v1697 = vld [vmem:[%s218 + $0xc98] sm:$0xff]
        %v1698 = vld [vmem:[%s218 + $0xca0] sm:$0xff]
        %v1699 = vld [vmem:[%s218 + $0xca8] sm:$0xff]
        %v1700 = vld [vmem:[%s218 + $0xcb0] sm:$0xff]
        %v1701 = vld [vmem:[%s218 + $0xcb8] sm:$0xff]
        %v1702 = vld [vmem:[%s218 + $0xcc0] sm:$0xff]
        %v1703 = vld [vmem:[%s218 + $0xcc8] sm:$0xff]
        %v1704 = vld [vmem:[%s218 + $0xcd0] sm:$0xff]
        %v1705 = vld [vmem:[%s218 + $0xcd8] sm:$0xff]
        %v1706 = vld [vmem:[%s218 + $0xce0] sm:$0xff]
        %v1707 = vld [vmem:[%s218 + $0xce8] sm:$0xff]
        %v1708 = vld [vmem:[%s218 + $0xcf0] sm:$0xff]
        %v1709 = vld [vmem:[%s218 + $0xcf8] sm:$0xff]
        %v1710 = vld [vmem:[%s218 + $0xd00] sm:$0xff]
        %v1711 = vld [vmem:[%s218 + $0xd08] sm:$0xff]
        %v1712 = vld [vmem:[%s218 + $0xd10] sm:$0xff]
        %v1713 = vld [vmem:[%s218 + $0xd18] sm:$0xff]
        %v1714 = vld [vmem:[%s218 + $0xd20] sm:$0xff]
        %v1715 = vld [vmem:[%s218 + $0xd28] sm:$0xff]
        %v1716 = vld [vmem:[%s218 + $0xd30] sm:$0xff]
        %v1717 = vld [vmem:[%s218 + $0xd38] sm:$0xff]
        %v1718 = vld [vmem:[%s218 + $0xd40] sm:$0xff]
        %v1719 = vld [vmem:[%s218 + $0xd48] sm:$0xff]
        %v1720 = vld [vmem:[%s218 + $0xd50] sm:$0xff]
        %v1721 = vld [vmem:[%s218 + $0xd58] sm:$0xff]
        %v1722 = vld [vmem:[%s218 + $0xd60] sm:$0xff]
        %v1723 = vld [vmem:[%s218 + $0xd68] sm:$0xff]
        %v1724 = vld [vmem:[%s218 + $0xd70] sm:$0xff]
        %v1725 = vld [vmem:[%s218 + $0xd78] sm:$0xff]
        %v1726 = vld [vmem:[%s218 + $0xd80] sm:$0xff]
        %v1727 = vld [vmem:[%s218 + $0xd88] sm:$0xff]
        %v1728 = vld [vmem:[%s218 + $0xd90] sm:$0xff]
        %v1729 = vld [vmem:[%s218 + $0xd98] sm:$0xff]
        %v1730 = vld [vmem:[%s218 + $0xda0] sm:$0xff]
        %v1731 = vld [vmem:[%s218 + $0xda8] sm:$0xff]
        %v1732 = vld [vmem:[%s218 + $0xdb0] sm:$0xff]
        %v1733 = vld [vmem:[%s218 + $0xdb8] sm:$0xff]
        %v1734 = vld [vmem:[%s218 + $0xdc0] sm:$0xff]
        %v1735 = vld [vmem:[%s218 + $0xdc8] sm:$0xff]
        %v1736 = vld [vmem:[%s218 + $0xdd0] sm:$0xff]
        %v1737 = vld [vmem:[%s218 + $0xdd8] sm:$0xff]
        %v1738 = vld [vmem:[%s218 + $0xde0] sm:$0xff]
        %v1739 = vld [vmem:[%s218 + $0xde8] sm:$0xff]
        %v1740 = vld [vmem:[%s218 + $0xdf0] sm:$0xff]
        %v1741 = vld [vmem:[%s218 + $0xdf8] sm:$0xff]
        %v1742 = vld [vmem:[%s218 + $0xe00] sm:$0xff]
        %v1743 = vld [vmem:[%s218 + $0xe08] sm:$0xff]
        %v1744 = vld [vmem:[%s218 + $0xe10] sm:$0xff]
        %v1745 = vld [vmem:[%s218 + $0xe18] sm:$0xff]
        %v1746 = vld [vmem:[%s218 + $0xe20] sm:$0xff]
        %v1747 = vld [vmem:[%s218 + $0xe28] sm:$0xff]
        %v1748 = vld [vmem:[%s218 + $0xe30] sm:$0xff]
        %v1749 = vld [vmem:[%s218 + $0xe38] sm:$0xff]
        %v1750 = vld [vmem:[%s218 + $0xe40] sm:$0xff]
        %v1751 = vld [vmem:[%s218 + $0xe48] sm:$0xff]
        %v1752 = vld [vmem:[%s218 + $0xe50] sm:$0xff]
        %v1753 = vld [vmem:[%s218 + $0xe58] sm:$0xff]
        %v1754 = vld [vmem:[%s218 + $0xe60] sm:$0xff]
        %v1755 = vld [vmem:[%s218 + $0xe68] sm:$0xff]
        %v1756 = vld [vmem:[%s218 + $0xe70] sm:$0xff]
        %v1757 = vld [vmem:[%s218 + $0xe78] sm:$0xff]
        %v1758 = vld [vmem:[%s218 + $0xe80] sm:$0xff]
        %v1759 = vld [vmem:[%s218 + $0xe88] sm:$0xff]
        %v1760 = vld [vmem:[%s218 + $0xe90] sm:$0xff]
        %v1761 = vld [vmem:[%s218 + $0xe98] sm:$0xff]
        %v1762 = vld [vmem:[%s218 + $0xea0] sm:$0xff]
        %v1763 = vld [vmem:[%s218 + $0xea8] sm:$0xff]
        %v1764 = vld [vmem:[%s218 + $0xeb0] sm:$0xff]
        %v1765 = vld [vmem:[%s218 + $0xeb8] sm:$0xff]
        %v1766 = vld [vmem:[%s218 + $0xec0] sm:$0xff]
        %v1767 = vld [vmem:[%s218 + $0xec8] sm:$0xff]
        %v1768 = vld [vmem:[%s218 + $0xed0] sm:$0xff]
        %v1769 = vld [vmem:[%s218 + $0xed8] sm:$0xff]
        %v1770 = vld [vmem:[%s218 + $0xee0] sm:$0xff]
        %v1771 = vld [vmem:[%s218 + $0xee8] sm:$0xff]
        %v1772 = vld [vmem:[%s218 + $0xef0] sm:$0xff]
        %v1773 = vld [vmem:[%s218 + $0xef8] sm:$0xff]
        %v1774 = vld [vmem:[%s218 + $0xf00] sm:$0xff]
        %v1775 = vld [vmem:[%s218 + $0xf08] sm:$0xff]
        %v1776 = vld [vmem:[%s218 + $0xf10] sm:$0xff]
        %v1777 = vld [vmem:[%s218 + $0xf18] sm:$0xff]
        %v1778 = vld [vmem:[%s218 + $0xf20] sm:$0xff]
        %v1779 = vld [vmem:[%s218 + $0xf28] sm:$0xff]
        %v1780 = vld [vmem:[%s218 + $0xf30] sm:$0xff]
        %v1781 = vld [vmem:[%s218 + $0xf38] sm:$0xff]
        %v1782 = vld [vmem:[%s218 + $0xf40] sm:$0xff]
        %v1783 = vld [vmem:[%s218 + $0xf48] sm:$0xff]
        %v1784 = vld [vmem:[%s218 + $0xf50] sm:$0xff]
        %v1785 = vld [vmem:[%s218 + $0xf58] sm:$0xff]
        %v1786 = vld [vmem:[%s218 + $0xf60] sm:$0xff]
        %v1787 = vld [vmem:[%s218 + $0xf68] sm:$0xff]
        %v1788 = vld [vmem:[%s218 + $0xf70] sm:$0xff]
        %v1789 = vld [vmem:[%s218 + $0xf78] sm:$0xff]
        %v1790 = vld [vmem:[%s218 + $0xf80] sm:$0xff]
        %v1791 = vld [vmem:[%s218 + $0xf88] sm:$0xff]
        %v1792 = vld [vmem:[%s218 + $0xf90] sm:$0xff]
        %v1793 = vld [vmem:[%s218 + $0xf98] sm:$0xff]
        %v1794 = vld [vmem:[%s218 + $0xfa0] sm:$0xff]
        %v1795 = vld [vmem:[%s218 + $0xfa8] sm:$0xff]
        %v1796 = vld [vmem:[%s218 + $0xfb0] sm:$0xff]
        %v1797 = vld [vmem:[%s218 + $0xfb8] sm:$0xff]
        %v1798 = vld [vmem:[%s218 + $0xfc0] sm:$0xff]
        %v1799 = vld [vmem:[%s218 + $0xfc8] sm:$0xff]
        %v1800 = vld [vmem:[%s218 + $0xfd0] sm:$0xff]
        %v1801 = vld [vmem:[%s218 + $0xfd8] sm:$0xff]
        %v1802 = vld [vmem:[%s218 + $0xfe0] sm:$0xff]
        %v1803 = vld [vmem:[%s218 + $0xfe8] sm:$0xff]
        %v1804 = vld [vmem:[%s218 + $0xff0] sm:$0xff]
        %v1805 = vld [vmem:[%s218 + $0xff8] sm:$0xff]
        %v1806 = vld [vmem:[%s218 + $0x1000] sm:$0xff]
        %v1807 = vld [vmem:[%s218 + $0x1008] sm:$0xff]
        %v1808 = vld [vmem:[%s218 + $0x1010] sm:$0xff]
        %v1809 = vld [vmem:[%s218 + $0x1018] sm:$0xff]
        %v1810 = vld [vmem:[%s218 + $0x1020] sm:$0xff]
        %v1811 = vld [vmem:[%s218 + $0x1028] sm:$0xff]
        %v1812 = vld [vmem:[%s218 + $0x1030] sm:$0xff]
        %v1813 = vld [vmem:[%s218 + $0x1038] sm:$0xff]
        %v1814 = vld [vmem:[%s218 + $0x1040] sm:$0xff]
        %v1815 = vld [vmem:[%s218 + $0x1048] sm:$0xff]
        %v1816 = vld [vmem:[%s218 + $0x1050] sm:$0xff]
        %v1817 = vld [vmem:[%s218 + $0x1058] sm:$0xff]
        %v1818 = vld [vmem:[%s218 + $0x1060] sm:$0xff]
        %v1819 = vld [vmem:[%s218 + $0x1068] sm:$0xff]
        %v1820 = vld [vmem:[%s218 + $0x1070] sm:$0xff]
        %v1821 = vld [vmem:[%s218 + $0x1078] sm:$0xff]
        %v1822 = vld [vmem:[%s218 + $0x1080] sm:$0xff]
        %v1823 = vld [vmem:[%s218 + $0x1088] sm:$0xff]
        %v1824 = vld [vmem:[%s218 + $0x1090] sm:$0xff]
        %v1825 = vld [vmem:[%s218 + $0x1098] sm:$0xff]
        %v1826 = vld [vmem:[%s218 + $0x10a0] sm:$0xff]
        %v1827 = vld [vmem:[%s218 + $0x10a8] sm:$0xff]
        %v1828 = vld [vmem:[%s218 + $0x10b0] sm:$0xff]
        %v1829 = vld [vmem:[%s218 + $0x10b8] sm:$0xff]
        %v1830 = vld [vmem:[%s218 + $0x10c0] sm:$0xff]
        %v1831 = vld [vmem:[%s218 + $0x10c8] sm:$0xff]
        %v1832 = vld [vmem:[%s218 + $0x10d0] sm:$0xff]
        %v1833 = vld [vmem:[%s218 + $0x10d8] sm:$0xff]
        %v1834 = vld [vmem:[%s218 + $0x10e0] sm:$0xff]
        %v1835 = vld [vmem:[%s218 + $0x10e8] sm:$0xff]
        %v1836 = vld [vmem:[%s218 + $0x10f0] sm:$0xff]
        %v1837 = vld [vmem:[%s218 + $0x10f8] sm:$0xff]
        %v1838 = vld [vmem:[%s218 + $0x1100] sm:$0xff]
        %v1839 = vld [vmem:[%s218 + $0x1108] sm:$0xff]
        %v1840 = vld [vmem:[%s218 + $0x1110] sm:$0xff]
        %v1841 = vld [vmem:[%s218 + $0x1118] sm:$0xff]
        %v1842 = vld [vmem:[%s218 + $0x1120] sm:$0xff]
        %v1843 = vld [vmem:[%s218 + $0x1128] sm:$0xff]
        %v1844 = vld [vmem:[%s218 + $0x1130] sm:$0xff]
        %v1845 = vld [vmem:[%s218 + $0x1138] sm:$0xff]
        %v1846 = vld [vmem:[%s218 + $0x1140] sm:$0xff]
        %v1847 = vld [vmem:[%s218 + $0x1148] sm:$0xff]
        %v1848 = vld [vmem:[%s218 + $0x1150] sm:$0xff]
        %v1849 = vld [vmem:[%s218 + $0x1158] sm:$0xff]
        %v1850 = vld [vmem:[%s218 + $0x1160] sm:$0xff]
        %v1851 = vld [vmem:[%s218 + $0x1168] sm:$0xff]
        %v1852 = vld [vmem:[%s218 + $0x1170] sm:$0xff]
        %v1853 = vld [vmem:[%s218 + $0x1178] sm:$0xff]
        %v1854 = vld [vmem:[%s218 + $0x1180] sm:$0xff]
        %v1855 = vld [vmem:[%s218 + $0x1188] sm:$0xff]
        %v1856 = vld [vmem:[%s218 + $0x1190] sm:$0xff]
        %v1857 = vld [vmem:[%s218 + $0x1198] sm:$0xff]
        %v1858 = vld [vmem:[%s218 + $0x11a0] sm:$0xff]
        %v1859 = vld [vmem:[%s218 + $0x11a8] sm:$0xff]
        %v1860 = vld [vmem:[%s218 + $0x11b0] sm:$0xff]
        %v1861 = vld [vmem:[%s218 + $0x11b8] sm:$0xff]
        %v1862 = vld [vmem:[%s218 + $0x11c0] sm:$0xff]
        %v1863 = vld [vmem:[%s218 + $0x11c8] sm:$0xff]
        %v1864 = vld [vmem:[%s218 + $0x11d0] sm:$0xff]
        %v1865 = vld [vmem:[%s218 + $0x11d8] sm:$0xff]
        %v1866 = vld [vmem:[%s218 + $0x11e0] sm:$0xff]
        %v1867 = vld [vmem:[%s218 + $0x11e8] sm:$0xff]
        %v1868 = vld [vmem:[%s218 + $0x11f0] sm:$0xff]
        %v1869 = vld [vmem:[%s218 + $0x11f8] sm:$0xff]
        %v1870 = vld [vmem:[%s218 + $0x1200] sm:$0xff]
        %v1871 = vld [vmem:[%s218 + $0x1208] sm:$0xff]
        %v1872 = vld [vmem:[%s218 + $0x1210] sm:$0xff]
        %v1873 = vld [vmem:[%s218 + $0x1218] sm:$0xff]
        %v1874 = vld [vmem:[%s218 + $0x1220] sm:$0xff]
        %v1875 = vld [vmem:[%s218 + $0x1228] sm:$0xff]
        %v1876 = vld [vmem:[%s218 + $0x1230] sm:$0xff]
        %v1877 = vld [vmem:[%s218 + $0x1238] sm:$0xff]
        %v1878 = vld [vmem:[%s218 + $0x1240] sm:$0xff]
        %v1879 = vld [vmem:[%s218 + $0x1248] sm:$0xff]
        %v1880 = vld [vmem:[%s218 + $0x1250] sm:$0xff]
        %v1881 = vld [vmem:[%s218 + $0x1258] sm:$0xff]
        %v1882 = vld [vmem:[%s218 + $0x1260] sm:$0xff]
        %v1883 = vld [vmem:[%s218 + $0x1268] sm:$0xff]
        %v1884 = vld [vmem:[%s218 + $0x1270] sm:$0xff]
        %v1885 = vld [vmem:[%s218 + $0x1278] sm:$0xff]
        %v1886 = vld [vmem:[%s218 + $0x1280] sm:$0xff]
        %v1887 = vld [vmem:[%s218 + $0x1288] sm:$0xff]
        %v1888 = vld [vmem:[%s218 + $0x1290] sm:$0xff]
        %v1889 = vld [vmem:[%s218 + $0x1298] sm:$0xff]
        %v1890 = vld [vmem:[%s218 + $0x12a0] sm:$0xff]
        %v1891 = vld [vmem:[%s218 + $0x12a8] sm:$0xff]
        %v1892 = vld [vmem:[%s218 + $0x12b0] sm:$0xff]
        %v1893 = vld [vmem:[%s218 + $0x12b8] sm:$0xff]
        %v1894 = vld [vmem:[%s218 + $0x12c0] sm:$0xff]
        %v1895 = vld [vmem:[%s218 + $0x12c8] sm:$0xff]
        %v1896 = vld [vmem:[%s218 + $0x12d0] sm:$0xff]
        %v1897 = vld [vmem:[%s218 + $0x12d8] sm:$0xff]
        %v1898 = vld [vmem:[%s218 + $0x12e0] sm:$0xff]
        %v1899 = vld [vmem:[%s218 + $0x12e8] sm:$0xff]
        %v1900 = vld [vmem:[%s218 + $0x12f0] sm:$0xff]
        %v1901 = vld [vmem:[%s218 + $0x12f8] sm:$0xff]
        %v1902 = vld [vmem:[%s218 + $0x1300] sm:$0xff]
        %v1903 = vld [vmem:[%s218 + $0x1308] sm:$0xff]
        %v1904 = vld [vmem:[%s218 + $0x1310] sm:$0xff]
        %v1905 = vld [vmem:[%s218 + $0x1318] sm:$0xff]
        %v1906 = vld [vmem:[%s218 + $0x1320] sm:$0xff]
        %v1907 = vld [vmem:[%s218 + $0x1328] sm:$0xff]
        %v1908 = vld [vmem:[%s218 + $0x1330] sm:$0xff]
        %v1909 = vld [vmem:[%s218 + $0x1338] sm:$0xff]
        %v1910 = vld [vmem:[%s218 + $0x1340] sm:$0xff]
        %v1911 = vld [vmem:[%s218 + $0x1348] sm:$0xff]
        %v1912 = vld [vmem:[%s218 + $0x1350] sm:$0xff]
        %v1913 = vld [vmem:[%s218 + $0x1358] sm:$0xff]
        %v1914 = vld [vmem:[%s218 + $0x1360] sm:$0xff]
        %v1915 = vld [vmem:[%s218 + $0x1368] sm:$0xff]
        %v1916 = vld [vmem:[%s218 + $0x1370] sm:$0xff]
        %v1917 = vld [vmem:[%s218 + $0x1378] sm:$0xff]
        %v1918 = vld [vmem:[%s218 + $0x1380] sm:$0xff]
        %v1919 = vld [vmem:[%s218 + $0x1388] sm:$0xff]
        %v1920 = vld [vmem:[%s218 + $0x1390] sm:$0xff]
        %v1921 = vld [vmem:[%s218 + $0x1398] sm:$0xff]
        %v1922 = vld [vmem:[%s218 + $0x13a0] sm:$0xff]
        %v1923 = vld [vmem:[%s218 + $0x13a8] sm:$0xff]
        %v1924 = vld [vmem:[%s218 + $0x13b0] sm:$0xff]
        %v1925 = vld [vmem:[%s218 + $0x13b8] sm:$0xff]
        %v1926 = vld [vmem:[%s218 + $0x13c0] sm:$0xff]
        %v1927 = vld [vmem:[%s218 + $0x13c8] sm:$0xff]
        %v1928 = vld [vmem:[%s218 + $0x13d0] sm:$0xff]
        %v1929 = vld [vmem:[%s218 + $0x13d8] sm:$0xff]
        %v1930 = vld [vmem:[%s218 + $0x13e0] sm:$0xff]
        %v1931 = vld [vmem:[%s218 + $0x13e8] sm:$0xff]
        %v1932 = vld [vmem:[%s218 + $0x13f0] sm:$0xff]
        %v1933 = vld [vmem:[%s218 + $0x13f8] sm:$0xff]
        %v1934 = vld [vmem:[%s218 + $0x1400] sm:$0xff]
        %v1935 = vld [vmem:[%s218 + $0x1408] sm:$0xff]
        %v1936 = vld [vmem:[%s218 + $0x1410] sm:$0xff]
        %v1937 = vld [vmem:[%s218 + $0x1418] sm:$0xff]
        %v1938 = vld [vmem:[%s218 + $0x1420] sm:$0xff]
        %v1939 = vld [vmem:[%s218 + $0x1428] sm:$0xff]
        %v1940 = vld [vmem:[%s218 + $0x1430] sm:$0xff]
        %v1941 = vld [vmem:[%s218 + $0x1438] sm:$0xff]
        %v1942 = vld [vmem:[%s218 + $0x1440] sm:$0xff]
        %v1943 = vld [vmem:[%s218 + $0x1448] sm:$0xff]
        %v1944 = vld [vmem:[%s218 + $0x1450] sm:$0xff]
        %v1945 = vld [vmem:[%s218 + $0x1458] sm:$0xff]
        %v1946 = vld [vmem:[%s218 + $0x1460] sm:$0xff]
        %v1947 = vld [vmem:[%s218 + $0x1468] sm:$0xff]
        %v1948 = vld [vmem:[%s218 + $0x1470] sm:$0xff]
        %v1949 = vld [vmem:[%s218 + $0x1478] sm:$0xff]
        %v1950 = vld [vmem:[%s218 + $0x1480] sm:$0xff]
        %v1951 = vld [vmem:[%s218 + $0x1488] sm:$0xff]
        %v1952 = vld [vmem:[%s218 + $0x1490] sm:$0xff]
        %v1953 = vld [vmem:[%s218 + $0x1498] sm:$0xff]
        %v1954 = vld [vmem:[%s218 + $0x14a0] sm:$0xff]
        %v1955 = vld [vmem:[%s218 + $0x14a8] sm:$0xff]
        %v1956 = vld [vmem:[%s218 + $0x14b0] sm:$0xff]
        %v1957 = vld [vmem:[%s218 + $0x14b8] sm:$0xff]
        %v1958 = vld [vmem:[%s218 + $0x14c0] sm:$0xff]
        %v1959 = vld [vmem:[%s218 + $0x14c8] sm:$0xff]
        %v1960 = vld [vmem:[%s218 + $0x14d0] sm:$0xff]
        %v1961 = vld [vmem:[%s218 + $0x14d8] sm:$0xff]
        %v1962 = vld [vmem:[%s218 + $0x14e0] sm:$0xff]
        %v1963 = vld [vmem:[%s218 + $0x14e8] sm:$0xff]
        %v1964 = vld [vmem:[%s218 + $0x14f0] sm:$0xff]
        %v1965 = vld [vmem:[%s218 + $0x14f8] sm:$0xff]
        %v1966 = vld [vmem:[%s218 + $0x1500] sm:$0xff]
        %v1967 = vld [vmem:[%s218 + $0x1508] sm:$0xff]
        %v1968 = vld [vmem:[%s218 + $0x1510] sm:$0xff]
        %v1969 = vld [vmem:[%s218 + $0x1518] sm:$0xff]
        %v1970 = vld [vmem:[%s218 + $0x1520] sm:$0xff]
        %v1971 = vld [vmem:[%s218 + $0x1528] sm:$0xff]
        %v1972 = vld [vmem:[%s218 + $0x1530] sm:$0xff]
        %v1973 = vld [vmem:[%s218 + $0x1538] sm:$0xff]
        %v1974 = vld [vmem:[%s218 + $0x1540] sm:$0xff]
        %v1975 = vld [vmem:[%s218 + $0x1548] sm:$0xff]
        %v1976 = vld [vmem:[%s218 + $0x1550] sm:$0xff]
        %v1977 = vld [vmem:[%s218 + $0x1558] sm:$0xff]
        %v1978 = vld [vmem:[%s218 + $0x1560] sm:$0xff]
        %v1979 = vld [vmem:[%s218 + $0x1568] sm:$0xff]
        %v1980 = vld [vmem:[%s218 + $0x1570] sm:$0xff]
        %v1981 = vld [vmem:[%s218 + $0x1578] sm:$0xff]
        %v1982 = vld [vmem:[%s218 + $0x1580] sm:$0xff]
        %v1983 = vld [vmem:[%s218 + $0x1588] sm:$0xff]
        %v1984 = vld [vmem:[%s218 + $0x1590] sm:$0xff]
        %v1985 = vld [vmem:[%s218 + $0x1598] sm:$0xff]
        %v1986 = vld [vmem:[%s218 + $0x15a0] sm:$0xff]
        %v1987 = vld [vmem:[%s218 + $0x15a8] sm:$0xff]
        %v1988 = vld [vmem:[%s218 + $0x15b0] sm:$0xff]
        %v1989 = vld [vmem:[%s218 + $0x15b8] sm:$0xff]
        %v1990 = vld [vmem:[%s218 + $0x15c0] sm:$0xff]
        %v1991 = vld [vmem:[%s218 + $0x15c8] sm:$0xff]
        %v1992 = vld [vmem:[%s218 + $0x15d0] sm:$0xff]
        %v1993 = vld [vmem:[%s218 + $0x15d8] sm:$0xff]
        %v1994 = vld [vmem:[%s218 + $0x15e0] sm:$0xff]
        %v1995 = vld [vmem:[%s218 + $0x15e8] sm:$0xff]
        %v1996 = vld [vmem:[%s218 + $0x15f0] sm:$0xff]
        %v1997 = vld [vmem:[%s218 + $0x15f8] sm:$0xff]
        %v1998 = vld [vmem:[%s218 + $0x1600] sm:$0xff]
        %v1999 = vld [vmem:[%s218 + $0x1608] sm:$0xff]
        %v2000 = vld [vmem:[%s218 + $0x1610] sm:$0xff]
        %v2001 = vld [vmem:[%s218 + $0x1618] sm:$0xff]
        %v2002 = vld [vmem:[%s218 + $0x1620] sm:$0xff]
        %v2003 = vld [vmem:[%s218 + $0x1628] sm:$0xff]
        %v2004 = vld [vmem:[%s218 + $0x1630] sm:$0xff]
        %v2005 = vld [vmem:[%s218 + $0x1638] sm:$0xff]
        %v2006 = vld [vmem:[%s218 + $0x1640] sm:$0xff]
        %v2007 = vld [vmem:[%s218 + $0x1648] sm:$0xff]
        %v2008 = vld [vmem:[%s218 + $0x1650] sm:$0xff]
        %v2009 = vld [vmem:[%s218 + $0x1658] sm:$0xff]
        %v2010 = vld [vmem:[%s218 + $0x1660] sm:$0xff]
        %v2011 = vld [vmem:[%s218 + $0x1668] sm:$0xff]
        %v2012 = vld [vmem:[%s218 + $0x1670] sm:$0xff]
        %v2013 = vld [vmem:[%s218 + $0x1678] sm:$0xff]
        %v2014 = vld [vmem:[%s218 + $0x1680] sm:$0xff]
        %v2015 = vld [vmem:[%s218 + $0x1688] sm:$0xff]
        %v2016 = vld [vmem:[%s218 + $0x1690] sm:$0xff]
        %v2017 = vld [vmem:[%s218 + $0x1698] sm:$0xff]
        %v2018 = vld [vmem:[%s218 + $0x16a0] sm:$0xff]
        %v2019 = vld [vmem:[%s218 + $0x16a8] sm:$0xff]
        %v2020 = vld [vmem:[%s218 + $0x16b0] sm:$0xff]
        %v2021 = vld [vmem:[%s218 + $0x16b8] sm:$0xff]
        %v2022 = vld [vmem:[%s218 + $0x16c0] sm:$0xff]
        %v2023 = vld [vmem:[%s218 + $0x16c8] sm:$0xff]
        %v2024 = vld [vmem:[%s218 + $0x16d0] sm:$0xff]
        %v2025 = vld [vmem:[%s218 + $0x16d8] sm:$0xff]
        %v2026 = vld [vmem:[%s218 + $0x16e0] sm:$0xff]
        %v2027 = vld [vmem:[%s218 + $0x16e8] sm:$0xff]
        %v2028 = vld [vmem:[%s218 + $0x16f0] sm:$0xff]
        %v2029 = vld [vmem:[%s218 + $0x16f8] sm:$0xff]
        %v2030 = vld [vmem:[%s218 + $0x1700] sm:$0xff]
        %v2031 = vld [vmem:[%s218 + $0x1708] sm:$0xff]
        %v2032 = vld [vmem:[%s218 + $0x1710] sm:$0xff]
        %v2033 = vld [vmem:[%s218 + $0x1718] sm:$0xff]
        %v2034 = vld [vmem:[%s218 + $0x1720] sm:$0xff]
        %v2035 = vld [vmem:[%s218 + $0x1728] sm:$0xff]
        %v2036 = vld [vmem:[%s218 + $0x1730] sm:$0xff]
        %v2037 = vld [vmem:[%s218 + $0x1738] sm:$0xff]
        %v2038 = vld [vmem:[%s218 + $0x1740] sm:$0xff]
        %v2039 = vld [vmem:[%s218 + $0x1748] sm:$0xff]
        %v2040 = vld [vmem:[%s218 + $0x1750] sm:$0xff]
        %v2041 = vld [vmem:[%s218 + $0x1758] sm:$0xff]
        %v2042 = vld [vmem:[%s218 + $0x1760] sm:$0xff]
        %v2043 = vld [vmem:[%s218 + $0x1768] sm:$0xff]
        %v2044 = vld [vmem:[%s218 + $0x1770] sm:$0xff]
        %v2045 = vld [vmem:[%s218 + $0x1778] sm:$0xff]
        %v2046 = vld [vmem:[%s218 + $0x1780] sm:$0xff]
        %v2047 = vld [vmem:[%s218 + $0x1788] sm:$0xff]
        %v2048 = vld [vmem:[%s218 + $0x1790] sm:$0xff]
        %v2049 = vld [vmem:[%s218 + $0x1798] sm:$0xff]
        %v2050 = vld [vmem:[%s218 + $0x17a0] sm:$0xff]
        %v2051 = vld [vmem:[%s218 + $0x17a8] sm:$0xff]
        %v2052 = vld [vmem:[%s218 + $0x17b0] sm:$0xff]
        %v2053 = vld [vmem:[%s218 + $0x17b8] sm:$0xff]
        %v2054 = vld [vmem:[%s218 + $0x17c0] sm:$0xff]
        %v2055 = vld [vmem:[%s218 + $0x17c8] sm:$0xff]
        %v2056 = vld [vmem:[%s218 + $0x17d0] sm:$0xff]
        %v2057 = vld [vmem:[%s218 + $0x17d8] sm:$0xff]
        %v2058 = vld [vmem:[%s218 + $0x17e0] sm:$0xff]
        %v2059 = vld [vmem:[%s218 + $0x17e8] sm:$0xff]
        %v2060 = vld [vmem:[%s218 + $0x17f0] sm:$0xff]
        %v2061 = vld [vmem:[%s218 + $0x17f8] sm:$0xff]
        %v2062 = vld [vmem:[%s218 + $0x1800] sm:$0xff]
        %v2063 = vld [vmem:[%s218 + $0x1808] sm:$0xff]
        %v2064 = vld [vmem:[%s218 + $0x1810] sm:$0xff]
        %v2065 = vld [vmem:[%s218 + $0x1818] sm:$0xff]
        %v2066 = vld [vmem:[%s218 + $0x1820] sm:$0xff]
        %v2067 = vld [vmem:[%s218 + $0x1828] sm:$0xff]
        %v2068 = vld [vmem:[%s218 + $0x1830] sm:$0xff]
        %v2069 = vld [vmem:[%s218 + $0x1838] sm:$0xff]
        %v2070 = vld [vmem:[%s218 + $0x1840] sm:$0xff]
        %v2071 = vld [vmem:[%s218 + $0x1848] sm:$0xff]
        %v2072 = vld [vmem:[%s218 + $0x1850] sm:$0xff]
        %v2073 = vld [vmem:[%s218 + $0x1858] sm:$0xff]
        %v2074 = vld [vmem:[%s218 + $0x1860] sm:$0xff]
        %v2075 = vld [vmem:[%s218 + $0x1868] sm:$0xff]
        %v2076 = vld [vmem:[%s218 + $0x1870] sm:$0xff]
        %v2077 = vld [vmem:[%s218 + $0x1878] sm:$0xff]
        %v2078 = vld [vmem:[%s218 + $0x1880] sm:$0xff]
        %v2079 = vld [vmem:[%s218 + $0x1888] sm:$0xff]
        %v2080 = vld [vmem:[%s218 + $0x1890] sm:$0xff]
        %v2081 = vld [vmem:[%s218 + $0x1898] sm:$0xff]
        %v2082 = vld [vmem:[%s218 + $0x18a0] sm:$0xff]
        %v2083 = vld [vmem:[%s218 + $0x18a8] sm:$0xff]
        %v2084 = vld [vmem:[%s218 + $0x18b0] sm:$0xff]
        %v2085 = vld [vmem:[%s218 + $0x18b8] sm:$0xff]
        %v2086 = vld [vmem:[%s218 + $0x18c0] sm:$0xff]
        %v2087 = vld [vmem:[%s218 + $0x18c8] sm:$0xff]
        %v2088 = vld [vmem:[%s218 + $0x18d0] sm:$0xff]
        %v2089 = vld [vmem:[%s218 + $0x18d8] sm:$0xff]
        %v2090 = vld [vmem:[%s218 + $0x18e0] sm:$0xff]
        %v2091 = vld [vmem:[%s218 + $0x18e8] sm:$0xff]
        %v2092 = vld [vmem:[%s218 + $0x18f0] sm:$0xff]
        %v2093 = vld [vmem:[%s218 + $0x18f8] sm:$0xff]
        %v2094 = vld [vmem:[%s218 + $0x1900] sm:$0xff]
        %v2095 = vld [vmem:[%s218 + $0x1908] sm:$0xff]
        %v2096 = vld [vmem:[%s218 + $0x1910] sm:$0xff]
        %v2097 = vld [vmem:[%s218 + $0x1918] sm:$0xff]
        %v2098 = vld [vmem:[%s218 + $0x1920] sm:$0xff]
        %v2099 = vld [vmem:[%s218 + $0x1928] sm:$0xff]
        %v2100 = vld [vmem:[%s218 + $0x1930] sm:$0xff]
        %v2101 = vld [vmem:[%s218 + $0x1938] sm:$0xff]
        %v2102 = vld [vmem:[%s218 + $0x1940] sm:$0xff]
        %v2103 = vld [vmem:[%s218 + $0x1948] sm:$0xff]
        %v2104 = vld [vmem:[%s218 + $0x1950] sm:$0xff]
        %v2105 = vld [vmem:[%s218 + $0x1958] sm:$0xff]
        %v2106 = vld [vmem:[%s218 + $0x1960] sm:$0xff]
        %v2107 = vld [vmem:[%s218 + $0x1968] sm:$0xff]
        %v2108 = vld [vmem:[%s218 + $0x1970] sm:$0xff]
        %v2109 = vld [vmem:[%s218 + $0x1978] sm:$0xff]
        %v2110 = vld [vmem:[%s218 + $0x1980] sm:$0xff]
        %v2111 = vld [vmem:[%s218 + $0x1988] sm:$0xff]
        %v2112 = vld [vmem:[%s218 + $0x1990] sm:$0xff]
        %v2113 = vld [vmem:[%s218 + $0x1998] sm:$0xff]
        %v2114 = vld [vmem:[%s218 + $0x19a0] sm:$0xff]
        %v2115 = vld [vmem:[%s218 + $0x19a8] sm:$0xff]
        %v2116 = vld [vmem:[%s218 + $0x19b0] sm:$0xff]
        %v2117 = vld [vmem:[%s218 + $0x19b8] sm:$0xff]
        %v2118 = vld [vmem:[%s218 + $0x19c0] sm:$0xff]
        %v2119 = vld [vmem:[%s218 + $0x19c8] sm:$0xff]
        %v2120 = vld [vmem:[%s218 + $0x19d0] sm:$0xff]
        %v2121 = vld [vmem:[%s218 + $0x19d8] sm:$0xff]
        %v2122 = vld [vmem:[%s218 + $0x19e0] sm:$0xff]
        %v2123 = vld [vmem:[%s218 + $0x19e8] sm:$0xff]
        %v2124 = vld [vmem:[%s218 + $0x19f0] sm:$0xff]
        %v2125 = vld [vmem:[%s218 + $0x19f8] sm:$0xff]
        %v2126 = vld [vmem:[%s218 + $0x1a00] sm:$0xff]
        %v2127 = vld [vmem:[%s218 + $0x1a08] sm:$0xff]
        %v2128 = vld [vmem:[%s218 + $0x1a10] sm:$0xff]
        %v2129 = vld [vmem:[%s218 + $0x1a18] sm:$0xff]
        %v2130 = vld [vmem:[%s218 + $0x1a20] sm:$0xff]
        %v2131 = vld [vmem:[%s218 + $0x1a28] sm:$0xff]
        %v2132 = vld [vmem:[%s218 + $0x1a30] sm:$0xff]
        %v2133 = vld [vmem:[%s218 + $0x1a38] sm:$0xff]
        %v2134 = vld [vmem:[%s218 + $0x1a40] sm:$0xff]
        %v2135 = vld [vmem:[%s218 + $0x1a48] sm:$0xff]
        %v2136 = vld [vmem:[%s218 + $0x1a50] sm:$0xff]
        %v2137 = vld [vmem:[%s218 + $0x1a58] sm:$0xff]
        %v2138 = vld [vmem:[%s218 + $0x1a60] sm:$0xff]
        %v2139 = vld [vmem:[%s218 + $0x1a68] sm:$0xff]
        %v2140 = vld [vmem:[%s218 + $0x1a70] sm:$0xff]
        %v2141 = vld [vmem:[%s218 + $0x1a78] sm:$0xff]
        %v2142 = vld [vmem:[%s218 + $0x1a80] sm:$0xff]
        %v2143 = vld [vmem:[%s218 + $0x1a88] sm:$0xff]
        %v2144 = vld [vmem:[%s218 + $0x1a90] sm:$0xff]
        %v2145 = vld [vmem:[%s218 + $0x1a98] sm:$0xff]
        %v2146 = vld [vmem:[%s218 + $0x1aa0] sm:$0xff]
        %v2147 = vld [vmem:[%s218 + $0x1aa8] sm:$0xff]
        %v2148 = vld [vmem:[%s218 + $0x1ab0] sm:$0xff]
        %v2149 = vld [vmem:[%s218 + $0x1ab8] sm:$0xff]
        %v2150 = vld [vmem:[%s218 + $0x1ac0] sm:$0xff]
        %v2151 = vld [vmem:[%s218 + $0x1ac8] sm:$0xff]
        %v2152 = vld [vmem:[%s218 + $0x1ad0] sm:$0xff]
        %v2153 = vld [vmem:[%s218 + $0x1ad8] sm:$0xff]
        %v2154 = vld [vmem:[%s218 + $0x1ae0] sm:$0xff]
        %v2155 = vld [vmem:[%s218 + $0x1ae8] sm:$0xff]
        %v2156 = vld [vmem:[%s218 + $0x1af0] sm:$0xff]
        %v2157 = vld [vmem:[%s218 + $0x1af8] sm:$0xff]
        %v2158 = vld [vmem:[%s218 + $0x1b00] sm:$0xff]
        %v2159 = vld [vmem:[%s218 + $0x1b08] sm:$0xff]
        %v2160 = vld [vmem:[%s218 + $0x1b10] sm:$0xff]
        %v2161 = vld [vmem:[%s218 + $0x1b18] sm:$0xff]
        %v2162 = vld [vmem:[%s218 + $0x1b20] sm:$0xff]
        %v2163 = vld [vmem:[%s218 + $0x1b28] sm:$0xff]
        %v2164 = vld [vmem:[%s218 + $0x1b30] sm:$0xff]
        %v2165 = vld [vmem:[%s218 + $0x1b38] sm:$0xff]
        %v2166 = vld [vmem:[%s218 + $0x1b40] sm:$0xff]
        %v2167 = vld [vmem:[%s218 + $0x1b48] sm:$0xff]
        %v2168 = vld [vmem:[%s218 + $0x1b50] sm:$0xff]
        %v2169 = vld [vmem:[%s218 + $0x1b58] sm:$0xff]
        %v2170 = vld [vmem:[%s218 + $0x1b60] sm:$0xff]
        %v2171 = vld [vmem:[%s218 + $0x1b68] sm:$0xff]
        %v2172 = vld [vmem:[%s218 + $0x1b70] sm:$0xff]
        %v2173 = vld [vmem:[%s218 + $0x1b78] sm:$0xff]
        %v2174 = vld [vmem:[%s218 + $0x1b80] sm:$0xff]
        %v2175 = vld [vmem:[%s218 + $0x1b88] sm:$0xff]
        %v2176 = vld [vmem:[%s218 + $0x1b90] sm:$0xff]
        %v2177 = vld [vmem:[%s218 + $0x1b98] sm:$0xff]
        %v2178 = vld [vmem:[%s218 + $0x1ba0] sm:$0xff]
        %v2179 = vld [vmem:[%s218 + $0x1ba8] sm:$0xff]
        %v2180 = vld [vmem:[%s218 + $0x1bb0] sm:$0xff]
        %v2181 = vld [vmem:[%s218 + $0x1bb8] sm:$0xff]
        %v2182 = vld [vmem:[%s218 + $0x1bc0] sm:$0xff]
        %v2183 = vld [vmem:[%s218 + $0x1bc8] sm:$0xff]
        %v2184 = vld [vmem:[%s218 + $0x1bd0] sm:$0xff]
        %v2185 = vld [vmem:[%s218 + $0x1bd8] sm:$0xff]
        %v2186 = vld [vmem:[%s218 + $0x1be0] sm:$0xff]
        %v2187 = vld [vmem:[%s218 + $0x1be8] sm:$0xff]
        %v2188 = vld [vmem:[%s218 + $0x1bf0] sm:$0xff]
        %v2189 = vld [vmem:[%s218 + $0x1bf8] sm:$0xff]
        %v2190 = vld [vmem:[%s218 + $0x1c00] sm:$0xff]
        %v2191 = vld [vmem:[%s218 + $0x1c08] sm:$0xff]
        %v2192 = vld [vmem:[%s218 + $0x1c10] sm:$0xff]
        %v2193 = vld [vmem:[%s218 + $0x1c18] sm:$0xff]
        %v2194 = vld [vmem:[%s218 + $0x1c20] sm:$0xff]
        %v2195 = vld [vmem:[%s218 + $0x1c28] sm:$0xff]
        %v2196 = vld [vmem:[%s218 + $0x1c30] sm:$0xff]
        %v2197 = vld [vmem:[%s218 + $0x1c38] sm:$0xff]
        %v2198 = vld [vmem:[%s218 + $0x1c40] sm:$0xff]
        %v2199 = vld [vmem:[%s218 + $0x1c48] sm:$0xff]
        %v2200 = vld [vmem:[%s218 + $0x1c50] sm:$0xff]
        %v2201 = vld [vmem:[%s218 + $0x1c58] sm:$0xff]
        %v2202 = vld [vmem:[%s218 + $0x1c60] sm:$0xff]
        %v2203 = vld [vmem:[%s218 + $0x1c68] sm:$0xff]
        %v2204 = vld [vmem:[%s218 + $0x1c70] sm:$0xff]
        %v2205 = vld [vmem:[%s218 + $0x1c78] sm:$0xff]
        %v2206 = vld [vmem:[%s218 + $0x1c80] sm:$0xff]
        %v2207 = vld [vmem:[%s218 + $0x1c88] sm:$0xff]
        %v2208 = vld [vmem:[%s218 + $0x1c90] sm:$0xff]
        %v2209 = vld [vmem:[%s218 + $0x1c98] sm:$0xff]
        %v2210 = vld [vmem:[%s218 + $0x1ca0] sm:$0xff]
        %v2211 = vld [vmem:[%s218 + $0x1ca8] sm:$0xff]
        %v2212 = vld [vmem:[%s218 + $0x1cb0] sm:$0xff]
        %v2213 = vld [vmem:[%s218 + $0x1cb8] sm:$0xff]
        %v2214 = vld [vmem:[%s218 + $0x1cc0] sm:$0xff]
        %v2215 = vld [vmem:[%s218 + $0x1cc8] sm:$0xff]
        %v2216 = vld [vmem:[%s218 + $0x1cd0] sm:$0xff]
        %v2217 = vld [vmem:[%s218 + $0x1cd8] sm:$0xff]
        %v2218 = vld [vmem:[%s218 + $0x1ce0] sm:$0xff]
        %v2219 = vld [vmem:[%s218 + $0x1ce8] sm:$0xff]
        %v2220 = vld [vmem:[%s218 + $0x1cf0] sm:$0xff]
        %v2221 = vld [vmem:[%s218 + $0x1cf8] sm:$0xff]
        %v2222 = vld [vmem:[%s218 + $0x1d00] sm:$0xff]
        %v2223 = vld [vmem:[%s218 + $0x1d08] sm:$0xff]
        %v2224 = vld [vmem:[%s218 + $0x1d10] sm:$0xff]
        %v2225 = vld [vmem:[%s218 + $0x1d18] sm:$0xff]
        %v2226 = vld [vmem:[%s218 + $0x1d20] sm:$0xff]
        %v2227 = vld [vmem:[%s218 + $0x1d28] sm:$0xff]
        %v2228 = vld [vmem:[%s218 + $0x1d30] sm:$0xff]
        %v2229 = vld [vmem:[%s218 + $0x1d38] sm:$0xff]
        %v2230 = vld [vmem:[%s218 + $0x1d40] sm:$0xff]
        %v2231 = vld [vmem:[%s218 + $0x1d48] sm:$0xff]
        %v2232 = vld [vmem:[%s218 + $0x1d50] sm:$0xff]
        %v2233 = vld [vmem:[%s218 + $0x1d58] sm:$0xff]
        %v2234 = vld [vmem:[%s218 + $0x1d60] sm:$0xff]
        %v2235 = vld [vmem:[%s218 + $0x1d68] sm:$0xff]
        %v2236 = vld [vmem:[%s218 + $0x1d70] sm:$0xff]
        %v2237 = vld [vmem:[%s218 + $0x1d78] sm:$0xff]
        %v2238 = vld [vmem:[%s218 + $0x1d80] sm:$0xff]
        %v2239 = vld [vmem:[%s218 + $0x1d88] sm:$0xff]
        %v2240 = vld [vmem:[%s218 + $0x1d90] sm:$0xff]
        %v2241 = vld [vmem:[%s218 + $0x1d98] sm:$0xff]
        %v2242 = vld [vmem:[%s218 + $0x1da0] sm:$0xff]
        %v2243 = vld [vmem:[%s218 + $0x1da8] sm:$0xff]
        %v2244 = vld [vmem:[%s218 + $0x1db0] sm:$0xff]
        %v2245 = vld [vmem:[%s218 + $0x1db8] sm:$0xff]
        %v2246 = vld [vmem:[%s218 + $0x1dc0] sm:$0xff]
        %v2247 = vld [vmem:[%s218 + $0x1dc8] sm:$0xff]
        %v2248 = vld [vmem:[%s218 + $0x1dd0] sm:$0xff]
        %v2249 = vld [vmem:[%s218 + $0x1dd8] sm:$0xff]
        %v2250 = vld [vmem:[%s218 + $0x1de0] sm:$0xff]
        %v2251 = vld [vmem:[%s218 + $0x1de8] sm:$0xff]
        %v2252 = vld [vmem:[%s218 + $0x1df0] sm:$0xff]
        %v2253 = vld [vmem:[%s218 + $0x1df8] sm:$0xff]
        %v2254 = vld [vmem:[%s218 + $0x1e00] sm:$0xff]
        %v2255 = vld [vmem:[%s218 + $0x1e08] sm:$0xff]
        %v2256 = vld [vmem:[%s218 + $0x1e10] sm:$0xff]
        %v2257 = vld [vmem:[%s218 + $0x1e18] sm:$0xff]
        %v2258 = vld [vmem:[%s218 + $0x1e20] sm:$0xff]
        %v2259 = vld [vmem:[%s218 + $0x1e28] sm:$0xff]
        %v2260 = vld [vmem:[%s218 + $0x1e30] sm:$0xff]
        %v2261 = vld [vmem:[%s218 + $0x1e38] sm:$0xff]
        %v2262 = vld [vmem:[%s218 + $0x1e40] sm:$0xff]
        %v2263 = vld [vmem:[%s218 + $0x1e48] sm:$0xff]
        %v2264 = vld [vmem:[%s218 + $0x1e50] sm:$0xff]
        %v2265 = vld [vmem:[%s218 + $0x1e58] sm:$0xff]
        %v2266 = vld [vmem:[%s218 + $0x1e60] sm:$0xff]
        %v2267 = vld [vmem:[%s218 + $0x1e68] sm:$0xff]
        %v2268 = vld [vmem:[%s218 + $0x1e70] sm:$0xff]
        %v2269 = vld [vmem:[%s218 + $0x1e78] sm:$0xff]
        %v2270 = vld [vmem:[%s218 + $0x1e80] sm:$0xff]
        %v2271 = vld [vmem:[%s218 + $0x1e88] sm:$0xff]
        %v2272 = vld [vmem:[%s218 + $0x1e90] sm:$0xff]
        %v2273 = vld [vmem:[%s218 + $0x1e98] sm:$0xff]
        %v2274 = vld [vmem:[%s218 + $0x1ea0] sm:$0xff]
        %v2275 = vld [vmem:[%s218 + $0x1ea8] sm:$0xff]
        %v2276 = vld [vmem:[%s218 + $0x1eb0] sm:$0xff]
        %v2277 = vld [vmem:[%s218 + $0x1eb8] sm:$0xff]
        %v2278 = vld [vmem:[%s218 + $0x1ec0] sm:$0xff]
        %v2279 = vld [vmem:[%s218 + $0x1ec8] sm:$0xff]
        %v2280 = vld [vmem:[%s218 + $0x1ed0] sm:$0xff]
        %v2281 = vld [vmem:[%s218 + $0x1ed8] sm:$0xff]
        %v2282 = vld [vmem:[%s218 + $0x1ee0] sm:$0xff]
        %v2283 = vld [vmem:[%s218 + $0x1ee8] sm:$0xff]
        %v2284 = vld [vmem:[%s218 + $0x1ef0] sm:$0xff]
        %v2285 = vld [vmem:[%s218 + $0x1ef8] sm:$0xff]
        %v2286 = vld [vmem:[%s218 + $0x1f00] sm:$0xff]
        %v2287 = vld [vmem:[%s218 + $0x1f08] sm:$0xff]
        %v2288 = vld [vmem:[%s218 + $0x1f10] sm:$0xff]
        %v2289 = vld [vmem:[%s218 + $0x1f18] sm:$0xff]
        %v2290 = vld [vmem:[%s218 + $0x1f20] sm:$0xff]
        %v2291 = vld [vmem:[%s218 + $0x1f28] sm:$0xff]
        %v2292 = vld [vmem:[%s218 + $0x1f30] sm:$0xff]
        %v2293 = vld [vmem:[%s218 + $0x1f38] sm:$0xff]
        %v2294 = vld [vmem:[%s218 + $0x1f40] sm:$0xff]
        %v2295 = vld [vmem:[%s218 + $0x1f48] sm:$0xff]
        %v2296 = vld [vmem:[%s218 + $0x1f50] sm:$0xff]
        %v2297 = vld [vmem:[%s218 + $0x1f58] sm:$0xff]
        %v2298 = vld [vmem:[%s218 + $0x1f60] sm:$0xff]
        %v2299 = vld [vmem:[%s218 + $0x1f68] sm:$0xff]
        %v2300 = vld [vmem:[%s218 + $0x1f70] sm:$0xff]
        %v2301 = vld [vmem:[%s218 + $0x1f78] sm:$0xff]
        %v2302 = vld [vmem:[%s218 + $0x1f80] sm:$0xff]
        %v2303 = vld [vmem:[%s218 + $0x1f88] sm:$0xff]
        %v2304 = vld [vmem:[%s218 + $0x1f90] sm:$0xff]
        %v2305 = vld [vmem:[%s218 + $0x1f98] sm:$0xff]
        %v2306 = vld [vmem:[%s218 + $0x1fa0] sm:$0xff]
        %v2307 = vld [vmem:[%s218 + $0x1fa8] sm:$0xff]
        %v2308 = vld [vmem:[%s218 + $0x1fb0] sm:$0xff]
        %v2309 = vld [vmem:[%s218 + $0x1fb8] sm:$0xff]
        %v2310 = vld [vmem:[%s218 + $0x1fc0] sm:$0xff]
        %v2311 = vld [vmem:[%s218 + $0x1fc8] sm:$0xff]
        %v2312 = vld [vmem:[%s218 + $0x1fd0] sm:$0xff]
        %v2313 = vld [vmem:[%s218 + $0x1fd8] sm:$0xff]
        %v2314 = vld [vmem:[%s218 + $0x1fe0] sm:$0xff]
        %v2315 = vld [vmem:[%s218 + $0x1fe8] sm:$0xff]
        %v2316 = vld [vmem:[%s218 + $0x1ff0] sm:$0xff]
        %v2317 = vld [vmem:[%s218 + $0x1ff8] sm:$0xff]
        %v2318 = vsub.f32 %v270, %v1294
        %v2319 = vsub.f32 %v271, %v1295
        %v2320 = vsub.f32 %v272, %v1296
        %v2321 = vsub.f32 %v273, %v1297
        %v2322 = vsub.f32 %v274, %v1298
        %v2323 = vsub.f32 %v275, %v1299
        %v2324 = vsub.f32 %v276, %v1300
        %v2325 = vsub.f32 %v277, %v1301
        %v2326 = vsub.f32 %v278, %v1302
        %v2327 = vsub.f32 %v279, %v1303
        %v2328 = vsub.f32 %v280, %v1304
        %v2329 = vsub.f32 %v281, %v1305
        %v2330 = vsub.f32 %v282, %v1306
        %v2331 = vsub.f32 %v283, %v1307
        %v2332 = vsub.f32 %v284, %v1308
        %v2333 = vsub.f32 %v285, %v1309
        %v2334 = vsub.f32 %v286, %v1310
        %v2335 = vsub.f32 %v287, %v1311
        %v2336 = vsub.f32 %v288, %v1312
        %v2337 = vsub.f32 %v289, %v1313
        %v2338 = vsub.f32 %v290, %v1314
        %v2339 = vsub.f32 %v291, %v1315
        %v2340 = vsub.f32 %v292, %v1316
        %v2341 = vsub.f32 %v293, %v1317
        %v2342 = vsub.f32 %v294, %v1318
        %v2343 = vsub.f32 %v295, %v1319
        %v2344 = vsub.f32 %v296, %v1320
        %v2345 = vsub.f32 %v297, %v1321
        %v2346 = vsub.f32 %v298, %v1322
        %v2347 = vsub.f32 %v299, %v1323
        %v2348 = vsub.f32 %v300, %v1324
        %v2349 = vsub.f32 %v301, %v1325
        %v2350 = vsub.f32 %v302, %v1326
        %v2351 = vsub.f32 %v303, %v1327
        %v2352 = vsub.f32 %v304, %v1328
        %v2353 = vsub.f32 %v305, %v1329
        %v2354 = vsub.f32 %v306, %v1330
        %v2355 = vsub.f32 %v307, %v1331
        %v2356 = vsub.f32 %v308, %v1332
        %v2357 = vsub.f32 %v309, %v1333
        %v2358 = vsub.f32 %v310, %v1334
        %v2359 = vsub.f32 %v311, %v1335
        %v2360 = vsub.f32 %v312, %v1336
        %v2361 = vsub.f32 %v313, %v1337
        %v2362 = vsub.f32 %v314, %v1338
        %v2363 = vsub.f32 %v315, %v1339
        %v2364 = vsub.f32 %v316, %v1340
        %v2365 = vsub.f32 %v317, %v1341
        %v2366 = vsub.f32 %v318, %v1342
        %v2367 = vsub.f32 %v319, %v1343
        %v2368 = vsub.f32 %v320, %v1344
        %v2369 = vsub.f32 %v321, %v1345
        %v2370 = vsub.f32 %v322, %v1346
        %v2371 = vsub.f32 %v323, %v1347
        %v2372 = vsub.f32 %v324, %v1348
        %v2373 = vsub.f32 %v325, %v1349
        %v2374 = vsub.f32 %v326, %v1350
        %v2375 = vsub.f32 %v327, %v1351
        %v2376 = vsub.f32 %v328, %v1352
        %v2377 = vsub.f32 %v329, %v1353
        %v2378 = vsub.f32 %v330, %v1354
        %v2379 = vsub.f32 %v331, %v1355
        %v2380 = vsub.f32 %v332, %v1356
        %v2381 = vsub.f32 %v333, %v1357
        %v2382 = vsub.f32 %v334, %v1358
        %v2383 = vsub.f32 %v335, %v1359
        %v2384 = vsub.f32 %v336, %v1360
        %v2385 = vsub.f32 %v337, %v1361
        %v2386 = vsub.f32 %v338, %v1362
        %v2387 = vsub.f32 %v339, %v1363
        %v2388 = vsub.f32 %v340, %v1364
        %v2389 = vsub.f32 %v341, %v1365
        %v2390 = vsub.f32 %v342, %v1366
        %v2391 = vsub.f32 %v343, %v1367
        %v2392 = vsub.f32 %v344, %v1368
        %v2393 = vsub.f32 %v345, %v1369
        %v2394 = vsub.f32 %v346, %v1370
        %v2395 = vsub.f32 %v347, %v1371
        %v2396 = vsub.f32 %v348, %v1372
        %v2397 = vsub.f32 %v349, %v1373
        %v2398 = vsub.f32 %v350, %v1374
        %v2399 = vsub.f32 %v351, %v1375
        %v2400 = vsub.f32 %v352, %v1376
        %v2401 = vsub.f32 %v353, %v1377
        %v2402 = vsub.f32 %v354, %v1378
        %v2403 = vsub.f32 %v355, %v1379
        %v2404 = vsub.f32 %v356, %v1380
        %v2405 = vsub.f32 %v357, %v1381
        %v2406 = vsub.f32 %v358, %v1382
        %v2407 = vsub.f32 %v359, %v1383
        %v2408 = vsub.f32 %v360, %v1384
        %v2409 = vsub.f32 %v361, %v1385
        %v2410 = vsub.f32 %v362, %v1386
        %v2411 = vsub.f32 %v363, %v1387
        %v2412 = vsub.f32 %v364, %v1388
        %v2413 = vsub.f32 %v365, %v1389
        %v2414 = vsub.f32 %v366, %v1390
        %v2415 = vsub.f32 %v367, %v1391
        %v2416 = vsub.f32 %v368, %v1392
        %v2417 = vsub.f32 %v369, %v1393
        %v2418 = vsub.f32 %v370, %v1394
        %v2419 = vsub.f32 %v371, %v1395
        %v2420 = vsub.f32 %v372, %v1396
        %v2421 = vsub.f32 %v373, %v1397
        %v2422 = vsub.f32 %v374, %v1398
        %v2423 = vsub.f32 %v375, %v1399
        %v2424 = vsub.f32 %v376, %v1400
        %v2425 = vsub.f32 %v377, %v1401
        %v2426 = vsub.f32 %v378, %v1402
        %v2427 = vsub.f32 %v379, %v1403
        %v2428 = vsub.f32 %v380, %v1404
        %v2429 = vsub.f32 %v381, %v1405
        %v2430 = vsub.f32 %v382, %v1406
        %v2431 = vsub.f32 %v383, %v1407
        %v2432 = vsub.f32 %v384, %v1408
        %v2433 = vsub.f32 %v385, %v1409
        %v2434 = vsub.f32 %v386, %v1410
        %v2435 = vsub.f32 %v387, %v1411
        %v2436 = vsub.f32 %v388, %v1412
        %v2437 = vsub.f32 %v389, %v1413
        %v2438 = vsub.f32 %v390, %v1414
        %v2439 = vsub.f32 %v391, %v1415
        %v2440 = vsub.f32 %v392, %v1416
        %v2441 = vsub.f32 %v393, %v1417
        %v2442 = vsub.f32 %v394, %v1418
        %v2443 = vsub.f32 %v395, %v1419
        %v2444 = vsub.f32 %v396, %v1420
        %v2445 = vsub.f32 %v397, %v1421
        %v2446 = vsub.f32 %v398, %v1422
        %v2447 = vsub.f32 %v399, %v1423
        %v2448 = vsub.f32 %v400, %v1424
        %v2449 = vsub.f32 %v401, %v1425
        %v2450 = vsub.f32 %v402, %v1426
        %v2451 = vsub.f32 %v403, %v1427
        %v2452 = vsub.f32 %v404, %v1428
        %v2453 = vsub.f32 %v405, %v1429
        %v2454 = vsub.f32 %v406, %v1430
        %v2455 = vsub.f32 %v407, %v1431
        %v2456 = vsub.f32 %v408, %v1432
        %v2457 = vsub.f32 %v409, %v1433
        %v2458 = vsub.f32 %v410, %v1434
        %v2459 = vsub.f32 %v411, %v1435
        %v2460 = vsub.f32 %v412, %v1436
        %v2461 = vsub.f32 %v413, %v1437
        %v2462 = vsub.f32 %v414, %v1438
        %v2463 = vsub.f32 %v415, %v1439
        %v2464 = vsub.f32 %v416, %v1440
        %v2465 = vsub.f32 %v417, %v1441
        %v2466 = vsub.f32 %v418, %v1442
        %v2467 = vsub.f32 %v419, %v1443
        %v2468 = vsub.f32 %v420, %v1444
        %v2469 = vsub.f32 %v421, %v1445
        %v2470 = vsub.f32 %v422, %v1446
        %v2471 = vsub.f32 %v423, %v1447
        %v2472 = vsub.f32 %v424, %v1448
        %v2473 = vsub.f32 %v425, %v1449
        %v2474 = vsub.f32 %v426, %v1450
        %v2475 = vsub.f32 %v427, %v1451
        %v2476 = vsub.f32 %v428, %v1452
        %v2477 = vsub.f32 %v429, %v1453
        %v2478 = vsub.f32 %v430, %v1454
        %v2479 = vsub.f32 %v431, %v1455
        %v2480 = vsub.f32 %v432, %v1456
        %v2481 = vsub.f32 %v433, %v1457
        %v2482 = vsub.f32 %v434, %v1458
        %v2483 = vsub.f32 %v435, %v1459
        %v2484 = vsub.f32 %v436, %v1460
        %v2485 = vsub.f32 %v437, %v1461
        %v2486 = vsub.f32 %v438, %v1462
        %v2487 = vsub.f32 %v439, %v1463
        %v2488 = vsub.f32 %v440, %v1464
        %v2489 = vsub.f32 %v441, %v1465
        %v2490 = vsub.f32 %v442, %v1466
        %v2491 = vsub.f32 %v443, %v1467
        %v2492 = vsub.f32 %v444, %v1468
        %v2493 = vsub.f32 %v445, %v1469
        %v2494 = vsub.f32 %v446, %v1470
        %v2495 = vsub.f32 %v447, %v1471
        %v2496 = vsub.f32 %v448, %v1472
        %v2497 = vsub.f32 %v449, %v1473
        %v2498 = vsub.f32 %v450, %v1474
        %v2499 = vsub.f32 %v451, %v1475
        %v2500 = vsub.f32 %v452, %v1476
        %v2501 = vsub.f32 %v453, %v1477
        %v2502 = vsub.f32 %v454, %v1478
        %v2503 = vsub.f32 %v455, %v1479
        %v2504 = vsub.f32 %v456, %v1480
        %v2505 = vsub.f32 %v457, %v1481
        %v2506 = vsub.f32 %v458, %v1482
        %v2507 = vsub.f32 %v459, %v1483
        %v2508 = vsub.f32 %v460, %v1484
        %v2509 = vsub.f32 %v461, %v1485
        %v2510 = vsub.f32 %v462, %v1486
        %v2511 = vsub.f32 %v463, %v1487
        %v2512 = vsub.f32 %v464, %v1488
        %v2513 = vsub.f32 %v465, %v1489
        %v2514 = vsub.f32 %v466, %v1490
        %v2515 = vsub.f32 %v467, %v1491
        %v2516 = vsub.f32 %v468, %v1492
        %v2517 = vsub.f32 %v469, %v1493
        %v2518 = vsub.f32 %v470, %v1494
        %v2519 = vsub.f32 %v471, %v1495
        %v2520 = vsub.f32 %v472, %v1496
        %v2521 = vsub.f32 %v473, %v1497
        %v2522 = vsub.f32 %v474, %v1498
        %v2523 = vsub.f32 %v475, %v1499
        %v2524 = vsub.f32 %v476, %v1500
        %v2525 = vsub.f32 %v477, %v1501
        %v2526 = vsub.f32 %v478, %v1502
        %v2527 = vsub.f32 %v479, %v1503
        %v2528 = vsub.f32 %v480, %v1504
        %v2529 = vsub.f32 %v481, %v1505
        %v2530 = vsub.f32 %v482, %v1506
        %v2531 = vsub.f32 %v483, %v1507
        %v2532 = vsub.f32 %v484, %v1508
        %v2533 = vsub.f32 %v485, %v1509
        %v2534 = vsub.f32 %v486, %v1510
        %v2535 = vsub.f32 %v487, %v1511
        %v2536 = vsub.f32 %v488, %v1512
        %v2537 = vsub.f32 %v489, %v1513
        %v2538 = vsub.f32 %v490, %v1514
        %v2539 = vsub.f32 %v491, %v1515
        %v2540 = vsub.f32 %v492, %v1516
        %v2541 = vsub.f32 %v493, %v1517
        %v2542 = vsub.f32 %v494, %v1518
        %v2543 = vsub.f32 %v495, %v1519
        %v2544 = vsub.f32 %v496, %v1520
        %v2545 = vsub.f32 %v497, %v1521
        %v2546 = vsub.f32 %v498, %v1522
        %v2547 = vsub.f32 %v499, %v1523
        %v2548 = vsub.f32 %v500, %v1524
        %v2549 = vsub.f32 %v501, %v1525
        %v2550 = vsub.f32 %v502, %v1526
        %v2551 = vsub.f32 %v503, %v1527
        %v2552 = vsub.f32 %v504, %v1528
        %v2553 = vsub.f32 %v505, %v1529
        %v2554 = vsub.f32 %v506, %v1530
        %v2555 = vsub.f32 %v507, %v1531
        %v2556 = vsub.f32 %v508, %v1532
        %v2557 = vsub.f32 %v509, %v1533
        %v2558 = vsub.f32 %v510, %v1534
        %v2559 = vsub.f32 %v511, %v1535
        %v2560 = vsub.f32 %v512, %v1536
        %v2561 = vsub.f32 %v513, %v1537
        %v2562 = vsub.f32 %v514, %v1538
        %v2563 = vsub.f32 %v515, %v1539
        %v2564 = vsub.f32 %v516, %v1540
        %v2565 = vsub.f32 %v517, %v1541
        %v2566 = vsub.f32 %v518, %v1542
        %v2567 = vsub.f32 %v519, %v1543
        %v2568 = vsub.f32 %v520, %v1544
        %v2569 = vsub.f32 %v521, %v1545
        %v2570 = vsub.f32 %v522, %v1546
        %v2571 = vsub.f32 %v523, %v1547
        %v2572 = vsub.f32 %v524, %v1548
        %v2573 = vsub.f32 %v525, %v1549
        %v2574 = vsub.f32 %v526, %v1550
        %v2575 = vsub.f32 %v527, %v1551
        %v2576 = vsub.f32 %v528, %v1552
        %v2577 = vsub.f32 %v529, %v1553
        %v2578 = vsub.f32 %v530, %v1554
        %v2579 = vsub.f32 %v531, %v1555
        %v2580 = vsub.f32 %v532, %v1556
        %v2581 = vsub.f32 %v533, %v1557
        %v2582 = vsub.f32 %v534, %v1558
        %v2583 = vsub.f32 %v535, %v1559
        %v2584 = vsub.f32 %v536, %v1560
        %v2585 = vsub.f32 %v537, %v1561
        %v2586 = vsub.f32 %v538, %v1562
        %v2587 = vsub.f32 %v539, %v1563
        %v2588 = vsub.f32 %v540, %v1564
        %v2589 = vsub.f32 %v541, %v1565
        %v2590 = vsub.f32 %v542, %v1566
        %v2591 = vsub.f32 %v543, %v1567
        %v2592 = vsub.f32 %v544, %v1568
        %v2593 = vsub.f32 %v545, %v1569
        %v2594 = vsub.f32 %v546, %v1570
        %v2595 = vsub.f32 %v547, %v1571
        %v2596 = vsub.f32 %v548, %v1572
        %v2597 = vsub.f32 %v549, %v1573
        %v2598 = vsub.f32 %v550, %v1574
        %v2599 = vsub.f32 %v551, %v1575
        %v2600 = vsub.f32 %v552, %v1576
        %v2601 = vsub.f32 %v553, %v1577
        %v2602 = vsub.f32 %v554, %v1578
        %v2603 = vsub.f32 %v555, %v1579
        %v2604 = vsub.f32 %v556, %v1580
        %v2605 = vsub.f32 %v557, %v1581
        %v2606 = vsub.f32 %v558, %v1582
        %v2607 = vsub.f32 %v559, %v1583
        %v2608 = vsub.f32 %v560, %v1584
        %v2609 = vsub.f32 %v561, %v1585
        %v2610 = vsub.f32 %v562, %v1586
        %v2611 = vsub.f32 %v563, %v1587
        %v2612 = vsub.f32 %v564, %v1588
        %v2613 = vsub.f32 %v565, %v1589
        %v2614 = vsub.f32 %v566, %v1590
        %v2615 = vsub.f32 %v567, %v1591
        %v2616 = vsub.f32 %v568, %v1592
        %v2617 = vsub.f32 %v569, %v1593
        %v2618 = vsub.f32 %v570, %v1594
        %v2619 = vsub.f32 %v571, %v1595
        %v2620 = vsub.f32 %v572, %v1596
        %v2621 = vsub.f32 %v573, %v1597
        %v2622 = vsub.f32 %v574, %v1598
        %v2623 = vsub.f32 %v575, %v1599
        %v2624 = vsub.f32 %v576, %v1600
        %v2625 = vsub.f32 %v577, %v1601
        %v2626 = vsub.f32 %v578, %v1602
        %v2627 = vsub.f32 %v579, %v1603
        %v2628 = vsub.f32 %v580, %v1604
        %v2629 = vsub.f32 %v581, %v1605
        %v2630 = vsub.f32 %v582, %v1606
        %v2631 = vsub.f32 %v583, %v1607
        %v2632 = vsub.f32 %v584, %v1608
        %v2633 = vsub.f32 %v585, %v1609
        %v2634 = vsub.f32 %v586, %v1610
        %v2635 = vsub.f32 %v587, %v1611
        %v2636 = vsub.f32 %v588, %v1612
        %v2637 = vsub.f32 %v589, %v1613
        %v2638 = vsub.f32 %v590, %v1614
        %v2639 = vsub.f32 %v591, %v1615
        %v2640 = vsub.f32 %v592, %v1616
        %v2641 = vsub.f32 %v593, %v1617
        %v2642 = vsub.f32 %v594, %v1618
        %v2643 = vsub.f32 %v595, %v1619
        %v2644 = vsub.f32 %v596, %v1620
        %v2645 = vsub.f32 %v597, %v1621
        %v2646 = vsub.f32 %v598, %v1622
        %v2647 = vsub.f32 %v599, %v1623
        %v2648 = vsub.f32 %v600, %v1624
        %v2649 = vsub.f32 %v601, %v1625
        %v2650 = vsub.f32 %v602, %v1626
        %v2651 = vsub.f32 %v603, %v1627
        %v2652 = vsub.f32 %v604, %v1628
        %v2653 = vsub.f32 %v605, %v1629
        %v2654 = vsub.f32 %v606, %v1630
        %v2655 = vsub.f32 %v607, %v1631
        %v2656 = vsub.f32 %v608, %v1632
        %v2657 = vsub.f32 %v609, %v1633
        %v2658 = vsub.f32 %v610, %v1634
        %v2659 = vsub.f32 %v611, %v1635
        %v2660 = vsub.f32 %v612, %v1636
        %v2661 = vsub.f32 %v613, %v1637
        %v2662 = vsub.f32 %v614, %v1638
        %v2663 = vsub.f32 %v615, %v1639
        %v2664 = vsub.f32 %v616, %v1640
        %v2665 = vsub.f32 %v617, %v1641
        %v2666 = vsub.f32 %v618, %v1642
        %v2667 = vsub.f32 %v619, %v1643
        %v2668 = vsub.f32 %v620, %v1644
        %v2669 = vsub.f32 %v621, %v1645
        %v2670 = vsub.f32 %v622, %v1646
        %v2671 = vsub.f32 %v623, %v1647
        %v2672 = vsub.f32 %v624, %v1648
        %v2673 = vsub.f32 %v625, %v1649
        %v2674 = vsub.f32 %v626, %v1650
        %v2675 = vsub.f32 %v627, %v1651
        %v2676 = vsub.f32 %v628, %v1652
        %v2677 = vsub.f32 %v629, %v1653
        %v2678 = vsub.f32 %v630, %v1654
        %v2679 = vsub.f32 %v631, %v1655
        %v2680 = vsub.f32 %v632, %v1656
        %v2681 = vsub.f32 %v633, %v1657
        %v2682 = vsub.f32 %v634, %v1658
        %v2683 = vsub.f32 %v635, %v1659
        %v2684 = vsub.f32 %v636, %v1660
        %v2685 = vsub.f32 %v637, %v1661
        %v2686 = vsub.f32 %v638, %v1662
        %v2687 = vsub.f32 %v639, %v1663
        %v2688 = vsub.f32 %v640, %v1664
        %v2689 = vsub.f32 %v641, %v1665
        %v2690 = vsub.f32 %v642, %v1666
        %v2691 = vsub.f32 %v643, %v1667
        %v2692 = vsub.f32 %v644, %v1668
        %v2693 = vsub.f32 %v645, %v1669
        %v2694 = vsub.f32 %v646, %v1670
        %v2695 = vsub.f32 %v647, %v1671
        %v2696 = vsub.f32 %v648, %v1672
        %v2697 = vsub.f32 %v649, %v1673
        %v2698 = vsub.f32 %v650, %v1674
        %v2699 = vsub.f32 %v651, %v1675
        %v2700 = vsub.f32 %v652, %v1676
        %v2701 = vsub.f32 %v653, %v1677
        %v2702 = vsub.f32 %v654, %v1678
        %v2703 = vsub.f32 %v655, %v1679
        %v2704 = vsub.f32 %v656, %v1680
        %v2705 = vsub.f32 %v657, %v1681
        %v2706 = vsub.f32 %v658, %v1682
        %v2707 = vsub.f32 %v659, %v1683
        %v2708 = vsub.f32 %v660, %v1684
        %v2709 = vsub.f32 %v661, %v1685
        %v2710 = vsub.f32 %v662, %v1686
        %v2711 = vsub.f32 %v663, %v1687
        %v2712 = vsub.f32 %v664, %v1688
        %v2713 = vsub.f32 %v665, %v1689
        %v2714 = vsub.f32 %v666, %v1690
        %v2715 = vsub.f32 %v667, %v1691
        %v2716 = vsub.f32 %v668, %v1692
        %v2717 = vsub.f32 %v669, %v1693
        %v2718 = vsub.f32 %v670, %v1694
        %v2719 = vsub.f32 %v671, %v1695
        %v2720 = vsub.f32 %v672, %v1696
        %v2721 = vsub.f32 %v673, %v1697
        %v2722 = vsub.f32 %v674, %v1698
        %v2723 = vsub.f32 %v675, %v1699
        %v2724 = vsub.f32 %v676, %v1700
        %v2725 = vsub.f32 %v677, %v1701
        %v2726 = vsub.f32 %v678, %v1702
        %v2727 = vsub.f32 %v679, %v1703
        %v2728 = vsub.f32 %v680, %v1704
        %v2729 = vsub.f32 %v681, %v1705
        %v2730 = vsub.f32 %v682, %v1706
        %v2731 = vsub.f32 %v683, %v1707
        %v2732 = vsub.f32 %v684, %v1708
        %v2733 = vsub.f32 %v685, %v1709
        %v2734 = vsub.f32 %v686, %v1710
        %v2735 = vsub.f32 %v687, %v1711
        %v2736 = vsub.f32 %v688, %v1712
        %v2737 = vsub.f32 %v689, %v1713
        %v2738 = vsub.f32 %v690, %v1714
        %v2739 = vsub.f32 %v691, %v1715
        %v2740 = vsub.f32 %v692, %v1716
        %v2741 = vsub.f32 %v693, %v1717
        %v2742 = vsub.f32 %v694, %v1718
        %v2743 = vsub.f32 %v695, %v1719
        %v2744 = vsub.f32 %v696, %v1720
        %v2745 = vsub.f32 %v697, %v1721
        %v2746 = vsub.f32 %v698, %v1722
        %v2747 = vsub.f32 %v699, %v1723
        %v2748 = vsub.f32 %v700, %v1724
        %v2749 = vsub.f32 %v701, %v1725
        %v2750 = vsub.f32 %v702, %v1726
        %v2751 = vsub.f32 %v703, %v1727
        %v2752 = vsub.f32 %v704, %v1728
        %v2753 = vsub.f32 %v705, %v1729
        %v2754 = vsub.f32 %v706, %v1730
        %v2755 = vsub.f32 %v707, %v1731
        %v2756 = vsub.f32 %v708, %v1732
        %v2757 = vsub.f32 %v709, %v1733
        %v2758 = vsub.f32 %v710, %v1734
        %v2759 = vsub.f32 %v711, %v1735
        %v2760 = vsub.f32 %v712, %v1736
        %v2761 = vsub.f32 %v713, %v1737
        %v2762 = vsub.f32 %v714, %v1738
        %v2763 = vsub.f32 %v715, %v1739
        %v2764 = vsub.f32 %v716, %v1740
        %v2765 = vsub.f32 %v717, %v1741
        %v2766 = vsub.f32 %v718, %v1742
        %v2767 = vsub.f32 %v719, %v1743
        %v2768 = vsub.f32 %v720, %v1744
        %v2769 = vsub.f32 %v721, %v1745
        %v2770 = vsub.f32 %v722, %v1746
        %v2771 = vsub.f32 %v723, %v1747
        %v2772 = vsub.f32 %v724, %v1748
        %v2773 = vsub.f32 %v725, %v1749
        %v2774 = vsub.f32 %v726, %v1750
        %v2775 = vsub.f32 %v727, %v1751
        %v2776 = vsub.f32 %v728, %v1752
        %v2777 = vsub.f32 %v729, %v1753
        %v2778 = vsub.f32 %v730, %v1754
        %v2779 = vsub.f32 %v731, %v1755
        %v2780 = vsub.f32 %v732, %v1756
        %v2781 = vsub.f32 %v733, %v1757
        %v2782 = vsub.f32 %v734, %v1758
        %v2783 = vsub.f32 %v735, %v1759
        %v2784 = vsub.f32 %v736, %v1760
        %v2785 = vsub.f32 %v737, %v1761
        %v2786 = vsub.f32 %v738, %v1762
        %v2787 = vsub.f32 %v739, %v1763
        %v2788 = vsub.f32 %v740, %v1764
        %v2789 = vsub.f32 %v741, %v1765
        %v2790 = vsub.f32 %v742, %v1766
        %v2791 = vsub.f32 %v743, %v1767
        %v2792 = vsub.f32 %v744, %v1768
        %v2793 = vsub.f32 %v745, %v1769
        %v2794 = vsub.f32 %v746, %v1770
        %v2795 = vsub.f32 %v747, %v1771
        %v2796 = vsub.f32 %v748, %v1772
        %v2797 = vsub.f32 %v749, %v1773
        %v2798 = vsub.f32 %v750, %v1774
        %v2799 = vsub.f32 %v751, %v1775
        %v2800 = vsub.f32 %v752, %v1776
        %v2801 = vsub.f32 %v753, %v1777
        %v2802 = vsub.f32 %v754, %v1778
        %v2803 = vsub.f32 %v755, %v1779
        %v2804 = vsub.f32 %v756, %v1780
        %v2805 = vsub.f32 %v757, %v1781
        %v2806 = vsub.f32 %v758, %v1782
        %v2807 = vsub.f32 %v759, %v1783
        %v2808 = vsub.f32 %v760, %v1784
        %v2809 = vsub.f32 %v761, %v1785
        %v2810 = vsub.f32 %v762, %v1786
        %v2811 = vsub.f32 %v763, %v1787
        %v2812 = vsub.f32 %v764, %v1788
        %v2813 = vsub.f32 %v765, %v1789
        %v2814 = vsub.f32 %v766, %v1790
        %v2815 = vsub.f32 %v767, %v1791
        %v2816 = vsub.f32 %v768, %v1792
        %v2817 = vsub.f32 %v769, %v1793
        %v2818 = vsub.f32 %v770, %v1794
        %v2819 = vsub.f32 %v771, %v1795
        %v2820 = vsub.f32 %v772, %v1796
        %v2821 = vsub.f32 %v773, %v1797
        %v2822 = vsub.f32 %v774, %v1798
        %v2823 = vsub.f32 %v775, %v1799
        %v2824 = vsub.f32 %v776, %v1800
        %v2825 = vsub.f32 %v777, %v1801
        %v2826 = vsub.f32 %v778, %v1802
        %v2827 = vsub.f32 %v779, %v1803
        %v2828 = vsub.f32 %v780, %v1804
        %v2829 = vsub.f32 %v781, %v1805
        %v2830 = vsub.f32 %v782, %v1806
        %v2831 = vsub.f32 %v783, %v1807
        %v2832 = vsub.f32 %v784, %v1808
        %v2833 = vsub.f32 %v785, %v1809
        %v2834 = vsub.f32 %v786, %v1810
        %v2835 = vsub.f32 %v787, %v1811
        %v2836 = vsub.f32 %v788, %v1812
        %v2837 = vsub.f32 %v789, %v1813
        %v2838 = vsub.f32 %v790, %v1814
        %v2839 = vsub.f32 %v791, %v1815
        %v2840 = vsub.f32 %v792, %v1816
        %v2841 = vsub.f32 %v793, %v1817
        %v2842 = vsub.f32 %v794, %v1818
        %v2843 = vsub.f32 %v795, %v1819
        %v2844 = vsub.f32 %v796, %v1820
        %v2845 = vsub.f32 %v797, %v1821
        %v2846 = vsub.f32 %v798, %v1822
        %v2847 = vsub.f32 %v799, %v1823
        %v2848 = vsub.f32 %v800, %v1824
        %v2849 = vsub.f32 %v801, %v1825
        %v2850 = vsub.f32 %v802, %v1826
        %v2851 = vsub.f32 %v803, %v1827
        %v2852 = vsub.f32 %v804, %v1828
        %v2853 = vsub.f32 %v805, %v1829
        %v2854 = vsub.f32 %v806, %v1830
        %v2855 = vsub.f32 %v807, %v1831
        %v2856 = vsub.f32 %v808, %v1832
        %v2857 = vsub.f32 %v809, %v1833
        %v2858 = vsub.f32 %v810, %v1834
        %v2859 = vsub.f32 %v811, %v1835
        %v2860 = vsub.f32 %v812, %v1836
        %v2861 = vsub.f32 %v813, %v1837
        %v2862 = vsub.f32 %v814, %v1838
        %v2863 = vsub.f32 %v815, %v1839
        %v2864 = vsub.f32 %v816, %v1840
        %v2865 = vsub.f32 %v817, %v1841
        %v2866 = vsub.f32 %v818, %v1842
        %v2867 = vsub.f32 %v819, %v1843
        %v2868 = vsub.f32 %v820, %v1844
        %v2869 = vsub.f32 %v821, %v1845
        %v2870 = vsub.f32 %v822, %v1846
        %v2871 = vsub.f32 %v823, %v1847
        %v2872 = vsub.f32 %v824, %v1848
        %v2873 = vsub.f32 %v825, %v1849
        %v2874 = vsub.f32 %v826, %v1850
        %v2875 = vsub.f32 %v827, %v1851
        %v2876 = vsub.f32 %v828, %v1852
        %v2877 = vsub.f32 %v829, %v1853
        %v2878 = vsub.f32 %v830, %v1854
        %v2879 = vsub.f32 %v831, %v1855
        %v2880 = vsub.f32 %v832, %v1856
        %v2881 = vsub.f32 %v833, %v1857
        %v2882 = vsub.f32 %v834, %v1858
        %v2883 = vsub.f32 %v835, %v1859
        %v2884 = vsub.f32 %v836, %v1860
        %v2885 = vsub.f32 %v837, %v1861
        %v2886 = vsub.f32 %v838, %v1862
        %v2887 = vsub.f32 %v839, %v1863
        %v2888 = vsub.f32 %v840, %v1864
        %v2889 = vsub.f32 %v841, %v1865
        %v2890 = vsub.f32 %v842, %v1866
        %v2891 = vsub.f32 %v843, %v1867
        %v2892 = vsub.f32 %v844, %v1868
        %v2893 = vsub.f32 %v845, %v1869
        %v2894 = vsub.f32 %v846, %v1870
        %v2895 = vsub.f32 %v847, %v1871
        %v2896 = vsub.f32 %v848, %v1872
        %v2897 = vsub.f32 %v849, %v1873
        %v2898 = vsub.f32 %v850, %v1874
        %v2899 = vsub.f32 %v851, %v1875
        %v2900 = vsub.f32 %v852, %v1876
        %v2901 = vsub.f32 %v853, %v1877
        %v2902 = vsub.f32 %v854, %v1878
        %v2903 = vsub.f32 %v855, %v1879
        %v2904 = vsub.f32 %v856, %v1880
        %v2905 = vsub.f32 %v857, %v1881
        %v2906 = vsub.f32 %v858, %v1882
        %v2907 = vsub.f32 %v859, %v1883
        %v2908 = vsub.f32 %v860, %v1884
        %v2909 = vsub.f32 %v861, %v1885
        %v2910 = vsub.f32 %v862, %v1886
        %v2911 = vsub.f32 %v863, %v1887
        %v2912 = vsub.f32 %v864, %v1888
        %v2913 = vsub.f32 %v865, %v1889
        %v2914 = vsub.f32 %v866, %v1890
        %v2915 = vsub.f32 %v867, %v1891
        %v2916 = vsub.f32 %v868, %v1892
        %v2917 = vsub.f32 %v869, %v1893
        %v2918 = vsub.f32 %v870, %v1894
        %v2919 = vsub.f32 %v871, %v1895
        %v2920 = vsub.f32 %v872, %v1896
        %v2921 = vsub.f32 %v873, %v1897
        %v2922 = vsub.f32 %v874, %v1898
        %v2923 = vsub.f32 %v875, %v1899
        %v2924 = vsub.f32 %v876, %v1900
        %v2925 = vsub.f32 %v877, %v1901
        %v2926 = vsub.f32 %v878, %v1902
        %v2927 = vsub.f32 %v879, %v1903
        %v2928 = vsub.f32 %v880, %v1904
        %v2929 = vsub.f32 %v881, %v1905
        %v2930 = vsub.f32 %v882, %v1906
        %v2931 = vsub.f32 %v883, %v1907
        %v2932 = vsub.f32 %v884, %v1908
        %v2933 = vsub.f32 %v885, %v1909
        %v2934 = vsub.f32 %v886, %v1910
        %v2935 = vsub.f32 %v887, %v1911
        %v2936 = vsub.f32 %v888, %v1912
        %v2937 = vsub.f32 %v889, %v1913
        %v2938 = vsub.f32 %v890, %v1914
        %v2939 = vsub.f32 %v891, %v1915
        %v2940 = vsub.f32 %v892, %v1916
        %v2941 = vsub.f32 %v893, %v1917
        %v2942 = vsub.f32 %v894, %v1918
        %v2943 = vsub.f32 %v895, %v1919
        %v2944 = vsub.f32 %v896, %v1920
        %v2945 = vsub.f32 %v897, %v1921
        %v2946 = vsub.f32 %v898, %v1922
        %v2947 = vsub.f32 %v899, %v1923
        %v2948 = vsub.f32 %v900, %v1924
        %v2949 = vsub.f32 %v901, %v1925
        %v2950 = vsub.f32 %v902, %v1926
        %v2951 = vsub.f32 %v903, %v1927
        %v2952 = vsub.f32 %v904, %v1928
        %v2953 = vsub.f32 %v905, %v1929
        %v2954 = vsub.f32 %v906, %v1930
        %v2955 = vsub.f32 %v907, %v1931
        %v2956 = vsub.f32 %v908, %v1932
        %v2957 = vsub.f32 %v909, %v1933
        %v2958 = vsub.f32 %v910, %v1934
        %v2959 = vsub.f32 %v911, %v1935
        %v2960 = vsub.f32 %v912, %v1936
        %v2961 = vsub.f32 %v913, %v1937
        %v2962 = vsub.f32 %v914, %v1938
        %v2963 = vsub.f32 %v915, %v1939
        %v2964 = vsub.f32 %v916, %v1940
        %v2965 = vsub.f32 %v917, %v1941
        %v2966 = vsub.f32 %v918, %v1942
        %v2967 = vsub.f32 %v919, %v1943
        %v2968 = vsub.f32 %v920, %v1944
        %v2969 = vsub.f32 %v921, %v1945
        %v2970 = vsub.f32 %v922, %v1946
        %v2971 = vsub.f32 %v923, %v1947
        %v2972 = vsub.f32 %v924, %v1948
        %v2973 = vsub.f32 %v925, %v1949
        %v2974 = vsub.f32 %v926, %v1950
        %v2975 = vsub.f32 %v927, %v1951
        %v2976 = vsub.f32 %v928, %v1952
        %v2977 = vsub.f32 %v929, %v1953
        %v2978 = vsub.f32 %v930, %v1954
        %v2979 = vsub.f32 %v931, %v1955
        %v2980 = vsub.f32 %v932, %v1956
        %v2981 = vsub.f32 %v933, %v1957
        %v2982 = vsub.f32 %v934, %v1958
        %v2983 = vsub.f32 %v935, %v1959
        %v2984 = vsub.f32 %v936, %v1960
        %v2985 = vsub.f32 %v937, %v1961
        %v2986 = vsub.f32 %v938, %v1962
        %v2987 = vsub.f32 %v939, %v1963
        %v2988 = vsub.f32 %v940, %v1964
        %v2989 = vsub.f32 %v941, %v1965
        %v2990 = vsub.f32 %v942, %v1966
        %v2991 = vsub.f32 %v943, %v1967
        %v2992 = vsub.f32 %v944, %v1968
        %v2993 = vsub.f32 %v945, %v1969
        %v2994 = vsub.f32 %v946, %v1970
        %v2995 = vsub.f32 %v947, %v1971
        %v2996 = vsub.f32 %v948, %v1972
        %v2997 = vsub.f32 %v949, %v1973
        %v2998 = vsub.f32 %v950, %v1974
        %v2999 = vsub.f32 %v951, %v1975
        %v3000 = vsub.f32 %v952, %v1976
        %v3001 = vsub.f32 %v953, %v1977
        %v3002 = vsub.f32 %v954, %v1978
        %v3003 = vsub.f32 %v955, %v1979
        %v3004 = vsub.f32 %v956, %v1980
        %v3005 = vsub.f32 %v957, %v1981
        %v3006 = vsub.f32 %v958, %v1982
        %v3007 = vsub.f32 %v959, %v1983
        %v3008 = vsub.f32 %v960, %v1984
        %v3009 = vsub.f32 %v961, %v1985
        %v3010 = vsub.f32 %v962, %v1986
        %v3011 = vsub.f32 %v963, %v1987
        %v3012 = vsub.f32 %v964, %v1988
        %v3013 = vsub.f32 %v965, %v1989
        %v3014 = vsub.f32 %v966, %v1990
        %v3015 = vsub.f32 %v967, %v1991
        %v3016 = vsub.f32 %v968, %v1992
        %v3017 = vsub.f32 %v969, %v1993
        %v3018 = vsub.f32 %v970, %v1994
        %v3019 = vsub.f32 %v971, %v1995
        %v3020 = vsub.f32 %v972, %v1996
        %v3021 = vsub.f32 %v973, %v1997
        %v3022 = vsub.f32 %v974, %v1998
        %v3023 = vsub.f32 %v975, %v1999
        %v3024 = vsub.f32 %v976, %v2000
        %v3025 = vsub.f32 %v977, %v2001
        %v3026 = vsub.f32 %v978, %v2002
        %v3027 = vsub.f32 %v979, %v2003
        %v3028 = vsub.f32 %v980, %v2004
        %v3029 = vsub.f32 %v981, %v2005
        %v3030 = vsub.f32 %v982, %v2006
        %v3031 = vsub.f32 %v983, %v2007
        %v3032 = vsub.f32 %v984, %v2008
        %v3033 = vsub.f32 %v985, %v2009
        %v3034 = vsub.f32 %v986, %v2010
        %v3035 = vsub.f32 %v987, %v2011
        %v3036 = vsub.f32 %v988, %v2012
        %v3037 = vsub.f32 %v989, %v2013
        %v3038 = vsub.f32 %v990, %v2014
        %v3039 = vsub.f32 %v991, %v2015
        %v3040 = vsub.f32 %v992, %v2016
        %v3041 = vsub.f32 %v993, %v2017
        %v3042 = vsub.f32 %v994, %v2018
        %v3043 = vsub.f32 %v995, %v2019
        %v3044 = vsub.f32 %v996, %v2020
        %v3045 = vsub.f32 %v997, %v2021
        %v3046 = vsub.f32 %v998, %v2022
        %v3047 = vsub.f32 %v999, %v2023
        %v3048 = vsub.f32 %v1000, %v2024
        %v3049 = vsub.f32 %v1001, %v2025
        %v3050 = vsub.f32 %v1002, %v2026
        %v3051 = vsub.f32 %v1003, %v2027
        %v3052 = vsub.f32 %v1004, %v2028
        %v3053 = vsub.f32 %v1005, %v2029
        %v3054 = vsub.f32 %v1006, %v2030
        %v3055 = vsub.f32 %v1007, %v2031
        %v3056 = vsub.f32 %v1008, %v2032
        %v3057 = vsub.f32 %v1009, %v2033
        %v3058 = vsub.f32 %v1010, %v2034
        %v3059 = vsub.f32 %v1011, %v2035
        %v3060 = vsub.f32 %v1012, %v2036
        %v3061 = vsub.f32 %v1013, %v2037
        %v3062 = vsub.f32 %v1014, %v2038
        %v3063 = vsub.f32 %v1015, %v2039
        %v3064 = vsub.f32 %v1016, %v2040
        %v3065 = vsub.f32 %v1017, %v2041
        %v3066 = vsub.f32 %v1018, %v2042
        %v3067 = vsub.f32 %v1019, %v2043
        %v3068 = vsub.f32 %v1020, %v2044
        %v3069 = vsub.f32 %v1021, %v2045
        %v3070 = vsub.f32 %v1022, %v2046
        %v3071 = vsub.f32 %v1023, %v2047
        %v3072 = vsub.f32 %v1024, %v2048
        %v3073 = vsub.f32 %v1025, %v2049
        %v3074 = vsub.f32 %v1026, %v2050
        %v3075 = vsub.f32 %v1027, %v2051
        %v3076 = vsub.f32 %v1028, %v2052
        %v3077 = vsub.f32 %v1029, %v2053
        %v3078 = vsub.f32 %v1030, %v2054
        %v3079 = vsub.f32 %v1031, %v2055
        %v3080 = vsub.f32 %v1032, %v2056
        %v3081 = vsub.f32 %v1033, %v2057
        %v3082 = vsub.f32 %v1034, %v2058
        %v3083 = vsub.f32 %v1035, %v2059
        %v3084 = vsub.f32 %v1036, %v2060
        %v3085 = vsub.f32 %v1037, %v2061
        %v3086 = vsub.f32 %v1038, %v2062
        %v3087 = vsub.f32 %v1039, %v2063
        %v3088 = vsub.f32 %v1040, %v2064
        %v3089 = vsub.f32 %v1041, %v2065
        %v3090 = vsub.f32 %v1042, %v2066
        %v3091 = vsub.f32 %v1043, %v2067
        %v3092 = vsub.f32 %v1044, %v2068
        %v3093 = vsub.f32 %v1045, %v2069
        %v3094 = vsub.f32 %v1046, %v2070
        %v3095 = vsub.f32 %v1047, %v2071
        %v3096 = vsub.f32 %v1048, %v2072
        %v3097 = vsub.f32 %v1049, %v2073
        %v3098 = vsub.f32 %v1050, %v2074
        %v3099 = vsub.f32 %v1051, %v2075
        %v3100 = vsub.f32 %v1052, %v2076
        %v3101 = vsub.f32 %v1053, %v2077
        %v3102 = vsub.f32 %v1054, %v2078
        %v3103 = vsub.f32 %v1055, %v2079
        %v3104 = vsub.f32 %v1056, %v2080
        %v3105 = vsub.f32 %v1057, %v2081
        %v3106 = vsub.f32 %v1058, %v2082
        %v3107 = vsub.f32 %v1059, %v2083
        %v3108 = vsub.f32 %v1060, %v2084
        %v3109 = vsub.f32 %v1061, %v2085
        %v3110 = vsub.f32 %v1062, %v2086
        %v3111 = vsub.f32 %v1063, %v2087
        %v3112 = vsub.f32 %v1064, %v2088
        %v3113 = vsub.f32 %v1065, %v2089
        %v3114 = vsub.f32 %v1066, %v2090
        %v3115 = vsub.f32 %v1067, %v2091
        %v3116 = vsub.f32 %v1068, %v2092
        %v3117 = vsub.f32 %v1069, %v2093
        %v3118 = vsub.f32 %v1070, %v2094
        %v3119 = vsub.f32 %v1071, %v2095
        %v3120 = vsub.f32 %v1072, %v2096
        %v3121 = vsub.f32 %v1073, %v2097
        %v3122 = vsub.f32 %v1074, %v2098
        %v3123 = vsub.f32 %v1075, %v2099
        %v3124 = vsub.f32 %v1076, %v2100
        %v3125 = vsub.f32 %v1077, %v2101
        %v3126 = vsub.f32 %v1078, %v2102
        %v3127 = vsub.f32 %v1079, %v2103
        %v3128 = vsub.f32 %v1080, %v2104
        %v3129 = vsub.f32 %v1081, %v2105
        %v3130 = vsub.f32 %v1082, %v2106
        %v3131 = vsub.f32 %v1083, %v2107
        %v3132 = vsub.f32 %v1084, %v2108
        %v3133 = vsub.f32 %v1085, %v2109
        %v3134 = vsub.f32 %v1086, %v2110
        %v3135 = vsub.f32 %v1087, %v2111
        %v3136 = vsub.f32 %v1088, %v2112
        %v3137 = vsub.f32 %v1089, %v2113
        %v3138 = vsub.f32 %v1090, %v2114
        %v3139 = vsub.f32 %v1091, %v2115
        %v3140 = vsub.f32 %v1092, %v2116
        %v3141 = vsub.f32 %v1093, %v2117
        %v3142 = vsub.f32 %v1094, %v2118
        %v3143 = vsub.f32 %v1095, %v2119
        %v3144 = vsub.f32 %v1096, %v2120
        %v3145 = vsub.f32 %v1097, %v2121
        %v3146 = vsub.f32 %v1098, %v2122
        %v3147 = vsub.f32 %v1099, %v2123
        %v3148 = vsub.f32 %v1100, %v2124
        %v3149 = vsub.f32 %v1101, %v2125
        %v3150 = vsub.f32 %v1102, %v2126
        %v3151 = vsub.f32 %v1103, %v2127
        %v3152 = vsub.f32 %v1104, %v2128
        %v3153 = vsub.f32 %v1105, %v2129
        %v3154 = vsub.f32 %v1106, %v2130
        %v3155 = vsub.f32 %v1107, %v2131
        %v3156 = vsub.f32 %v1108, %v2132
        %v3157 = vsub.f32 %v1109, %v2133
        %v3158 = vsub.f32 %v1110, %v2134
        %v3159 = vsub.f32 %v1111, %v2135
        %v3160 = vsub.f32 %v1112, %v2136
        %v3161 = vsub.f32 %v1113, %v2137
        %v3162 = vsub.f32 %v1114, %v2138
        %v3163 = vsub.f32 %v1115, %v2139
        %v3164 = vsub.f32 %v1116, %v2140
        %v3165 = vsub.f32 %v1117, %v2141
        %v3166 = vsub.f32 %v1118, %v2142
        %v3167 = vsub.f32 %v1119, %v2143
        %v3168 = vsub.f32 %v1120, %v2144
        %v3169 = vsub.f32 %v1121, %v2145
        %v3170 = vsub.f32 %v1122, %v2146
        %v3171 = vsub.f32 %v1123, %v2147
        %v3172 = vsub.f32 %v1124, %v2148
        %v3173 = vsub.f32 %v1125, %v2149
        %v3174 = vsub.f32 %v1126, %v2150
        %v3175 = vsub.f32 %v1127, %v2151
        %v3176 = vsub.f32 %v1128, %v2152
        %v3177 = vsub.f32 %v1129, %v2153
        %v3178 = vsub.f32 %v1130, %v2154
        %v3179 = vsub.f32 %v1131, %v2155
        %v3180 = vsub.f32 %v1132, %v2156
        %v3181 = vsub.f32 %v1133, %v2157
        %v3182 = vsub.f32 %v1134, %v2158
        %v3183 = vsub.f32 %v1135, %v2159
        %v3184 = vsub.f32 %v1136, %v2160
        %v3185 = vsub.f32 %v1137, %v2161
        %v3186 = vsub.f32 %v1138, %v2162
        %v3187 = vsub.f32 %v1139, %v2163
        %v3188 = vsub.f32 %v1140, %v2164
        %v3189 = vsub.f32 %v1141, %v2165
        %v3190 = vsub.f32 %v1142, %v2166
        %v3191 = vsub.f32 %v1143, %v2167
        %v3192 = vsub.f32 %v1144, %v2168
        %v3193 = vsub.f32 %v1145, %v2169
        %v3194 = vsub.f32 %v1146, %v2170
        %v3195 = vsub.f32 %v1147, %v2171
        %v3196 = vsub.f32 %v1148, %v2172
        %v3197 = vsub.f32 %v1149, %v2173
        %v3198 = vsub.f32 %v1150, %v2174
        %v3199 = vsub.f32 %v1151, %v2175
        %v3200 = vsub.f32 %v1152, %v2176
        %v3201 = vsub.f32 %v1153, %v2177
        %v3202 = vsub.f32 %v1154, %v2178
        %v3203 = vsub.f32 %v1155, %v2179
        %v3204 = vsub.f32 %v1156, %v2180
        %v3205 = vsub.f32 %v1157, %v2181
        %v3206 = vsub.f32 %v1158, %v2182
        %v3207 = vsub.f32 %v1159, %v2183
        %v3208 = vsub.f32 %v1160, %v2184
        %v3209 = vsub.f32 %v1161, %v2185
        %v3210 = vsub.f32 %v1162, %v2186
        %v3211 = vsub.f32 %v1163, %v2187
        %v3212 = vsub.f32 %v1164, %v2188
        %v3213 = vsub.f32 %v1165, %v2189
        %v3214 = vsub.f32 %v1166, %v2190
        %v3215 = vsub.f32 %v1167, %v2191
        %v3216 = vsub.f32 %v1168, %v2192
        %v3217 = vsub.f32 %v1169, %v2193
        %v3218 = vsub.f32 %v1170, %v2194
        %v3219 = vsub.f32 %v1171, %v2195
        %v3220 = vsub.f32 %v1172, %v2196
        %v3221 = vsub.f32 %v1173, %v2197
        %v3222 = vsub.f32 %v1174, %v2198
        %v3223 = vsub.f32 %v1175, %v2199
        %v3224 = vsub.f32 %v1176, %v2200
        %v3225 = vsub.f32 %v1177, %v2201
        %v3226 = vsub.f32 %v1178, %v2202
        %v3227 = vsub.f32 %v1179, %v2203
        %v3228 = vsub.f32 %v1180, %v2204
        %v3229 = vsub.f32 %v1181, %v2205
        %v3230 = vsub.f32 %v1182, %v2206
        %v3231 = vsub.f32 %v1183, %v2207
        %v3232 = vsub.f32 %v1184, %v2208
        %v3233 = vsub.f32 %v1185, %v2209
        %v3234 = vsub.f32 %v1186, %v2210
        %v3235 = vsub.f32 %v1187, %v2211
        %v3236 = vsub.f32 %v1188, %v2212
        %v3237 = vsub.f32 %v1189, %v2213
        %v3238 = vsub.f32 %v1190, %v2214
        %v3239 = vsub.f32 %v1191, %v2215
        %v3240 = vsub.f32 %v1192, %v2216
        %v3241 = vsub.f32 %v1193, %v2217
        %v3242 = vsub.f32 %v1194, %v2218
        %v3243 = vsub.f32 %v1195, %v2219
        %v3244 = vsub.f32 %v1196, %v2220
        %v3245 = vsub.f32 %v1197, %v2221
        %v3246 = vsub.f32 %v1198, %v2222
        %v3247 = vsub.f32 %v1199, %v2223
        %v3248 = vsub.f32 %v1200, %v2224
        %v3249 = vsub.f32 %v1201, %v2225
        %v3250 = vsub.f32 %v1202, %v2226
        %v3251 = vsub.f32 %v1203, %v2227
        %v3252 = vsub.f32 %v1204, %v2228
        %v3253 = vsub.f32 %v1205, %v2229
        %v3254 = vsub.f32 %v1206, %v2230
        %v3255 = vsub.f32 %v1207, %v2231
        %v3256 = vsub.f32 %v1208, %v2232
        %v3257 = vsub.f32 %v1209, %v2233
        %v3258 = vsub.f32 %v1210, %v2234
        %v3259 = vsub.f32 %v1211, %v2235
        %v3260 = vsub.f32 %v1212, %v2236
        %v3261 = vsub.f32 %v1213, %v2237
        %v3262 = vsub.f32 %v1214, %v2238
        %v3263 = vsub.f32 %v1215, %v2239
        %v3264 = vsub.f32 %v1216, %v2240
        %v3265 = vsub.f32 %v1217, %v2241
        %v3266 = vsub.f32 %v1218, %v2242
        %v3267 = vsub.f32 %v1219, %v2243
        %v3268 = vsub.f32 %v1220, %v2244
        %v3269 = vsub.f32 %v1221, %v2245
        %v3270 = vsub.f32 %v1222, %v2246
        %v3271 = vsub.f32 %v1223, %v2247
        %v3272 = vsub.f32 %v1224, %v2248
        %v3273 = vsub.f32 %v1225, %v2249
        %v3274 = vsub.f32 %v1226, %v2250
        %v3275 = vsub.f32 %v1227, %v2251
        %v3276 = vsub.f32 %v1228, %v2252
        %v3277 = vsub.f32 %v1229, %v2253
        %v3278 = vsub.f32 %v1230, %v2254
        %v3279 = vsub.f32 %v1231, %v2255
        %v3280 = vsub.f32 %v1232, %v2256
        %v3281 = vsub.f32 %v1233, %v2257
        %v3282 = vsub.f32 %v1234, %v2258
        %v3283 = vsub.f32 %v1235, %v2259
        %v3284 = vsub.f32 %v1236, %v2260
        %v3285 = vsub.f32 %v1237, %v2261
        %v3286 = vsub.f32 %v1238, %v2262
        %v3287 = vsub.f32 %v1239, %v2263
        %v3288 = vsub.f32 %v1240, %v2264
        %v3289 = vsub.f32 %v1241, %v2265
        %v3290 = vsub.f32 %v1242, %v2266
        %v3291 = vsub.f32 %v1243, %v2267
        %v3292 = vsub.f32 %v1244, %v2268
        %v3293 = vsub.f32 %v1245, %v2269
        %v3294 = vsub.f32 %v1246, %v2270
        %v3295 = vsub.f32 %v1247, %v2271
        %v3296 = vsub.f32 %v1248, %v2272
        %v3297 = vsub.f32 %v1249, %v2273
        %v3298 = vsub.f32 %v1250, %v2274
        %v3299 = vsub.f32 %v1251, %v2275
        %v3300 = vsub.f32 %v1252, %v2276
        %v3301 = vsub.f32 %v1253, %v2277
        %v3302 = vsub.f32 %v1254, %v2278
        %v3303 = vsub.f32 %v1255, %v2279
        %v3304 = vsub.f32 %v1256, %v2280
        %v3305 = vsub.f32 %v1257, %v2281
        %v3306 = vsub.f32 %v1258, %v2282
        %v3307 = vsub.f32 %v1259, %v2283
        %v3308 = vsub.f32 %v1260, %v2284
        %v3309 = vsub.f32 %v1261, %v2285
        %v3310 = vsub.f32 %v1262, %v2286
        %v3311 = vsub.f32 %v1263, %v2287
        %v3312 = vsub.f32 %v1264, %v2288
        %v3313 = vsub.f32 %v1265, %v2289
        %v3314 = vsub.f32 %v1266, %v2290
        %v3315 = vsub.f32 %v1267, %v2291
        %v3316 = vsub.f32 %v1268, %v2292
        %v3317 = vsub.f32 %v1269, %v2293
        %v3318 = vsub.f32 %v1270, %v2294
        %v3319 = vsub.f32 %v1271, %v2295
        %v3320 = vsub.f32 %v1272, %v2296
        %v3321 = vsub.f32 %v1273, %v2297
        %v3322 = vsub.f32 %v1274, %v2298
        %v3323 = vsub.f32 %v1275, %v2299
        %v3324 = vsub.f32 %v1276, %v2300
        %v3325 = vsub.f32 %v1277, %v2301
        %v3326 = vsub.f32 %v1278, %v2302
        %v3327 = vsub.f32 %v1279, %v2303
        %v3328 = vsub.f32 %v1280, %v2304
        %v3329 = vsub.f32 %v1281, %v2305
        %v3330 = vsub.f32 %v1282, %v2306
        %v3331 = vsub.f32 %v1283, %v2307
        %v3332 = vsub.f32 %v1284, %v2308
        %v3333 = vsub.f32 %v1285, %v2309
        %v3334 = vsub.f32 %v1286, %v2310
        %v3335 = vsub.f32 %v1287, %v2311
        %v3336 = vsub.f32 %v1288, %v2312
        %v3337 = vsub.f32 %v1289, %v2313
        %v3338 = vsub.f32 %v1290, %v2314
        %v3339 = vsub.f32 %v1291, %v2315
        %v3340 = vsub.f32 %v1292, %v2316
        %v3341 = vsub.f32 %v1293, %v2317
        %v3342 = vlaneseq
        %v3343 = vshrl.u32 %v3342, 7
        %v3344 = vadd.s32 %v3343, 8
        %v3345 = vadd.s32 %v3343, 16
        %v3346 = vadd.s32 %v3343, 24
        %v3347 = vadd.s32 %v3343, 32
        %v3348 = vadd.s32 %v3343, 40
        %v3349 = vadd.s32 %v3343, 48
        %v3350 = vadd.s32 %v3343, 56
        %v3351 = vadd.s32 %v3343, 64
        %v3352 = vadd.s32 %v3343, 72
        %v3353 = vadd.s32 %v3343, 80
        %v3354 = vadd.s32 %v3343, 88
        %v3355 = vadd.s32 %v3343, 96
        %v3356 = vadd.s32 %v3343, 104
        %v3357 = vadd.s32 %v3343, 112
        %v3358 = vadd.s32 %v3343, 120
        %v3359 = vadd.s32 %v3343, 128
        %v3360 = vadd.s32 %v3343, 136
        %v3361 = vadd.s32 %v3343, 144
        %v3362 = vadd.s32 %v3343, 152
        %v3363 = vadd.s32 %v3343, 160
        %v3364 = vadd.s32 %v3343, 168
        %v3365 = vadd.s32 %v3343, 176
        %v3366 = vadd.s32 %v3343, 184
        %v3367 = vadd.s32 %v3343, 192
        %v3368 = vadd.s32 %v3343, 200
        %v3369 = vadd.s32 %v3343, 208
        %v3370 = vadd.s32 %v3343, 216
        %v3371 = vadd.s32 %v3343, 224
        %v3372 = vadd.s32 %v3343, 232
        %v3373 = vadd.s32 %v3343, 240
        %v3374 = vadd.s32 %v3343, 248
        %v3375 = vadd.s32 %v3343, 256
        %v3376 = vadd.s32 %v3343, 264
        %v3377 = vadd.s32 %v3343, 272
        %v3378 = vadd.s32 %v3343, 280
        %v3379 = vadd.s32 %v3343, 288
        %v3380 = vadd.s32 %v3343, 296
        %v3381 = vadd.s32 %v3343, 304
        %v3382 = vadd.s32 %v3343, 312
        %v3383 = vadd.s32 %v3343, 320
        %v3384 = vadd.s32 %v3343, 328
        %v3385 = vadd.s32 %v3343, 336
        %v3386 = vadd.s32 %v3343, 344
        %v3387 = vadd.s32 %v3343, 352
        %v3388 = vadd.s32 %v3343, 360
        %v3389 = vadd.s32 %v3343, 368
        %v3390 = vadd.s32 %v3343, 376
        %v3391 = vadd.s32 %v3343, 384
        %v3392 = vadd.s32 %v3343, 392
        %v3393 = vadd.s32 %v3343, 400
        %v3394 = vadd.s32 %v3343, 408
        %v3395 = vadd.s32 %v3343, 416
        %v3396 = vadd.s32 %v3343, 424
        %v3397 = vadd.s32 %v3343, 432
        %v3398 = vadd.s32 %v3343, 440
        %v3399 = vadd.s32 %v3343, 448
        %v3400 = vadd.s32 %v3343, 456
        %v3401 = vadd.s32 %v3343, 464
        %v3402 = vadd.s32 %v3343, 472
        %v3403 = vadd.s32 %v3343, 480
        %v3404 = vadd.s32 %v3343, 488
        %v3405 = vadd.s32 %v3343, 496
        %v3406 = vadd.s32 %v3343, 504
        %v3407 = vadd.s32 %v3343, 512
        %v3408 = vadd.s32 %v3343, 520
        %v3409 = vadd.s32 %v3343, 528
        %v3410 = vadd.s32 %v3343, 536
        %v3411 = vadd.s32 %v3343, 544
        %v3412 = vadd.s32 %v3343, 552
        %v3413 = vadd.s32 %v3343, 560
        %v3414 = vadd.s32 %v3343, 568
        %v3415 = vadd.s32 %v3343, 576
        %v3416 = vadd.s32 %v3343, 584
        %v3417 = vadd.s32 %v3343, 592
        %v3418 = vadd.s32 %v3343, 600
        %v3419 = vadd.s32 %v3343, 608
        %v3420 = vadd.s32 %v3343, 616
        %v3421 = vadd.s32 %v3343, 624
        %v3422 = vadd.s32 %v3343, 632
        %v3423 = vadd.s32 %v3343, 640
        %v3424 = vadd.s32 %v3343, 648
        %v3425 = vadd.s32 %v3343, 656
        %v3426 = vadd.s32 %v3343, 664
        %v3427 = vadd.s32 %v3343, 672
        %v3428 = vadd.s32 %v3343, 680
        %v3429 = vadd.s32 %v3343, 688
        %v3430 = vadd.s32 %v3343, 696
        %v3431 = vadd.s32 %v3343, 704
        %v3432 = vadd.s32 %v3343, 712
        %v3433 = vadd.s32 %v3343, 720
        %v3434 = vadd.s32 %v3343, 728
        %v3435 = vadd.s32 %v3343, 736
        %v3436 = vadd.s32 %v3343, 744
        %v3437 = vadd.s32 %v3343, 752
        %v3438 = vadd.s32 %v3343, 760
        %v3439 = vadd.s32 %v3343, 768
        %v3440 = vadd.s32 %v3343, 776
        %v3441 = vadd.s32 %v3343, 784
        %v3442 = vadd.s32 %v3343, 792
        %v3443 = vadd.s32 %v3343, 800
        %v3444 = vadd.s32 %v3343, 808
        %v3445 = vadd.s32 %v3343, 816
        %v3446 = vadd.s32 %v3343, 824
        %v3447 = vadd.s32 %v3343, 832
        %v3448 = vadd.s32 %v3343, 840
        %v3449 = vadd.s32 %v3343, 848
        %v3450 = vadd.s32 %v3343, 856
        %v3451 = vadd.s32 %v3343, 864
        %v3452 = vadd.s32 %v3343, 872
        %v3453 = vadd.s32 %v3343, 880
        %v3454 = vadd.s32 %v3343, 888
        %v3455 = vadd.s32 %v3343, 896
        %v3456 = vadd.s32 %v3343, 904
        %v3457 = vadd.s32 %v3343, 912
        %v3458 = vadd.s32 %v3343, 920
        %v3459 = vadd.s32 %v3343, 928
        %v3460 = vadd.s32 %v3343, 936
        %v3461 = vadd.s32 %v3343, 944
        %v3462 = vadd.s32 %v3343, 952
        %v3463 = vadd.s32 %v3343, 960
        %v3464 = vadd.s32 %v3343, 968
        %v3465 = vadd.s32 %v3343, 976
        %v3466 = vadd.s32 %v3343, 984
        %v3467 = vadd.s32 %v3343, 992
        %v3468 = vadd.s32 %v3343, 1000
        %v3469 = vadd.s32 %v3343, 1008
        %v3470 = vadd.s32 %v3343, 1016
        %v3471 = vadd.s32 %v3343, 1024
        %v3472 = vadd.s32 %v3343, 1032
        %v3473 = vadd.s32 %v3343, 1040
        %v3474 = vadd.s32 %v3343, 1048
        %v3475 = vadd.s32 %v3343, 1056
        %v3476 = vadd.s32 %v3343, 1064
        %v3477 = vadd.s32 %v3343, 1072
        %v3478 = vadd.s32 %v3343, 1080
        %v3479 = vadd.s32 %v3343, 1088
        %v3480 = vadd.s32 %v3343, 1096
        %v3481 = vadd.s32 %v3343, 1104
        %v3482 = vadd.s32 %v3343, 1112
        %v3483 = vadd.s32 %v3343, 1120
        %v3484 = vadd.s32 %v3343, 1128
        %v3485 = vadd.s32 %v3343, 1136
        %v3486 = vadd.s32 %v3343, 1144
        %v3487 = vadd.s32 %v3343, 1152
        %v3488 = vadd.s32 %v3343, 1160
        %v3489 = vadd.s32 %v3343, 1168
        %v3490 = vadd.s32 %v3343, 1176
        %v3491 = vadd.s32 %v3343, 1184
        %v3492 = vadd.s32 %v3343, 1192
        %v3493 = vadd.s32 %v3343, 1200
        %v3494 = vadd.s32 %v3343, 1208
        %v3495 = vadd.s32 %v3343, 1216
        %v3496 = vadd.s32 %v3343, 1224
        %v3497 = vadd.s32 %v3343, 1232
        %v3498 = vadd.s32 %v3343, 1240
        %v3499 = vadd.s32 %v3343, 1248
        %v3500 = vadd.s32 %v3343, 1256
        %v3501 = vadd.s32 %v3343, 1264
        %v3502 = vadd.s32 %v3343, 1272
        %v3503 = vadd.s32 %v3343, 1280
        %v3504 = vadd.s32 %v3343, 1288
        %v3505 = vadd.s32 %v3343, 1296
        %v3506 = vadd.s32 %v3343, 1304
        %v3507 = vadd.s32 %v3343, 1312
        %v3508 = vadd.s32 %v3343, 1320
        %v3509 = vadd.s32 %v3343, 1328
        %v3510 = vadd.s32 %v3343, 1336
        %v3511 = vadd.s32 %v3343, 1344
        %v3512 = vadd.s32 %v3343, 1352
        %v3513 = vadd.s32 %v3343, 1360
        %v3514 = vadd.s32 %v3343, 1368
        %v3515 = vadd.s32 %v3343, 1376
        %v3516 = vadd.s32 %v3343, 1384
        %v3517 = vadd.s32 %v3343, 1392
        %v3518 = vadd.s32 %v3343, 1400
        %v3519 = vadd.s32 %v3343, 1408
        %v3520 = vadd.s32 %v3343, 1416
        %v3521 = vadd.s32 %v3343, 1424
        %v3522 = vadd.s32 %v3343, 1432
        %v3523 = vadd.s32 %v3343, 1440
        %v3524 = vadd.s32 %v3343, 1448
        %v3525 = vadd.s32 %v3343, 1456
        %v3526 = vadd.s32 %v3343, 1464
        %v3527 = vadd.s32 %v3343, 1472
        %v3528 = vadd.s32 %v3343, 1480
        %v3529 = vadd.s32 %v3343, 1488
        %v3530 = vadd.s32 %v3343, 1496
        %v3531 = vadd.s32 %v3343, 1504
        %v3532 = vadd.s32 %v3343, 1512
        %v3533 = vadd.s32 %v3343, 1520
        %v3534 = vadd.s32 %v3343, 1528
        %v3535 = vadd.s32 %v3343, 1536
        %v3536 = vadd.s32 %v3343, 1544
        %v3537 = vadd.s32 %v3343, 1552
        %v3538 = vadd.s32 %v3343, 1560
        %v3539 = vadd.s32 %v3343, 1568
        %v3540 = vadd.s32 %v3343, 1576
        %v3541 = vadd.s32 %v3343, 1584
        %v3542 = vadd.s32 %v3343, 1592
        %v3543 = vadd.s32 %v3343, 1600
        %v3544 = vadd.s32 %v3343, 1608
        %v3545 = vadd.s32 %v3343, 1616
        %v3546 = vadd.s32 %v3343, 1624
        %v3547 = vadd.s32 %v3343, 1632
        %v3548 = vadd.s32 %v3343, 1640
        %v3549 = vadd.s32 %v3343, 1648
        %v3550 = vadd.s32 %v3343, 1656
        %v3551 = vadd.s32 %v3343, 1664
        %v3552 = vadd.s32 %v3343, 1672
        %v3553 = vadd.s32 %v3343, 1680
        %v3554 = vadd.s32 %v3343, 1688
        %v3555 = vadd.s32 %v3343, 1696
        %v3556 = vadd.s32 %v3343, 1704
        %v3557 = vadd.s32 %v3343, 1712
        %v3558 = vadd.s32 %v3343, 1720
        %v3559 = vadd.s32 %v3343, 1728
        %v3560 = vadd.s32 %v3343, 1736
        %v3561 = vadd.s32 %v3343, 1744
        %v3562 = vadd.s32 %v3343, 1752
        %v3563 = vadd.s32 %v3343, 1760
        %v3564 = vadd.s32 %v3343, 1768
        %v3565 = vadd.s32 %v3343, 1776
        %v3566 = vadd.s32 %v3343, 1784
        %v3567 = vadd.s32 %v3343, 1792
        %v3568 = vadd.s32 %v3343, 1800
        %v3569 = vadd.s32 %v3343, 1808
        %v3570 = vadd.s32 %v3343, 1816
        %v3571 = vadd.s32 %v3343, 1824
        %v3572 = vadd.s32 %v3343, 1832
        %v3573 = vadd.s32 %v3343, 1840
        %v3574 = vadd.s32 %v3343, 1848
        %v3575 = vadd.s32 %v3343, 1856
        %v3576 = vadd.s32 %v3343, 1864
        %v3577 = vadd.s32 %v3343, 1872
        %v3578 = vadd.s32 %v3343, 1880
        %v3579 = vadd.s32 %v3343, 1888
        %v3580 = vadd.s32 %v3343, 1896
        %v3581 = vadd.s32 %v3343, 1904
        %v3582 = vadd.s32 %v3343, 1912
        %v3583 = vadd.s32 %v3343, 1920
        %v3584 = vadd.s32 %v3343, 1928
        %v3585 = vadd.s32 %v3343, 1936
        %v3586 = vadd.s32 %v3343, 1944
        %v3587 = vadd.s32 %v3343, 1952
        %v3588 = vadd.s32 %v3343, 1960
        %v3589 = vadd.s32 %v3343, 1968
        %v3590 = vadd.s32 %v3343, 1976
        %v3591 = vadd.s32 %v3343, 1984
        %v3592 = vadd.s32 %v3343, 1992
        %v3593 = vadd.s32 %v3343, 2000
        %v3594 = vadd.s32 %v3343, 2008
        %v3595 = vadd.s32 %v3343, 2016
        %v3596 = vadd.s32 %v3343, 2024
        %v3597 = vadd.s32 %v3343, 2032
        %v3598 = vadd.s32 %v3343, 2040
        %s3599 = smul.u32 %s24, 2048
        %v3600 = vstv %s3599
        %v3601 = vadd.s32 %v3343, %v3600
        %v3602 = vadd.s32 %v3344, %v3600
        %v3603 = vadd.s32 %v3345, %v3600
        %v3604 = vadd.s32 %v3346, %v3600
        %v3605 = vadd.s32 %v3347, %v3600
        %v3606 = vadd.s32 %v3348, %v3600
        %v3607 = vadd.s32 %v3349, %v3600
        %v3608 = vadd.s32 %v3350, %v3600
        %v3609 = vadd.s32 %v3351, %v3600
        %v3610 = vadd.s32 %v3352, %v3600
        %v3611 = vadd.s32 %v3353, %v3600
        %v3612 = vadd.s32 %v3354, %v3600
        %v3613 = vadd.s32 %v3355, %v3600
        %v3614 = vadd.s32 %v3356, %v3600
        %v3615 = vadd.s32 %v3357, %v3600
        %v3616 = vadd.s32 %v3358, %v3600
        %v3617 = vadd.s32 %v3359, %v3600
        %v3618 = vadd.s32 %v3360, %v3600
        %v3619 = vadd.s32 %v3361, %v3600
        %v3620 = vadd.s32 %v3362, %v3600
        %v3621 = vadd.s32 %v3363, %v3600
        %v3622 = vadd.s32 %v3364, %v3600
        %v3623 = vadd.s32 %v3365, %v3600
        %v3624 = vadd.s32 %v3366, %v3600
        %v3625 = vadd.s32 %v3367, %v3600
        %v3626 = vadd.s32 %v3368, %v3600
        %v3627 = vadd.s32 %v3369, %v3600
        %v3628 = vadd.s32 %v3370, %v3600
        %v3629 = vadd.s32 %v3371, %v3600
        %v3630 = vadd.s32 %v3372, %v3600
        %v3631 = vadd.s32 %v3373, %v3600
        %v3632 = vadd.s32 %v3374, %v3600
        %v3633 = vadd.s32 %v3375, %v3600
        %v3634 = vadd.s32 %v3376, %v3600
        %v3635 = vadd.s32 %v3377, %v3600
        %v3636 = vadd.s32 %v3378, %v3600
        %v3637 = vadd.s32 %v3379, %v3600
        %v3638 = vadd.s32 %v3380, %v3600
        %v3639 = vadd.s32 %v3381, %v3600
        %v3640 = vadd.s32 %v3382, %v3600
        %v3641 = vadd.s32 %v3383, %v3600
        %v3642 = vadd.s32 %v3384, %v3600
        %v3643 = vadd.s32 %v3385, %v3600
        %v3644 = vadd.s32 %v3386, %v3600
        %v3645 = vadd.s32 %v3387, %v3600
        %v3646 = vadd.s32 %v3388, %v3600
        %v3647 = vadd.s32 %v3389, %v3600
        %v3648 = vadd.s32 %v3390, %v3600
        %v3649 = vadd.s32 %v3391, %v3600
        %v3650 = vadd.s32 %v3392, %v3600
        %v3651 = vadd.s32 %v3393, %v3600
        %v3652 = vadd.s32 %v3394, %v3600
        %v3653 = vadd.s32 %v3395, %v3600
        %v3654 = vadd.s32 %v3396, %v3600
        %v3655 = vadd.s32 %v3397, %v3600
        %v3656 = vadd.s32 %v3398, %v3600
        %v3657 = vadd.s32 %v3399, %v3600
        %v3658 = vadd.s32 %v3400, %v3600
        %v3659 = vadd.s32 %v3401, %v3600
        %v3660 = vadd.s32 %v3402, %v3600
        %v3661 = vadd.s32 %v3403, %v3600
        %v3662 = vadd.s32 %v3404, %v3600
        %v3663 = vadd.s32 %v3405, %v3600
        %v3664 = vadd.s32 %v3406, %v3600
        %v3665 = vadd.s32 %v3407, %v3600
        %v3666 = vadd.s32 %v3408, %v3600
        %v3667 = vadd.s32 %v3409, %v3600
        %v3668 = vadd.s32 %v3410, %v3600
        %v3669 = vadd.s32 %v3411, %v3600
        %v3670 = vadd.s32 %v3412, %v3600
        %v3671 = vadd.s32 %v3413, %v3600
        %v3672 = vadd.s32 %v3414, %v3600
        %v3673 = vadd.s32 %v3415, %v3600
        %v3674 = vadd.s32 %v3416, %v3600
        %v3675 = vadd.s32 %v3417, %v3600
        %v3676 = vadd.s32 %v3418, %v3600
        %v3677 = vadd.s32 %v3419, %v3600
        %v3678 = vadd.s32 %v3420, %v3600
        %v3679 = vadd.s32 %v3421, %v3600
        %v3680 = vadd.s32 %v3422, %v3600
        %v3681 = vadd.s32 %v3423, %v3600
        %v3682 = vadd.s32 %v3424, %v3600
        %v3683 = vadd.s32 %v3425, %v3600
        %v3684 = vadd.s32 %v3426, %v3600
        %v3685 = vadd.s32 %v3427, %v3600
        %v3686 = vadd.s32 %v3428, %v3600
        %v3687 = vadd.s32 %v3429, %v3600
        %v3688 = vadd.s32 %v3430, %v3600
        %v3689 = vadd.s32 %v3431, %v3600
        %v3690 = vadd.s32 %v3432, %v3600
        %v3691 = vadd.s32 %v3433, %v3600
        %v3692 = vadd.s32 %v3434, %v3600
        %v3693 = vadd.s32 %v3435, %v3600
        %v3694 = vadd.s32 %v3436, %v3600
        %v3695 = vadd.s32 %v3437, %v3600
        %v3696 = vadd.s32 %v3438, %v3600
        %v3697 = vadd.s32 %v3439, %v3600
        %v3698 = vadd.s32 %v3440, %v3600
        %v3699 = vadd.s32 %v3441, %v3600
        %v3700 = vadd.s32 %v3442, %v3600
        %v3701 = vadd.s32 %v3443, %v3600
        %v3702 = vadd.s32 %v3444, %v3600
        %v3703 = vadd.s32 %v3445, %v3600
        %v3704 = vadd.s32 %v3446, %v3600
        %v3705 = vadd.s32 %v3447, %v3600
        %v3706 = vadd.s32 %v3448, %v3600
        %v3707 = vadd.s32 %v3449, %v3600
        %v3708 = vadd.s32 %v3450, %v3600
        %v3709 = vadd.s32 %v3451, %v3600
        %v3710 = vadd.s32 %v3452, %v3600
        %v3711 = vadd.s32 %v3453, %v3600
        %v3712 = vadd.s32 %v3454, %v3600
        %v3713 = vadd.s32 %v3455, %v3600
        %v3714 = vadd.s32 %v3456, %v3600
        %v3715 = vadd.s32 %v3457, %v3600
        %v3716 = vadd.s32 %v3458, %v3600
        %v3717 = vadd.s32 %v3459, %v3600
        %v3718 = vadd.s32 %v3460, %v3600
        %v3719 = vadd.s32 %v3461, %v3600
        %v3720 = vadd.s32 %v3462, %v3600
        %v3721 = vadd.s32 %v3463, %v3600
        %v3722 = vadd.s32 %v3464, %v3600
        %v3723 = vadd.s32 %v3465, %v3600
        %v3724 = vadd.s32 %v3466, %v3600
        %v3725 = vadd.s32 %v3467, %v3600
        %v3726 = vadd.s32 %v3468, %v3600
        %v3727 = vadd.s32 %v3469, %v3600
        %v3728 = vadd.s32 %v3470, %v3600
        %v3729 = vadd.s32 %v3471, %v3600
        %v3730 = vadd.s32 %v3472, %v3600
        %v3731 = vadd.s32 %v3473, %v3600
        %v3732 = vadd.s32 %v3474, %v3600
        %v3733 = vadd.s32 %v3475, %v3600
        %v3734 = vadd.s32 %v3476, %v3600
        %v3735 = vadd.s32 %v3477, %v3600
        %v3736 = vadd.s32 %v3478, %v3600
        %v3737 = vadd.s32 %v3479, %v3600
        %v3738 = vadd.s32 %v3480, %v3600
        %v3739 = vadd.s32 %v3481, %v3600
        %v3740 = vadd.s32 %v3482, %v3600
        %v3741 = vadd.s32 %v3483, %v3600
        %v3742 = vadd.s32 %v3484, %v3600
        %v3743 = vadd.s32 %v3485, %v3600
        %v3744 = vadd.s32 %v3486, %v3600
        %v3745 = vadd.s32 %v3487, %v3600
        %v3746 = vadd.s32 %v3488, %v3600
        %v3747 = vadd.s32 %v3489, %v3600
        %v3748 = vadd.s32 %v3490, %v3600
        %v3749 = vadd.s32 %v3491, %v3600
        %v3750 = vadd.s32 %v3492, %v3600
        %v3751 = vadd.s32 %v3493, %v3600
        %v3752 = vadd.s32 %v3494, %v3600
        %v3753 = vadd.s32 %v3495, %v3600
        %v3754 = vadd.s32 %v3496, %v3600
        %v3755 = vadd.s32 %v3497, %v3600
        %v3756 = vadd.s32 %v3498, %v3600
        %v3757 = vadd.s32 %v3499, %v3600
        %v3758 = vadd.s32 %v3500, %v3600
        %v3759 = vadd.s32 %v3501, %v3600
        %v3760 = vadd.s32 %v3502, %v3600
        %v3761 = vadd.s32 %v3503, %v3600
        %v3762 = vadd.s32 %v3504, %v3600
        %v3763 = vadd.s32 %v3505, %v3600
        %v3764 = vadd.s32 %v3506, %v3600
        %v3765 = vadd.s32 %v3507, %v3600
        %v3766 = vadd.s32 %v3508, %v3600
        %v3767 = vadd.s32 %v3509, %v3600
        %v3768 = vadd.s32 %v3510, %v3600
        %v3769 = vadd.s32 %v3511, %v3600
        %v3770 = vadd.s32 %v3512, %v3600
        %v3771 = vadd.s32 %v3513, %v3600
        %v3772 = vadd.s32 %v3514, %v3600
        %v3773 = vadd.s32 %v3515, %v3600
        %v3774 = vadd.s32 %v3516, %v3600
        %v3775 = vadd.s32 %v3517, %v3600
        %v3776 = vadd.s32 %v3518, %v3600
        %v3777 = vadd.s32 %v3519, %v3600
        %v3778 = vadd.s32 %v3520, %v3600
        %v3779 = vadd.s32 %v3521, %v3600
        %v3780 = vadd.s32 %v3522, %v3600
        %v3781 = vadd.s32 %v3523, %v3600
        %v3782 = vadd.s32 %v3524, %v3600
        %v3783 = vadd.s32 %v3525, %v3600
        %v3784 = vadd.s32 %v3526, %v3600
        %v3785 = vadd.s32 %v3527, %v3600
        %v3786 = vadd.s32 %v3528, %v3600
        %v3787 = vadd.s32 %v3529, %v3600
        %v3788 = vadd.s32 %v3530, %v3600
        %v3789 = vadd.s32 %v3531, %v3600
        %v3790 = vadd.s32 %v3532, %v3600
        %v3791 = vadd.s32 %v3533, %v3600
        %v3792 = vadd.s32 %v3534, %v3600
        %v3793 = vadd.s32 %v3535, %v3600
        %v3794 = vadd.s32 %v3536, %v3600
        %v3795 = vadd.s32 %v3537, %v3600
        %v3796 = vadd.s32 %v3538, %v3600
        %v3797 = vadd.s32 %v3539, %v3600
        %v3798 = vadd.s32 %v3540, %v3600
        %v3799 = vadd.s32 %v3541, %v3600
        %v3800 = vadd.s32 %v3542, %v3600
        %v3801 = vadd.s32 %v3543, %v3600
        %v3802 = vadd.s32 %v3544, %v3600
        %v3803 = vadd.s32 %v3545, %v3600
        %v3804 = vadd.s32 %v3546, %v3600
        %v3805 = vadd.s32 %v3547, %v3600
        %v3806 = vadd.s32 %v3548, %v3600
        %v3807 = vadd.s32 %v3549, %v3600
        %v3808 = vadd.s32 %v3550, %v3600
        %v3809 = vadd.s32 %v3551, %v3600
        %v3810 = vadd.s32 %v3552, %v3600
        %v3811 = vadd.s32 %v3553, %v3600
        %v3812 = vadd.s32 %v3554, %v3600
        %v3813 = vadd.s32 %v3555, %v3600
        %v3814 = vadd.s32 %v3556, %v3600
        %v3815 = vadd.s32 %v3557, %v3600
        %v3816 = vadd.s32 %v3558, %v3600
        %v3817 = vadd.s32 %v3559, %v3600
        %v3818 = vadd.s32 %v3560, %v3600
        %v3819 = vadd.s32 %v3561, %v3600
        %v3820 = vadd.s32 %v3562, %v3600
        %v3821 = vadd.s32 %v3563, %v3600
        %v3822 = vadd.s32 %v3564, %v3600
        %v3823 = vadd.s32 %v3565, %v3600
        %v3824 = vadd.s32 %v3566, %v3600
        %v3825 = vadd.s32 %v3567, %v3600
        %v3826 = vadd.s32 %v3568, %v3600
        %v3827 = vadd.s32 %v3569, %v3600
        %v3828 = vadd.s32 %v3570, %v3600
        %v3829 = vadd.s32 %v3571, %v3600
        %v3830 = vadd.s32 %v3572, %v3600
        %v3831 = vadd.s32 %v3573, %v3600
        %v3832 = vadd.s32 %v3574, %v3600
        %v3833 = vadd.s32 %v3575, %v3600
        %v3834 = vadd.s32 %v3576, %v3600
        %v3835 = vadd.s32 %v3577, %v3600
        %v3836 = vadd.s32 %v3578, %v3600
        %v3837 = vadd.s32 %v3579, %v3600
        %v3838 = vadd.s32 %v3580, %v3600
        %v3839 = vadd.s32 %v3581, %v3600
        %v3840 = vadd.s32 %v3582, %v3600
        %v3841 = vadd.s32 %v3583, %v3600
        %v3842 = vadd.s32 %v3584, %v3600
        %v3843 = vadd.s32 %v3585, %v3600
        %v3844 = vadd.s32 %v3586, %v3600
        %v3845 = vadd.s32 %v3587, %v3600
        %v3846 = vadd.s32 %v3588, %v3600
        %v3847 = vadd.s32 %v3589, %v3600
        %v3848 = vadd.s32 %v3590, %v3600
        %v3849 = vadd.s32 %v3591, %v3600
        %v3850 = vadd.s32 %v3592, %v3600
        %v3851 = vadd.s32 %v3593, %v3600
        %v3852 = vadd.s32 %v3594, %v3600
        %v3853 = vadd.s32 %v3595, %v3600
        %v3854 = vadd.s32 %v3596, %v3600
        %v3855 = vadd.s32 %v3597, %v3600
        %v3856 = vadd.s32 %v3598, %v3600
        %vm3857 = vcmp.lt.s32.totalorder %v3601, 2056
        %vm3858 = vcmp.lt.s32.totalorder %v3602, 2056
        %vm3859 = vcmp.lt.s32.totalorder %v3603, 2056
        %vm3860 = vcmp.lt.s32.totalorder %v3604, 2056
        %vm3861 = vcmp.lt.s32.totalorder %v3605, 2056
        %vm3862 = vcmp.lt.s32.totalorder %v3606, 2056
        %vm3863 = vcmp.lt.s32.totalorder %v3607, 2056
        %vm3864 = vcmp.lt.s32.totalorder %v3608, 2056
        %vm3865 = vcmp.lt.s32.totalorder %v3609, 2056
        %vm3866 = vcmp.lt.s32.totalorder %v3610, 2056
        %vm3867 = vcmp.lt.s32.totalorder %v3611, 2056
        %vm3868 = vcmp.lt.s32.totalorder %v3612, 2056
        %vm3869 = vcmp.lt.s32.totalorder %v3613, 2056
        %vm3870 = vcmp.lt.s32.totalorder %v3614, 2056
        %vm3871 = vcmp.lt.s32.totalorder %v3615, 2056
        %vm3872 = vcmp.lt.s32.totalorder %v3616, 2056
        %vm3873 = vcmp.lt.s32.totalorder %v3617, 2056
        %vm3874 = vcmp.lt.s32.totalorder %v3618, 2056
        %vm3875 = vcmp.lt.s32.totalorder %v3619, 2056
        %vm3876 = vcmp.lt.s32.totalorder %v3620, 2056
        %vm3877 = vcmp.lt.s32.totalorder %v3621, 2056
        %vm3878 = vcmp.lt.s32.totalorder %v3622, 2056
        %vm3879 = vcmp.lt.s32.totalorder %v3623, 2056
        %vm3880 = vcmp.lt.s32.totalorder %v3624, 2056
        %vm3881 = vcmp.lt.s32.totalorder %v3625, 2056
        %vm3882 = vcmp.lt.s32.totalorder %v3626, 2056
        %vm3883 = vcmp.lt.s32.totalorder %v3627, 2056
        %vm3884 = vcmp.lt.s32.totalorder %v3628, 2056
        %vm3885 = vcmp.lt.s32.totalorder %v3629, 2056
        %vm3886 = vcmp.lt.s32.totalorder %v3630, 2056
        %vm3887 = vcmp.lt.s32.totalorder %v3631, 2056
        %vm3888 = vcmp.lt.s32.totalorder %v3632, 2056
        %vm3889 = vcmp.lt.s32.totalorder %v3633, 2056
        %vm3890 = vcmp.lt.s32.totalorder %v3634, 2056
        %vm3891 = vcmp.lt.s32.totalorder %v3635, 2056
        %vm3892 = vcmp.lt.s32.totalorder %v3636, 2056
        %vm3893 = vcmp.lt.s32.totalorder %v3637, 2056
        %vm3894 = vcmp.lt.s32.totalorder %v3638, 2056
        %vm3895 = vcmp.lt.s32.totalorder %v3639, 2056
        %vm3896 = vcmp.lt.s32.totalorder %v3640, 2056
        %vm3897 = vcmp.lt.s32.totalorder %v3641, 2056
        %vm3898 = vcmp.lt.s32.totalorder %v3642, 2056
        %vm3899 = vcmp.lt.s32.totalorder %v3643, 2056
        %vm3900 = vcmp.lt.s32.totalorder %v3644, 2056
        %vm3901 = vcmp.lt.s32.totalorder %v3645, 2056
        %vm3902 = vcmp.lt.s32.totalorder %v3646, 2056
        %vm3903 = vcmp.lt.s32.totalorder %v3647, 2056
        %vm3904 = vcmp.lt.s32.totalorder %v3648, 2056
        %vm3905 = vcmp.lt.s32.totalorder %v3649, 2056
        %vm3906 = vcmp.lt.s32.totalorder %v3650, 2056
        %vm3907 = vcmp.lt.s32.totalorder %v3651, 2056
        %vm3908 = vcmp.lt.s32.totalorder %v3652, 2056
        %vm3909 = vcmp.lt.s32.totalorder %v3653, 2056
        %vm3910 = vcmp.lt.s32.totalorder %v3654, 2056
        %vm3911 = vcmp.lt.s32.totalorder %v3655, 2056
        %vm3912 = vcmp.lt.s32.totalorder %v3656, 2056
        %vm3913 = vcmp.lt.s32.totalorder %v3657, 2056
        %vm3914 = vcmp.lt.s32.totalorder %v3658, 2056
        %vm3915 = vcmp.lt.s32.totalorder %v3659, 2056
        %vm3916 = vcmp.lt.s32.totalorder %v3660, 2056
        %vm3917 = vcmp.lt.s32.totalorder %v3661, 2056
        %vm3918 = vcmp.lt.s32.totalorder %v3662, 2056
        %vm3919 = vcmp.lt.s32.totalorder %v3663, 2056
        %vm3920 = vcmp.lt.s32.totalorder %v3664, 2056
        %vm3921 = vcmp.lt.s32.totalorder %v3665, 2056
        %vm3922 = vcmp.lt.s32.totalorder %v3666, 2056
        %vm3923 = vcmp.lt.s32.totalorder %v3667, 2056
        %vm3924 = vcmp.lt.s32.totalorder %v3668, 2056
        %vm3925 = vcmp.lt.s32.totalorder %v3669, 2056
        %vm3926 = vcmp.lt.s32.totalorder %v3670, 2056
        %vm3927 = vcmp.lt.s32.totalorder %v3671, 2056
        %vm3928 = vcmp.lt.s32.totalorder %v3672, 2056
        %vm3929 = vcmp.lt.s32.totalorder %v3673, 2056
        %vm3930 = vcmp.lt.s32.totalorder %v3674, 2056
        %vm3931 = vcmp.lt.s32.totalorder %v3675, 2056
        %vm3932 = vcmp.lt.s32.totalorder %v3676, 2056
        %vm3933 = vcmp.lt.s32.totalorder %v3677, 2056
        %vm3934 = vcmp.lt.s32.totalorder %v3678, 2056
        %vm3935 = vcmp.lt.s32.totalorder %v3679, 2056
        %vm3936 = vcmp.lt.s32.totalorder %v3680, 2056
        %vm3937 = vcmp.lt.s32.totalorder %v3681, 2056
        %vm3938 = vcmp.lt.s32.totalorder %v3682, 2056
        %vm3939 = vcmp.lt.s32.totalorder %v3683, 2056
        %vm3940 = vcmp.lt.s32.totalorder %v3684, 2056
        %vm3941 = vcmp.lt.s32.totalorder %v3685, 2056
        %vm3942 = vcmp.lt.s32.totalorder %v3686, 2056
        %vm3943 = vcmp.lt.s32.totalorder %v3687, 2056
        %vm3944 = vcmp.lt.s32.totalorder %v3688, 2056
        %vm3945 = vcmp.lt.s32.totalorder %v3689, 2056
        %vm3946 = vcmp.lt.s32.totalorder %v3690, 2056
        %vm3947 = vcmp.lt.s32.totalorder %v3691, 2056
        %vm3948 = vcmp.lt.s32.totalorder %v3692, 2056
        %vm3949 = vcmp.lt.s32.totalorder %v3693, 2056
        %vm3950 = vcmp.lt.s32.totalorder %v3694, 2056
        %vm3951 = vcmp.lt.s32.totalorder %v3695, 2056
        %vm3952 = vcmp.lt.s32.totalorder %v3696, 2056
        %vm3953 = vcmp.lt.s32.totalorder %v3697, 2056
        %vm3954 = vcmp.lt.s32.totalorder %v3698, 2056
        %vm3955 = vcmp.lt.s32.totalorder %v3699, 2056
        %vm3956 = vcmp.lt.s32.totalorder %v3700, 2056
        %vm3957 = vcmp.lt.s32.totalorder %v3701, 2056
        %vm3958 = vcmp.lt.s32.totalorder %v3702, 2056
        %vm3959 = vcmp.lt.s32.totalorder %v3703, 2056
        %vm3960 = vcmp.lt.s32.totalorder %v3704, 2056
        %vm3961 = vcmp.lt.s32.totalorder %v3705, 2056
        %vm3962 = vcmp.lt.s32.totalorder %v3706, 2056
        %vm3963 = vcmp.lt.s32.totalorder %v3707, 2056
        %vm3964 = vcmp.lt.s32.totalorder %v3708, 2056
        %vm3965 = vcmp.lt.s32.totalorder %v3709, 2056
        %vm3966 = vcmp.lt.s32.totalorder %v3710, 2056
        %vm3967 = vcmp.lt.s32.totalorder %v3711, 2056
        %vm3968 = vcmp.lt.s32.totalorder %v3712, 2056
        %vm3969 = vcmp.lt.s32.totalorder %v3713, 2056
        %vm3970 = vcmp.lt.s32.totalorder %v3714, 2056
        %vm3971 = vcmp.lt.s32.totalorder %v3715, 2056
        %vm3972 = vcmp.lt.s32.totalorder %v3716, 2056
        %vm3973 = vcmp.lt.s32.totalorder %v3717, 2056
        %vm3974 = vcmp.lt.s32.totalorder %v3718, 2056
        %vm3975 = vcmp.lt.s32.totalorder %v3719, 2056
        %vm3976 = vcmp.lt.s32.totalorder %v3720, 2056
        %vm3977 = vcmp.lt.s32.totalorder %v3721, 2056
        %vm3978 = vcmp.lt.s32.totalorder %v3722, 2056
        %vm3979 = vcmp.lt.s32.totalorder %v3723, 2056
        %vm3980 = vcmp.lt.s32.totalorder %v3724, 2056
        %vm3981 = vcmp.lt.s32.totalorder %v3725, 2056
        %vm3982 = vcmp.lt.s32.totalorder %v3726, 2056
        %vm3983 = vcmp.lt.s32.totalorder %v3727, 2056
        %vm3984 = vcmp.lt.s32.totalorder %v3728, 2056
        %vm3985 = vcmp.lt.s32.totalorder %v3729, 2056
        %vm3986 = vcmp.lt.s32.totalorder %v3730, 2056
        %vm3987 = vcmp.lt.s32.totalorder %v3731, 2056
        %vm3988 = vcmp.lt.s32.totalorder %v3732, 2056
        %vm3989 = vcmp.lt.s32.totalorder %v3733, 2056
        %vm3990 = vcmp.lt.s32.totalorder %v3734, 2056
        %vm3991 = vcmp.lt.s32.totalorder %v3735, 2056
        %vm3992 = vcmp.lt.s32.totalorder %v3736, 2056
        %vm3993 = vcmp.lt.s32.totalorder %v3737, 2056
        %vm3994 = vcmp.lt.s32.totalorder %v3738, 2056
        %vm3995 = vcmp.lt.s32.totalorder %v3739, 2056
        %vm3996 = vcmp.lt.s32.totalorder %v3740, 2056
        %vm3997 = vcmp.lt.s32.totalorder %v3741, 2056
        %vm3998 = vcmp.lt.s32.totalorder %v3742, 2056
        %vm3999 = vcmp.lt.s32.totalorder %v3743, 2056
        %vm4000 = vcmp.lt.s32.totalorder %v3744, 2056
        %vm4001 = vcmp.lt.s32.totalorder %v3745, 2056
        %vm4002 = vcmp.lt.s32.totalorder %v3746, 2056
        %vm4003 = vcmp.lt.s32.totalorder %v3747, 2056
        %vm4004 = vcmp.lt.s32.totalorder %v3748, 2056
        %vm4005 = vcmp.lt.s32.totalorder %v3749, 2056
        %vm4006 = vcmp.lt.s32.totalorder %v3750, 2056
        %vm4007 = vcmp.lt.s32.totalorder %v3751, 2056
        %vm4008 = vcmp.lt.s32.totalorder %v3752, 2056
        %vm4009 = vcmp.lt.s32.totalorder %v3753, 2056
        %vm4010 = vcmp.lt.s32.totalorder %v3754, 2056
        %vm4011 = vcmp.lt.s32.totalorder %v3755, 2056
        %vm4012 = vcmp.lt.s32.totalorder %v3756, 2056
        %vm4013 = vcmp.lt.s32.totalorder %v3757, 2056
        %vm4014 = vcmp.lt.s32.totalorder %v3758, 2056
        %vm4015 = vcmp.lt.s32.totalorder %v3759, 2056
        %vm4016 = vcmp.lt.s32.totalorder %v3760, 2056
        %vm4017 = vcmp.lt.s32.totalorder %v3761, 2056
        %vm4018 = vcmp.lt.s32.totalorder %v3762, 2056
        %vm4019 = vcmp.lt.s32.totalorder %v3763, 2056
        %vm4020 = vcmp.lt.s32.totalorder %v3764, 2056
        %vm4021 = vcmp.lt.s32.totalorder %v3765, 2056
        %vm4022 = vcmp.lt.s32.totalorder %v3766, 2056
        %vm4023 = vcmp.lt.s32.totalorder %v3767, 2056
        %vm4024 = vcmp.lt.s32.totalorder %v3768, 2056
        %vm4025 = vcmp.lt.s32.totalorder %v3769, 2056
        %vm4026 = vcmp.lt.s32.totalorder %v3770, 2056
        %vm4027 = vcmp.lt.s32.totalorder %v3771, 2056
        %vm4028 = vcmp.lt.s32.totalorder %v3772, 2056
        %vm4029 = vcmp.lt.s32.totalorder %v3773, 2056
        %vm4030 = vcmp.lt.s32.totalorder %v3774, 2056
        %vm4031 = vcmp.lt.s32.totalorder %v3775, 2056
        %vm4032 = vcmp.lt.s32.totalorder %v3776, 2056
        %vm4033 = vcmp.lt.s32.totalorder %v3777, 2056
        %vm4034 = vcmp.lt.s32.totalorder %v3778, 2056
        %vm4035 = vcmp.lt.s32.totalorder %v3779, 2056
        %vm4036 = vcmp.lt.s32.totalorder %v3780, 2056
        %vm4037 = vcmp.lt.s32.totalorder %v3781, 2056
        %vm4038 = vcmp.lt.s32.totalorder %v3782, 2056
        %vm4039 = vcmp.lt.s32.totalorder %v3783, 2056
        %vm4040 = vcmp.lt.s32.totalorder %v3784, 2056
        %vm4041 = vcmp.lt.s32.totalorder %v3785, 2056
        %vm4042 = vcmp.lt.s32.totalorder %v3786, 2056
        %vm4043 = vcmp.lt.s32.totalorder %v3787, 2056
        %vm4044 = vcmp.lt.s32.totalorder %v3788, 2056
        %vm4045 = vcmp.lt.s32.totalorder %v3789, 2056
        %vm4046 = vcmp.lt.s32.totalorder %v3790, 2056
        %vm4047 = vcmp.lt.s32.totalorder %v3791, 2056
        %vm4048 = vcmp.lt.s32.totalorder %v3792, 2056
        %vm4049 = vcmp.lt.s32.totalorder %v3793, 2056
        %vm4050 = vcmp.lt.s32.totalorder %v3794, 2056
        %vm4051 = vcmp.lt.s32.totalorder %v3795, 2056
        %vm4052 = vcmp.lt.s32.totalorder %v3796, 2056
        %vm4053 = vcmp.lt.s32.totalorder %v3797, 2056
        %vm4054 = vcmp.lt.s32.totalorder %v3798, 2056
        %vm4055 = vcmp.lt.s32.totalorder %v3799, 2056
        %vm4056 = vcmp.lt.s32.totalorder %v3800, 2056
        %vm4057 = vcmp.lt.s32.totalorder %v3801, 2056
        %vm4058 = vcmp.lt.s32.totalorder %v3802, 2056
        %vm4059 = vcmp.lt.s32.totalorder %v3803, 2056
        %vm4060 = vcmp.lt.s32.totalorder %v3804, 2056
        %vm4061 = vcmp.lt.s32.totalorder %v3805, 2056
        %vm4062 = vcmp.lt.s32.totalorder %v3806, 2056
        %vm4063 = vcmp.lt.s32.totalorder %v3807, 2056
        %vm4064 = vcmp.lt.s32.totalorder %v3808, 2056
        %vm4065 = vcmp.lt.s32.totalorder %v3809, 2056
        %vm4066 = vcmp.lt.s32.totalorder %v3810, 2056
        %vm4067 = vcmp.lt.s32.totalorder %v3811, 2056
        %vm4068 = vcmp.lt.s32.totalorder %v3812, 2056
        %vm4069 = vcmp.lt.s32.totalorder %v3813, 2056
        %vm4070 = vcmp.lt.s32.totalorder %v3814, 2056
        %vm4071 = vcmp.lt.s32.totalorder %v3815, 2056
        %vm4072 = vcmp.lt.s32.totalorder %v3816, 2056
        %vm4073 = vcmp.lt.s32.totalorder %v3817, 2056
        %vm4074 = vcmp.lt.s32.totalorder %v3818, 2056
        %vm4075 = vcmp.lt.s32.totalorder %v3819, 2056
        %vm4076 = vcmp.lt.s32.totalorder %v3820, 2056
        %vm4077 = vcmp.lt.s32.totalorder %v3821, 2056
        %vm4078 = vcmp.lt.s32.totalorder %v3822, 2056
        %vm4079 = vcmp.lt.s32.totalorder %v3823, 2056
        %vm4080 = vcmp.lt.s32.totalorder %v3824, 2056
        %vm4081 = vcmp.lt.s32.totalorder %v3825, 2056
        %vm4082 = vcmp.lt.s32.totalorder %v3826, 2056
        %vm4083 = vcmp.lt.s32.totalorder %v3827, 2056
        %vm4084 = vcmp.lt.s32.totalorder %v3828, 2056
        %vm4085 = vcmp.lt.s32.totalorder %v3829, 2056
        %vm4086 = vcmp.lt.s32.totalorder %v3830, 2056
        %vm4087 = vcmp.lt.s32.totalorder %v3831, 2056
        %vm4088 = vcmp.lt.s32.totalorder %v3832, 2056
        %vm4089 = vcmp.lt.s32.totalorder %v3833, 2056
        %vm4090 = vcmp.lt.s32.totalorder %v3834, 2056
        %vm4091 = vcmp.lt.s32.totalorder %v3835, 2056
        %vm4092 = vcmp.lt.s32.totalorder %v3836, 2056
        %vm4093 = vcmp.lt.s32.totalorder %v3837, 2056
        %vm4094 = vcmp.lt.s32.totalorder %v3838, 2056
        %vm4095 = vcmp.lt.s32.totalorder %v3839, 2056
        %vm4096 = vcmp.lt.s32.totalorder %v3840, 2056
        %vm4097 = vcmp.lt.s32.totalorder %v3841, 2056
        %vm4098 = vcmp.lt.s32.totalorder %v3842, 2056
        %vm4099 = vcmp.lt.s32.totalorder %v3843, 2056
        %vm4100 = vcmp.lt.s32.totalorder %v3844, 2056
        %vm4101 = vcmp.lt.s32.totalorder %v3845, 2056
        %vm4102 = vcmp.lt.s32.totalorder %v3846, 2056
        %vm4103 = vcmp.lt.s32.totalorder %v3847, 2056
        %vm4104 = vcmp.lt.s32.totalorder %v3848, 2056
        %vm4105 = vcmp.lt.s32.totalorder %v3849, 2056
        %vm4106 = vcmp.lt.s32.totalorder %v3850, 2056
        %vm4107 = vcmp.lt.s32.totalorder %v3851, 2056
        %vm4108 = vcmp.lt.s32.totalorder %v3852, 2056
        %vm4109 = vcmp.lt.s32.totalorder %v3853, 2056
        %vm4110 = vcmp.lt.s32.totalorder %v3854, 2056
        %vm4111 = vcmp.lt.s32.totalorder %v3855, 2056
        %vm4112 = vcmp.lt.s32.totalorder %v3856, 2056
        %v4113 = vlaneseq
        %v4114 = vand.u32 %v4113, 127
        %v4115 = vadd.s32 %v4114, 128
        %v4116 = vadd.s32 %v4114, 256
        %v4117 = vadd.s32 %v4114, 384
        %s4118 = smul.u32 %s25, 512
        %v4119 = vstv %s4118
        %v4120 = vadd.s32 %v4114, %v4119
        %v4121 = vadd.s32 %v4115, %v4119
        %v4122 = vadd.s32 %v4116, %v4119
        %v4123 = vadd.s32 %v4117, %v4119
        %vm4124 = vcmp.lt.s32.totalorder %v4120, 640
        %vm4125 = vcmp.lt.s32.totalorder %v4121, 640
        %vm4126 = vcmp.lt.s32.totalorder %v4122, 640
        %vm4127 = vcmp.lt.s32.totalorder %v4123, 640
        %vm4128 = vmand %vm3857, %vm4124
        %vm4129 = vmand %vm3857, %vm4125
        %vm4130 = vmand %vm3857, %vm4126
        %vm4131 = vmand %vm3857, %vm4127
        %vm4132 = vmand %vm3858, %vm4124
        %vm4133 = vmand %vm3858, %vm4125
        %vm4134 = vmand %vm3858, %vm4126
        %vm4135 = vmand %vm3858, %vm4127
        %vm4136 = vmand %vm3859, %vm4124
        %vm4137 = vmand %vm3859, %vm4125
        %vm4138 = vmand %vm3859, %vm4126
        %vm4139 = vmand %vm3859, %vm4127
        %vm4140 = vmand %vm3860, %vm4124
        %vm4141 = vmand %vm3860, %vm4125
        %vm4142 = vmand %vm3860, %vm4126
        %vm4143 = vmand %vm3860, %vm4127
        %vm4144 = vmand %vm3861, %vm4124
        %vm4145 = vmand %vm3861, %vm4125
        %vm4146 = vmand %vm3861, %vm4126
        %vm4147 = vmand %vm3861, %vm4127
        %vm4148 = vmand %vm3862, %vm4124
        %vm4149 = vmand %vm3862, %vm4125
        %vm4150 = vmand %vm3862, %vm4126
        %vm4151 = vmand %vm3862, %vm4127
        %vm4152 = vmand %vm3863, %vm4124
        %vm4153 = vmand %vm3863, %vm4125
        %vm4154 = vmand %vm3863, %vm4126
        %vm4155 = vmand %vm3863, %vm4127
        %vm4156 = vmand %vm3864, %vm4124
        %vm4157 = vmand %vm3864, %vm4125
        %vm4158 = vmand %vm3864, %vm4126
        %vm4159 = vmand %vm3864, %vm4127
        %vm4160 = vmand %vm3865, %vm4124
        %vm4161 = vmand %vm3865, %vm4125
        %vm4162 = vmand %vm3865, %vm4126
        %vm4163 = vmand %vm3865, %vm4127
        %vm4164 = vmand %vm3866, %vm4124
        %vm4165 = vmand %vm3866, %vm4125
        %vm4166 = vmand %vm3866, %vm4126
        %vm4167 = vmand %vm3866, %vm4127
        %vm4168 = vmand %vm3867, %vm4124
        %vm4169 = vmand %vm3867, %vm4125
        %vm4170 = vmand %vm3867, %vm4126
        %vm4171 = vmand %vm3867, %vm4127
        %vm4172 = vmand %vm3868, %vm4124
        %vm4173 = vmand %vm3868, %vm4125
        %vm4174 = vmand %vm3868, %vm4126
        %vm4175 = vmand %vm3868, %vm4127
        %vm4176 = vmand %vm3869, %vm4124
        %vm4177 = vmand %vm3869, %vm4125
        %vm4178 = vmand %vm3869, %vm4126
        %vm4179 = vmand %vm3869, %vm4127
        %vm4180 = vmand %vm3870, %vm4124
        %vm4181 = vmand %vm3870, %vm4125
        %vm4182 = vmand %vm3870, %vm4126
        %vm4183 = vmand %vm3870, %vm4127
        %vm4184 = vmand %vm3871, %vm4124
        %vm4185 = vmand %vm3871, %vm4125
        %vm4186 = vmand %vm3871, %vm4126
        %vm4187 = vmand %vm3871, %vm4127
        %vm4188 = vmand %vm3872, %vm4124
        %vm4189 = vmand %vm3872, %vm4125
        %vm4190 = vmand %vm3872, %vm4126
        %vm4191 = vmand %vm3872, %vm4127
        %vm4192 = vmand %vm3873, %vm4124
        %vm4193 = vmand %vm3873, %vm4125
        %vm4194 = vmand %vm3873, %vm4126
        %vm4195 = vmand %vm3873, %vm4127
        %vm4196 = vmand %vm3874, %vm4124
        %vm4197 = vmand %vm3874, %vm4125
        %vm4198 = vmand %vm3874, %vm4126
        %vm4199 = vmand %vm3874, %vm4127
        %vm4200 = vmand %vm3875, %vm4124
        %vm4201 = vmand %vm3875, %vm4125
        %vm4202 = vmand %vm3875, %vm4126
        %vm4203 = vmand %vm3875, %vm4127
        %vm4204 = vmand %vm3876, %vm4124
        %vm4205 = vmand %vm3876, %vm4125
        %vm4206 = vmand %vm3876, %vm4126
        %vm4207 = vmand %vm3876, %vm4127
        %vm4208 = vmand %vm3877, %vm4124
        %vm4209 = vmand %vm3877, %vm4125
        %vm4210 = vmand %vm3877, %vm4126
        %vm4211 = vmand %vm3877, %vm4127
        %vm4212 = vmand %vm3878, %vm4124
        %vm4213 = vmand %vm3878, %vm4125
        %vm4214 = vmand %vm3878, %vm4126
        %vm4215 = vmand %vm3878, %vm4127
        %vm4216 = vmand %vm3879, %vm4124
        %vm4217 = vmand %vm3879, %vm4125
        %vm4218 = vmand %vm3879, %vm4126
        %vm4219 = vmand %vm3879, %vm4127
        %vm4220 = vmand %vm3880, %vm4124
        %vm4221 = vmand %vm3880, %vm4125
        %vm4222 = vmand %vm3880, %vm4126
        %vm4223 = vmand %vm3880, %vm4127
        %vm4224 = vmand %vm3881, %vm4124
        %vm4225 = vmand %vm3881, %vm4125
        %vm4226 = vmand %vm3881, %vm4126
        %vm4227 = vmand %vm3881, %vm4127
        %vm4228 = vmand %vm3882, %vm4124
        %vm4229 = vmand %vm3882, %vm4125
        %vm4230 = vmand %vm3882, %vm4126
        %vm4231 = vmand %vm3882, %vm4127
        %vm4232 = vmand %vm3883, %vm4124
        %vm4233 = vmand %vm3883, %vm4125
        %vm4234 = vmand %vm3883, %vm4126
        %vm4235 = vmand %vm3883, %vm4127
        %vm4236 = vmand %vm3884, %vm4124
        %vm4237 = vmand %vm3884, %vm4125
        %vm4238 = vmand %vm3884, %vm4126
        %vm4239 = vmand %vm3884, %vm4127
        %vm4240 = vmand %vm3885, %vm4124
        %vm4241 = vmand %vm3885, %vm4125
        %vm4242 = vmand %vm3885, %vm4126
        %vm4243 = vmand %vm3885, %vm4127
        %vm4244 = vmand %vm3886, %vm4124
        %vm4245 = vmand %vm3886, %vm4125
        %vm4246 = vmand %vm3886, %vm4126
        %vm4247 = vmand %vm3886, %vm4127
        %vm4248 = vmand %vm3887, %vm4124
        %vm4249 = vmand %vm3887, %vm4125
        %vm4250 = vmand %vm3887, %vm4126
        %vm4251 = vmand %vm3887, %vm4127
        %vm4252 = vmand %vm3888, %vm4124
        %vm4253 = vmand %vm3888, %vm4125
        %vm4254 = vmand %vm3888, %vm4126
        %vm4255 = vmand %vm3888, %vm4127
        %vm4256 = vmand %vm3889, %vm4124
        %vm4257 = vmand %vm3889, %vm4125
        %vm4258 = vmand %vm3889, %vm4126
        %vm4259 = vmand %vm3889, %vm4127
        %vm4260 = vmand %vm3890, %vm4124
        %vm4261 = vmand %vm3890, %vm4125
        %vm4262 = vmand %vm3890, %vm4126
        %vm4263 = vmand %vm3890, %vm4127
        %vm4264 = vmand %vm3891, %vm4124
        %vm4265 = vmand %vm3891, %vm4125
        %vm4266 = vmand %vm3891, %vm4126
        %vm4267 = vmand %vm3891, %vm4127
        %vm4268 = vmand %vm3892, %vm4124
        %vm4269 = vmand %vm3892, %vm4125
        %vm4270 = vmand %vm3892, %vm4126
        %vm4271 = vmand %vm3892, %vm4127
        %vm4272 = vmand %vm3893, %vm4124
        %vm4273 = vmand %vm3893, %vm4125
        %vm4274 = vmand %vm3893, %vm4126
        %vm4275 = vmand %vm3893, %vm4127
        %vm4276 = vmand %vm3894, %vm4124
        %vm4277 = vmand %vm3894, %vm4125
        %vm4278 = vmand %vm3894, %vm4126
        %vm4279 = vmand %vm3894, %vm4127
        %vm4280 = vmand %vm3895, %vm4124
        %vm4281 = vmand %vm3895, %vm4125
        %vm4282 = vmand %vm3895, %vm4126
        %vm4283 = vmand %vm3895, %vm4127
        %vm4284 = vmand %vm3896, %vm4124
        %vm4285 = vmand %vm3896, %vm4125
        %vm4286 = vmand %vm3896, %vm4126
        %vm4287 = vmand %vm3896, %vm4127
        %vm4288 = vmand %vm3897, %vm4124
        %vm4289 = vmand %vm3897, %vm4125
        %vm4290 = vmand %vm3897, %vm4126
        %vm4291 = vmand %vm3897, %vm4127
        %vm4292 = vmand %vm3898, %vm4124
        %vm4293 = vmand %vm3898, %vm4125
        %vm4294 = vmand %vm3898, %vm4126
        %vm4295 = vmand %vm3898, %vm4127
        %vm4296 = vmand %vm3899, %vm4124
        %vm4297 = vmand %vm3899, %vm4125
        %vm4298 = vmand %vm3899, %vm4126
        %vm4299 = vmand %vm3899, %vm4127
        %vm4300 = vmand %vm3900, %vm4124
        %vm4301 = vmand %vm3900, %vm4125
        %vm4302 = vmand %vm3900, %vm4126
        %vm4303 = vmand %vm3900, %vm4127
        %vm4304 = vmand %vm3901, %vm4124
        %vm4305 = vmand %vm3901, %vm4125
        %vm4306 = vmand %vm3901, %vm4126
        %vm4307 = vmand %vm3901, %vm4127
        %vm4308 = vmand %vm3902, %vm4124
        %vm4309 = vmand %vm3902, %vm4125
        %vm4310 = vmand %vm3902, %vm4126
        %vm4311 = vmand %vm3902, %vm4127
        %vm4312 = vmand %vm3903, %vm4124
        %vm4313 = vmand %vm3903, %vm4125
        %vm4314 = vmand %vm3903, %vm4126
        %vm4315 = vmand %vm3903, %vm4127
        %vm4316 = vmand %vm3904, %vm4124
        %vm4317 = vmand %vm3904, %vm4125
        %vm4318 = vmand %vm3904, %vm4126
        %vm4319 = vmand %vm3904, %vm4127
        %vm4320 = vmand %vm3905, %vm4124
        %vm4321 = vmand %vm3905, %vm4125
        %vm4322 = vmand %vm3905, %vm4126
        %vm4323 = vmand %vm3905, %vm4127
        %vm4324 = vmand %vm3906, %vm4124
        %vm4325 = vmand %vm3906, %vm4125
        %vm4326 = vmand %vm3906, %vm4126
        %vm4327 = vmand %vm3906, %vm4127
        %vm4328 = vmand %vm3907, %vm4124
        %vm4329 = vmand %vm3907, %vm4125
        %vm4330 = vmand %vm3907, %vm4126
        %vm4331 = vmand %vm3907, %vm4127
        %vm4332 = vmand %vm3908, %vm4124
        %vm4333 = vmand %vm3908, %vm4125
        %vm4334 = vmand %vm3908, %vm4126
        %vm4335 = vmand %vm3908, %vm4127
        %vm4336 = vmand %vm3909, %vm4124
        %vm4337 = vmand %vm3909, %vm4125
        %vm4338 = vmand %vm3909, %vm4126
        %vm4339 = vmand %vm3909, %vm4127
        %vm4340 = vmand %vm3910, %vm4124
        %vm4341 = vmand %vm3910, %vm4125
        %vm4342 = vmand %vm3910, %vm4126
        %vm4343 = vmand %vm3910, %vm4127
        %vm4344 = vmand %vm3911, %vm4124
        %vm4345 = vmand %vm3911, %vm4125
        %vm4346 = vmand %vm3911, %vm4126
        %vm4347 = vmand %vm3911, %vm4127
        %vm4348 = vmand %vm3912, %vm4124
        %vm4349 = vmand %vm3912, %vm4125
        %vm4350 = vmand %vm3912, %vm4126
        %vm4351 = vmand %vm3912, %vm4127
        %vm4352 = vmand %vm3913, %vm4124
        %vm4353 = vmand %vm3913, %vm4125
        %vm4354 = vmand %vm3913, %vm4126
        %vm4355 = vmand %vm3913, %vm4127
        %vm4356 = vmand %vm3914, %vm4124
        %vm4357 = vmand %vm3914, %vm4125
        %vm4358 = vmand %vm3914, %vm4126
        %vm4359 = vmand %vm3914, %vm4127
        %vm4360 = vmand %vm3915, %vm4124
        %vm4361 = vmand %vm3915, %vm4125
        %vm4362 = vmand %vm3915, %vm4126
        %vm4363 = vmand %vm3915, %vm4127
        %vm4364 = vmand %vm3916, %vm4124
        %vm4365 = vmand %vm3916, %vm4125
        %vm4366 = vmand %vm3916, %vm4126
        %vm4367 = vmand %vm3916, %vm4127
        %vm4368 = vmand %vm3917, %vm4124
        %vm4369 = vmand %vm3917, %vm4125
        %vm4370 = vmand %vm3917, %vm4126
        %vm4371 = vmand %vm3917, %vm4127
        %vm4372 = vmand %vm3918, %vm4124
        %vm4373 = vmand %vm3918, %vm4125
        %vm4374 = vmand %vm3918, %vm4126
        %vm4375 = vmand %vm3918, %vm4127
        %vm4376 = vmand %vm3919, %vm4124
        %vm4377 = vmand %vm3919, %vm4125
        %vm4378 = vmand %vm3919, %vm4126
        %vm4379 = vmand %vm3919, %vm4127
        %vm4380 = vmand %vm3920, %vm4124
        %vm4381 = vmand %vm3920, %vm4125
        %vm4382 = vmand %vm3920, %vm4126
        %vm4383 = vmand %vm3920, %vm4127
        %vm4384 = vmand %vm3921, %vm4124
        %vm4385 = vmand %vm3921, %vm4125
        %vm4386 = vmand %vm3921, %vm4126
        %vm4387 = vmand %vm3921, %vm4127
        %vm4388 = vmand %vm3922, %vm4124
        %vm4389 = vmand %vm3922, %vm4125
        %vm4390 = vmand %vm3922, %vm4126
        %vm4391 = vmand %vm3922, %vm4127
        %vm4392 = vmand %vm3923, %vm4124
        %vm4393 = vmand %vm3923, %vm4125
        %vm4394 = vmand %vm3923, %vm4126
        %vm4395 = vmand %vm3923, %vm4127
        %vm4396 = vmand %vm3924, %vm4124
        %vm4397 = vmand %vm3924, %vm4125
        %vm4398 = vmand %vm3924, %vm4126
        %vm4399 = vmand %vm3924, %vm4127
        %vm4400 = vmand %vm3925, %vm4124
        %vm4401 = vmand %vm3925, %vm4125
        %vm4402 = vmand %vm3925, %vm4126
        %vm4403 = vmand %vm3925, %vm4127
        %vm4404 = vmand %vm3926, %vm4124
        %vm4405 = vmand %vm3926, %vm4125
        %vm4406 = vmand %vm3926, %vm4126
        %vm4407 = vmand %vm3926, %vm4127
        %vm4408 = vmand %vm3927, %vm4124
        %vm4409 = vmand %vm3927, %vm4125
        %vm4410 = vmand %vm3927, %vm4126
        %vm4411 = vmand %vm3927, %vm4127
        %vm4412 = vmand %vm3928, %vm4124
        %vm4413 = vmand %vm3928, %vm4125
        %vm4414 = vmand %vm3928, %vm4126
        %vm4415 = vmand %vm3928, %vm4127
        %vm4416 = vmand %vm3929, %vm4124
        %vm4417 = vmand %vm3929, %vm4125
        %vm4418 = vmand %vm3929, %vm4126
        %vm4419 = vmand %vm3929, %vm4127
        %vm4420 = vmand %vm3930, %vm4124
        %vm4421 = vmand %vm3930, %vm4125
        %vm4422 = vmand %vm3930, %vm4126
        %vm4423 = vmand %vm3930, %vm4127
        %vm4424 = vmand %vm3931, %vm4124
        %vm4425 = vmand %vm3931, %vm4125
        %vm4426 = vmand %vm3931, %vm4126
        %vm4427 = vmand %vm3931, %vm4127
        %vm4428 = vmand %vm3932, %vm4124
        %vm4429 = vmand %vm3932, %vm4125
        %vm4430 = vmand %vm3932, %vm4126
        %vm4431 = vmand %vm3932, %vm4127
        %vm4432 = vmand %vm3933, %vm4124
        %vm4433 = vmand %vm3933, %vm4125
        %vm4434 = vmand %vm3933, %vm4126
        %vm4435 = vmand %vm3933, %vm4127
        %vm4436 = vmand %vm3934, %vm4124
        %vm4437 = vmand %vm3934, %vm4125
        %vm4438 = vmand %vm3934, %vm4126
        %vm4439 = vmand %vm3934, %vm4127
        %vm4440 = vmand %vm3935, %vm4124
        %vm4441 = vmand %vm3935, %vm4125
        %vm4442 = vmand %vm3935, %vm4126
        %vm4443 = vmand %vm3935, %vm4127
        %vm4444 = vmand %vm3936, %vm4124
        %vm4445 = vmand %vm3936, %vm4125
        %vm4446 = vmand %vm3936, %vm4126
        %vm4447 = vmand %vm3936, %vm4127
        %vm4448 = vmand %vm3937, %vm4124
        %vm4449 = vmand %vm3937, %vm4125
        %vm4450 = vmand %vm3937, %vm4126
        %vm4451 = vmand %vm3937, %vm4127
        %vm4452 = vmand %vm3938, %vm4124
        %vm4453 = vmand %vm3938, %vm4125
        %vm4454 = vmand %vm3938, %vm4126
        %vm4455 = vmand %vm3938, %vm4127
        %vm4456 = vmand %vm3939, %vm4124
        %vm4457 = vmand %vm3939, %vm4125
        %vm4458 = vmand %vm3939, %vm4126
        %vm4459 = vmand %vm3939, %vm4127
        %vm4460 = vmand %vm3940, %vm4124
        %vm4461 = vmand %vm3940, %vm4125
        %vm4462 = vmand %vm3940, %vm4126
        %vm4463 = vmand %vm3940, %vm4127
        %vm4464 = vmand %vm3941, %vm4124
        %vm4465 = vmand %vm3941, %vm4125
        %vm4466 = vmand %vm3941, %vm4126
        %vm4467 = vmand %vm3941, %vm4127
        %vm4468 = vmand %vm3942, %vm4124
        %vm4469 = vmand %vm3942, %vm4125
        %vm4470 = vmand %vm3942, %vm4126
        %vm4471 = vmand %vm3942, %vm4127
        %vm4472 = vmand %vm3943, %vm4124
        %vm4473 = vmand %vm3943, %vm4125
        %vm4474 = vmand %vm3943, %vm4126
        %vm4475 = vmand %vm3943, %vm4127
        %vm4476 = vmand %vm3944, %vm4124
        %vm4477 = vmand %vm3944, %vm4125
        %vm4478 = vmand %vm3944, %vm4126
        %vm4479 = vmand %vm3944, %vm4127
        %vm4480 = vmand %vm3945, %vm4124
        %vm4481 = vmand %vm3945, %vm4125
        %vm4482 = vmand %vm3945, %vm4126
        %vm4483 = vmand %vm3945, %vm4127
        %vm4484 = vmand %vm3946, %vm4124
        %vm4485 = vmand %vm3946, %vm4125
        %vm4486 = vmand %vm3946, %vm4126
        %vm4487 = vmand %vm3946, %vm4127
        %vm4488 = vmand %vm3947, %vm4124
        %vm4489 = vmand %vm3947, %vm4125
        %vm4490 = vmand %vm3947, %vm4126
        %vm4491 = vmand %vm3947, %vm4127
        %vm4492 = vmand %vm3948, %vm4124
        %vm4493 = vmand %vm3948, %vm4125
        %vm4494 = vmand %vm3948, %vm4126
        %vm4495 = vmand %vm3948, %vm4127
        %vm4496 = vmand %vm3949, %vm4124
        %vm4497 = vmand %vm3949, %vm4125
        %vm4498 = vmand %vm3949, %vm4126
        %vm4499 = vmand %vm3949, %vm4127
        %vm4500 = vmand %vm3950, %vm4124
        %vm4501 = vmand %vm3950, %vm4125
        %vm4502 = vmand %vm3950, %vm4126
        %vm4503 = vmand %vm3950, %vm4127
        %vm4504 = vmand %vm3951, %vm4124
        %vm4505 = vmand %vm3951, %vm4125
        %vm4506 = vmand %vm3951, %vm4126
        %vm4507 = vmand %vm3951, %vm4127
        %vm4508 = vmand %vm3952, %vm4124
        %vm4509 = vmand %vm3952, %vm4125
        %vm4510 = vmand %vm3952, %vm4126
        %vm4511 = vmand %vm3952, %vm4127
        %vm4512 = vmand %vm3953, %vm4124
        %vm4513 = vmand %vm3953, %vm4125
        %vm4514 = vmand %vm3953, %vm4126
        %vm4515 = vmand %vm3953, %vm4127
        %vm4516 = vmand %vm3954, %vm4124
        %vm4517 = vmand %vm3954, %vm4125
        %vm4518 = vmand %vm3954, %vm4126
        %vm4519 = vmand %vm3954, %vm4127
        %vm4520 = vmand %vm3955, %vm4124
        %vm4521 = vmand %vm3955, %vm4125
        %vm4522 = vmand %vm3955, %vm4126
        %vm4523 = vmand %vm3955, %vm4127
        %vm4524 = vmand %vm3956, %vm4124
        %vm4525 = vmand %vm3956, %vm4125
        %vm4526 = vmand %vm3956, %vm4126
        %vm4527 = vmand %vm3956, %vm4127
        %vm4528 = vmand %vm3957, %vm4124
        %vm4529 = vmand %vm3957, %vm4125
        %vm4530 = vmand %vm3957, %vm4126
        %vm4531 = vmand %vm3957, %vm4127
        %vm4532 = vmand %vm3958, %vm4124
        %vm4533 = vmand %vm3958, %vm4125
        %vm4534 = vmand %vm3958, %vm4126
        %vm4535 = vmand %vm3958, %vm4127
        %vm4536 = vmand %vm3959, %vm4124
        %vm4537 = vmand %vm3959, %vm4125
        %vm4538 = vmand %vm3959, %vm4126
        %vm4539 = vmand %vm3959, %vm4127
        %vm4540 = vmand %vm3960, %vm4124
        %vm4541 = vmand %vm3960, %vm4125
        %vm4542 = vmand %vm3960, %vm4126
        %vm4543 = vmand %vm3960, %vm4127
        %vm4544 = vmand %vm3961, %vm4124
        %vm4545 = vmand %vm3961, %vm4125
        %vm4546 = vmand %vm3961, %vm4126
        %vm4547 = vmand %vm3961, %vm4127
        %vm4548 = vmand %vm3962, %vm4124
        %vm4549 = vmand %vm3962, %vm4125
        %vm4550 = vmand %vm3962, %vm4126
        %vm4551 = vmand %vm3962, %vm4127
        %vm4552 = vmand %vm3963, %vm4124
        %vm4553 = vmand %vm3963, %vm4125
        %vm4554 = vmand %vm3963, %vm4126
        %vm4555 = vmand %vm3963, %vm4127
        %vm4556 = vmand %vm3964, %vm4124
        %vm4557 = vmand %vm3964, %vm4125
        %vm4558 = vmand %vm3964, %vm4126
        %vm4559 = vmand %vm3964, %vm4127
        %vm4560 = vmand %vm3965, %vm4124
        %vm4561 = vmand %vm3965, %vm4125
        %vm4562 = vmand %vm3965, %vm4126
        %vm4563 = vmand %vm3965, %vm4127
        %vm4564 = vmand %vm3966, %vm4124
        %vm4565 = vmand %vm3966, %vm4125
        %vm4566 = vmand %vm3966, %vm4126
        %vm4567 = vmand %vm3966, %vm4127
        %vm4568 = vmand %vm3967, %vm4124
        %vm4569 = vmand %vm3967, %vm4125
        %vm4570 = vmand %vm3967, %vm4126
        %vm4571 = vmand %vm3967, %vm4127
        %vm4572 = vmand %vm3968, %vm4124
        %vm4573 = vmand %vm3968, %vm4125
        %vm4574 = vmand %vm3968, %vm4126
        %vm4575 = vmand %vm3968, %vm4127
        %vm4576 = vmand %vm3969, %vm4124
        %vm4577 = vmand %vm3969, %vm4125
        %vm4578 = vmand %vm3969, %vm4126
        %vm4579 = vmand %vm3969, %vm4127
        %vm4580 = vmand %vm3970, %vm4124
        %vm4581 = vmand %vm3970, %vm4125
        %vm4582 = vmand %vm3970, %vm4126
        %vm4583 = vmand %vm3970, %vm4127
        %vm4584 = vmand %vm3971, %vm4124
        %vm4585 = vmand %vm3971, %vm4125
        %vm4586 = vmand %vm3971, %vm4126
        %vm4587 = vmand %vm3971, %vm4127
        %vm4588 = vmand %vm3972, %vm4124
        %vm4589 = vmand %vm3972, %vm4125
        %vm4590 = vmand %vm3972, %vm4126
        %vm4591 = vmand %vm3972, %vm4127
        %vm4592 = vmand %vm3973, %vm4124
        %vm4593 = vmand %vm3973, %vm4125
        %vm4594 = vmand %vm3973, %vm4126
        %vm4595 = vmand %vm3973, %vm4127
        %vm4596 = vmand %vm3974, %vm4124
        %vm4597 = vmand %vm3974, %vm4125
        %vm4598 = vmand %vm3974, %vm4126
        %vm4599 = vmand %vm3974, %vm4127
        %vm4600 = vmand %vm3975, %vm4124
        %vm4601 = vmand %vm3975, %vm4125
        %vm4602 = vmand %vm3975, %vm4126
        %vm4603 = vmand %vm3975, %vm4127
        %vm4604 = vmand %vm3976, %vm4124
        %vm4605 = vmand %vm3976, %vm4125
        %vm4606 = vmand %vm3976, %vm4126
        %vm4607 = vmand %vm3976, %vm4127
        %vm4608 = vmand %vm3977, %vm4124
        %vm4609 = vmand %vm3977, %vm4125
        %vm4610 = vmand %vm3977, %vm4126
        %vm4611 = vmand %vm3977, %vm4127
        %vm4612 = vmand %vm3978, %vm4124
        %vm4613 = vmand %vm3978, %vm4125
        %vm4614 = vmand %vm3978, %vm4126
        %vm4615 = vmand %vm3978, %vm4127
        %vm4616 = vmand %vm3979, %vm4124
        %vm4617 = vmand %vm3979, %vm4125
        %vm4618 = vmand %vm3979, %vm4126
        %vm4619 = vmand %vm3979, %vm4127
        %vm4620 = vmand %vm3980, %vm4124
        %vm4621 = vmand %vm3980, %vm4125
        %vm4622 = vmand %vm3980, %vm4126
        %vm4623 = vmand %vm3980, %vm4127
        %vm4624 = vmand %vm3981, %vm4124
        %vm4625 = vmand %vm3981, %vm4125
        %vm4626 = vmand %vm3981, %vm4126
        %vm4627 = vmand %vm3981, %vm4127
        %vm4628 = vmand %vm3982, %vm4124
        %vm4629 = vmand %vm3982, %vm4125
        %vm4630 = vmand %vm3982, %vm4126
        %vm4631 = vmand %vm3982, %vm4127
        %vm4632 = vmand %vm3983, %vm4124
        %vm4633 = vmand %vm3983, %vm4125
        %vm4634 = vmand %vm3983, %vm4126
        %vm4635 = vmand %vm3983, %vm4127
        %vm4636 = vmand %vm3984, %vm4124
        %vm4637 = vmand %vm3984, %vm4125
        %vm4638 = vmand %vm3984, %vm4126
        %vm4639 = vmand %vm3984, %vm4127
        %vm4640 = vmand %vm3985, %vm4124
        %vm4641 = vmand %vm3985, %vm4125
        %vm4642 = vmand %vm3985, %vm4126
        %vm4643 = vmand %vm3985, %vm4127
        %vm4644 = vmand %vm3986, %vm4124
        %vm4645 = vmand %vm3986, %vm4125
        %vm4646 = vmand %vm3986, %vm4126
        %vm4647 = vmand %vm3986, %vm4127
        %vm4648 = vmand %vm3987, %vm4124
        %vm4649 = vmand %vm3987, %vm4125
        %vm4650 = vmand %vm3987, %vm4126
        %vm4651 = vmand %vm3987, %vm4127
        %vm4652 = vmand %vm3988, %vm4124
        %vm4653 = vmand %vm3988, %vm4125
        %vm4654 = vmand %vm3988, %vm4126
        %vm4655 = vmand %vm3988, %vm4127
        %vm4656 = vmand %vm3989, %vm4124
        %vm4657 = vmand %vm3989, %vm4125
        %vm4658 = vmand %vm3989, %vm4126
        %vm4659 = vmand %vm3989, %vm4127
        %vm4660 = vmand %vm3990, %vm4124
        %vm4661 = vmand %vm3990, %vm4125
        %vm4662 = vmand %vm3990, %vm4126
        %vm4663 = vmand %vm3990, %vm4127
        %vm4664 = vmand %vm3991, %vm4124
        %vm4665 = vmand %vm3991, %vm4125
        %vm4666 = vmand %vm3991, %vm4126
        %vm4667 = vmand %vm3991, %vm4127
        %vm4668 = vmand %vm3992, %vm4124
        %vm4669 = vmand %vm3992, %vm4125
        %vm4670 = vmand %vm3992, %vm4126
        %vm4671 = vmand %vm3992, %vm4127
        %vm4672 = vmand %vm3993, %vm4124
        %vm4673 = vmand %vm3993, %vm4125
        %vm4674 = vmand %vm3993, %vm4126
        %vm4675 = vmand %vm3993, %vm4127
        %vm4676 = vmand %vm3994, %vm4124
        %vm4677 = vmand %vm3994, %vm4125
        %vm4678 = vmand %vm3994, %vm4126
        %vm4679 = vmand %vm3994, %vm4127
        %vm4680 = vmand %vm3995, %vm4124
        %vm4681 = vmand %vm3995, %vm4125
        %vm4682 = vmand %vm3995, %vm4126
        %vm4683 = vmand %vm3995, %vm4127
        %vm4684 = vmand %vm3996, %vm4124
        %vm4685 = vmand %vm3996, %vm4125
        %vm4686 = vmand %vm3996, %vm4126
        %vm4687 = vmand %vm3996, %vm4127
        %vm4688 = vmand %vm3997, %vm4124
        %vm4689 = vmand %vm3997, %vm4125
        %vm4690 = vmand %vm3997, %vm4126
        %vm4691 = vmand %vm3997, %vm4127
        %vm4692 = vmand %vm3998, %vm4124
        %vm4693 = vmand %vm3998, %vm4125
        %vm4694 = vmand %vm3998, %vm4126
        %vm4695 = vmand %vm3998, %vm4127
        %vm4696 = vmand %vm3999, %vm4124
        %vm4697 = vmand %vm3999, %vm4125
        %vm4698 = vmand %vm3999, %vm4126
        %vm4699 = vmand %vm3999, %vm4127
        %vm4700 = vmand %vm4000, %vm4124
        %vm4701 = vmand %vm4000, %vm4125
        %vm4702 = vmand %vm4000, %vm4126
        %vm4703 = vmand %vm4000, %vm4127
        %vm4704 = vmand %vm4001, %vm4124
        %vm4705 = vmand %vm4001, %vm4125
        %vm4706 = vmand %vm4001, %vm4126
        %vm4707 = vmand %vm4001, %vm4127
        %vm4708 = vmand %vm4002, %vm4124
        %vm4709 = vmand %vm4002, %vm4125
        %vm4710 = vmand %vm4002, %vm4126
        %vm4711 = vmand %vm4002, %vm4127
        %vm4712 = vmand %vm4003, %vm4124
        %vm4713 = vmand %vm4003, %vm4125
        %vm4714 = vmand %vm4003, %vm4126
        %vm4715 = vmand %vm4003, %vm4127
        %vm4716 = vmand %vm4004, %vm4124
        %vm4717 = vmand %vm4004, %vm4125
        %vm4718 = vmand %vm4004, %vm4126
        %vm4719 = vmand %vm4004, %vm4127
        %vm4720 = vmand %vm4005, %vm4124
        %vm4721 = vmand %vm4005, %vm4125
        %vm4722 = vmand %vm4005, %vm4126
        %vm4723 = vmand %vm4005, %vm4127
        %vm4724 = vmand %vm4006, %vm4124
        %vm4725 = vmand %vm4006, %vm4125
        %vm4726 = vmand %vm4006, %vm4126
        %vm4727 = vmand %vm4006, %vm4127
        %vm4728 = vmand %vm4007, %vm4124
        %vm4729 = vmand %vm4007, %vm4125
        %vm4730 = vmand %vm4007, %vm4126
        %vm4731 = vmand %vm4007, %vm4127
        %vm4732 = vmand %vm4008, %vm4124
        %vm4733 = vmand %vm4008, %vm4125
        %vm4734 = vmand %vm4008, %vm4126
        %vm4735 = vmand %vm4008, %vm4127
        %vm4736 = vmand %vm4009, %vm4124
        %vm4737 = vmand %vm4009, %vm4125
        %vm4738 = vmand %vm4009, %vm4126
        %vm4739 = vmand %vm4009, %vm4127
        %vm4740 = vmand %vm4010, %vm4124
        %vm4741 = vmand %vm4010, %vm4125
        %vm4742 = vmand %vm4010, %vm4126
        %vm4743 = vmand %vm4010, %vm4127
        %vm4744 = vmand %vm4011, %vm4124
        %vm4745 = vmand %vm4011, %vm4125
        %vm4746 = vmand %vm4011, %vm4126
        %vm4747 = vmand %vm4011, %vm4127
        %vm4748 = vmand %vm4012, %vm4124
        %vm4749 = vmand %vm4012, %vm4125
        %vm4750 = vmand %vm4012, %vm4126
        %vm4751 = vmand %vm4012, %vm4127
        %vm4752 = vmand %vm4013, %vm4124
        %vm4753 = vmand %vm4013, %vm4125
        %vm4754 = vmand %vm4013, %vm4126
        %vm4755 = vmand %vm4013, %vm4127
        %vm4756 = vmand %vm4014, %vm4124
        %vm4757 = vmand %vm4014, %vm4125
        %vm4758 = vmand %vm4014, %vm4126
        %vm4759 = vmand %vm4014, %vm4127
        %vm4760 = vmand %vm4015, %vm4124
        %vm4761 = vmand %vm4015, %vm4125
        %vm4762 = vmand %vm4015, %vm4126
        %vm4763 = vmand %vm4015, %vm4127
        %vm4764 = vmand %vm4016, %vm4124
        %vm4765 = vmand %vm4016, %vm4125
        %vm4766 = vmand %vm4016, %vm4126
        %vm4767 = vmand %vm4016, %vm4127
        %vm4768 = vmand %vm4017, %vm4124
        %vm4769 = vmand %vm4017, %vm4125
        %vm4770 = vmand %vm4017, %vm4126
        %vm4771 = vmand %vm4017, %vm4127
        %vm4772 = vmand %vm4018, %vm4124
        %vm4773 = vmand %vm4018, %vm4125
        %vm4774 = vmand %vm4018, %vm4126
        %vm4775 = vmand %vm4018, %vm4127
        %vm4776 = vmand %vm4019, %vm4124
        %vm4777 = vmand %vm4019, %vm4125
        %vm4778 = vmand %vm4019, %vm4126
        %vm4779 = vmand %vm4019, %vm4127
        %vm4780 = vmand %vm4020, %vm4124
        %vm4781 = vmand %vm4020, %vm4125
        %vm4782 = vmand %vm4020, %vm4126
        %vm4783 = vmand %vm4020, %vm4127
        %vm4784 = vmand %vm4021, %vm4124
        %vm4785 = vmand %vm4021, %vm4125
        %vm4786 = vmand %vm4021, %vm4126
        %vm4787 = vmand %vm4021, %vm4127
        %vm4788 = vmand %vm4022, %vm4124
        %vm4789 = vmand %vm4022, %vm4125
        %vm4790 = vmand %vm4022, %vm4126
        %vm4791 = vmand %vm4022, %vm4127
        %vm4792 = vmand %vm4023, %vm4124
        %vm4793 = vmand %vm4023, %vm4125
        %vm4794 = vmand %vm4023, %vm4126
        %vm4795 = vmand %vm4023, %vm4127
        %vm4796 = vmand %vm4024, %vm4124
        %vm4797 = vmand %vm4024, %vm4125
        %vm4798 = vmand %vm4024, %vm4126
        %vm4799 = vmand %vm4024, %vm4127
        %vm4800 = vmand %vm4025, %vm4124
        %vm4801 = vmand %vm4025, %vm4125
        %vm4802 = vmand %vm4025, %vm4126
        %vm4803 = vmand %vm4025, %vm4127
        %vm4804 = vmand %vm4026, %vm4124
        %vm4805 = vmand %vm4026, %vm4125
        %vm4806 = vmand %vm4026, %vm4126
        %vm4807 = vmand %vm4026, %vm4127
        %vm4808 = vmand %vm4027, %vm4124
        %vm4809 = vmand %vm4027, %vm4125
        %vm4810 = vmand %vm4027, %vm4126
        %vm4811 = vmand %vm4027, %vm4127
        %vm4812 = vmand %vm4028, %vm4124
        %vm4813 = vmand %vm4028, %vm4125
        %vm4814 = vmand %vm4028, %vm4126
        %vm4815 = vmand %vm4028, %vm4127
        %vm4816 = vmand %vm4029, %vm4124
        %vm4817 = vmand %vm4029, %vm4125
        %vm4818 = vmand %vm4029, %vm4126
        %vm4819 = vmand %vm4029, %vm4127
        %vm4820 = vmand %vm4030, %vm4124
        %vm4821 = vmand %vm4030, %vm4125
        %vm4822 = vmand %vm4030, %vm4126
        %vm4823 = vmand %vm4030, %vm4127
        %vm4824 = vmand %vm4031, %vm4124
        %vm4825 = vmand %vm4031, %vm4125
        %vm4826 = vmand %vm4031, %vm4126
        %vm4827 = vmand %vm4031, %vm4127
        %vm4828 = vmand %vm4032, %vm4124
        %vm4829 = vmand %vm4032, %vm4125
        %vm4830 = vmand %vm4032, %vm4126
        %vm4831 = vmand %vm4032, %vm4127
        %vm4832 = vmand %vm4033, %vm4124
        %vm4833 = vmand %vm4033, %vm4125
        %vm4834 = vmand %vm4033, %vm4126
        %vm4835 = vmand %vm4033, %vm4127
        %vm4836 = vmand %vm4034, %vm4124
        %vm4837 = vmand %vm4034, %vm4125
        %vm4838 = vmand %vm4034, %vm4126
        %vm4839 = vmand %vm4034, %vm4127
        %vm4840 = vmand %vm4035, %vm4124
        %vm4841 = vmand %vm4035, %vm4125
        %vm4842 = vmand %vm4035, %vm4126
        %vm4843 = vmand %vm4035, %vm4127
        %vm4844 = vmand %vm4036, %vm4124
        %vm4845 = vmand %vm4036, %vm4125
        %vm4846 = vmand %vm4036, %vm4126
        %vm4847 = vmand %vm4036, %vm4127
        %vm4848 = vmand %vm4037, %vm4124
        %vm4849 = vmand %vm4037, %vm4125
        %vm4850 = vmand %vm4037, %vm4126
        %vm4851 = vmand %vm4037, %vm4127
        %vm4852 = vmand %vm4038, %vm4124
        %vm4853 = vmand %vm4038, %vm4125
        %vm4854 = vmand %vm4038, %vm4126
        %vm4855 = vmand %vm4038, %vm4127
        %vm4856 = vmand %vm4039, %vm4124
        %vm4857 = vmand %vm4039, %vm4125
        %vm4858 = vmand %vm4039, %vm4126
        %vm4859 = vmand %vm4039, %vm4127
        %vm4860 = vmand %vm4040, %vm4124
        %vm4861 = vmand %vm4040, %vm4125
        %vm4862 = vmand %vm4040, %vm4126
        %vm4863 = vmand %vm4040, %vm4127
        %vm4864 = vmand %vm4041, %vm4124
        %vm4865 = vmand %vm4041, %vm4125
        %vm4866 = vmand %vm4041, %vm4126
        %vm4867 = vmand %vm4041, %vm4127
        %vm4868 = vmand %vm4042, %vm4124
        %vm4869 = vmand %vm4042, %vm4125
        %vm4870 = vmand %vm4042, %vm4126
        %vm4871 = vmand %vm4042, %vm4127
        %vm4872 = vmand %vm4043, %vm4124
        %vm4873 = vmand %vm4043, %vm4125
        %vm4874 = vmand %vm4043, %vm4126
        %vm4875 = vmand %vm4043, %vm4127
        %vm4876 = vmand %vm4044, %vm4124
        %vm4877 = vmand %vm4044, %vm4125
        %vm4878 = vmand %vm4044, %vm4126
        %vm4879 = vmand %vm4044, %vm4127
        %vm4880 = vmand %vm4045, %vm4124
        %vm4881 = vmand %vm4045, %vm4125
        %vm4882 = vmand %vm4045, %vm4126
        %vm4883 = vmand %vm4045, %vm4127
        %vm4884 = vmand %vm4046, %vm4124
        %vm4885 = vmand %vm4046, %vm4125
        %vm4886 = vmand %vm4046, %vm4126
        %vm4887 = vmand %vm4046, %vm4127
        %vm4888 = vmand %vm4047, %vm4124
        %vm4889 = vmand %vm4047, %vm4125
        %vm4890 = vmand %vm4047, %vm4126
        %vm4891 = vmand %vm4047, %vm4127
        %vm4892 = vmand %vm4048, %vm4124
        %vm4893 = vmand %vm4048, %vm4125
        %vm4894 = vmand %vm4048, %vm4126
        %vm4895 = vmand %vm4048, %vm4127
        %vm4896 = vmand %vm4049, %vm4124
        %vm4897 = vmand %vm4049, %vm4125
        %vm4898 = vmand %vm4049, %vm4126
        %vm4899 = vmand %vm4049, %vm4127
        %vm4900 = vmand %vm4050, %vm4124
        %vm4901 = vmand %vm4050, %vm4125
        %vm4902 = vmand %vm4050, %vm4126
        %vm4903 = vmand %vm4050, %vm4127
        %vm4904 = vmand %vm4051, %vm4124
        %vm4905 = vmand %vm4051, %vm4125
        %vm4906 = vmand %vm4051, %vm4126
        %vm4907 = vmand %vm4051, %vm4127
        %vm4908 = vmand %vm4052, %vm4124
        %vm4909 = vmand %vm4052, %vm4125
        %vm4910 = vmand %vm4052, %vm4126
        %vm4911 = vmand %vm4052, %vm4127
        %vm4912 = vmand %vm4053, %vm4124
        %vm4913 = vmand %vm4053, %vm4125
        %vm4914 = vmand %vm4053, %vm4126
        %vm4915 = vmand %vm4053, %vm4127
        %vm4916 = vmand %vm4054, %vm4124
        %vm4917 = vmand %vm4054, %vm4125
        %vm4918 = vmand %vm4054, %vm4126
        %vm4919 = vmand %vm4054, %vm4127
        %vm4920 = vmand %vm4055, %vm4124
        %vm4921 = vmand %vm4055, %vm4125
        %vm4922 = vmand %vm4055, %vm4126
        %vm4923 = vmand %vm4055, %vm4127
        %vm4924 = vmand %vm4056, %vm4124
        %vm4925 = vmand %vm4056, %vm4125
        %vm4926 = vmand %vm4056, %vm4126
        %vm4927 = vmand %vm4056, %vm4127
        %vm4928 = vmand %vm4057, %vm4124
        %vm4929 = vmand %vm4057, %vm4125
        %vm4930 = vmand %vm4057, %vm4126
        %vm4931 = vmand %vm4057, %vm4127
        %vm4932 = vmand %vm4058, %vm4124
        %vm4933 = vmand %vm4058, %vm4125
        %vm4934 = vmand %vm4058, %vm4126
        %vm4935 = vmand %vm4058, %vm4127
        %vm4936 = vmand %vm4059, %vm4124
        %vm4937 = vmand %vm4059, %vm4125
        %vm4938 = vmand %vm4059, %vm4126
        %vm4939 = vmand %vm4059, %vm4127
        %vm4940 = vmand %vm4060, %vm4124
        %vm4941 = vmand %vm4060, %vm4125
        %vm4942 = vmand %vm4060, %vm4126
        %vm4943 = vmand %vm4060, %vm4127
        %vm4944 = vmand %vm4061, %vm4124
        %vm4945 = vmand %vm4061, %vm4125
        %vm4946 = vmand %vm4061, %vm4126
        %vm4947 = vmand %vm4061, %vm4127
        %vm4948 = vmand %vm4062, %vm4124
        %vm4949 = vmand %vm4062, %vm4125
        %vm4950 = vmand %vm4062, %vm4126
        %vm4951 = vmand %vm4062, %vm4127
        %vm4952 = vmand %vm4063, %vm4124
        %vm4953 = vmand %vm4063, %vm4125
        %vm4954 = vmand %vm4063, %vm4126
        %vm4955 = vmand %vm4063, %vm4127
        %vm4956 = vmand %vm4064, %vm4124
        %vm4957 = vmand %vm4064, %vm4125
        %vm4958 = vmand %vm4064, %vm4126
        %vm4959 = vmand %vm4064, %vm4127
        %vm4960 = vmand %vm4065, %vm4124
        %vm4961 = vmand %vm4065, %vm4125
        %vm4962 = vmand %vm4065, %vm4126
        %vm4963 = vmand %vm4065, %vm4127
        %vm4964 = vmand %vm4066, %vm4124
        %vm4965 = vmand %vm4066, %vm4125
        %vm4966 = vmand %vm4066, %vm4126
        %vm4967 = vmand %vm4066, %vm4127
        %vm4968 = vmand %vm4067, %vm4124
        %vm4969 = vmand %vm4067, %vm4125
        %vm4970 = vmand %vm4067, %vm4126
        %vm4971 = vmand %vm4067, %vm4127
        %vm4972 = vmand %vm4068, %vm4124
        %vm4973 = vmand %vm4068, %vm4125
        %vm4974 = vmand %vm4068, %vm4126
        %vm4975 = vmand %vm4068, %vm4127
        %vm4976 = vmand %vm4069, %vm4124
        %vm4977 = vmand %vm4069, %vm4125
        %vm4978 = vmand %vm4069, %vm4126
        %vm4979 = vmand %vm4069, %vm4127
        %vm4980 = vmand %vm4070, %vm4124
        %vm4981 = vmand %vm4070, %vm4125
        %vm4982 = vmand %vm4070, %vm4126
        %vm4983 = vmand %vm4070, %vm4127
        %vm4984 = vmand %vm4071, %vm4124
        %vm4985 = vmand %vm4071, %vm4125
        %vm4986 = vmand %vm4071, %vm4126
        %vm4987 = vmand %vm4071, %vm4127
        %vm4988 = vmand %vm4072, %vm4124
        %vm4989 = vmand %vm4072, %vm4125
        %vm4990 = vmand %vm4072, %vm4126
        %vm4991 = vmand %vm4072, %vm4127
        %vm4992 = vmand %vm4073, %vm4124
        %vm4993 = vmand %vm4073, %vm4125
        %vm4994 = vmand %vm4073, %vm4126
        %vm4995 = vmand %vm4073, %vm4127
        %vm4996 = vmand %vm4074, %vm4124
        %vm4997 = vmand %vm4074, %vm4125
        %vm4998 = vmand %vm4074, %vm4126
        %vm4999 = vmand %vm4074, %vm4127
        %vm5000 = vmand %vm4075, %vm4124
        %vm5001 = vmand %vm4075, %vm4125
        %vm5002 = vmand %vm4075, %vm4126
        %vm5003 = vmand %vm4075, %vm4127
        %vm5004 = vmand %vm4076, %vm4124
        %vm5005 = vmand %vm4076, %vm4125
        %vm5006 = vmand %vm4076, %vm4126
        %vm5007 = vmand %vm4076, %vm4127
        %vm5008 = vmand %vm4077, %vm4124
        %vm5009 = vmand %vm4077, %vm4125
        %vm5010 = vmand %vm4077, %vm4126
        %vm5011 = vmand %vm4077, %vm4127
        %vm5012 = vmand %vm4078, %vm4124
        %vm5013 = vmand %vm4078, %vm4125
        %vm5014 = vmand %vm4078, %vm4126
        %vm5015 = vmand %vm4078, %vm4127
        %vm5016 = vmand %vm4079, %vm4124
        %vm5017 = vmand %vm4079, %vm4125
        %vm5018 = vmand %vm4079, %vm4126
        %vm5019 = vmand %vm4079, %vm4127
        %vm5020 = vmand %vm4080, %vm4124
        %vm5021 = vmand %vm4080, %vm4125
        %vm5022 = vmand %vm4080, %vm4126
        %vm5023 = vmand %vm4080, %vm4127
        %vm5024 = vmand %vm4081, %vm4124
        %vm5025 = vmand %vm4081, %vm4125
        %vm5026 = vmand %vm4081, %vm4126
        %vm5027 = vmand %vm4081, %vm4127
        %vm5028 = vmand %vm4082, %vm4124
        %vm5029 = vmand %vm4082, %vm4125
        %vm5030 = vmand %vm4082, %vm4126
        %vm5031 = vmand %vm4082, %vm4127
        %vm5032 = vmand %vm4083, %vm4124
        %vm5033 = vmand %vm4083, %vm4125
        %vm5034 = vmand %vm4083, %vm4126
        %vm5035 = vmand %vm4083, %vm4127
        %vm5036 = vmand %vm4084, %vm4124
        %vm5037 = vmand %vm4084, %vm4125
        %vm5038 = vmand %vm4084, %vm4126
        %vm5039 = vmand %vm4084, %vm4127
        %vm5040 = vmand %vm4085, %vm4124
        %vm5041 = vmand %vm4085, %vm4125
        %vm5042 = vmand %vm4085, %vm4126
        %vm5043 = vmand %vm4085, %vm4127
        %vm5044 = vmand %vm4086, %vm4124
        %vm5045 = vmand %vm4086, %vm4125
        %vm5046 = vmand %vm4086, %vm4126
        %vm5047 = vmand %vm4086, %vm4127
        %vm5048 = vmand %vm4087, %vm4124
        %vm5049 = vmand %vm4087, %vm4125
        %vm5050 = vmand %vm4087, %vm4126
        %vm5051 = vmand %vm4087, %vm4127
        %vm5052 = vmand %vm4088, %vm4124
        %vm5053 = vmand %vm4088, %vm4125
        %vm5054 = vmand %vm4088, %vm4126
        %vm5055 = vmand %vm4088, %vm4127
        %vm5056 = vmand %vm4089, %vm4124
        %vm5057 = vmand %vm4089, %vm4125
        %vm5058 = vmand %vm4089, %vm4126
        %vm5059 = vmand %vm4089, %vm4127
        %vm5060 = vmand %vm4090, %vm4124
        %vm5061 = vmand %vm4090, %vm4125
        %vm5062 = vmand %vm4090, %vm4126
        %vm5063 = vmand %vm4090, %vm4127
        %vm5064 = vmand %vm4091, %vm4124
        %vm5065 = vmand %vm4091, %vm4125
        %vm5066 = vmand %vm4091, %vm4126
        %vm5067 = vmand %vm4091, %vm4127
        %vm5068 = vmand %vm4092, %vm4124
        %vm5069 = vmand %vm4092, %vm4125
        %vm5070 = vmand %vm4092, %vm4126
        %vm5071 = vmand %vm4092, %vm4127
        %vm5072 = vmand %vm4093, %vm4124
        %vm5073 = vmand %vm4093, %vm4125
        %vm5074 = vmand %vm4093, %vm4126
        %vm5075 = vmand %vm4093, %vm4127
        %vm5076 = vmand %vm4094, %vm4124
        %vm5077 = vmand %vm4094, %vm4125
        %vm5078 = vmand %vm4094, %vm4126
        %vm5079 = vmand %vm4094, %vm4127
        %vm5080 = vmand %vm4095, %vm4124
        %vm5081 = vmand %vm4095, %vm4125
        %vm5082 = vmand %vm4095, %vm4126
        %vm5083 = vmand %vm4095, %vm4127
        %vm5084 = vmand %vm4096, %vm4124
        %vm5085 = vmand %vm4096, %vm4125
        %vm5086 = vmand %vm4096, %vm4126
        %vm5087 = vmand %vm4096, %vm4127
        %vm5088 = vmand %vm4097, %vm4124
        %vm5089 = vmand %vm4097, %vm4125
        %vm5090 = vmand %vm4097, %vm4126
        %vm5091 = vmand %vm4097, %vm4127
        %vm5092 = vmand %vm4098, %vm4124
        %vm5093 = vmand %vm4098, %vm4125
        %vm5094 = vmand %vm4098, %vm4126
        %vm5095 = vmand %vm4098, %vm4127
        %vm5096 = vmand %vm4099, %vm4124
        %vm5097 = vmand %vm4099, %vm4125
        %vm5098 = vmand %vm4099, %vm4126
        %vm5099 = vmand %vm4099, %vm4127
        %vm5100 = vmand %vm4100, %vm4124
        %vm5101 = vmand %vm4100, %vm4125
        %vm5102 = vmand %vm4100, %vm4126
        %vm5103 = vmand %vm4100, %vm4127
        %vm5104 = vmand %vm4101, %vm4124
        %vm5105 = vmand %vm4101, %vm4125
        %vm5106 = vmand %vm4101, %vm4126
        %vm5107 = vmand %vm4101, %vm4127
        %vm5108 = vmand %vm4102, %vm4124
        %vm5109 = vmand %vm4102, %vm4125
        %vm5110 = vmand %vm4102, %vm4126
        %vm5111 = vmand %vm4102, %vm4127
        %vm5112 = vmand %vm4103, %vm4124
        %vm5113 = vmand %vm4103, %vm4125
        %vm5114 = vmand %vm4103, %vm4126
        %vm5115 = vmand %vm4103, %vm4127
        %vm5116 = vmand %vm4104, %vm4124
        %vm5117 = vmand %vm4104, %vm4125
        %vm5118 = vmand %vm4104, %vm4126
        %vm5119 = vmand %vm4104, %vm4127
        %vm5120 = vmand %vm4105, %vm4124
        %vm5121 = vmand %vm4105, %vm4125
        %vm5122 = vmand %vm4105, %vm4126
        %vm5123 = vmand %vm4105, %vm4127
        %vm5124 = vmand %vm4106, %vm4124
        %vm5125 = vmand %vm4106, %vm4125
        %vm5126 = vmand %vm4106, %vm4126
        %vm5127 = vmand %vm4106, %vm4127
        %vm5128 = vmand %vm4107, %vm4124
        %vm5129 = vmand %vm4107, %vm4125
        %vm5130 = vmand %vm4107, %vm4126
        %vm5131 = vmand %vm4107, %vm4127
        %vm5132 = vmand %vm4108, %vm4124
        %vm5133 = vmand %vm4108, %vm4125
        %vm5134 = vmand %vm4108, %vm4126
        %vm5135 = vmand %vm4108, %vm4127
        %vm5136 = vmand %vm4109, %vm4124
        %vm5137 = vmand %vm4109, %vm4125
        %vm5138 = vmand %vm4109, %vm4126
        %vm5139 = vmand %vm4109, %vm4127
        %vm5140 = vmand %vm4110, %vm4124
        %vm5141 = vmand %vm4110, %vm4125
        %vm5142 = vmand %vm4110, %vm4126
        %vm5143 = vmand %vm4110, %vm4127
        %vm5144 = vmand %vm4111, %vm4124
        %vm5145 = vmand %vm4111, %vm4125
        %vm5146 = vmand %vm4111, %vm4126
        %vm5147 = vmand %vm4111, %vm4127
        %vm5148 = vmand %vm4112, %vm4124
        %vm5149 = vmand %vm4112, %vm4125
        %vm5150 = vmand %vm4112, %vm4126
        %vm5151 = vmand %vm4112, %vm4127
        %v5152 = vsel %vm4128, %v2318, 0.0
        %v5153 = vsel %vm4129, %v2319, 0.0
        %v5154 = vsel %vm4130, %v2320, 0.0
        %v5155 = vsel %vm4131, %v2321, 0.0
        %v5156 = vsel %vm4132, %v2322, 0.0
        %v5157 = vsel %vm4133, %v2323, 0.0
        %v5158 = vsel %vm4134, %v2324, 0.0
        %v5159 = vsel %vm4135, %v2325, 0.0
        %v5160 = vsel %vm4136, %v2326, 0.0
        %v5161 = vsel %vm4137, %v2327, 0.0
        %v5162 = vsel %vm4138, %v2328, 0.0
        %v5163 = vsel %vm4139, %v2329, 0.0
        %v5164 = vsel %vm4140, %v2330, 0.0
        %v5165 = vsel %vm4141, %v2331, 0.0
        %v5166 = vsel %vm4142, %v2332, 0.0
        %v5167 = vsel %vm4143, %v2333, 0.0
        %v5168 = vsel %vm4144, %v2334, 0.0
        %v5169 = vsel %vm4145, %v2335, 0.0
        %v5170 = vsel %vm4146, %v2336, 0.0
        %v5171 = vsel %vm4147, %v2337, 0.0
        %v5172 = vsel %vm4148, %v2338, 0.0
        %v5173 = vsel %vm4149, %v2339, 0.0
        %v5174 = vsel %vm4150, %v2340, 0.0
        %v5175 = vsel %vm4151, %v2341, 0.0
        %v5176 = vsel %vm4152, %v2342, 0.0
        %v5177 = vsel %vm4153, %v2343, 0.0
        %v5178 = vsel %vm4154, %v2344, 0.0
        %v5179 = vsel %vm4155, %v2345, 0.0
        %v5180 = vsel %vm4156, %v2346, 0.0
        %v5181 = vsel %vm4157, %v2347, 0.0
        %v5182 = vsel %vm4158, %v2348, 0.0
        %v5183 = vsel %vm4159, %v2349, 0.0
        %v5184 = vsel %vm4160, %v2350, 0.0
        %v5185 = vsel %vm4161, %v2351, 0.0
        %v5186 = vsel %vm4162, %v2352, 0.0
        %v5187 = vsel %vm4163, %v2353, 0.0
        %v5188 = vsel %vm4164, %v2354, 0.0
        %v5189 = vsel %vm4165, %v2355, 0.0
        %v5190 = vsel %vm4166, %v2356, 0.0
        %v5191 = vsel %vm4167, %v2357, 0.0
        %v5192 = vsel %vm4168, %v2358, 0.0
        %v5193 = vsel %vm4169, %v2359, 0.0
        %v5194 = vsel %vm4170, %v2360, 0.0
        %v5195 = vsel %vm4171, %v2361, 0.0
        %v5196 = vsel %vm4172, %v2362, 0.0
        %v5197 = vsel %vm4173, %v2363, 0.0
        %v5198 = vsel %vm4174, %v2364, 0.0
        %v5199 = vsel %vm4175, %v2365, 0.0
        %v5200 = vsel %vm4176, %v2366, 0.0
        %v5201 = vsel %vm4177, %v2367, 0.0
        %v5202 = vsel %vm4178, %v2368, 0.0
        %v5203 = vsel %vm4179, %v2369, 0.0
        %v5204 = vsel %vm4180, %v2370, 0.0
        %v5205 = vsel %vm4181, %v2371, 0.0
        %v5206 = vsel %vm4182, %v2372, 0.0
        %v5207 = vsel %vm4183, %v2373, 0.0
        %v5208 = vsel %vm4184, %v2374, 0.0
        %v5209 = vsel %vm4185, %v2375, 0.0
        %v5210 = vsel %vm4186, %v2376, 0.0
        %v5211 = vsel %vm4187, %v2377, 0.0
        %v5212 = vsel %vm4188, %v2378, 0.0
        %v5213 = vsel %vm4189, %v2379, 0.0
        %v5214 = vsel %vm4190, %v2380, 0.0
        %v5215 = vsel %vm4191, %v2381, 0.0
        %v5216 = vsel %vm4192, %v2382, 0.0
        %v5217 = vsel %vm4193, %v2383, 0.0
        %v5218 = vsel %vm4194, %v2384, 0.0
        %v5219 = vsel %vm4195, %v2385, 0.0
        %v5220 = vsel %vm4196, %v2386, 0.0
        %v5221 = vsel %vm4197, %v2387, 0.0
        %v5222 = vsel %vm4198, %v2388, 0.0
        %v5223 = vsel %vm4199, %v2389, 0.0
        %v5224 = vsel %vm4200, %v2390, 0.0
        %v5225 = vsel %vm4201, %v2391, 0.0
        %v5226 = vsel %vm4202, %v2392, 0.0
        %v5227 = vsel %vm4203, %v2393, 0.0
        %v5228 = vsel %vm4204, %v2394, 0.0
        %v5229 = vsel %vm4205, %v2395, 0.0
        %v5230 = vsel %vm4206, %v2396, 0.0
        %v5231 = vsel %vm4207, %v2397, 0.0
        %v5232 = vsel %vm4208, %v2398, 0.0
        %v5233 = vsel %vm4209, %v2399, 0.0
        %v5234 = vsel %vm4210, %v2400, 0.0
        %v5235 = vsel %vm4211, %v2401, 0.0
        %v5236 = vsel %vm4212, %v2402, 0.0
        %v5237 = vsel %vm4213, %v2403, 0.0
        %v5238 = vsel %vm4214, %v2404, 0.0
        %v5239 = vsel %vm4215, %v2405, 0.0
        %v5240 = vsel %vm4216, %v2406, 0.0
        %v5241 = vsel %vm4217, %v2407, 0.0
        %v5242 = vsel %vm4218, %v2408, 0.0
        %v5243 = vsel %vm4219, %v2409, 0.0
        %v5244 = vsel %vm4220, %v2410, 0.0
        %v5245 = vsel %vm4221, %v2411, 0.0
        %v5246 = vsel %vm4222, %v2412, 0.0
        %v5247 = vsel %vm4223, %v2413, 0.0
        %v5248 = vsel %vm4224, %v2414, 0.0
        %v5249 = vsel %vm4225, %v2415, 0.0
        %v5250 = vsel %vm4226, %v2416, 0.0
        %v5251 = vsel %vm4227, %v2417, 0.0
        %v5252 = vsel %vm4228, %v2418, 0.0
        %v5253 = vsel %vm4229, %v2419, 0.0
        %v5254 = vsel %vm4230, %v2420, 0.0
        %v5255 = vsel %vm4231, %v2421, 0.0
        %v5256 = vsel %vm4232, %v2422, 0.0
        %v5257 = vsel %vm4233, %v2423, 0.0
        %v5258 = vsel %vm4234, %v2424, 0.0
        %v5259 = vsel %vm4235, %v2425, 0.0
        %v5260 = vsel %vm4236, %v2426, 0.0
        %v5261 = vsel %vm4237, %v2427, 0.0
        %v5262 = vsel %vm4238, %v2428, 0.0
        %v5263 = vsel %vm4239, %v2429, 0.0
        %v5264 = vsel %vm4240, %v2430, 0.0
        %v5265 = vsel %vm4241, %v2431, 0.0
        %v5266 = vsel %vm4242, %v2432, 0.0
        %v5267 = vsel %vm4243, %v2433, 0.0
        %v5268 = vsel %vm4244, %v2434, 0.0
        %v5269 = vsel %vm4245, %v2435, 0.0
        %v5270 = vsel %vm4246, %v2436, 0.0
        %v5271 = vsel %vm4247, %v2437, 0.0
        %v5272 = vsel %vm4248, %v2438, 0.0
        %v5273 = vsel %vm4249, %v2439, 0.0
        %v5274 = vsel %vm4250, %v2440, 0.0
        %v5275 = vsel %vm4251, %v2441, 0.0
        %v5276 = vsel %vm4252, %v2442, 0.0
        %v5277 = vsel %vm4253, %v2443, 0.0
        %v5278 = vsel %vm4254, %v2444, 0.0
        %v5279 = vsel %vm4255, %v2445, 0.0
        %v5280 = vsel %vm4256, %v2446, 0.0
        %v5281 = vsel %vm4257, %v2447, 0.0
        %v5282 = vsel %vm4258, %v2448, 0.0
        %v5283 = vsel %vm4259, %v2449, 0.0
        %v5284 = vsel %vm4260, %v2450, 0.0
        %v5285 = vsel %vm4261, %v2451, 0.0
        %v5286 = vsel %vm4262, %v2452, 0.0
        %v5287 = vsel %vm4263, %v2453, 0.0
        %v5288 = vsel %vm4264, %v2454, 0.0
        %v5289 = vsel %vm4265, %v2455, 0.0
        %v5290 = vsel %vm4266, %v2456, 0.0
        %v5291 = vsel %vm4267, %v2457, 0.0
        %v5292 = vsel %vm4268, %v2458, 0.0
        %v5293 = vsel %vm4269, %v2459, 0.0
        %v5294 = vsel %vm4270, %v2460, 0.0
        %v5295 = vsel %vm4271, %v2461, 0.0
        %v5296 = vsel %vm4272, %v2462, 0.0
        %v5297 = vsel %vm4273, %v2463, 0.0
        %v5298 = vsel %vm4274, %v2464, 0.0
        %v5299 = vsel %vm4275, %v2465, 0.0
        %v5300 = vsel %vm4276, %v2466, 0.0
        %v5301 = vsel %vm4277, %v2467, 0.0
        %v5302 = vsel %vm4278, %v2468, 0.0
        %v5303 = vsel %vm4279, %v2469, 0.0
        %v5304 = vsel %vm4280, %v2470, 0.0
        %v5305 = vsel %vm4281, %v2471, 0.0
        %v5306 = vsel %vm4282, %v2472, 0.0
        %v5307 = vsel %vm4283, %v2473, 0.0
        %v5308 = vsel %vm4284, %v2474, 0.0
        %v5309 = vsel %vm4285, %v2475, 0.0
        %v5310 = vsel %vm4286, %v2476, 0.0
        %v5311 = vsel %vm4287, %v2477, 0.0
        %v5312 = vsel %vm4288, %v2478, 0.0
        %v5313 = vsel %vm4289, %v2479, 0.0
        %v5314 = vsel %vm4290, %v2480, 0.0
        %v5315 = vsel %vm4291, %v2481, 0.0
        %v5316 = vsel %vm4292, %v2482, 0.0
        %v5317 = vsel %vm4293, %v2483, 0.0
        %v5318 = vsel %vm4294, %v2484, 0.0
        %v5319 = vsel %vm4295, %v2485, 0.0
        %v5320 = vsel %vm4296, %v2486, 0.0
        %v5321 = vsel %vm4297, %v2487, 0.0
        %v5322 = vsel %vm4298, %v2488, 0.0
        %v5323 = vsel %vm4299, %v2489, 0.0
        %v5324 = vsel %vm4300, %v2490, 0.0
        %v5325 = vsel %vm4301, %v2491, 0.0
        %v5326 = vsel %vm4302, %v2492, 0.0
        %v5327 = vsel %vm4303, %v2493, 0.0
        %v5328 = vsel %vm4304, %v2494, 0.0
        %v5329 = vsel %vm4305, %v2495, 0.0
        %v5330 = vsel %vm4306, %v2496, 0.0
        %v5331 = vsel %vm4307, %v2497, 0.0
        %v5332 = vsel %vm4308, %v2498, 0.0
        %v5333 = vsel %vm4309, %v2499, 0.0
        %v5334 = vsel %vm4310, %v2500, 0.0
        %v5335 = vsel %vm4311, %v2501, 0.0
        %v5336 = vsel %vm4312, %v2502, 0.0
        %v5337 = vsel %vm4313, %v2503, 0.0
        %v5338 = vsel %vm4314, %v2504, 0.0
        %v5339 = vsel %vm4315, %v2505, 0.0
        %v5340 = vsel %vm4316, %v2506, 0.0
        %v5341 = vsel %vm4317, %v2507, 0.0
        %v5342 = vsel %vm4318, %v2508, 0.0
        %v5343 = vsel %vm4319, %v2509, 0.0
        %v5344 = vsel %vm4320, %v2510, 0.0
        %v5345 = vsel %vm4321, %v2511, 0.0
        %v5346 = vsel %vm4322, %v2512, 0.0
        %v5347 = vsel %vm4323, %v2513, 0.0
        %v5348 = vsel %vm4324, %v2514, 0.0
        %v5349 = vsel %vm4325, %v2515, 0.0
        %v5350 = vsel %vm4326, %v2516, 0.0
        %v5351 = vsel %vm4327, %v2517, 0.0
        %v5352 = vsel %vm4328, %v2518, 0.0
        %v5353 = vsel %vm4329, %v2519, 0.0
        %v5354 = vsel %vm4330, %v2520, 0.0
        %v5355 = vsel %vm4331, %v2521, 0.0
        %v5356 = vsel %vm4332, %v2522, 0.0
        %v5357 = vsel %vm4333, %v2523, 0.0
        %v5358 = vsel %vm4334, %v2524, 0.0
        %v5359 = vsel %vm4335, %v2525, 0.0
        %v5360 = vsel %vm4336, %v2526, 0.0
        %v5361 = vsel %vm4337, %v2527, 0.0
        %v5362 = vsel %vm4338, %v2528, 0.0
        %v5363 = vsel %vm4339, %v2529, 0.0
        %v5364 = vsel %vm4340, %v2530, 0.0
        %v5365 = vsel %vm4341, %v2531, 0.0
        %v5366 = vsel %vm4342, %v2532, 0.0
        %v5367 = vsel %vm4343, %v2533, 0.0
        %v5368 = vsel %vm4344, %v2534, 0.0
        %v5369 = vsel %vm4345, %v2535, 0.0
        %v5370 = vsel %vm4346, %v2536, 0.0
        %v5371 = vsel %vm4347, %v2537, 0.0
        %v5372 = vsel %vm4348, %v2538, 0.0
        %v5373 = vsel %vm4349, %v2539, 0.0
        %v5374 = vsel %vm4350, %v2540, 0.0
        %v5375 = vsel %vm4351, %v2541, 0.0
        %v5376 = vsel %vm4352, %v2542, 0.0
        %v5377 = vsel %vm4353, %v2543, 0.0
        %v5378 = vsel %vm4354, %v2544, 0.0
        %v5379 = vsel %vm4355, %v2545, 0.0
        %v5380 = vsel %vm4356, %v2546, 0.0
        %v5381 = vsel %vm4357, %v2547, 0.0
        %v5382 = vsel %vm4358, %v2548, 0.0
        %v5383 = vsel %vm4359, %v2549, 0.0
        %v5384 = vsel %vm4360, %v2550, 0.0
        %v5385 = vsel %vm4361, %v2551, 0.0
        %v5386 = vsel %vm4362, %v2552, 0.0
        %v5387 = vsel %vm4363, %v2553, 0.0
        %v5388 = vsel %vm4364, %v2554, 0.0
        %v5389 = vsel %vm4365, %v2555, 0.0
        %v5390 = vsel %vm4366, %v2556, 0.0
        %v5391 = vsel %vm4367, %v2557, 0.0
        %v5392 = vsel %vm4368, %v2558, 0.0
        %v5393 = vsel %vm4369, %v2559, 0.0
        %v5394 = vsel %vm4370, %v2560, 0.0
        %v5395 = vsel %vm4371, %v2561, 0.0
        %v5396 = vsel %vm4372, %v2562, 0.0
        %v5397 = vsel %vm4373, %v2563, 0.0
        %v5398 = vsel %vm4374, %v2564, 0.0
        %v5399 = vsel %vm4375, %v2565, 0.0
        %v5400 = vsel %vm4376, %v2566, 0.0
        %v5401 = vsel %vm4377, %v2567, 0.0
        %v5402 = vsel %vm4378, %v2568, 0.0
        %v5403 = vsel %vm4379, %v2569, 0.0
        %v5404 = vsel %vm4380, %v2570, 0.0
        %v5405 = vsel %vm4381, %v2571, 0.0
        %v5406 = vsel %vm4382, %v2572, 0.0
        %v5407 = vsel %vm4383, %v2573, 0.0
        %v5408 = vsel %vm4384, %v2574, 0.0
        %v5409 = vsel %vm4385, %v2575, 0.0
        %v5410 = vsel %vm4386, %v2576, 0.0
        %v5411 = vsel %vm4387, %v2577, 0.0
        %v5412 = vsel %vm4388, %v2578, 0.0
        %v5413 = vsel %vm4389, %v2579, 0.0
        %v5414 = vsel %vm4390, %v2580, 0.0
        %v5415 = vsel %vm4391, %v2581, 0.0
        %v5416 = vsel %vm4392, %v2582, 0.0
        %v5417 = vsel %vm4393, %v2583, 0.0
        %v5418 = vsel %vm4394, %v2584, 0.0
        %v5419 = vsel %vm4395, %v2585, 0.0
        %v5420 = vsel %vm4396, %v2586, 0.0
        %v5421 = vsel %vm4397, %v2587, 0.0
        %v5422 = vsel %vm4398, %v2588, 0.0
        %v5423 = vsel %vm4399, %v2589, 0.0
        %v5424 = vsel %vm4400, %v2590, 0.0
        %v5425 = vsel %vm4401, %v2591, 0.0
        %v5426 = vsel %vm4402, %v2592, 0.0
        %v5427 = vsel %vm4403, %v2593, 0.0
        %v5428 = vsel %vm4404, %v2594, 0.0
        %v5429 = vsel %vm4405, %v2595, 0.0
        %v5430 = vsel %vm4406, %v2596, 0.0
        %v5431 = vsel %vm4407, %v2597, 0.0
        %v5432 = vsel %vm4408, %v2598, 0.0
        %v5433 = vsel %vm4409, %v2599, 0.0
        %v5434 = vsel %vm4410, %v2600, 0.0
        %v5435 = vsel %vm4411, %v2601, 0.0
        %v5436 = vsel %vm4412, %v2602, 0.0
        %v5437 = vsel %vm4413, %v2603, 0.0
        %v5438 = vsel %vm4414, %v2604, 0.0
        %v5439 = vsel %vm4415, %v2605, 0.0
        %v5440 = vsel %vm4416, %v2606, 0.0
        %v5441 = vsel %vm4417, %v2607, 0.0
        %v5442 = vsel %vm4418, %v2608, 0.0
        %v5443 = vsel %vm4419, %v2609, 0.0
        %v5444 = vsel %vm4420, %v2610, 0.0
        %v5445 = vsel %vm4421, %v2611, 0.0
        %v5446 = vsel %vm4422, %v2612, 0.0
        %v5447 = vsel %vm4423, %v2613, 0.0
        %v5448 = vsel %vm4424, %v2614, 0.0
        %v5449 = vsel %vm4425, %v2615, 0.0
        %v5450 = vsel %vm4426, %v2616, 0.0
        %v5451 = vsel %vm4427, %v2617, 0.0
        %v5452 = vsel %vm4428, %v2618, 0.0
        %v5453 = vsel %vm4429, %v2619, 0.0
        %v5454 = vsel %vm4430, %v2620, 0.0
        %v5455 = vsel %vm4431, %v2621, 0.0
        %v5456 = vsel %vm4432, %v2622, 0.0
        %v5457 = vsel %vm4433, %v2623, 0.0
        %v5458 = vsel %vm4434, %v2624, 0.0
        %v5459 = vsel %vm4435, %v2625, 0.0
        %v5460 = vsel %vm4436, %v2626, 0.0
        %v5461 = vsel %vm4437, %v2627, 0.0
        %v5462 = vsel %vm4438, %v2628, 0.0
        %v5463 = vsel %vm4439, %v2629, 0.0
        %v5464 = vsel %vm4440, %v2630, 0.0
        %v5465 = vsel %vm4441, %v2631, 0.0
        %v5466 = vsel %vm4442, %v2632, 0.0
        %v5467 = vsel %vm4443, %v2633, 0.0
        %v5468 = vsel %vm4444, %v2634, 0.0
        %v5469 = vsel %vm4445, %v2635, 0.0
        %v5470 = vsel %vm4446, %v2636, 0.0
        %v5471 = vsel %vm4447, %v2637, 0.0
        %v5472 = vsel %vm4448, %v2638, 0.0
        %v5473 = vsel %vm4449, %v2639, 0.0
        %v5474 = vsel %vm4450, %v2640, 0.0
        %v5475 = vsel %vm4451, %v2641, 0.0
        %v5476 = vsel %vm4452, %v2642, 0.0
        %v5477 = vsel %vm4453, %v2643, 0.0
        %v5478 = vsel %vm4454, %v2644, 0.0
        %v5479 = vsel %vm4455, %v2645, 0.0
        %v5480 = vsel %vm4456, %v2646, 0.0
        %v5481 = vsel %vm4457, %v2647, 0.0
        %v5482 = vsel %vm4458, %v2648, 0.0
        %v5483 = vsel %vm4459, %v2649, 0.0
        %v5484 = vsel %vm4460, %v2650, 0.0
        %v5485 = vsel %vm4461, %v2651, 0.0
        %v5486 = vsel %vm4462, %v2652, 0.0
        %v5487 = vsel %vm4463, %v2653, 0.0
        %v5488 = vsel %vm4464, %v2654, 0.0
        %v5489 = vsel %vm4465, %v2655, 0.0
        %v5490 = vsel %vm4466, %v2656, 0.0
        %v5491 = vsel %vm4467, %v2657, 0.0
        %v5492 = vsel %vm4468, %v2658, 0.0
        %v5493 = vsel %vm4469, %v2659, 0.0
        %v5494 = vsel %vm4470, %v2660, 0.0
        %v5495 = vsel %vm4471, %v2661, 0.0
        %v5496 = vsel %vm4472, %v2662, 0.0
        %v5497 = vsel %vm4473, %v2663, 0.0
        %v5498 = vsel %vm4474, %v2664, 0.0
        %v5499 = vsel %vm4475, %v2665, 0.0
        %v5500 = vsel %vm4476, %v2666, 0.0
        %v5501 = vsel %vm4477, %v2667, 0.0
        %v5502 = vsel %vm4478, %v2668, 0.0
        %v5503 = vsel %vm4479, %v2669, 0.0
        %v5504 = vsel %vm4480, %v2670, 0.0
        %v5505 = vsel %vm4481, %v2671, 0.0
        %v5506 = vsel %vm4482, %v2672, 0.0
        %v5507 = vsel %vm4483, %v2673, 0.0
        %v5508 = vsel %vm4484, %v2674, 0.0
        %v5509 = vsel %vm4485, %v2675, 0.0
        %v5510 = vsel %vm4486, %v2676, 0.0
        %v5511 = vsel %vm4487, %v2677, 0.0
        %v5512 = vsel %vm4488, %v2678, 0.0
        %v5513 = vsel %vm4489, %v2679, 0.0
        %v5514 = vsel %vm4490, %v2680, 0.0
        %v5515 = vsel %vm4491, %v2681, 0.0
        %v5516 = vsel %vm4492, %v2682, 0.0
        %v5517 = vsel %vm4493, %v2683, 0.0
        %v5518 = vsel %vm4494, %v2684, 0.0
        %v5519 = vsel %vm4495, %v2685, 0.0
        %v5520 = vsel %vm4496, %v2686, 0.0
        %v5521 = vsel %vm4497, %v2687, 0.0
        %v5522 = vsel %vm4498, %v2688, 0.0
        %v5523 = vsel %vm4499, %v2689, 0.0
        %v5524 = vsel %vm4500, %v2690, 0.0
        %v5525 = vsel %vm4501, %v2691, 0.0
        %v5526 = vsel %vm4502, %v2692, 0.0
        %v5527 = vsel %vm4503, %v2693, 0.0
        %v5528 = vsel %vm4504, %v2694, 0.0
        %v5529 = vsel %vm4505, %v2695, 0.0
        %v5530 = vsel %vm4506, %v2696, 0.0
        %v5531 = vsel %vm4507, %v2697, 0.0
        %v5532 = vsel %vm4508, %v2698, 0.0
        %v5533 = vsel %vm4509, %v2699, 0.0
        %v5534 = vsel %vm4510, %v2700, 0.0
        %v5535 = vsel %vm4511, %v2701, 0.0
        %v5536 = vsel %vm4512, %v2702, 0.0
        %v5537 = vsel %vm4513, %v2703, 0.0
        %v5538 = vsel %vm4514, %v2704, 0.0
        %v5539 = vsel %vm4515, %v2705, 0.0
        %v5540 = vsel %vm4516, %v2706, 0.0
        %v5541 = vsel %vm4517, %v2707, 0.0
        %v5542 = vsel %vm4518, %v2708, 0.0
        %v5543 = vsel %vm4519, %v2709, 0.0
        %v5544 = vsel %vm4520, %v2710, 0.0
        %v5545 = vsel %vm4521, %v2711, 0.0
        %v5546 = vsel %vm4522, %v2712, 0.0
        %v5547 = vsel %vm4523, %v2713, 0.0
        %v5548 = vsel %vm4524, %v2714, 0.0
        %v5549 = vsel %vm4525, %v2715, 0.0
        %v5550 = vsel %vm4526, %v2716, 0.0
        %v5551 = vsel %vm4527, %v2717, 0.0
        %v5552 = vsel %vm4528, %v2718, 0.0
        %v5553 = vsel %vm4529, %v2719, 0.0
        %v5554 = vsel %vm4530, %v2720, 0.0
        %v5555 = vsel %vm4531, %v2721, 0.0
        %v5556 = vsel %vm4532, %v2722, 0.0
        %v5557 = vsel %vm4533, %v2723, 0.0
        %v5558 = vsel %vm4534, %v2724, 0.0
        %v5559 = vsel %vm4535, %v2725, 0.0
        %v5560 = vsel %vm4536, %v2726, 0.0
        %v5561 = vsel %vm4537, %v2727, 0.0
        %v5562 = vsel %vm4538, %v2728, 0.0
        %v5563 = vsel %vm4539, %v2729, 0.0
        %v5564 = vsel %vm4540, %v2730, 0.0
        %v5565 = vsel %vm4541, %v2731, 0.0
        %v5566 = vsel %vm4542, %v2732, 0.0
        %v5567 = vsel %vm4543, %v2733, 0.0
        %v5568 = vsel %vm4544, %v2734, 0.0
        %v5569 = vsel %vm4545, %v2735, 0.0
        %v5570 = vsel %vm4546, %v2736, 0.0
        %v5571 = vsel %vm4547, %v2737, 0.0
        %v5572 = vsel %vm4548, %v2738, 0.0
        %v5573 = vsel %vm4549, %v2739, 0.0
        %v5574 = vsel %vm4550, %v2740, 0.0
        %v5575 = vsel %vm4551, %v2741, 0.0
        %v5576 = vsel %vm4552, %v2742, 0.0
        %v5577 = vsel %vm4553, %v2743, 0.0
        %v5578 = vsel %vm4554, %v2744, 0.0
        %v5579 = vsel %vm4555, %v2745, 0.0
        %v5580 = vsel %vm4556, %v2746, 0.0
        %v5581 = vsel %vm4557, %v2747, 0.0
        %v5582 = vsel %vm4558, %v2748, 0.0
        %v5583 = vsel %vm4559, %v2749, 0.0
        %v5584 = vsel %vm4560, %v2750, 0.0
        %v5585 = vsel %vm4561, %v2751, 0.0
        %v5586 = vsel %vm4562, %v2752, 0.0
        %v5587 = vsel %vm4563, %v2753, 0.0
        %v5588 = vsel %vm4564, %v2754, 0.0
        %v5589 = vsel %vm4565, %v2755, 0.0
        %v5590 = vsel %vm4566, %v2756, 0.0
        %v5591 = vsel %vm4567, %v2757, 0.0
        %v5592 = vsel %vm4568, %v2758, 0.0
        %v5593 = vsel %vm4569, %v2759, 0.0
        %v5594 = vsel %vm4570, %v2760, 0.0
        %v5595 = vsel %vm4571, %v2761, 0.0
        %v5596 = vsel %vm4572, %v2762, 0.0
        %v5597 = vsel %vm4573, %v2763, 0.0
        %v5598 = vsel %vm4574, %v2764, 0.0
        %v5599 = vsel %vm4575, %v2765, 0.0
        %v5600 = vsel %vm4576, %v2766, 0.0
        %v5601 = vsel %vm4577, %v2767, 0.0
        %v5602 = vsel %vm4578, %v2768, 0.0
        %v5603 = vsel %vm4579, %v2769, 0.0
        %v5604 = vsel %vm4580, %v2770, 0.0
        %v5605 = vsel %vm4581, %v2771, 0.0
        %v5606 = vsel %vm4582, %v2772, 0.0
        %v5607 = vsel %vm4583, %v2773, 0.0
        %v5608 = vsel %vm4584, %v2774, 0.0
        %v5609 = vsel %vm4585, %v2775, 0.0
        %v5610 = vsel %vm4586, %v2776, 0.0
        %v5611 = vsel %vm4587, %v2777, 0.0
        %v5612 = vsel %vm4588, %v2778, 0.0
        %v5613 = vsel %vm4589, %v2779, 0.0
        %v5614 = vsel %vm4590, %v2780, 0.0
        %v5615 = vsel %vm4591, %v2781, 0.0
        %v5616 = vsel %vm4592, %v2782, 0.0
        %v5617 = vsel %vm4593, %v2783, 0.0
        %v5618 = vsel %vm4594, %v2784, 0.0
        %v5619 = vsel %vm4595, %v2785, 0.0
        %v5620 = vsel %vm4596, %v2786, 0.0
        %v5621 = vsel %vm4597, %v2787, 0.0
        %v5622 = vsel %vm4598, %v2788, 0.0
        %v5623 = vsel %vm4599, %v2789, 0.0
        %v5624 = vsel %vm4600, %v2790, 0.0
        %v5625 = vsel %vm4601, %v2791, 0.0
        %v5626 = vsel %vm4602, %v2792, 0.0
        %v5627 = vsel %vm4603, %v2793, 0.0
        %v5628 = vsel %vm4604, %v2794, 0.0
        %v5629 = vsel %vm4605, %v2795, 0.0
        %v5630 = vsel %vm4606, %v2796, 0.0
        %v5631 = vsel %vm4607, %v2797, 0.0
        %v5632 = vsel %vm4608, %v2798, 0.0
        %v5633 = vsel %vm4609, %v2799, 0.0
        %v5634 = vsel %vm4610, %v2800, 0.0
        %v5635 = vsel %vm4611, %v2801, 0.0
        %v5636 = vsel %vm4612, %v2802, 0.0
        %v5637 = vsel %vm4613, %v2803, 0.0
        %v5638 = vsel %vm4614, %v2804, 0.0
        %v5639 = vsel %vm4615, %v2805, 0.0
        %v5640 = vsel %vm4616, %v2806, 0.0
        %v5641 = vsel %vm4617, %v2807, 0.0
        %v5642 = vsel %vm4618, %v2808, 0.0
        %v5643 = vsel %vm4619, %v2809, 0.0
        %v5644 = vsel %vm4620, %v2810, 0.0
        %v5645 = vsel %vm4621, %v2811, 0.0
        %v5646 = vsel %vm4622, %v2812, 0.0
        %v5647 = vsel %vm4623, %v2813, 0.0
        %v5648 = vsel %vm4624, %v2814, 0.0
        %v5649 = vsel %vm4625, %v2815, 0.0
        %v5650 = vsel %vm4626, %v2816, 0.0
        %v5651 = vsel %vm4627, %v2817, 0.0
        %v5652 = vsel %vm4628, %v2818, 0.0
        %v5653 = vsel %vm4629, %v2819, 0.0
        %v5654 = vsel %vm4630, %v2820, 0.0
        %v5655 = vsel %vm4631, %v2821, 0.0
        %v5656 = vsel %vm4632, %v2822, 0.0
        %v5657 = vsel %vm4633, %v2823, 0.0
        %v5658 = vsel %vm4634, %v2824, 0.0
        %v5659 = vsel %vm4635, %v2825, 0.0
        %v5660 = vsel %vm4636, %v2826, 0.0
        %v5661 = vsel %vm4637, %v2827, 0.0
        %v5662 = vsel %vm4638, %v2828, 0.0
        %v5663 = vsel %vm4639, %v2829, 0.0
        %v5664 = vsel %vm4640, %v2830, 0.0
        %v5665 = vsel %vm4641, %v2831, 0.0
        %v5666 = vsel %vm4642, %v2832, 0.0
        %v5667 = vsel %vm4643, %v2833, 0.0
        %v5668 = vsel %vm4644, %v2834, 0.0
        %v5669 = vsel %vm4645, %v2835, 0.0
        %v5670 = vsel %vm4646, %v2836, 0.0
        %v5671 = vsel %vm4647, %v2837, 0.0
        %v5672 = vsel %vm4648, %v2838, 0.0
        %v5673 = vsel %vm4649, %v2839, 0.0
        %v5674 = vsel %vm4650, %v2840, 0.0
        %v5675 = vsel %vm4651, %v2841, 0.0
        %v5676 = vsel %vm4652, %v2842, 0.0
        %v5677 = vsel %vm4653, %v2843, 0.0
        %v5678 = vsel %vm4654, %v2844, 0.0
        %v5679 = vsel %vm4655, %v2845, 0.0
        %v5680 = vsel %vm4656, %v2846, 0.0
        %v5681 = vsel %vm4657, %v2847, 0.0
        %v5682 = vsel %vm4658, %v2848, 0.0
        %v5683 = vsel %vm4659, %v2849, 0.0
        %v5684 = vsel %vm4660, %v2850, 0.0
        %v5685 = vsel %vm4661, %v2851, 0.0
        %v5686 = vsel %vm4662, %v2852, 0.0
        %v5687 = vsel %vm4663, %v2853, 0.0
        %v5688 = vsel %vm4664, %v2854, 0.0
        %v5689 = vsel %vm4665, %v2855, 0.0
        %v5690 = vsel %vm4666, %v2856, 0.0
        %v5691 = vsel %vm4667, %v2857, 0.0
        %v5692 = vsel %vm4668, %v2858, 0.0
        %v5693 = vsel %vm4669, %v2859, 0.0
        %v5694 = vsel %vm4670, %v2860, 0.0
        %v5695 = vsel %vm4671, %v2861, 0.0
        %v5696 = vsel %vm4672, %v2862, 0.0
        %v5697 = vsel %vm4673, %v2863, 0.0
        %v5698 = vsel %vm4674, %v2864, 0.0
        %v5699 = vsel %vm4675, %v2865, 0.0
        %v5700 = vsel %vm4676, %v2866, 0.0
        %v5701 = vsel %vm4677, %v2867, 0.0
        %v5702 = vsel %vm4678, %v2868, 0.0
        %v5703 = vsel %vm4679, %v2869, 0.0
        %v5704 = vsel %vm4680, %v2870, 0.0
        %v5705 = vsel %vm4681, %v2871, 0.0
        %v5706 = vsel %vm4682, %v2872, 0.0
        %v5707 = vsel %vm4683, %v2873, 0.0
        %v5708 = vsel %vm4684, %v2874, 0.0
        %v5709 = vsel %vm4685, %v2875, 0.0
        %v5710 = vsel %vm4686, %v2876, 0.0
        %v5711 = vsel %vm4687, %v2877, 0.0
        %v5712 = vsel %vm4688, %v2878, 0.0
        %v5713 = vsel %vm4689, %v2879, 0.0
        %v5714 = vsel %vm4690, %v2880, 0.0
        %v5715 = vsel %vm4691, %v2881, 0.0
        %v5716 = vsel %vm4692, %v2882, 0.0
        %v5717 = vsel %vm4693, %v2883, 0.0
        %v5718 = vsel %vm4694, %v2884, 0.0
        %v5719 = vsel %vm4695, %v2885, 0.0
        %v5720 = vsel %vm4696, %v2886, 0.0
        %v5721 = vsel %vm4697, %v2887, 0.0
        %v5722 = vsel %vm4698, %v2888, 0.0
        %v5723 = vsel %vm4699, %v2889, 0.0
        %v5724 = vsel %vm4700, %v2890, 0.0
        %v5725 = vsel %vm4701, %v2891, 0.0
        %v5726 = vsel %vm4702, %v2892, 0.0
        %v5727 = vsel %vm4703, %v2893, 0.0
        %v5728 = vsel %vm4704, %v2894, 0.0
        %v5729 = vsel %vm4705, %v2895, 0.0
        %v5730 = vsel %vm4706, %v2896, 0.0
        %v5731 = vsel %vm4707, %v2897, 0.0
        %v5732 = vsel %vm4708, %v2898, 0.0
        %v5733 = vsel %vm4709, %v2899, 0.0
        %v5734 = vsel %vm4710, %v2900, 0.0
        %v5735 = vsel %vm4711, %v2901, 0.0
        %v5736 = vsel %vm4712, %v2902, 0.0
        %v5737 = vsel %vm4713, %v2903, 0.0
        %v5738 = vsel %vm4714, %v2904, 0.0
        %v5739 = vsel %vm4715, %v2905, 0.0
        %v5740 = vsel %vm4716, %v2906, 0.0
        %v5741 = vsel %vm4717, %v2907, 0.0
        %v5742 = vsel %vm4718, %v2908, 0.0
        %v5743 = vsel %vm4719, %v2909, 0.0
        %v5744 = vsel %vm4720, %v2910, 0.0
        %v5745 = vsel %vm4721, %v2911, 0.0
        %v5746 = vsel %vm4722, %v2912, 0.0
        %v5747 = vsel %vm4723, %v2913, 0.0
        %v5748 = vsel %vm4724, %v2914, 0.0
        %v5749 = vsel %vm4725, %v2915, 0.0
        %v5750 = vsel %vm4726, %v2916, 0.0
        %v5751 = vsel %vm4727, %v2917, 0.0
        %v5752 = vsel %vm4728, %v2918, 0.0
        %v5753 = vsel %vm4729, %v2919, 0.0
        %v5754 = vsel %vm4730, %v2920, 0.0
        %v5755 = vsel %vm4731, %v2921, 0.0
        %v5756 = vsel %vm4732, %v2922, 0.0
        %v5757 = vsel %vm4733, %v2923, 0.0
        %v5758 = vsel %vm4734, %v2924, 0.0
        %v5759 = vsel %vm4735, %v2925, 0.0
        %v5760 = vsel %vm4736, %v2926, 0.0
        %v5761 = vsel %vm4737, %v2927, 0.0
        %v5762 = vsel %vm4738, %v2928, 0.0
        %v5763 = vsel %vm4739, %v2929, 0.0
        %v5764 = vsel %vm4740, %v2930, 0.0
        %v5765 = vsel %vm4741, %v2931, 0.0
        %v5766 = vsel %vm4742, %v2932, 0.0
        %v5767 = vsel %vm4743, %v2933, 0.0
        %v5768 = vsel %vm4744, %v2934, 0.0
        %v5769 = vsel %vm4745, %v2935, 0.0
        %v5770 = vsel %vm4746, %v2936, 0.0
        %v5771 = vsel %vm4747, %v2937, 0.0
        %v5772 = vsel %vm4748, %v2938, 0.0
        %v5773 = vsel %vm4749, %v2939, 0.0
        %v5774 = vsel %vm4750, %v2940, 0.0
        %v5775 = vsel %vm4751, %v2941, 0.0
        %v5776 = vsel %vm4752, %v2942, 0.0
        %v5777 = vsel %vm4753, %v2943, 0.0
        %v5778 = vsel %vm4754, %v2944, 0.0
        %v5779 = vsel %vm4755, %v2945, 0.0
        %v5780 = vsel %vm4756, %v2946, 0.0
        %v5781 = vsel %vm4757, %v2947, 0.0
        %v5782 = vsel %vm4758, %v2948, 0.0
        %v5783 = vsel %vm4759, %v2949, 0.0
        %v5784 = vsel %vm4760, %v2950, 0.0
        %v5785 = vsel %vm4761, %v2951, 0.0
        %v5786 = vsel %vm4762, %v2952, 0.0
        %v5787 = vsel %vm4763, %v2953, 0.0
        %v5788 = vsel %vm4764, %v2954, 0.0
        %v5789 = vsel %vm4765, %v2955, 0.0
        %v5790 = vsel %vm4766, %v2956, 0.0
        %v5791 = vsel %vm4767, %v2957, 0.0
        %v5792 = vsel %vm4768, %v2958, 0.0
        %v5793 = vsel %vm4769, %v2959, 0.0
        %v5794 = vsel %vm4770, %v2960, 0.0
        %v5795 = vsel %vm4771, %v2961, 0.0
        %v5796 = vsel %vm4772, %v2962, 0.0
        %v5797 = vsel %vm4773, %v2963, 0.0
        %v5798 = vsel %vm4774, %v2964, 0.0
        %v5799 = vsel %vm4775, %v2965, 0.0
        %v5800 = vsel %vm4776, %v2966, 0.0
        %v5801 = vsel %vm4777, %v2967, 0.0
        %v5802 = vsel %vm4778, %v2968, 0.0
        %v5803 = vsel %vm4779, %v2969, 0.0
        %v5804 = vsel %vm4780, %v2970, 0.0
        %v5805 = vsel %vm4781, %v2971, 0.0
        %v5806 = vsel %vm4782, %v2972, 0.0
        %v5807 = vsel %vm4783, %v2973, 0.0
        %v5808 = vsel %vm4784, %v2974, 0.0
        %v5809 = vsel %vm4785, %v2975, 0.0
        %v5810 = vsel %vm4786, %v2976, 0.0
        %v5811 = vsel %vm4787, %v2977, 0.0
        %v5812 = vsel %vm4788, %v2978, 0.0
        %v5813 = vsel %vm4789, %v2979, 0.0
        %v5814 = vsel %vm4790, %v2980, 0.0
        %v5815 = vsel %vm4791, %v2981, 0.0
        %v5816 = vsel %vm4792, %v2982, 0.0
        %v5817 = vsel %vm4793, %v2983, 0.0
        %v5818 = vsel %vm4794, %v2984, 0.0
        %v5819 = vsel %vm4795, %v2985, 0.0
        %v5820 = vsel %vm4796, %v2986, 0.0
        %v5821 = vsel %vm4797, %v2987, 0.0
        %v5822 = vsel %vm4798, %v2988, 0.0
        %v5823 = vsel %vm4799, %v2989, 0.0
        %v5824 = vsel %vm4800, %v2990, 0.0
        %v5825 = vsel %vm4801, %v2991, 0.0
        %v5826 = vsel %vm4802, %v2992, 0.0
        %v5827 = vsel %vm4803, %v2993, 0.0
        %v5828 = vsel %vm4804, %v2994, 0.0
        %v5829 = vsel %vm4805, %v2995, 0.0
        %v5830 = vsel %vm4806, %v2996, 0.0
        %v5831 = vsel %vm4807, %v2997, 0.0
        %v5832 = vsel %vm4808, %v2998, 0.0
        %v5833 = vsel %vm4809, %v2999, 0.0
        %v5834 = vsel %vm4810, %v3000, 0.0
        %v5835 = vsel %vm4811, %v3001, 0.0
        %v5836 = vsel %vm4812, %v3002, 0.0
        %v5837 = vsel %vm4813, %v3003, 0.0
        %v5838 = vsel %vm4814, %v3004, 0.0
        %v5839 = vsel %vm4815, %v3005, 0.0
        %v5840 = vsel %vm4816, %v3006, 0.0
        %v5841 = vsel %vm4817, %v3007, 0.0
        %v5842 = vsel %vm4818, %v3008, 0.0
        %v5843 = vsel %vm4819, %v3009, 0.0
        %v5844 = vsel %vm4820, %v3010, 0.0
        %v5845 = vsel %vm4821, %v3011, 0.0
        %v5846 = vsel %vm4822, %v3012, 0.0
        %v5847 = vsel %vm4823, %v3013, 0.0
        %v5848 = vsel %vm4824, %v3014, 0.0
        %v5849 = vsel %vm4825, %v3015, 0.0
        %v5850 = vsel %vm4826, %v3016, 0.0
        %v5851 = vsel %vm4827, %v3017, 0.0
        %v5852 = vsel %vm4828, %v3018, 0.0
        %v5853 = vsel %vm4829, %v3019, 0.0
        %v5854 = vsel %vm4830, %v3020, 0.0
        %v5855 = vsel %vm4831, %v3021, 0.0
        %v5856 = vsel %vm4832, %v3022, 0.0
        %v5857 = vsel %vm4833, %v3023, 0.0
        %v5858 = vsel %vm4834, %v3024, 0.0
        %v5859 = vsel %vm4835, %v3025, 0.0
        %v5860 = vsel %vm4836, %v3026, 0.0
        %v5861 = vsel %vm4837, %v3027, 0.0
        %v5862 = vsel %vm4838, %v3028, 0.0
        %v5863 = vsel %vm4839, %v3029, 0.0
        %v5864 = vsel %vm4840, %v3030, 0.0
        %v5865 = vsel %vm4841, %v3031, 0.0
        %v5866 = vsel %vm4842, %v3032, 0.0
        %v5867 = vsel %vm4843, %v3033, 0.0
        %v5868 = vsel %vm4844, %v3034, 0.0
        %v5869 = vsel %vm4845, %v3035, 0.0
        %v5870 = vsel %vm4846, %v3036, 0.0
        %v5871 = vsel %vm4847, %v3037, 0.0
        %v5872 = vsel %vm4848, %v3038, 0.0
        %v5873 = vsel %vm4849, %v3039, 0.0
        %v5874 = vsel %vm4850, %v3040, 0.0
        %v5875 = vsel %vm4851, %v3041, 0.0
        %v5876 = vsel %vm4852, %v3042, 0.0
        %v5877 = vsel %vm4853, %v3043, 0.0
        %v5878 = vsel %vm4854, %v3044, 0.0
        %v5879 = vsel %vm4855, %v3045, 0.0
        %v5880 = vsel %vm4856, %v3046, 0.0
        %v5881 = vsel %vm4857, %v3047, 0.0
        %v5882 = vsel %vm4858, %v3048, 0.0
        %v5883 = vsel %vm4859, %v3049, 0.0
        %v5884 = vsel %vm4860, %v3050, 0.0
        %v5885 = vsel %vm4861, %v3051, 0.0
        %v5886 = vsel %vm4862, %v3052, 0.0
        %v5887 = vsel %vm4863, %v3053, 0.0
        %v5888 = vsel %vm4864, %v3054, 0.0
        %v5889 = vsel %vm4865, %v3055, 0.0
        %v5890 = vsel %vm4866, %v3056, 0.0
        %v5891 = vsel %vm4867, %v3057, 0.0
        %v5892 = vsel %vm4868, %v3058, 0.0
        %v5893 = vsel %vm4869, %v3059, 0.0
        %v5894 = vsel %vm4870, %v3060, 0.0
        %v5895 = vsel %vm4871, %v3061, 0.0
        %v5896 = vsel %vm4872, %v3062, 0.0
        %v5897 = vsel %vm4873, %v3063, 0.0
        %v5898 = vsel %vm4874, %v3064, 0.0
        %v5899 = vsel %vm4875, %v3065, 0.0
        %v5900 = vsel %vm4876, %v3066, 0.0
        %v5901 = vsel %vm4877, %v3067, 0.0
        %v5902 = vsel %vm4878, %v3068, 0.0
        %v5903 = vsel %vm4879, %v3069, 0.0
        %v5904 = vsel %vm4880, %v3070, 0.0
        %v5905 = vsel %vm4881, %v3071, 0.0
        %v5906 = vsel %vm4882, %v3072, 0.0
        %v5907 = vsel %vm4883, %v3073, 0.0
        %v5908 = vsel %vm4884, %v3074, 0.0
        %v5909 = vsel %vm4885, %v3075, 0.0
        %v5910 = vsel %vm4886, %v3076, 0.0
        %v5911 = vsel %vm4887, %v3077, 0.0
        %v5912 = vsel %vm4888, %v3078, 0.0
        %v5913 = vsel %vm4889, %v3079, 0.0
        %v5914 = vsel %vm4890, %v3080, 0.0
        %v5915 = vsel %vm4891, %v3081, 0.0
        %v5916 = vsel %vm4892, %v3082, 0.0
        %v5917 = vsel %vm4893, %v3083, 0.0
        %v5918 = vsel %vm4894, %v3084, 0.0
        %v5919 = vsel %vm4895, %v3085, 0.0
        %v5920 = vsel %vm4896, %v3086, 0.0
        %v5921 = vsel %vm4897, %v3087, 0.0
        %v5922 = vsel %vm4898, %v3088, 0.0
        %v5923 = vsel %vm4899, %v3089, 0.0
        %v5924 = vsel %vm4900, %v3090, 0.0
        %v5925 = vsel %vm4901, %v3091, 0.0
        %v5926 = vsel %vm4902, %v3092, 0.0
        %v5927 = vsel %vm4903, %v3093, 0.0
        %v5928 = vsel %vm4904, %v3094, 0.0
        %v5929 = vsel %vm4905, %v3095, 0.0
        %v5930 = vsel %vm4906, %v3096, 0.0
        %v5931 = vsel %vm4907, %v3097, 0.0
        %v5932 = vsel %vm4908, %v3098, 0.0
        %v5933 = vsel %vm4909, %v3099, 0.0
        %v5934 = vsel %vm4910, %v3100, 0.0
        %v5935 = vsel %vm4911, %v3101, 0.0
        %v5936 = vsel %vm4912, %v3102, 0.0
        %v5937 = vsel %vm4913, %v3103, 0.0
        %v5938 = vsel %vm4914, %v3104, 0.0
        %v5939 = vsel %vm4915, %v3105, 0.0
        %v5940 = vsel %vm4916, %v3106, 0.0
        %v5941 = vsel %vm4917, %v3107, 0.0
        %v5942 = vsel %vm4918, %v3108, 0.0
        %v5943 = vsel %vm4919, %v3109, 0.0
        %v5944 = vsel %vm4920, %v3110, 0.0
        %v5945 = vsel %vm4921, %v3111, 0.0
        %v5946 = vsel %vm4922, %v3112, 0.0
        %v5947 = vsel %vm4923, %v3113, 0.0
        %v5948 = vsel %vm4924, %v3114, 0.0
        %v5949 = vsel %vm4925, %v3115, 0.0
        %v5950 = vsel %vm4926, %v3116, 0.0
        %v5951 = vsel %vm4927, %v3117, 0.0
        %v5952 = vsel %vm4928, %v3118, 0.0
        %v5953 = vsel %vm4929, %v3119, 0.0
        %v5954 = vsel %vm4930, %v3120, 0.0
        %v5955 = vsel %vm4931, %v3121, 0.0
        %v5956 = vsel %vm4932, %v3122, 0.0
        %v5957 = vsel %vm4933, %v3123, 0.0
        %v5958 = vsel %vm4934, %v3124, 0.0
        %v5959 = vsel %vm4935, %v3125, 0.0
        %v5960 = vsel %vm4936, %v3126, 0.0
        %v5961 = vsel %vm4937, %v3127, 0.0
        %v5962 = vsel %vm4938, %v3128, 0.0
        %v5963 = vsel %vm4939, %v3129, 0.0
        %v5964 = vsel %vm4940, %v3130, 0.0
        %v5965 = vsel %vm4941, %v3131, 0.0
        %v5966 = vsel %vm4942, %v3132, 0.0
        %v5967 = vsel %vm4943, %v3133, 0.0
        %v5968 = vsel %vm4944, %v3134, 0.0
        %v5969 = vsel %vm4945, %v3135, 0.0
        %v5970 = vsel %vm4946, %v3136, 0.0
        %v5971 = vsel %vm4947, %v3137, 0.0
        %v5972 = vsel %vm4948, %v3138, 0.0
        %v5973 = vsel %vm4949, %v3139, 0.0
        %v5974 = vsel %vm4950, %v3140, 0.0
        %v5975 = vsel %vm4951, %v3141, 0.0
        %v5976 = vsel %vm4952, %v3142, 0.0
        %v5977 = vsel %vm4953, %v3143, 0.0
        %v5978 = vsel %vm4954, %v3144, 0.0
        %v5979 = vsel %vm4955, %v3145, 0.0
        %v5980 = vsel %vm4956, %v3146, 0.0
        %v5981 = vsel %vm4957, %v3147, 0.0
        %v5982 = vsel %vm4958, %v3148, 0.0
        %v5983 = vsel %vm4959, %v3149, 0.0
        %v5984 = vsel %vm4960, %v3150, 0.0
        %v5985 = vsel %vm4961, %v3151, 0.0
        %v5986 = vsel %vm4962, %v3152, 0.0
        %v5987 = vsel %vm4963, %v3153, 0.0
        %v5988 = vsel %vm4964, %v3154, 0.0
        %v5989 = vsel %vm4965, %v3155, 0.0
        %v5990 = vsel %vm4966, %v3156, 0.0
        %v5991 = vsel %vm4967, %v3157, 0.0
        %v5992 = vsel %vm4968, %v3158, 0.0
        %v5993 = vsel %vm4969, %v3159, 0.0
        %v5994 = vsel %vm4970, %v3160, 0.0
        %v5995 = vsel %vm4971, %v3161, 0.0
        %v5996 = vsel %vm4972, %v3162, 0.0
        %v5997 = vsel %vm4973, %v3163, 0.0
        %v5998 = vsel %vm4974, %v3164, 0.0
        %v5999 = vsel %vm4975, %v3165, 0.0
        %v6000 = vsel %vm4976, %v3166, 0.0
        %v6001 = vsel %vm4977, %v3167, 0.0
        %v6002 = vsel %vm4978, %v3168, 0.0
        %v6003 = vsel %vm4979, %v3169, 0.0
        %v6004 = vsel %vm4980, %v3170, 0.0
        %v6005 = vsel %vm4981, %v3171, 0.0
        %v6006 = vsel %vm4982, %v3172, 0.0
        %v6007 = vsel %vm4983, %v3173, 0.0
        %v6008 = vsel %vm4984, %v3174, 0.0
        %v6009 = vsel %vm4985, %v3175, 0.0
        %v6010 = vsel %vm4986, %v3176, 0.0
        %v6011 = vsel %vm4987, %v3177, 0.0
        %v6012 = vsel %vm4988, %v3178, 0.0
        %v6013 = vsel %vm4989, %v3179, 0.0
        %v6014 = vsel %vm4990, %v3180, 0.0
        %v6015 = vsel %vm4991, %v3181, 0.0
        %v6016 = vsel %vm4992, %v3182, 0.0
        %v6017 = vsel %vm4993, %v3183, 0.0
        %v6018 = vsel %vm4994, %v3184, 0.0
        %v6019 = vsel %vm4995, %v3185, 0.0
        %v6020 = vsel %vm4996, %v3186, 0.0
        %v6021 = vsel %vm4997, %v3187, 0.0
        %v6022 = vsel %vm4998, %v3188, 0.0
        %v6023 = vsel %vm4999, %v3189, 0.0
        %v6024 = vsel %vm5000, %v3190, 0.0
        %v6025 = vsel %vm5001, %v3191, 0.0
        %v6026 = vsel %vm5002, %v3192, 0.0
        %v6027 = vsel %vm5003, %v3193, 0.0
        %v6028 = vsel %vm5004, %v3194, 0.0
        %v6029 = vsel %vm5005, %v3195, 0.0
        %v6030 = vsel %vm5006, %v3196, 0.0
        %v6031 = vsel %vm5007, %v3197, 0.0
        %v6032 = vsel %vm5008, %v3198, 0.0
        %v6033 = vsel %vm5009, %v3199, 0.0
        %v6034 = vsel %vm5010, %v3200, 0.0
        %v6035 = vsel %vm5011, %v3201, 0.0
        %v6036 = vsel %vm5012, %v3202, 0.0
        %v6037 = vsel %vm5013, %v3203, 0.0
        %v6038 = vsel %vm5014, %v3204, 0.0
        %v6039 = vsel %vm5015, %v3205, 0.0
        %v6040 = vsel %vm5016, %v3206, 0.0
        %v6041 = vsel %vm5017, %v3207, 0.0
        %v6042 = vsel %vm5018, %v3208, 0.0
        %v6043 = vsel %vm5019, %v3209, 0.0
        %v6044 = vsel %vm5020, %v3210, 0.0
        %v6045 = vsel %vm5021, %v3211, 0.0
        %v6046 = vsel %vm5022, %v3212, 0.0
        %v6047 = vsel %vm5023, %v3213, 0.0
        %v6048 = vsel %vm5024, %v3214, 0.0
        %v6049 = vsel %vm5025, %v3215, 0.0
        %v6050 = vsel %vm5026, %v3216, 0.0
        %v6051 = vsel %vm5027, %v3217, 0.0
        %v6052 = vsel %vm5028, %v3218, 0.0
        %v6053 = vsel %vm5029, %v3219, 0.0
        %v6054 = vsel %vm5030, %v3220, 0.0
        %v6055 = vsel %vm5031, %v3221, 0.0
        %v6056 = vsel %vm5032, %v3222, 0.0
        %v6057 = vsel %vm5033, %v3223, 0.0
        %v6058 = vsel %vm5034, %v3224, 0.0
        %v6059 = vsel %vm5035, %v3225, 0.0
        %v6060 = vsel %vm5036, %v3226, 0.0
        %v6061 = vsel %vm5037, %v3227, 0.0
        %v6062 = vsel %vm5038, %v3228, 0.0
        %v6063 = vsel %vm5039, %v3229, 0.0
        %v6064 = vsel %vm5040, %v3230, 0.0
        %v6065 = vsel %vm5041, %v3231, 0.0
        %v6066 = vsel %vm5042, %v3232, 0.0
        %v6067 = vsel %vm5043, %v3233, 0.0
        %v6068 = vsel %vm5044, %v3234, 0.0
        %v6069 = vsel %vm5045, %v3235, 0.0
        %v6070 = vsel %vm5046, %v3236, 0.0
        %v6071 = vsel %vm5047, %v3237, 0.0
        %v6072 = vsel %vm5048, %v3238, 0.0
        %v6073 = vsel %vm5049, %v3239, 0.0
        %v6074 = vsel %vm5050, %v3240, 0.0
        %v6075 = vsel %vm5051, %v3241, 0.0
        %v6076 = vsel %vm5052, %v3242, 0.0
        %v6077 = vsel %vm5053, %v3243, 0.0
        %v6078 = vsel %vm5054, %v3244, 0.0
        %v6079 = vsel %vm5055, %v3245, 0.0
        %v6080 = vsel %vm5056, %v3246, 0.0
        %v6081 = vsel %vm5057, %v3247, 0.0
        %v6082 = vsel %vm5058, %v3248, 0.0
        %v6083 = vsel %vm5059, %v3249, 0.0
        %v6084 = vsel %vm5060, %v3250, 0.0
        %v6085 = vsel %vm5061, %v3251, 0.0
        %v6086 = vsel %vm5062, %v3252, 0.0
        %v6087 = vsel %vm5063, %v3253, 0.0
        %v6088 = vsel %vm5064, %v3254, 0.0
        %v6089 = vsel %vm5065, %v3255, 0.0
        %v6090 = vsel %vm5066, %v3256, 0.0
        %v6091 = vsel %vm5067, %v3257, 0.0
        %v6092 = vsel %vm5068, %v3258, 0.0
        %v6093 = vsel %vm5069, %v3259, 0.0
        %v6094 = vsel %vm5070, %v3260, 0.0
        %v6095 = vsel %vm5071, %v3261, 0.0
        %v6096 = vsel %vm5072, %v3262, 0.0
        %v6097 = vsel %vm5073, %v3263, 0.0
        %v6098 = vsel %vm5074, %v3264, 0.0
        %v6099 = vsel %vm5075, %v3265, 0.0
        %v6100 = vsel %vm5076, %v3266, 0.0
        %v6101 = vsel %vm5077, %v3267, 0.0
        %v6102 = vsel %vm5078, %v3268, 0.0
        %v6103 = vsel %vm5079, %v3269, 0.0
        %v6104 = vsel %vm5080, %v3270, 0.0
        %v6105 = vsel %vm5081, %v3271, 0.0
        %v6106 = vsel %vm5082, %v3272, 0.0
        %v6107 = vsel %vm5083, %v3273, 0.0
        %v6108 = vsel %vm5084, %v3274, 0.0
        %v6109 = vsel %vm5085, %v3275, 0.0
        %v6110 = vsel %vm5086, %v3276, 0.0
        %v6111 = vsel %vm5087, %v3277, 0.0
        %v6112 = vsel %vm5088, %v3278, 0.0
        %v6113 = vsel %vm5089, %v3279, 0.0
        %v6114 = vsel %vm5090, %v3280, 0.0
        %v6115 = vsel %vm5091, %v3281, 0.0
        %v6116 = vsel %vm5092, %v3282, 0.0
        %v6117 = vsel %vm5093, %v3283, 0.0
        %v6118 = vsel %vm5094, %v3284, 0.0
        %v6119 = vsel %vm5095, %v3285, 0.0
        %v6120 = vsel %vm5096, %v3286, 0.0
        %v6121 = vsel %vm5097, %v3287, 0.0
        %v6122 = vsel %vm5098, %v3288, 0.0
        %v6123 = vsel %vm5099, %v3289, 0.0
        %v6124 = vsel %vm5100, %v3290, 0.0
        %v6125 = vsel %vm5101, %v3291, 0.0
        %v6126 = vsel %vm5102, %v3292, 0.0
        %v6127 = vsel %vm5103, %v3293, 0.0
        %v6128 = vsel %vm5104, %v3294, 0.0
        %v6129 = vsel %vm5105, %v3295, 0.0
        %v6130 = vsel %vm5106, %v3296, 0.0
        %v6131 = vsel %vm5107, %v3297, 0.0
        %v6132 = vsel %vm5108, %v3298, 0.0
        %v6133 = vsel %vm5109, %v3299, 0.0
        %v6134 = vsel %vm5110, %v3300, 0.0
        %v6135 = vsel %vm5111, %v3301, 0.0
        %v6136 = vsel %vm5112, %v3302, 0.0
        %v6137 = vsel %vm5113, %v3303, 0.0
        %v6138 = vsel %vm5114, %v3304, 0.0
        %v6139 = vsel %vm5115, %v3305, 0.0
        %v6140 = vsel %vm5116, %v3306, 0.0
        %v6141 = vsel %vm5117, %v3307, 0.0
        %v6142 = vsel %vm5118, %v3308, 0.0
        %v6143 = vsel %vm5119, %v3309, 0.0
        %v6144 = vsel %vm5120, %v3310, 0.0
        %v6145 = vsel %vm5121, %v3311, 0.0
        %v6146 = vsel %vm5122, %v3312, 0.0
        %v6147 = vsel %vm5123, %v3313, 0.0
        %v6148 = vsel %vm5124, %v3314, 0.0
        %v6149 = vsel %vm5125, %v3315, 0.0
        %v6150 = vsel %vm5126, %v3316, 0.0
        %v6151 = vsel %vm5127, %v3317, 0.0
        %v6152 = vsel %vm5128, %v3318, 0.0
        %v6153 = vsel %vm5129, %v3319, 0.0
        %v6154 = vsel %vm5130, %v3320, 0.0
        %v6155 = vsel %vm5131, %v3321, 0.0
        %v6156 = vsel %vm5132, %v3322, 0.0
        %v6157 = vsel %vm5133, %v3323, 0.0
        %v6158 = vsel %vm5134, %v3324, 0.0
        %v6159 = vsel %vm5135, %v3325, 0.0
        %v6160 = vsel %vm5136, %v3326, 0.0
        %v6161 = vsel %vm5137, %v3327, 0.0
        %v6162 = vsel %vm5138, %v3328, 0.0
        %v6163 = vsel %vm5139, %v3329, 0.0
        %v6164 = vsel %vm5140, %v3330, 0.0
        %v6165 = vsel %vm5141, %v3331, 0.0
        %v6166 = vsel %vm5142, %v3332, 0.0
        %v6167 = vsel %vm5143, %v3333, 0.0
        %v6168 = vsel %vm5144, %v3334, 0.0
        %v6169 = vsel %vm5145, %v3335, 0.0
        %v6170 = vsel %vm5146, %v3336, 0.0
        %v6171 = vsel %vm5147, %v3337, 0.0
        %v6172 = vsel %vm5148, %v3338, 0.0
        %v6173 = vsel %vm5149, %v3339, 0.0
        %v6174 = vsel %vm5150, %v3340, 0.0
        %v6175 = vsel %vm5151, %v3341, 0.0
        %v6176 = vmul.f32 %v5152, %v5152
        %v6177 = vmul.f32 %v5153, %v5153
        %v6178 = vmul.f32 %v5154, %v5154
        %v6179 = vmul.f32 %v5155, %v5155
        %v6180 = vmul.f32 %v5156, %v5156
        %v6181 = vmul.f32 %v5157, %v5157
        %v6182 = vmul.f32 %v5158, %v5158
        %v6183 = vmul.f32 %v5159, %v5159
        %v6184 = vmul.f32 %v5160, %v5160
        %v6185 = vmul.f32 %v5161, %v5161
        %v6186 = vmul.f32 %v5162, %v5162
        %v6187 = vmul.f32 %v5163, %v5163
        %v6188 = vmul.f32 %v5164, %v5164
        %v6189 = vmul.f32 %v5165, %v5165
        %v6190 = vmul.f32 %v5166, %v5166
        %v6191 = vmul.f32 %v5167, %v5167
        %v6192 = vmul.f32 %v5168, %v5168
        %v6193 = vmul.f32 %v5169, %v5169
        %v6194 = vmul.f32 %v5170, %v5170
        %v6195 = vmul.f32 %v5171, %v5171
        %v6196 = vmul.f32 %v5172, %v5172
        %v6197 = vmul.f32 %v5173, %v5173
        %v6198 = vmul.f32 %v5174, %v5174
        %v6199 = vmul.f32 %v5175, %v5175
        %v6200 = vmul.f32 %v5176, %v5176
        %v6201 = vmul.f32 %v5177, %v5177
        %v6202 = vmul.f32 %v5178, %v5178
        %v6203 = vmul.f32 %v5179, %v5179
        %v6204 = vmul.f32 %v5180, %v5180
        %v6205 = vmul.f32 %v5181, %v5181
        %v6206 = vmul.f32 %v5182, %v5182
        %v6207 = vmul.f32 %v5183, %v5183
        %v6208 = vmul.f32 %v5184, %v5184
        %v6209 = vmul.f32 %v5185, %v5185
        %v6210 = vmul.f32 %v5186, %v5186
        %v6211 = vmul.f32 %v5187, %v5187
        %v6212 = vmul.f32 %v5188, %v5188
        %v6213 = vmul.f32 %v5189, %v5189
        %v6214 = vmul.f32 %v5190, %v5190
        %v6215 = vmul.f32 %v5191, %v5191
        %v6216 = vmul.f32 %v5192, %v5192
        %v6217 = vmul.f32 %v5193, %v5193
        %v6218 = vmul.f32 %v5194, %v5194
        %v6219 = vmul.f32 %v5195, %v5195
        %v6220 = vmul.f32 %v5196, %v5196
        %v6221 = vmul.f32 %v5197, %v5197
        %v6222 = vmul.f32 %v5198, %v5198
        %v6223 = vmul.f32 %v5199, %v5199
        %v6224 = vmul.f32 %v5200, %v5200
        %v6225 = vmul.f32 %v5201, %v5201
        %v6226 = vmul.f32 %v5202, %v5202
        %v6227 = vmul.f32 %v5203, %v5203
        %v6228 = vmul.f32 %v5204, %v5204
        %v6229 = vmul.f32 %v5205, %v5205
        %v6230 = vmul.f32 %v5206, %v5206
        %v6231 = vmul.f32 %v5207, %v5207
        %v6232 = vmul.f32 %v5208, %v5208
        %v6233 = vmul.f32 %v5209, %v5209
        %v6234 = vmul.f32 %v5210, %v5210
        %v6235 = vmul.f32 %v5211, %v5211
        %v6236 = vmul.f32 %v5212, %v5212
        %v6237 = vmul.f32 %v5213, %v5213
        %v6238 = vmul.f32 %v5214, %v5214
        %v6239 = vmul.f32 %v5215, %v5215
        %v6240 = vmul.f32 %v5216, %v5216
        %v6241 = vmul.f32 %v5217, %v5217
        %v6242 = vmul.f32 %v5218, %v5218
        %v6243 = vmul.f32 %v5219, %v5219
        %v6244 = vmul.f32 %v5220, %v5220
        %v6245 = vmul.f32 %v5221, %v5221
        %v6246 = vmul.f32 %v5222, %v5222
        %v6247 = vmul.f32 %v5223, %v5223
        %v6248 = vmul.f32 %v5224, %v5224
        %v6249 = vmul.f32 %v5225, %v5225
        %v6250 = vmul.f32 %v5226, %v5226
        %v6251 = vmul.f32 %v5227, %v5227
        %v6252 = vmul.f32 %v5228, %v5228
        %v6253 = vmul.f32 %v5229, %v5229
        %v6254 = vmul.f32 %v5230, %v5230
        %v6255 = vmul.f32 %v5231, %v5231
        %v6256 = vmul.f32 %v5232, %v5232
        %v6257 = vmul.f32 %v5233, %v5233
        %v6258 = vmul.f32 %v5234, %v5234
        %v6259 = vmul.f32 %v5235, %v5235
        %v6260 = vmul.f32 %v5236, %v5236
        %v6261 = vmul.f32 %v5237, %v5237
        %v6262 = vmul.f32 %v5238, %v5238
        %v6263 = vmul.f32 %v5239, %v5239
        %v6264 = vmul.f32 %v5240, %v5240
        %v6265 = vmul.f32 %v5241, %v5241
        %v6266 = vmul.f32 %v5242, %v5242
        %v6267 = vmul.f32 %v5243, %v5243
        %v6268 = vmul.f32 %v5244, %v5244
        %v6269 = vmul.f32 %v5245, %v5245
        %v6270 = vmul.f32 %v5246, %v5246
        %v6271 = vmul.f32 %v5247, %v5247
        %v6272 = vmul.f32 %v5248, %v5248
        %v6273 = vmul.f32 %v5249, %v5249
        %v6274 = vmul.f32 %v5250, %v5250
        %v6275 = vmul.f32 %v5251, %v5251
        %v6276 = vmul.f32 %v5252, %v5252
        %v6277 = vmul.f32 %v5253, %v5253
        %v6278 = vmul.f32 %v5254, %v5254
        %v6279 = vmul.f32 %v5255, %v5255
        %v6280 = vmul.f32 %v5256, %v5256
        %v6281 = vmul.f32 %v5257, %v5257
        %v6282 = vmul.f32 %v5258, %v5258
        %v6283 = vmul.f32 %v5259, %v5259
        %v6284 = vmul.f32 %v5260, %v5260
        %v6285 = vmul.f32 %v5261, %v5261
        %v6286 = vmul.f32 %v5262, %v5262
        %v6287 = vmul.f32 %v5263, %v5263
        %v6288 = vmul.f32 %v5264, %v5264
        %v6289 = vmul.f32 %v5265, %v5265
        %v6290 = vmul.f32 %v5266, %v5266
        %v6291 = vmul.f32 %v5267, %v5267
        %v6292 = vmul.f32 %v5268, %v5268
        %v6293 = vmul.f32 %v5269, %v5269
        %v6294 = vmul.f32 %v5270, %v5270
        %v6295 = vmul.f32 %v5271, %v5271
        %v6296 = vmul.f32 %v5272, %v5272
        %v6297 = vmul.f32 %v5273, %v5273
        %v6298 = vmul.f32 %v5274, %v5274
        %v6299 = vmul.f32 %v5275, %v5275
        %v6300 = vmul.f32 %v5276, %v5276
        %v6301 = vmul.f32 %v5277, %v5277
        %v6302 = vmul.f32 %v5278, %v5278
        %v6303 = vmul.f32 %v5279, %v5279
        %v6304 = vmul.f32 %v5280, %v5280
        %v6305 = vmul.f32 %v5281, %v5281
        %v6306 = vmul.f32 %v5282, %v5282
        %v6307 = vmul.f32 %v5283, %v5283
        %v6308 = vmul.f32 %v5284, %v5284
        %v6309 = vmul.f32 %v5285, %v5285
        %v6310 = vmul.f32 %v5286, %v5286
        %v6311 = vmul.f32 %v5287, %v5287
        %v6312 = vmul.f32 %v5288, %v5288
        %v6313 = vmul.f32 %v5289, %v5289
        %v6314 = vmul.f32 %v5290, %v5290
        %v6315 = vmul.f32 %v5291, %v5291
        %v6316 = vmul.f32 %v5292, %v5292
        %v6317 = vmul.f32 %v5293, %v5293
        %v6318 = vmul.f32 %v5294, %v5294
        %v6319 = vmul.f32 %v5295, %v5295
        %v6320 = vmul.f32 %v5296, %v5296
        %v6321 = vmul.f32 %v5297, %v5297
        %v6322 = vmul.f32 %v5298, %v5298
        %v6323 = vmul.f32 %v5299, %v5299
        %v6324 = vmul.f32 %v5300, %v5300
        %v6325 = vmul.f32 %v5301, %v5301
        %v6326 = vmul.f32 %v5302, %v5302
        %v6327 = vmul.f32 %v5303, %v5303
        %v6328 = vmul.f32 %v5304, %v5304
        %v6329 = vmul.f32 %v5305, %v5305
        %v6330 = vmul.f32 %v5306, %v5306
        %v6331 = vmul.f32 %v5307, %v5307
        %v6332 = vmul.f32 %v5308, %v5308
        %v6333 = vmul.f32 %v5309, %v5309
        %v6334 = vmul.f32 %v5310, %v5310
        %v6335 = vmul.f32 %v5311, %v5311
        %v6336 = vmul.f32 %v5312, %v5312
        %v6337 = vmul.f32 %v5313, %v5313
        %v6338 = vmul.f32 %v5314, %v5314
        %v6339 = vmul.f32 %v5315, %v5315
        %v6340 = vmul.f32 %v5316, %v5316
        %v6341 = vmul.f32 %v5317, %v5317
        %v6342 = vmul.f32 %v5318, %v5318
        %v6343 = vmul.f32 %v5319, %v5319
        %v6344 = vmul.f32 %v5320, %v5320
        %v6345 = vmul.f32 %v5321, %v5321
        %v6346 = vmul.f32 %v5322, %v5322
        %v6347 = vmul.f32 %v5323, %v5323
        %v6348 = vmul.f32 %v5324, %v5324
        %v6349 = vmul.f32 %v5325, %v5325
        %v6350 = vmul.f32 %v5326, %v5326
        %v6351 = vmul.f32 %v5327, %v5327
        %v6352 = vmul.f32 %v5328, %v5328
        %v6353 = vmul.f32 %v5329, %v5329
        %v6354 = vmul.f32 %v5330, %v5330
        %v6355 = vmul.f32 %v5331, %v5331
        %v6356 = vmul.f32 %v5332, %v5332
        %v6357 = vmul.f32 %v5333, %v5333
        %v6358 = vmul.f32 %v5334, %v5334
        %v6359 = vmul.f32 %v5335, %v5335
        %v6360 = vmul.f32 %v5336, %v5336
        %v6361 = vmul.f32 %v5337, %v5337
        %v6362 = vmul.f32 %v5338, %v5338
        %v6363 = vmul.f32 %v5339, %v5339
        %v6364 = vmul.f32 %v5340, %v5340
        %v6365 = vmul.f32 %v5341, %v5341
        %v6366 = vmul.f32 %v5342, %v5342
        %v6367 = vmul.f32 %v5343, %v5343
        %v6368 = vmul.f32 %v5344, %v5344
        %v6369 = vmul.f32 %v5345, %v5345
        %v6370 = vmul.f32 %v5346, %v5346
        %v6371 = vmul.f32 %v5347, %v5347
        %v6372 = vmul.f32 %v5348, %v5348
        %v6373 = vmul.f32 %v5349, %v5349
        %v6374 = vmul.f32 %v5350, %v5350
        %v6375 = vmul.f32 %v5351, %v5351
        %v6376 = vmul.f32 %v5352, %v5352
        %v6377 = vmul.f32 %v5353, %v5353
        %v6378 = vmul.f32 %v5354, %v5354
        %v6379 = vmul.f32 %v5355, %v5355
        %v6380 = vmul.f32 %v5356, %v5356
        %v6381 = vmul.f32 %v5357, %v5357
        %v6382 = vmul.f32 %v5358, %v5358
        %v6383 = vmul.f32 %v5359, %v5359
        %v6384 = vmul.f32 %v5360, %v5360
        %v6385 = vmul.f32 %v5361, %v5361
        %v6386 = vmul.f32 %v5362, %v5362
        %v6387 = vmul.f32 %v5363, %v5363
        %v6388 = vmul.f32 %v5364, %v5364
        %v6389 = vmul.f32 %v5365, %v5365
        %v6390 = vmul.f32 %v5366, %v5366
        %v6391 = vmul.f32 %v5367, %v5367
        %v6392 = vmul.f32 %v5368, %v5368
        %v6393 = vmul.f32 %v5369, %v5369
        %v6394 = vmul.f32 %v5370, %v5370
        %v6395 = vmul.f32 %v5371, %v5371
        %v6396 = vmul.f32 %v5372, %v5372
        %v6397 = vmul.f32 %v5373, %v5373
        %v6398 = vmul.f32 %v5374, %v5374
        %v6399 = vmul.f32 %v5375, %v5375
        %v6400 = vmul.f32 %v5376, %v5376
        %v6401 = vmul.f32 %v5377, %v5377
        %v6402 = vmul.f32 %v5378, %v5378
        %v6403 = vmul.f32 %v5379, %v5379
        %v6404 = vmul.f32 %v5380, %v5380
        %v6405 = vmul.f32 %v5381, %v5381
        %v6406 = vmul.f32 %v5382, %v5382
        %v6407 = vmul.f32 %v5383, %v5383
        %v6408 = vmul.f32 %v5384, %v5384
        %v6409 = vmul.f32 %v5385, %v5385
        %v6410 = vmul.f32 %v5386, %v5386
        %v6411 = vmul.f32 %v5387, %v5387
        %v6412 = vmul.f32 %v5388, %v5388
        %v6413 = vmul.f32 %v5389, %v5389
        %v6414 = vmul.f32 %v5390, %v5390
        %v6415 = vmul.f32 %v5391, %v5391
        %v6416 = vmul.f32 %v5392, %v5392
        %v6417 = vmul.f32 %v5393, %v5393
        %v6418 = vmul.f32 %v5394, %v5394
        %v6419 = vmul.f32 %v5395, %v5395
        %v6420 = vmul.f32 %v5396, %v5396
        %v6421 = vmul.f32 %v5397, %v5397
        %v6422 = vmul.f32 %v5398, %v5398
        %v6423 = vmul.f32 %v5399, %v5399
        %v6424 = vmul.f32 %v5400, %v5400
        %v6425 = vmul.f32 %v5401, %v5401
        %v6426 = vmul.f32 %v5402, %v5402
        %v6427 = vmul.f32 %v5403, %v5403
        %v6428 = vmul.f32 %v5404, %v5404
        %v6429 = vmul.f32 %v5405, %v5405
        %v6430 = vmul.f32 %v5406, %v5406
        %v6431 = vmul.f32 %v5407, %v5407
        %v6432 = vmul.f32 %v5408, %v5408
        %v6433 = vmul.f32 %v5409, %v5409
        %v6434 = vmul.f32 %v5410, %v5410
        %v6435 = vmul.f32 %v5411, %v5411
        %v6436 = vmul.f32 %v5412, %v5412
        %v6437 = vmul.f32 %v5413, %v5413
        %v6438 = vmul.f32 %v5414, %v5414
        %v6439 = vmul.f32 %v5415, %v5415
        %v6440 = vmul.f32 %v5416, %v5416
        %v6441 = vmul.f32 %v5417, %v5417
        %v6442 = vmul.f32 %v5418, %v5418
        %v6443 = vmul.f32 %v5419, %v5419
        %v6444 = vmul.f32 %v5420, %v5420
        %v6445 = vmul.f32 %v5421, %v5421
        %v6446 = vmul.f32 %v5422, %v5422
        %v6447 = vmul.f32 %v5423, %v5423
        %v6448 = vmul.f32 %v5424, %v5424
        %v6449 = vmul.f32 %v5425, %v5425
        %v6450 = vmul.f32 %v5426, %v5426
        %v6451 = vmul.f32 %v5427, %v5427
        %v6452 = vmul.f32 %v5428, %v5428
        %v6453 = vmul.f32 %v5429, %v5429
        %v6454 = vmul.f32 %v5430, %v5430
        %v6455 = vmul.f32 %v5431, %v5431
        %v6456 = vmul.f32 %v5432, %v5432
        %v6457 = vmul.f32 %v5433, %v5433
        %v6458 = vmul.f32 %v5434, %v5434
        %v6459 = vmul.f32 %v5435, %v5435
        %v6460 = vmul.f32 %v5436, %v5436
        %v6461 = vmul.f32 %v5437, %v5437
        %v6462 = vmul.f32 %v5438, %v5438
        %v6463 = vmul.f32 %v5439, %v5439
        %v6464 = vmul.f32 %v5440, %v5440
        %v6465 = vmul.f32 %v5441, %v5441
        %v6466 = vmul.f32 %v5442, %v5442
        %v6467 = vmul.f32 %v5443, %v5443
        %v6468 = vmul.f32 %v5444, %v5444
        %v6469 = vmul.f32 %v5445, %v5445
        %v6470 = vmul.f32 %v5446, %v5446
        %v6471 = vmul.f32 %v5447, %v5447
        %v6472 = vmul.f32 %v5448, %v5448
        %v6473 = vmul.f32 %v5449, %v5449
        %v6474 = vmul.f32 %v5450, %v5450
        %v6475 = vmul.f32 %v5451, %v5451
        %v6476 = vmul.f32 %v5452, %v5452
        %v6477 = vmul.f32 %v5453, %v5453
        %v6478 = vmul.f32 %v5454, %v5454
        %v6479 = vmul.f32 %v5455, %v5455
        %v6480 = vmul.f32 %v5456, %v5456
        %v6481 = vmul.f32 %v5457, %v5457
        %v6482 = vmul.f32 %v5458, %v5458
        %v6483 = vmul.f32 %v5459, %v5459
        %v6484 = vmul.f32 %v5460, %v5460
        %v6485 = vmul.f32 %v5461, %v5461
        %v6486 = vmul.f32 %v5462, %v5462
        %v6487 = vmul.f32 %v5463, %v5463
        %v6488 = vmul.f32 %v5464, %v5464
        %v6489 = vmul.f32 %v5465, %v5465
        %v6490 = vmul.f32 %v5466, %v5466
        %v6491 = vmul.f32 %v5467, %v5467
        %v6492 = vmul.f32 %v5468, %v5468
        %v6493 = vmul.f32 %v5469, %v5469
        %v6494 = vmul.f32 %v5470, %v5470
        %v6495 = vmul.f32 %v5471, %v5471
        %v6496 = vmul.f32 %v5472, %v5472
        %v6497 = vmul.f32 %v5473, %v5473
        %v6498 = vmul.f32 %v5474, %v5474
        %v6499 = vmul.f32 %v5475, %v5475
        %v6500 = vmul.f32 %v5476, %v5476
        %v6501 = vmul.f32 %v5477, %v5477
        %v6502 = vmul.f32 %v5478, %v5478
        %v6503 = vmul.f32 %v5479, %v5479
        %v6504 = vmul.f32 %v5480, %v5480
        %v6505 = vmul.f32 %v5481, %v5481
        %v6506 = vmul.f32 %v5482, %v5482
        %v6507 = vmul.f32 %v5483, %v5483
        %v6508 = vmul.f32 %v5484, %v5484
        %v6509 = vmul.f32 %v5485, %v5485
        %v6510 = vmul.f32 %v5486, %v5486
        %v6511 = vmul.f32 %v5487, %v5487
        %v6512 = vmul.f32 %v5488, %v5488
        %v6513 = vmul.f32 %v5489, %v5489
        %v6514 = vmul.f32 %v5490, %v5490
        %v6515 = vmul.f32 %v5491, %v5491
        %v6516 = vmul.f32 %v5492, %v5492
        %v6517 = vmul.f32 %v5493, %v5493
        %v6518 = vmul.f32 %v5494, %v5494
        %v6519 = vmul.f32 %v5495, %v5495
        %v6520 = vmul.f32 %v5496, %v5496
        %v6521 = vmul.f32 %v5497, %v5497
        %v6522 = vmul.f32 %v5498, %v5498
        %v6523 = vmul.f32 %v5499, %v5499
        %v6524 = vmul.f32 %v5500, %v5500
        %v6525 = vmul.f32 %v5501, %v5501
        %v6526 = vmul.f32 %v5502, %v5502
        %v6527 = vmul.f32 %v5503, %v5503
        %v6528 = vmul.f32 %v5504, %v5504
        %v6529 = vmul.f32 %v5505, %v5505
        %v6530 = vmul.f32 %v5506, %v5506
        %v6531 = vmul.f32 %v5507, %v5507
        %v6532 = vmul.f32 %v5508, %v5508
        %v6533 = vmul.f32 %v5509, %v5509
        %v6534 = vmul.f32 %v5510, %v5510
        %v6535 = vmul.f32 %v5511, %v5511
        %v6536 = vmul.f32 %v5512, %v5512
        %v6537 = vmul.f32 %v5513, %v5513
        %v6538 = vmul.f32 %v5514, %v5514
        %v6539 = vmul.f32 %v5515, %v5515
        %v6540 = vmul.f32 %v5516, %v5516
        %v6541 = vmul.f32 %v5517, %v5517
        %v6542 = vmul.f32 %v5518, %v5518
        %v6543 = vmul.f32 %v5519, %v5519
        %v6544 = vmul.f32 %v5520, %v5520
        %v6545 = vmul.f32 %v5521, %v5521
        %v6546 = vmul.f32 %v5522, %v5522
        %v6547 = vmul.f32 %v5523, %v5523
        %v6548 = vmul.f32 %v5524, %v5524
        %v6549 = vmul.f32 %v5525, %v5525
        %v6550 = vmul.f32 %v5526, %v5526
        %v6551 = vmul.f32 %v5527, %v5527
        %v6552 = vmul.f32 %v5528, %v5528
        %v6553 = vmul.f32 %v5529, %v5529
        %v6554 = vmul.f32 %v5530, %v5530
        %v6555 = vmul.f32 %v5531, %v5531
        %v6556 = vmul.f32 %v5532, %v5532
        %v6557 = vmul.f32 %v5533, %v5533
        %v6558 = vmul.f32 %v5534, %v5534
        %v6559 = vmul.f32 %v5535, %v5535
        %v6560 = vmul.f32 %v5536, %v5536
        %v6561 = vmul.f32 %v5537, %v5537
        %v6562 = vmul.f32 %v5538, %v5538
        %v6563 = vmul.f32 %v5539, %v5539
        %v6564 = vmul.f32 %v5540, %v5540
        %v6565 = vmul.f32 %v5541, %v5541
        %v6566 = vmul.f32 %v5542, %v5542
        %v6567 = vmul.f32 %v5543, %v5543
        %v6568 = vmul.f32 %v5544, %v5544
        %v6569 = vmul.f32 %v5545, %v5545
        %v6570 = vmul.f32 %v5546, %v5546
        %v6571 = vmul.f32 %v5547, %v5547
        %v6572 = vmul.f32 %v5548, %v5548
        %v6573 = vmul.f32 %v5549, %v5549
        %v6574 = vmul.f32 %v5550, %v5550
        %v6575 = vmul.f32 %v5551, %v5551
        %v6576 = vmul.f32 %v5552, %v5552
        %v6577 = vmul.f32 %v5553, %v5553
        %v6578 = vmul.f32 %v5554, %v5554
        %v6579 = vmul.f32 %v5555, %v5555
        %v6580 = vmul.f32 %v5556, %v5556
        %v6581 = vmul.f32 %v5557, %v5557
        %v6582 = vmul.f32 %v5558, %v5558
        %v6583 = vmul.f32 %v5559, %v5559
        %v6584 = vmul.f32 %v5560, %v5560
        %v6585 = vmul.f32 %v5561, %v5561
        %v6586 = vmul.f32 %v5562, %v5562
        %v6587 = vmul.f32 %v5563, %v5563
        %v6588 = vmul.f32 %v5564, %v5564
        %v6589 = vmul.f32 %v5565, %v5565
        %v6590 = vmul.f32 %v5566, %v5566
        %v6591 = vmul.f32 %v5567, %v5567
        %v6592 = vmul.f32 %v5568, %v5568
        %v6593 = vmul.f32 %v5569, %v5569
        %v6594 = vmul.f32 %v5570, %v5570
        %v6595 = vmul.f32 %v5571, %v5571
        %v6596 = vmul.f32 %v5572, %v5572
        %v6597 = vmul.f32 %v5573, %v5573
        %v6598 = vmul.f32 %v5574, %v5574
        %v6599 = vmul.f32 %v5575, %v5575
        %v6600 = vmul.f32 %v5576, %v5576
        %v6601 = vmul.f32 %v5577, %v5577
        %v6602 = vmul.f32 %v5578, %v5578
        %v6603 = vmul.f32 %v5579, %v5579
        %v6604 = vmul.f32 %v5580, %v5580
        %v6605 = vmul.f32 %v5581, %v5581
        %v6606 = vmul.f32 %v5582, %v5582
        %v6607 = vmul.f32 %v5583, %v5583
        %v6608 = vmul.f32 %v5584, %v5584
        %v6609 = vmul.f32 %v5585, %v5585
        %v6610 = vmul.f32 %v5586, %v5586
        %v6611 = vmul.f32 %v5587, %v5587
        %v6612 = vmul.f32 %v5588, %v5588
        %v6613 = vmul.f32 %v5589, %v5589
        %v6614 = vmul.f32 %v5590, %v5590
        %v6615 = vmul.f32 %v5591, %v5591
        %v6616 = vmul.f32 %v5592, %v5592
        %v6617 = vmul.f32 %v5593, %v5593
        %v6618 = vmul.f32 %v5594, %v5594
        %v6619 = vmul.f32 %v5595, %v5595
        %v6620 = vmul.f32 %v5596, %v5596
        %v6621 = vmul.f32 %v5597, %v5597
        %v6622 = vmul.f32 %v5598, %v5598
        %v6623 = vmul.f32 %v5599, %v5599
        %v6624 = vmul.f32 %v5600, %v5600
        %v6625 = vmul.f32 %v5601, %v5601
        %v6626 = vmul.f32 %v5602, %v5602
        %v6627 = vmul.f32 %v5603, %v5603
        %v6628 = vmul.f32 %v5604, %v5604
        %v6629 = vmul.f32 %v5605, %v5605
        %v6630 = vmul.f32 %v5606, %v5606
        %v6631 = vmul.f32 %v5607, %v5607
        %v6632 = vmul.f32 %v5608, %v5608
        %v6633 = vmul.f32 %v5609, %v5609
        %v6634 = vmul.f32 %v5610, %v5610
        %v6635 = vmul.f32 %v5611, %v5611
        %v6636 = vmul.f32 %v5612, %v5612
        %v6637 = vmul.f32 %v5613, %v5613
        %v6638 = vmul.f32 %v5614, %v5614
        %v6639 = vmul.f32 %v5615, %v5615
        %v6640 = vmul.f32 %v5616, %v5616
        %v6641 = vmul.f32 %v5617, %v5617
        %v6642 = vmul.f32 %v5618, %v5618
        %v6643 = vmul.f32 %v5619, %v5619
        %v6644 = vmul.f32 %v5620, %v5620
        %v6645 = vmul.f32 %v5621, %v5621
        %v6646 = vmul.f32 %v5622, %v5622
        %v6647 = vmul.f32 %v5623, %v5623
        %v6648 = vmul.f32 %v5624, %v5624
        %v6649 = vmul.f32 %v5625, %v5625
        %v6650 = vmul.f32 %v5626, %v5626
        %v6651 = vmul.f32 %v5627, %v5627
        %v6652 = vmul.f32 %v5628, %v5628
        %v6653 = vmul.f32 %v5629, %v5629
        %v6654 = vmul.f32 %v5630, %v5630
        %v6655 = vmul.f32 %v5631, %v5631
        %v6656 = vmul.f32 %v5632, %v5632
        %v6657 = vmul.f32 %v5633, %v5633
        %v6658 = vmul.f32 %v5634, %v5634
        %v6659 = vmul.f32 %v5635, %v5635
        %v6660 = vmul.f32 %v5636, %v5636
        %v6661 = vmul.f32 %v5637, %v5637
        %v6662 = vmul.f32 %v5638, %v5638
        %v6663 = vmul.f32 %v5639, %v5639
        %v6664 = vmul.f32 %v5640, %v5640
        %v6665 = vmul.f32 %v5641, %v5641
        %v6666 = vmul.f32 %v5642, %v5642
        %v6667 = vmul.f32 %v5643, %v5643
        %v6668 = vmul.f32 %v5644, %v5644
        %v6669 = vmul.f32 %v5645, %v5645
        %v6670 = vmul.f32 %v5646, %v5646
        %v6671 = vmul.f32 %v5647, %v5647
        %v6672 = vmul.f32 %v5648, %v5648
        %v6673 = vmul.f32 %v5649, %v5649
        %v6674 = vmul.f32 %v5650, %v5650
        %v6675 = vmul.f32 %v5651, %v5651
        %v6676 = vmul.f32 %v5652, %v5652
        %v6677 = vmul.f32 %v5653, %v5653
        %v6678 = vmul.f32 %v5654, %v5654
        %v6679 = vmul.f32 %v5655, %v5655
        %v6680 = vmul.f32 %v5656, %v5656
        %v6681 = vmul.f32 %v5657, %v5657
        %v6682 = vmul.f32 %v5658, %v5658
        %v6683 = vmul.f32 %v5659, %v5659
        %v6684 = vmul.f32 %v5660, %v5660
        %v6685 = vmul.f32 %v5661, %v5661
        %v6686 = vmul.f32 %v5662, %v5662
        %v6687 = vmul.f32 %v5663, %v5663
        %v6688 = vmul.f32 %v5664, %v5664
        %v6689 = vmul.f32 %v5665, %v5665
        %v6690 = vmul.f32 %v5666, %v5666
        %v6691 = vmul.f32 %v5667, %v5667
        %v6692 = vmul.f32 %v5668, %v5668
        %v6693 = vmul.f32 %v5669, %v5669
        %v6694 = vmul.f32 %v5670, %v5670
        %v6695 = vmul.f32 %v5671, %v5671
        %v6696 = vmul.f32 %v5672, %v5672
        %v6697 = vmul.f32 %v5673, %v5673
        %v6698 = vmul.f32 %v5674, %v5674
        %v6699 = vmul.f32 %v5675, %v5675
        %v6700 = vmul.f32 %v5676, %v5676
        %v6701 = vmul.f32 %v5677, %v5677
        %v6702 = vmul.f32 %v5678, %v5678
        %v6703 = vmul.f32 %v5679, %v5679
        %v6704 = vmul.f32 %v5680, %v5680
        %v6705 = vmul.f32 %v5681, %v5681
        %v6706 = vmul.f32 %v5682, %v5682
        %v6707 = vmul.f32 %v5683, %v5683
        %v6708 = vmul.f32 %v5684, %v5684
        %v6709 = vmul.f32 %v5685, %v5685
        %v6710 = vmul.f32 %v5686, %v5686
        %v6711 = vmul.f32 %v5687, %v5687
        %v6712 = vmul.f32 %v5688, %v5688
        %v6713 = vmul.f32 %v5689, %v5689
        %v6714 = vmul.f32 %v5690, %v5690
        %v6715 = vmul.f32 %v5691, %v5691
        %v6716 = vmul.f32 %v5692, %v5692
        %v6717 = vmul.f32 %v5693, %v5693
        %v6718 = vmul.f32 %v5694, %v5694
        %v6719 = vmul.f32 %v5695, %v5695
        %v6720 = vmul.f32 %v5696, %v5696
        %v6721 = vmul.f32 %v5697, %v5697
        %v6722 = vmul.f32 %v5698, %v5698
        %v6723 = vmul.f32 %v5699, %v5699
        %v6724 = vmul.f32 %v5700, %v5700
        %v6725 = vmul.f32 %v5701, %v5701
        %v6726 = vmul.f32 %v5702, %v5702
        %v6727 = vmul.f32 %v5703, %v5703
        %v6728 = vmul.f32 %v5704, %v5704
        %v6729 = vmul.f32 %v5705, %v5705
        %v6730 = vmul.f32 %v5706, %v5706
        %v6731 = vmul.f32 %v5707, %v5707
        %v6732 = vmul.f32 %v5708, %v5708
        %v6733 = vmul.f32 %v5709, %v5709
        %v6734 = vmul.f32 %v5710, %v5710
        %v6735 = vmul.f32 %v5711, %v5711
        %v6736 = vmul.f32 %v5712, %v5712
        %v6737 = vmul.f32 %v5713, %v5713
        %v6738 = vmul.f32 %v5714, %v5714
        %v6739 = vmul.f32 %v5715, %v5715
        %v6740 = vmul.f32 %v5716, %v5716
        %v6741 = vmul.f32 %v5717, %v5717
        %v6742 = vmul.f32 %v5718, %v5718
        %v6743 = vmul.f32 %v5719, %v5719
        %v6744 = vmul.f32 %v5720, %v5720
        %v6745 = vmul.f32 %v5721, %v5721
        %v6746 = vmul.f32 %v5722, %v5722
        %v6747 = vmul.f32 %v5723, %v5723
        %v6748 = vmul.f32 %v5724, %v5724
        %v6749 = vmul.f32 %v5725, %v5725
        %v6750 = vmul.f32 %v5726, %v5726
        %v6751 = vmul.f32 %v5727, %v5727
        %v6752 = vmul.f32 %v5728, %v5728
        %v6753 = vmul.f32 %v5729, %v5729
        %v6754 = vmul.f32 %v5730, %v5730
        %v6755 = vmul.f32 %v5731, %v5731
        %v6756 = vmul.f32 %v5732, %v5732
        %v6757 = vmul.f32 %v5733, %v5733
        %v6758 = vmul.f32 %v5734, %v5734
        %v6759 = vmul.f32 %v5735, %v5735
        %v6760 = vmul.f32 %v5736, %v5736
        %v6761 = vmul.f32 %v5737, %v5737
        %v6762 = vmul.f32 %v5738, %v5738
        %v6763 = vmul.f32 %v5739, %v5739
        %v6764 = vmul.f32 %v5740, %v5740
        %v6765 = vmul.f32 %v5741, %v5741
        %v6766 = vmul.f32 %v5742, %v5742
        %v6767 = vmul.f32 %v5743, %v5743
        %v6768 = vmul.f32 %v5744, %v5744
        %v6769 = vmul.f32 %v5745, %v5745
        %v6770 = vmul.f32 %v5746, %v5746
        %v6771 = vmul.f32 %v5747, %v5747
        %v6772 = vmul.f32 %v5748, %v5748
        %v6773 = vmul.f32 %v5749, %v5749
        %v6774 = vmul.f32 %v5750, %v5750
        %v6775 = vmul.f32 %v5751, %v5751
        %v6776 = vmul.f32 %v5752, %v5752
        %v6777 = vmul.f32 %v5753, %v5753
        %v6778 = vmul.f32 %v5754, %v5754
        %v6779 = vmul.f32 %v5755, %v5755
        %v6780 = vmul.f32 %v5756, %v5756
        %v6781 = vmul.f32 %v5757, %v5757
        %v6782 = vmul.f32 %v5758, %v5758
        %v6783 = vmul.f32 %v5759, %v5759
        %v6784 = vmul.f32 %v5760, %v5760
        %v6785 = vmul.f32 %v5761, %v5761
        %v6786 = vmul.f32 %v5762, %v5762
        %v6787 = vmul.f32 %v5763, %v5763
        %v6788 = vmul.f32 %v5764, %v5764
        %v6789 = vmul.f32 %v5765, %v5765
        %v6790 = vmul.f32 %v5766, %v5766
        %v6791 = vmul.f32 %v5767, %v5767
        %v6792 = vmul.f32 %v5768, %v5768
        %v6793 = vmul.f32 %v5769, %v5769
        %v6794 = vmul.f32 %v5770, %v5770
        %v6795 = vmul.f32 %v5771, %v5771
        %v6796 = vmul.f32 %v5772, %v5772
        %v6797 = vmul.f32 %v5773, %v5773
        %v6798 = vmul.f32 %v5774, %v5774
        %v6799 = vmul.f32 %v5775, %v5775
        %v6800 = vmul.f32 %v5776, %v5776
        %v6801 = vmul.f32 %v5777, %v5777
        %v6802 = vmul.f32 %v5778, %v5778
        %v6803 = vmul.f32 %v5779, %v5779
        %v6804 = vmul.f32 %v5780, %v5780
        %v6805 = vmul.f32 %v5781, %v5781
        %v6806 = vmul.f32 %v5782, %v5782
        %v6807 = vmul.f32 %v5783, %v5783
        %v6808 = vmul.f32 %v5784, %v5784
        %v6809 = vmul.f32 %v5785, %v5785
        %v6810 = vmul.f32 %v5786, %v5786
        %v6811 = vmul.f32 %v5787, %v5787
        %v6812 = vmul.f32 %v5788, %v5788
        %v6813 = vmul.f32 %v5789, %v5789
        %v6814 = vmul.f32 %v5790, %v5790
        %v6815 = vmul.f32 %v5791, %v5791
        %v6816 = vmul.f32 %v5792, %v5792
        %v6817 = vmul.f32 %v5793, %v5793
        %v6818 = vmul.f32 %v5794, %v5794
        %v6819 = vmul.f32 %v5795, %v5795
        %v6820 = vmul.f32 %v5796, %v5796
        %v6821 = vmul.f32 %v5797, %v5797
        %v6822 = vmul.f32 %v5798, %v5798
        %v6823 = vmul.f32 %v5799, %v5799
        %v6824 = vmul.f32 %v5800, %v5800
        %v6825 = vmul.f32 %v5801, %v5801
        %v6826 = vmul.f32 %v5802, %v5802
        %v6827 = vmul.f32 %v5803, %v5803
        %v6828 = vmul.f32 %v5804, %v5804
        %v6829 = vmul.f32 %v5805, %v5805
        %v6830 = vmul.f32 %v5806, %v5806
        %v6831 = vmul.f32 %v5807, %v5807
        %v6832 = vmul.f32 %v5808, %v5808
        %v6833 = vmul.f32 %v5809, %v5809
        %v6834 = vmul.f32 %v5810, %v5810
        %v6835 = vmul.f32 %v5811, %v5811
        %v6836 = vmul.f32 %v5812, %v5812
        %v6837 = vmul.f32 %v5813, %v5813
        %v6838 = vmul.f32 %v5814, %v5814
        %v6839 = vmul.f32 %v5815, %v5815
        %v6840 = vmul.f32 %v5816, %v5816
        %v6841 = vmul.f32 %v5817, %v5817
        %v6842 = vmul.f32 %v5818, %v5818
        %v6843 = vmul.f32 %v5819, %v5819
        %v6844 = vmul.f32 %v5820, %v5820
        %v6845 = vmul.f32 %v5821, %v5821
        %v6846 = vmul.f32 %v5822, %v5822
        %v6847 = vmul.f32 %v5823, %v5823
        %v6848 = vmul.f32 %v5824, %v5824
        %v6849 = vmul.f32 %v5825, %v5825
        %v6850 = vmul.f32 %v5826, %v5826
        %v6851 = vmul.f32 %v5827, %v5827
        %v6852 = vmul.f32 %v5828, %v5828
        %v6853 = vmul.f32 %v5829, %v5829
        %v6854 = vmul.f32 %v5830, %v5830
        %v6855 = vmul.f32 %v5831, %v5831
        %v6856 = vmul.f32 %v5832, %v5832
        %v6857 = vmul.f32 %v5833, %v5833
        %v6858 = vmul.f32 %v5834, %v5834
        %v6859 = vmul.f32 %v5835, %v5835
        %v6860 = vmul.f32 %v5836, %v5836
        %v6861 = vmul.f32 %v5837, %v5837
        %v6862 = vmul.f32 %v5838, %v5838
        %v6863 = vmul.f32 %v5839, %v5839
        %v6864 = vmul.f32 %v5840, %v5840
        %v6865 = vmul.f32 %v5841, %v5841
        %v6866 = vmul.f32 %v5842, %v5842
        %v6867 = vmul.f32 %v5843, %v5843
        %v6868 = vmul.f32 %v5844, %v5844
        %v6869 = vmul.f32 %v5845, %v5845
        %v6870 = vmul.f32 %v5846, %v5846
        %v6871 = vmul.f32 %v5847, %v5847
        %v6872 = vmul.f32 %v5848, %v5848
        %v6873 = vmul.f32 %v5849, %v5849
        %v6874 = vmul.f32 %v5850, %v5850
        %v6875 = vmul.f32 %v5851, %v5851
        %v6876 = vmul.f32 %v5852, %v5852
        %v6877 = vmul.f32 %v5853, %v5853
        %v6878 = vmul.f32 %v5854, %v5854
        %v6879 = vmul.f32 %v5855, %v5855
        %v6880 = vmul.f32 %v5856, %v5856
        %v6881 = vmul.f32 %v5857, %v5857
        %v6882 = vmul.f32 %v5858, %v5858
        %v6883 = vmul.f32 %v5859, %v5859
        %v6884 = vmul.f32 %v5860, %v5860
        %v6885 = vmul.f32 %v5861, %v5861
        %v6886 = vmul.f32 %v5862, %v5862
        %v6887 = vmul.f32 %v5863, %v5863
        %v6888 = vmul.f32 %v5864, %v5864
        %v6889 = vmul.f32 %v5865, %v5865
        %v6890 = vmul.f32 %v5866, %v5866
        %v6891 = vmul.f32 %v5867, %v5867
        %v6892 = vmul.f32 %v5868, %v5868
        %v6893 = vmul.f32 %v5869, %v5869
        %v6894 = vmul.f32 %v5870, %v5870
        %v6895 = vmul.f32 %v5871, %v5871
        %v6896 = vmul.f32 %v5872, %v5872
        %v6897 = vmul.f32 %v5873, %v5873
        %v6898 = vmul.f32 %v5874, %v5874
        %v6899 = vmul.f32 %v5875, %v5875
        %v6900 = vmul.f32 %v5876, %v5876
        %v6901 = vmul.f32 %v5877, %v5877
        %v6902 = vmul.f32 %v5878, %v5878
        %v6903 = vmul.f32 %v5879, %v5879
        %v6904 = vmul.f32 %v5880, %v5880
        %v6905 = vmul.f32 %v5881, %v5881
        %v6906 = vmul.f32 %v5882, %v5882
        %v6907 = vmul.f32 %v5883, %v5883
        %v6908 = vmul.f32 %v5884, %v5884
        %v6909 = vmul.f32 %v5885, %v5885
        %v6910 = vmul.f32 %v5886, %v5886
        %v6911 = vmul.f32 %v5887, %v5887
        %v6912 = vmul.f32 %v5888, %v5888
        %v6913 = vmul.f32 %v5889, %v5889
        %v6914 = vmul.f32 %v5890, %v5890
        %v6915 = vmul.f32 %v5891, %v5891
        %v6916 = vmul.f32 %v5892, %v5892
        %v6917 = vmul.f32 %v5893, %v5893
        %v6918 = vmul.f32 %v5894, %v5894
        %v6919 = vmul.f32 %v5895, %v5895
        %v6920 = vmul.f32 %v5896, %v5896
        %v6921 = vmul.f32 %v5897, %v5897
        %v6922 = vmul.f32 %v5898, %v5898
        %v6923 = vmul.f32 %v5899, %v5899
        %v6924 = vmul.f32 %v5900, %v5900
        %v6925 = vmul.f32 %v5901, %v5901
        %v6926 = vmul.f32 %v5902, %v5902
        %v6927 = vmul.f32 %v5903, %v5903
        %v6928 = vmul.f32 %v5904, %v5904
        %v6929 = vmul.f32 %v5905, %v5905
        %v6930 = vmul.f32 %v5906, %v5906
        %v6931 = vmul.f32 %v5907, %v5907
        %v6932 = vmul.f32 %v5908, %v5908
        %v6933 = vmul.f32 %v5909, %v5909
        %v6934 = vmul.f32 %v5910, %v5910
        %v6935 = vmul.f32 %v5911, %v5911
        %v6936 = vmul.f32 %v5912, %v5912
        %v6937 = vmul.f32 %v5913, %v5913
        %v6938 = vmul.f32 %v5914, %v5914
        %v6939 = vmul.f32 %v5915, %v5915
        %v6940 = vmul.f32 %v5916, %v5916
        %v6941 = vmul.f32 %v5917, %v5917
        %v6942 = vmul.f32 %v5918, %v5918
        %v6943 = vmul.f32 %v5919, %v5919
        %v6944 = vmul.f32 %v5920, %v5920
        %v6945 = vmul.f32 %v5921, %v5921
        %v6946 = vmul.f32 %v5922, %v5922
        %v6947 = vmul.f32 %v5923, %v5923
        %v6948 = vmul.f32 %v5924, %v5924
        %v6949 = vmul.f32 %v5925, %v5925
        %v6950 = vmul.f32 %v5926, %v5926
        %v6951 = vmul.f32 %v5927, %v5927
        %v6952 = vmul.f32 %v5928, %v5928
        %v6953 = vmul.f32 %v5929, %v5929
        %v6954 = vmul.f32 %v5930, %v5930
        %v6955 = vmul.f32 %v5931, %v5931
        %v6956 = vmul.f32 %v5932, %v5932
        %v6957 = vmul.f32 %v5933, %v5933
        %v6958 = vmul.f32 %v5934, %v5934
        %v6959 = vmul.f32 %v5935, %v5935
        %v6960 = vmul.f32 %v5936, %v5936
        %v6961 = vmul.f32 %v5937, %v5937
        %v6962 = vmul.f32 %v5938, %v5938
        %v6963 = vmul.f32 %v5939, %v5939
        %v6964 = vmul.f32 %v5940, %v5940
        %v6965 = vmul.f32 %v5941, %v5941
        %v6966 = vmul.f32 %v5942, %v5942
        %v6967 = vmul.f32 %v5943, %v5943
        %v6968 = vmul.f32 %v5944, %v5944
        %v6969 = vmul.f32 %v5945, %v5945
        %v6970 = vmul.f32 %v5946, %v5946
        %v6971 = vmul.f32 %v5947, %v5947
        %v6972 = vmul.f32 %v5948, %v5948
        %v6973 = vmul.f32 %v5949, %v5949
        %v6974 = vmul.f32 %v5950, %v5950
        %v6975 = vmul.f32 %v5951, %v5951
        %v6976 = vmul.f32 %v5952, %v5952
        %v6977 = vmul.f32 %v5953, %v5953
        %v6978 = vmul.f32 %v5954, %v5954
        %v6979 = vmul.f32 %v5955, %v5955
        %v6980 = vmul.f32 %v5956, %v5956
        %v6981 = vmul.f32 %v5957, %v5957
        %v6982 = vmul.f32 %v5958, %v5958
        %v6983 = vmul.f32 %v5959, %v5959
        %v6984 = vmul.f32 %v5960, %v5960
        %v6985 = vmul.f32 %v5961, %v5961
        %v6986 = vmul.f32 %v5962, %v5962
        %v6987 = vmul.f32 %v5963, %v5963
        %v6988 = vmul.f32 %v5964, %v5964
        %v6989 = vmul.f32 %v5965, %v5965
        %v6990 = vmul.f32 %v5966, %v5966
        %v6991 = vmul.f32 %v5967, %v5967
        %v6992 = vmul.f32 %v5968, %v5968
        %v6993 = vmul.f32 %v5969, %v5969
        %v6994 = vmul.f32 %v5970, %v5970
        %v6995 = vmul.f32 %v5971, %v5971
        %v6996 = vmul.f32 %v5972, %v5972
        %v6997 = vmul.f32 %v5973, %v5973
        %v6998 = vmul.f32 %v5974, %v5974
        %v6999 = vmul.f32 %v5975, %v5975
        %v7000 = vmul.f32 %v5976, %v5976
        %v7001 = vmul.f32 %v5977, %v5977
        %v7002 = vmul.f32 %v5978, %v5978
        %v7003 = vmul.f32 %v5979, %v5979
        %v7004 = vmul.f32 %v5980, %v5980
        %v7005 = vmul.f32 %v5981, %v5981
        %v7006 = vmul.f32 %v5982, %v5982
        %v7007 = vmul.f32 %v5983, %v5983
        %v7008 = vmul.f32 %v5984, %v5984
        %v7009 = vmul.f32 %v5985, %v5985
        %v7010 = vmul.f32 %v5986, %v5986
        %v7011 = vmul.f32 %v5987, %v5987
        %v7012 = vmul.f32 %v5988, %v5988
        %v7013 = vmul.f32 %v5989, %v5989
        %v7014 = vmul.f32 %v5990, %v5990
        %v7015 = vmul.f32 %v5991, %v5991
        %v7016 = vmul.f32 %v5992, %v5992
        %v7017 = vmul.f32 %v5993, %v5993
        %v7018 = vmul.f32 %v5994, %v5994
        %v7019 = vmul.f32 %v5995, %v5995
        %v7020 = vmul.f32 %v5996, %v5996
        %v7021 = vmul.f32 %v5997, %v5997
        %v7022 = vmul.f32 %v5998, %v5998
        %v7023 = vmul.f32 %v5999, %v5999
        %v7024 = vmul.f32 %v6000, %v6000
        %v7025 = vmul.f32 %v6001, %v6001
        %v7026 = vmul.f32 %v6002, %v6002
        %v7027 = vmul.f32 %v6003, %v6003
        %v7028 = vmul.f32 %v6004, %v6004
        %v7029 = vmul.f32 %v6005, %v6005
        %v7030 = vmul.f32 %v6006, %v6006
        %v7031 = vmul.f32 %v6007, %v6007
        %v7032 = vmul.f32 %v6008, %v6008
        %v7033 = vmul.f32 %v6009, %v6009
        %v7034 = vmul.f32 %v6010, %v6010
        %v7035 = vmul.f32 %v6011, %v6011
        %v7036 = vmul.f32 %v6012, %v6012
        %v7037 = vmul.f32 %v6013, %v6013
        %v7038 = vmul.f32 %v6014, %v6014
        %v7039 = vmul.f32 %v6015, %v6015
        %v7040 = vmul.f32 %v6016, %v6016
        %v7041 = vmul.f32 %v6017, %v6017
        %v7042 = vmul.f32 %v6018, %v6018
        %v7043 = vmul.f32 %v6019, %v6019
        %v7044 = vmul.f32 %v6020, %v6020
        %v7045 = vmul.f32 %v6021, %v6021
        %v7046 = vmul.f32 %v6022, %v6022
        %v7047 = vmul.f32 %v6023, %v6023
        %v7048 = vmul.f32 %v6024, %v6024
        %v7049 = vmul.f32 %v6025, %v6025
        %v7050 = vmul.f32 %v6026, %v6026
        %v7051 = vmul.f32 %v6027, %v6027
        %v7052 = vmul.f32 %v6028, %v6028
        %v7053 = vmul.f32 %v6029, %v6029
        %v7054 = vmul.f32 %v6030, %v6030
        %v7055 = vmul.f32 %v6031, %v6031
        %v7056 = vmul.f32 %v6032, %v6032
        %v7057 = vmul.f32 %v6033, %v6033
        %v7058 = vmul.f32 %v6034, %v6034
        %v7059 = vmul.f32 %v6035, %v6035
        %v7060 = vmul.f32 %v6036, %v6036
        %v7061 = vmul.f32 %v6037, %v6037
        %v7062 = vmul.f32 %v6038, %v6038
        %v7063 = vmul.f32 %v6039, %v6039
        %v7064 = vmul.f32 %v6040, %v6040
        %v7065 = vmul.f32 %v6041, %v6041
        %v7066 = vmul.f32 %v6042, %v6042
        %v7067 = vmul.f32 %v6043, %v6043
        %v7068 = vmul.f32 %v6044, %v6044
        %v7069 = vmul.f32 %v6045, %v6045
        %v7070 = vmul.f32 %v6046, %v6046
        %v7071 = vmul.f32 %v6047, %v6047
        %v7072 = vmul.f32 %v6048, %v6048
        %v7073 = vmul.f32 %v6049, %v6049
        %v7074 = vmul.f32 %v6050, %v6050
        %v7075 = vmul.f32 %v6051, %v6051
        %v7076 = vmul.f32 %v6052, %v6052
        %v7077 = vmul.f32 %v6053, %v6053
        %v7078 = vmul.f32 %v6054, %v6054
        %v7079 = vmul.f32 %v6055, %v6055
        %v7080 = vmul.f32 %v6056, %v6056
        %v7081 = vmul.f32 %v6057, %v6057
        %v7082 = vmul.f32 %v6058, %v6058
        %v7083 = vmul.f32 %v6059, %v6059
        %v7084 = vmul.f32 %v6060, %v6060
        %v7085 = vmul.f32 %v6061, %v6061
        %v7086 = vmul.f32 %v6062, %v6062
        %v7087 = vmul.f32 %v6063, %v6063
        %v7088 = vmul.f32 %v6064, %v6064
        %v7089 = vmul.f32 %v6065, %v6065
        %v7090 = vmul.f32 %v6066, %v6066
        %v7091 = vmul.f32 %v6067, %v6067
        %v7092 = vmul.f32 %v6068, %v6068
        %v7093 = vmul.f32 %v6069, %v6069
        %v7094 = vmul.f32 %v6070, %v6070
        %v7095 = vmul.f32 %v6071, %v6071
        %v7096 = vmul.f32 %v6072, %v6072
        %v7097 = vmul.f32 %v6073, %v6073
        %v7098 = vmul.f32 %v6074, %v6074
        %v7099 = vmul.f32 %v6075, %v6075
        %v7100 = vmul.f32 %v6076, %v6076
        %v7101 = vmul.f32 %v6077, %v6077
        %v7102 = vmul.f32 %v6078, %v6078
        %v7103 = vmul.f32 %v6079, %v6079
        %v7104 = vmul.f32 %v6080, %v6080
        %v7105 = vmul.f32 %v6081, %v6081
        %v7106 = vmul.f32 %v6082, %v6082
        %v7107 = vmul.f32 %v6083, %v6083
        %v7108 = vmul.f32 %v6084, %v6084
        %v7109 = vmul.f32 %v6085, %v6085
        %v7110 = vmul.f32 %v6086, %v6086
        %v7111 = vmul.f32 %v6087, %v6087
        %v7112 = vmul.f32 %v6088, %v6088
        %v7113 = vmul.f32 %v6089, %v6089
        %v7114 = vmul.f32 %v6090, %v6090
        %v7115 = vmul.f32 %v6091, %v6091
        %v7116 = vmul.f32 %v6092, %v6092
        %v7117 = vmul.f32 %v6093, %v6093
        %v7118 = vmul.f32 %v6094, %v6094
        %v7119 = vmul.f32 %v6095, %v6095
        %v7120 = vmul.f32 %v6096, %v6096
        %v7121 = vmul.f32 %v6097, %v6097
        %v7122 = vmul.f32 %v6098, %v6098
        %v7123 = vmul.f32 %v6099, %v6099
        %v7124 = vmul.f32 %v6100, %v6100
        %v7125 = vmul.f32 %v6101, %v6101
        %v7126 = vmul.f32 %v6102, %v6102
        %v7127 = vmul.f32 %v6103, %v6103
        %v7128 = vmul.f32 %v6104, %v6104
        %v7129 = vmul.f32 %v6105, %v6105
        %v7130 = vmul.f32 %v6106, %v6106
        %v7131 = vmul.f32 %v6107, %v6107
        %v7132 = vmul.f32 %v6108, %v6108
        %v7133 = vmul.f32 %v6109, %v6109
        %v7134 = vmul.f32 %v6110, %v6110
        %v7135 = vmul.f32 %v6111, %v6111
        %v7136 = vmul.f32 %v6112, %v6112
        %v7137 = vmul.f32 %v6113, %v6113
        %v7138 = vmul.f32 %v6114, %v6114
        %v7139 = vmul.f32 %v6115, %v6115
        %v7140 = vmul.f32 %v6116, %v6116
        %v7141 = vmul.f32 %v6117, %v6117
        %v7142 = vmul.f32 %v6118, %v6118
        %v7143 = vmul.f32 %v6119, %v6119
        %v7144 = vmul.f32 %v6120, %v6120
        %v7145 = vmul.f32 %v6121, %v6121
        %v7146 = vmul.f32 %v6122, %v6122
        %v7147 = vmul.f32 %v6123, %v6123
        %v7148 = vmul.f32 %v6124, %v6124
        %v7149 = vmul.f32 %v6125, %v6125
        %v7150 = vmul.f32 %v6126, %v6126
        %v7151 = vmul.f32 %v6127, %v6127
        %v7152 = vmul.f32 %v6128, %v6128
        %v7153 = vmul.f32 %v6129, %v6129
        %v7154 = vmul.f32 %v6130, %v6130
        %v7155 = vmul.f32 %v6131, %v6131
        %v7156 = vmul.f32 %v6132, %v6132
        %v7157 = vmul.f32 %v6133, %v6133
        %v7158 = vmul.f32 %v6134, %v6134
        %v7159 = vmul.f32 %v6135, %v6135
        %v7160 = vmul.f32 %v6136, %v6136
        %v7161 = vmul.f32 %v6137, %v6137
        %v7162 = vmul.f32 %v6138, %v6138
        %v7163 = vmul.f32 %v6139, %v6139
        %v7164 = vmul.f32 %v6140, %v6140
        %v7165 = vmul.f32 %v6141, %v6141
        %v7166 = vmul.f32 %v6142, %v6142
        %v7167 = vmul.f32 %v6143, %v6143
        %v7168 = vmul.f32 %v6144, %v6144
        %v7169 = vmul.f32 %v6145, %v6145
        %v7170 = vmul.f32 %v6146, %v6146
        %v7171 = vmul.f32 %v6147, %v6147
        %v7172 = vmul.f32 %v6148, %v6148
        %v7173 = vmul.f32 %v6149, %v6149
        %v7174 = vmul.f32 %v6150, %v6150
        %v7175 = vmul.f32 %v6151, %v6151
        %v7176 = vmul.f32 %v6152, %v6152
        %v7177 = vmul.f32 %v6153, %v6153
        %v7178 = vmul.f32 %v6154, %v6154
        %v7179 = vmul.f32 %v6155, %v6155
        %v7180 = vmul.f32 %v6156, %v6156
        %v7181 = vmul.f32 %v6157, %v6157
        %v7182 = vmul.f32 %v6158, %v6158
        %v7183 = vmul.f32 %v6159, %v6159
        %v7184 = vmul.f32 %v6160, %v6160
        %v7185 = vmul.f32 %v6161, %v6161
        %v7186 = vmul.f32 %v6162, %v6162
        %v7187 = vmul.f32 %v6163, %v6163
        %v7188 = vmul.f32 %v6164, %v6164
        %v7189 = vmul.f32 %v6165, %v6165
        %v7190 = vmul.f32 %v6166, %v6166
        %v7191 = vmul.f32 %v6167, %v6167
        %v7192 = vmul.f32 %v6168, %v6168
        %v7193 = vmul.f32 %v6169, %v6169
        %v7194 = vmul.f32 %v6170, %v6170
        %v7195 = vmul.f32 %v6171, %v6171
        %v7196 = vmul.f32 %v6172, %v6172
        %v7197 = vmul.f32 %v6173, %v6173
        %v7198 = vmul.f32 %v6174, %v6174
        %v7199 = vmul.f32 %v6175, %v6175
        %v7200 = vld [vmem:[#allocation2] sm:$0xff]
        %v7201 = vld [vmem:[#allocation2 + $0x8] sm:$0xff]
        %v7202 = vld [vmem:[#allocation2 + $0x10] sm:$0xff]
        %v7203 = vld [vmem:[#allocation2 + $0x18] sm:$0xff]
        %v7204 = vadd.f32 %v6176, %v6180
        %v7205 = vadd.f32 %v7204, %v6184
        %v7206 = vadd.f32 %v7205, %v6188
        %v7207 = vadd.f32 %v7206, %v6192
        %v7208 = vadd.f32 %v7207, %v6196
        %v7209 = vadd.f32 %v7208, %v6200
        %v7210 = vadd.f32 %v7209, %v6204
        %v7211 = vadd.f32 %v7210, %v6208
        %v7212 = vadd.f32 %v7211, %v6212
        %v7213 = vadd.f32 %v7212, %v6216
        %v7214 = vadd.f32 %v7213, %v6220
        %v7215 = vadd.f32 %v7214, %v6224
        %v7216 = vadd.f32 %v7215, %v6228
        %v7217 = vadd.f32 %v7216, %v6232
        %v7218 = vadd.f32 %v7217, %v6236
        %v7219 = vadd.f32 %v7218, %v6240
        %v7220 = vadd.f32 %v7219, %v6244
        %v7221 = vadd.f32 %v7220, %v6248
        %v7222 = vadd.f32 %v7221, %v6252
        %v7223 = vadd.f32 %v7222, %v6256
        %v7224 = vadd.f32 %v7223, %v6260
        %v7225 = vadd.f32 %v7224, %v6264
        %v7226 = vadd.f32 %v7225, %v6268
        %v7227 = vadd.f32 %v7226, %v6272
        %v7228 = vadd.f32 %v7227, %v6276
        %v7229 = vadd.f32 %v7228, %v6280
        %v7230 = vadd.f32 %v7229, %v6284
        %v7231 = vadd.f32 %v7230, %v6288
        %v7232 = vadd.f32 %v7231, %v6292
        %v7233 = vadd.f32 %v7232, %v6296
        %v7234 = vadd.f32 %v7233, %v6300
        %v7235 = vadd.f32 %v7234, %v6304
        %v7236 = vadd.f32 %v7235, %v6308
        %v7237 = vadd.f32 %v7236, %v6312
        %v7238 = vadd.f32 %v7237, %v6316
        %v7239 = vadd.f32 %v7238, %v6320
        %v7240 = vadd.f32 %v7239, %v6324
        %v7241 = vadd.f32 %v7240, %v6328
        %v7242 = vadd.f32 %v7241, %v6332
        %v7243 = vadd.f32 %v7242, %v6336
        %v7244 = vadd.f32 %v7243, %v6340
        %v7245 = vadd.f32 %v7244, %v6344
        %v7246 = vadd.f32 %v7245, %v6348
        %v7247 = vadd.f32 %v7246, %v6352
        %v7248 = vadd.f32 %v7247, %v6356
        %v7249 = vadd.f32 %v7248, %v6360
        %v7250 = vadd.f32 %v7249, %v6364
        %v7251 = vadd.f32 %v7250, %v6368
        %v7252 = vadd.f32 %v7251, %v6372
        %v7253 = vadd.f32 %v7252, %v6376
        %v7254 = vadd.f32 %v7253, %v6380
        %v7255 = vadd.f32 %v7254, %v6384
        %v7256 = vadd.f32 %v7255, %v6388
        %v7257 = vadd.f32 %v7256, %v6392
        %v7258 = vadd.f32 %v7257, %v6396
        %v7259 = vadd.f32 %v7258, %v6400
        %v7260 = vadd.f32 %v7259, %v6404
        %v7261 = vadd.f32 %v7260, %v6408
        %v7262 = vadd.f32 %v7261, %v6412
        %v7263 = vadd.f32 %v7262, %v6416
        %v7264 = vadd.f32 %v7263, %v6420
        %v7265 = vadd.f32 %v7264, %v6424
        %v7266 = vadd.f32 %v7265, %v6428
        %v7267 = vadd.f32 %v7266, %v6432
        %v7268 = vadd.f32 %v7267, %v6436
        %v7269 = vadd.f32 %v7268, %v6440
        %v7270 = vadd.f32 %v7269, %v6444
        %v7271 = vadd.f32 %v7270, %v6448
        %v7272 = vadd.f32 %v7271, %v6452
        %v7273 = vadd.f32 %v7272, %v6456
        %v7274 = vadd.f32 %v7273, %v6460
        %v7275 = vadd.f32 %v7274, %v6464
        %v7276 = vadd.f32 %v7275, %v6468
        %v7277 = vadd.f32 %v7276, %v6472
        %v7278 = vadd.f32 %v7277, %v6476
        %v7279 = vadd.f32 %v7278, %v6480
        %v7280 = vadd.f32 %v7279, %v6484
        %v7281 = vadd.f32 %v7280, %v6488
        %v7282 = vadd.f32 %v7281, %v6492
        %v7283 = vadd.f32 %v7282, %v6496
        %v7284 = vadd.f32 %v7283, %v6500
        %v7285 = vadd.f32 %v7284, %v6504
        %v7286 = vadd.f32 %v7285, %v6508
        %v7287 = vadd.f32 %v7286, %v6512
        %v7288 = vadd.f32 %v7287, %v6516
        %v7289 = vadd.f32 %v7288, %v6520
        %v7290 = vadd.f32 %v7289, %v6524
        %v7291 = vadd.f32 %v7290, %v6528
        %v7292 = vadd.f32 %v7291, %v6532
        %v7293 = vadd.f32 %v7292, %v6536
        %v7294 = vadd.f32 %v7293, %v6540
        %v7295 = vadd.f32 %v7294, %v6544
        %v7296 = vadd.f32 %v7295, %v6548
        %v7297 = vadd.f32 %v7296, %v6552
        %v7298 = vadd.f32 %v7297, %v6556
        %v7299 = vadd.f32 %v7298, %v6560
        %v7300 = vadd.f32 %v7299, %v6564
        %v7301 = vadd.f32 %v7300, %v6568
        %v7302 = vadd.f32 %v7301, %v6572
        %v7303 = vadd.f32 %v7302, %v6576
        %v7304 = vadd.f32 %v7303, %v6580
        %v7305 = vadd.f32 %v7304, %v6584
        %v7306 = vadd.f32 %v7305, %v6588
        %v7307 = vadd.f32 %v7306, %v6592
        %v7308 = vadd.f32 %v7307, %v6596
        %v7309 = vadd.f32 %v7308, %v6600
        %v7310 = vadd.f32 %v7309, %v6604
        %v7311 = vadd.f32 %v7310, %v6608
        %v7312 = vadd.f32 %v7311, %v6612
        %v7313 = vadd.f32 %v7312, %v6616
        %v7314 = vadd.f32 %v7313, %v6620
        %v7315 = vadd.f32 %v7314, %v6624
        %v7316 = vadd.f32 %v7315, %v6628
        %v7317 = vadd.f32 %v7316, %v6632
        %v7318 = vadd.f32 %v7317, %v6636
        %v7319 = vadd.f32 %v7318, %v6640
        %v7320 = vadd.f32 %v7319, %v6644
        %v7321 = vadd.f32 %v7320, %v6648
        %v7322 = vadd.f32 %v7321, %v6652
        %v7323 = vadd.f32 %v7322, %v6656
        %v7324 = vadd.f32 %v7323, %v6660
        %v7325 = vadd.f32 %v7324, %v6664
        %v7326 = vadd.f32 %v7325, %v6668
        %v7327 = vadd.f32 %v7326, %v6672
        %v7328 = vadd.f32 %v7327, %v6676
        %v7329 = vadd.f32 %v7328, %v6680
        %v7330 = vadd.f32 %v7329, %v6684
        %v7331 = vadd.f32 %v7330, %v6688
        %v7332 = vadd.f32 %v7331, %v6692
        %v7333 = vadd.f32 %v7332, %v6696
        %v7334 = vadd.f32 %v7333, %v6700
        %v7335 = vadd.f32 %v7334, %v6704
        %v7336 = vadd.f32 %v7335, %v6708
        %v7337 = vadd.f32 %v7336, %v6712
        %v7338 = vadd.f32 %v7337, %v6716
        %v7339 = vadd.f32 %v7338, %v6720
        %v7340 = vadd.f32 %v7339, %v6724
        %v7341 = vadd.f32 %v7340, %v6728
        %v7342 = vadd.f32 %v7341, %v6732
        %v7343 = vadd.f32 %v7342, %v6736
        %v7344 = vadd.f32 %v7343, %v6740
        %v7345 = vadd.f32 %v7344, %v6744
        %v7346 = vadd.f32 %v7345, %v6748
        %v7347 = vadd.f32 %v7346, %v6752
        %v7348 = vadd.f32 %v7347, %v6756
        %v7349 = vadd.f32 %v7348, %v6760
        %v7350 = vadd.f32 %v7349, %v6764
        %v7351 = vadd.f32 %v7350, %v6768
        %v7352 = vadd.f32 %v7351, %v6772
        %v7353 = vadd.f32 %v7352, %v6776
        %v7354 = vadd.f32 %v7353, %v6780
        %v7355 = vadd.f32 %v7354, %v6784
        %v7356 = vadd.f32 %v7355, %v6788
        %v7357 = vadd.f32 %v7356, %v6792
        %v7358 = vadd.f32 %v7357, %v6796
        %v7359 = vadd.f32 %v7358, %v6800
        %v7360 = vadd.f32 %v7359, %v6804
        %v7361 = vadd.f32 %v7360, %v6808
        %v7362 = vadd.f32 %v7361, %v6812
        %v7363 = vadd.f32 %v7362, %v6816
        %v7364 = vadd.f32 %v7363, %v6820
        %v7365 = vadd.f32 %v7364, %v6824
        %v7366 = vadd.f32 %v7365, %v6828
        %v7367 = vadd.f32 %v7366, %v6832
        %v7368 = vadd.f32 %v7367, %v6836
        %v7369 = vadd.f32 %v7368, %v6840
        %v7370 = vadd.f32 %v7369, %v6844
        %v7371 = vadd.f32 %v7370, %v6848
        %v7372 = vadd.f32 %v7371, %v6852
        %v7373 = vadd.f32 %v7372, %v6856
        %v7374 = vadd.f32 %v7373, %v6860
        %v7375 = vadd.f32 %v7374, %v6864
        %v7376 = vadd.f32 %v7375, %v6868
        %v7377 = vadd.f32 %v7376, %v6872
        %v7378 = vadd.f32 %v7377, %v6876
        %v7379 = vadd.f32 %v7378, %v6880
        %v7380 = vadd.f32 %v7379, %v6884
        %v7381 = vadd.f32 %v7380, %v6888
        %v7382 = vadd.f32 %v7381, %v6892
        %v7383 = vadd.f32 %v7382, %v6896
        %v7384 = vadd.f32 %v7383, %v6900
        %v7385 = vadd.f32 %v7384, %v6904
        %v7386 = vadd.f32 %v7385, %v6908
        %v7387 = vadd.f32 %v7386, %v6912
        %v7388 = vadd.f32 %v7387, %v6916
        %v7389 = vadd.f32 %v7388, %v6920
        %v7390 = vadd.f32 %v7389, %v6924
        %v7391 = vadd.f32 %v7390, %v6928
        %v7392 = vadd.f32 %v7391, %v6932
        %v7393 = vadd.f32 %v7392, %v6936
        %v7394 = vadd.f32 %v7393, %v6940
        %v7395 = vadd.f32 %v7394, %v6944
        %v7396 = vadd.f32 %v7395, %v6948
        %v7397 = vadd.f32 %v7396, %v6952
        %v7398 = vadd.f32 %v7397, %v6956
        %v7399 = vadd.f32 %v7398, %v6960
        %v7400 = vadd.f32 %v7399, %v6964
        %v7401 = vadd.f32 %v7400, %v6968
        %v7402 = vadd.f32 %v7401, %v6972
        %v7403 = vadd.f32 %v7402, %v6976
        %v7404 = vadd.f32 %v7403, %v6980
        %v7405 = vadd.f32 %v7404, %v6984
        %v7406 = vadd.f32 %v7405, %v6988
        %v7407 = vadd.f32 %v7406, %v6992
        %v7408 = vadd.f32 %v7407, %v6996
        %v7409 = vadd.f32 %v7408, %v7000
        %v7410 = vadd.f32 %v7409, %v7004
        %v7411 = vadd.f32 %v7410, %v7008
        %v7412 = vadd.f32 %v7411, %v7012
        %v7413 = vadd.f32 %v7412, %v7016
        %v7414 = vadd.f32 %v7413, %v7020
        %v7415 = vadd.f32 %v7414, %v7024
        %v7416 = vadd.f32 %v7415, %v7028
        %v7417 = vadd.f32 %v7416, %v7032
        %v7418 = vadd.f32 %v7417, %v7036
        %v7419 = vadd.f32 %v7418, %v7040
        %v7420 = vadd.f32 %v7419, %v7044
        %v7421 = vadd.f32 %v7420, %v7048
        %v7422 = vadd.f32 %v7421, %v7052
        %v7423 = vadd.f32 %v7422, %v7056
        %v7424 = vadd.f32 %v7423, %v7060
        %v7425 = vadd.f32 %v7424, %v7064
        %v7426 = vadd.f32 %v7425, %v7068
        %v7427 = vadd.f32 %v7426, %v7072
        %v7428 = vadd.f32 %v7427, %v7076
        %v7429 = vadd.f32 %v7428, %v7080
        %v7430 = vadd.f32 %v7429, %v7084
        %v7431 = vadd.f32 %v7430, %v7088
        %v7432 = vadd.f32 %v7431, %v7092
        %v7433 = vadd.f32 %v7432, %v7096
        %v7434 = vadd.f32 %v7433, %v7100
        %v7435 = vadd.f32 %v7434, %v7104
        %v7436 = vadd.f32 %v7435, %v7108
        %v7437 = vadd.f32 %v7436, %v7112
        %v7438 = vadd.f32 %v7437, %v7116
        %v7439 = vadd.f32 %v7438, %v7120
        %v7440 = vadd.f32 %v7439, %v7124
        %v7441 = vadd.f32 %v7440, %v7128
        %v7442 = vadd.f32 %v7441, %v7132
        %v7443 = vadd.f32 %v7442, %v7136
        %v7444 = vadd.f32 %v7443, %v7140
        %v7445 = vadd.f32 %v7444, %v7144
        %v7446 = vadd.f32 %v7445, %v7148
        %v7447 = vadd.f32 %v7446, %v7152
        %v7448 = vadd.f32 %v7447, %v7156
        %v7449 = vadd.f32 %v7448, %v7160
        %v7450 = vadd.f32 %v7449, %v7164
        %v7451 = vadd.f32 %v7450, %v7168
        %v7452 = vadd.f32 %v7451, %v7172
        %v7453 = vadd.f32 %v7452, %v7176
        %v7454 = vadd.f32 %v7453, %v7180
        %v7455 = vadd.f32 %v7454, %v7184
        %v7456 = vadd.f32 %v7455, %v7188
        %v7457 = vadd.f32 %v7456, %v7192
        %v7458 = vadd.f32 %v7457, %v7196
        %v7459 = vadd.f32 %v6177, %v6181
        %v7460 = vadd.f32 %v7459, %v6185
        %v7461 = vadd.f32 %v7460, %v6189
        %v7462 = vadd.f32 %v7461, %v6193
        %v7463 = vadd.f32 %v7462, %v6197
        %v7464 = vadd.f32 %v7463, %v6201
        %v7465 = vadd.f32 %v7464, %v6205
        %v7466 = vadd.f32 %v7465, %v6209
        %v7467 = vadd.f32 %v7466, %v6213
        %v7468 = vadd.f32 %v7467, %v6217
        %v7469 = vadd.f32 %v7468, %v6221
        %v7470 = vadd.f32 %v7469, %v6225
        %v7471 = vadd.f32 %v7470, %v6229
        %v7472 = vadd.f32 %v7471, %v6233
        %v7473 = vadd.f32 %v7472, %v6237
        %v7474 = vadd.f32 %v7473, %v6241
        %v7475 = vadd.f32 %v7474, %v6245
        %v7476 = vadd.f32 %v7475, %v6249
        %v7477 = vadd.f32 %v7476, %v6253
        %v7478 = vadd.f32 %v7477, %v6257
        %v7479 = vadd.f32 %v7478, %v6261
        %v7480 = vadd.f32 %v7479, %v6265
        %v7481 = vadd.f32 %v7480, %v6269
        %v7482 = vadd.f32 %v7481, %v6273
        %v7483 = vadd.f32 %v7482, %v6277
        %v7484 = vadd.f32 %v7483, %v6281
        %v7485 = vadd.f32 %v7484, %v6285
        %v7486 = vadd.f32 %v7485, %v6289
        %v7487 = vadd.f32 %v7486, %v6293
        %v7488 = vadd.f32 %v7487, %v6297
        %v7489 = vadd.f32 %v7488, %v6301
        %v7490 = vadd.f32 %v7489, %v6305
        %v7491 = vadd.f32 %v7490, %v6309
        %v7492 = vadd.f32 %v7491, %v6313
        %v7493 = vadd.f32 %v7492, %v6317
        %v7494 = vadd.f32 %v7493, %v6321
        %v7495 = vadd.f32 %v7494, %v6325
        %v7496 = vadd.f32 %v7495, %v6329
        %v7497 = vadd.f32 %v7496, %v6333
        %v7498 = vadd.f32 %v7497, %v6337
        %v7499 = vadd.f32 %v7498, %v6341
        %v7500 = vadd.f32 %v7499, %v6345
        %v7501 = vadd.f32 %v7500, %v6349
        %v7502 = vadd.f32 %v7501, %v6353
        %v7503 = vadd.f32 %v7502, %v6357
        %v7504 = vadd.f32 %v7503, %v6361
        %v7505 = vadd.f32 %v7504, %v6365
        %v7506 = vadd.f32 %v7505, %v6369
        %v7507 = vadd.f32 %v7506, %v6373
        %v7508 = vadd.f32 %v7507, %v6377
        %v7509 = vadd.f32 %v7508, %v6381
        %v7510 = vadd.f32 %v7509, %v6385
        %v7511 = vadd.f32 %v7510, %v6389
        %v7512 = vadd.f32 %v7511, %v6393
        %v7513 = vadd.f32 %v7512, %v6397
        %v7514 = vadd.f32 %v7513, %v6401
        %v7515 = vadd.f32 %v7514, %v6405
        %v7516 = vadd.f32 %v7515, %v6409
        %v7517 = vadd.f32 %v7516, %v6413
        %v7518 = vadd.f32 %v7517, %v6417
        %v7519 = vadd.f32 %v7518, %v6421
        %v7520 = vadd.f32 %v7519, %v6425
        %v7521 = vadd.f32 %v7520, %v6429
        %v7522 = vadd.f32 %v7521, %v6433
        %v7523 = vadd.f32 %v7522, %v6437
        %v7524 = vadd.f32 %v7523, %v6441
        %v7525 = vadd.f32 %v7524, %v6445
        %v7526 = vadd.f32 %v7525, %v6449
        %v7527 = vadd.f32 %v7526, %v6453
        %v7528 = vadd.f32 %v7527, %v6457
        %v7529 = vadd.f32 %v7528, %v6461
        %v7530 = vadd.f32 %v7529, %v6465
        %v7531 = vadd.f32 %v7530, %v6469
        %v7532 = vadd.f32 %v7531, %v6473
        %v7533 = vadd.f32 %v7532, %v6477
        %v7534 = vadd.f32 %v7533, %v6481
        %v7535 = vadd.f32 %v7534, %v6485
        %v7536 = vadd.f32 %v7535, %v6489
        %v7537 = vadd.f32 %v7536, %v6493
        %v7538 = vadd.f32 %v7537, %v6497
        %v7539 = vadd.f32 %v7538, %v6501
        %v7540 = vadd.f32 %v7539, %v6505
        %v7541 = vadd.f32 %v7540, %v6509
        %v7542 = vadd.f32 %v7541, %v6513
        %v7543 = vadd.f32 %v7542, %v6517
        %v7544 = vadd.f32 %v7543, %v6521
        %v7545 = vadd.f32 %v7544, %v6525
        %v7546 = vadd.f32 %v7545, %v6529
        %v7547 = vadd.f32 %v7546, %v6533
        %v7548 = vadd.f32 %v7547, %v6537
        %v7549 = vadd.f32 %v7548, %v6541
        %v7550 = vadd.f32 %v7549, %v6545
        %v7551 = vadd.f32 %v7550, %v6549
        %v7552 = vadd.f32 %v7551, %v6553
        %v7553 = vadd.f32 %v7552, %v6557
        %v7554 = vadd.f32 %v7553, %v6561
        %v7555 = vadd.f32 %v7554, %v6565
        %v7556 = vadd.f32 %v7555, %v6569
        %v7557 = vadd.f32 %v7556, %v6573
        %v7558 = vadd.f32 %v7557, %v6577
        %v7559 = vadd.f32 %v7558, %v6581
        %v7560 = vadd.f32 %v7559, %v6585
        %v7561 = vadd.f32 %v7560, %v6589
        %v7562 = vadd.f32 %v7561, %v6593
        %v7563 = vadd.f32 %v7562, %v6597
        %v7564 = vadd.f32 %v7563, %v6601
        %v7565 = vadd.f32 %v7564, %v6605
        %v7566 = vadd.f32 %v7565, %v6609
        %v7567 = vadd.f32 %v7566, %v6613
        %v7568 = vadd.f32 %v7567, %v6617
        %v7569 = vadd.f32 %v7568, %v6621
        %v7570 = vadd.f32 %v7569, %v6625
        %v7571 = vadd.f32 %v7570, %v6629
        %v7572 = vadd.f32 %v7571, %v6633
        %v7573 = vadd.f32 %v7572, %v6637
        %v7574 = vadd.f32 %v7573, %v6641
        %v7575 = vadd.f32 %v7574, %v6645
        %v7576 = vadd.f32 %v7575, %v6649
        %v7577 = vadd.f32 %v7576, %v6653
        %v7578 = vadd.f32 %v7577, %v6657
        %v7579 = vadd.f32 %v7578, %v6661
        %v7580 = vadd.f32 %v7579, %v6665
        %v7581 = vadd.f32 %v7580, %v6669
        %v7582 = vadd.f32 %v7581, %v6673
        %v7583 = vadd.f32 %v7582, %v6677
        %v7584 = vadd.f32 %v7583, %v6681
        %v7585 = vadd.f32 %v7584, %v6685
        %v7586 = vadd.f32 %v7585, %v6689
        %v7587 = vadd.f32 %v7586, %v6693
        %v7588 = vadd.f32 %v7587, %v6697
        %v7589 = vadd.f32 %v7588, %v6701
        %v7590 = vadd.f32 %v7589, %v6705
        %v7591 = vadd.f32 %v7590, %v6709
        %v7592 = vadd.f32 %v7591, %v6713
        %v7593 = vadd.f32 %v7592, %v6717
        %v7594 = vadd.f32 %v7593, %v6721
        %v7595 = vadd.f32 %v7594, %v6725
        %v7596 = vadd.f32 %v7595, %v6729
        %v7597 = vadd.f32 %v7596, %v6733
        %v7598 = vadd.f32 %v7597, %v6737
        %v7599 = vadd.f32 %v7598, %v6741
        %v7600 = vadd.f32 %v7599, %v6745
        %v7601 = vadd.f32 %v7600, %v6749
        %v7602 = vadd.f32 %v7601, %v6753
        %v7603 = vadd.f32 %v7602, %v6757
        %v7604 = vadd.f32 %v7603, %v6761
        %v7605 = vadd.f32 %v7604, %v6765
        %v7606 = vadd.f32 %v7605, %v6769
        %v7607 = vadd.f32 %v7606, %v6773
        %v7608 = vadd.f32 %v7607, %v6777
        %v7609 = vadd.f32 %v7608, %v6781
        %v7610 = vadd.f32 %v7609, %v6785
        %v7611 = vadd.f32 %v7610, %v6789
        %v7612 = vadd.f32 %v7611, %v6793
        %v7613 = vadd.f32 %v7612, %v6797
        %v7614 = vadd.f32 %v7613, %v6801
        %v7615 = vadd.f32 %v7614, %v6805
        %v7616 = vadd.f32 %v7615, %v6809
        %v7617 = vadd.f32 %v7616, %v6813
        %v7618 = vadd.f32 %v7617, %v6817
        %v7619 = vadd.f32 %v7618, %v6821
        %v7620 = vadd.f32 %v7619, %v6825
        %v7621 = vadd.f32 %v7620, %v6829
        %v7622 = vadd.f32 %v7621, %v6833
        %v7623 = vadd.f32 %v7622, %v6837
        %v7624 = vadd.f32 %v7623, %v6841
        %v7625 = vadd.f32 %v7624, %v6845
        %v7626 = vadd.f32 %v7625, %v6849
        %v7627 = vadd.f32 %v7626, %v6853
        %v7628 = vadd.f32 %v7627, %v6857
        %v7629 = vadd.f32 %v7628, %v6861
        %v7630 = vadd.f32 %v7629, %v6865
        %v7631 = vadd.f32 %v7630, %v6869
        %v7632 = vadd.f32 %v7631, %v6873
        %v7633 = vadd.f32 %v7632, %v6877
        %v7634 = vadd.f32 %v7633, %v6881
        %v7635 = vadd.f32 %v7634, %v6885
        %v7636 = vadd.f32 %v7635, %v6889
        %v7637 = vadd.f32 %v7636, %v6893
        %v7638 = vadd.f32 %v7637, %v6897
        %v7639 = vadd.f32 %v7638, %v6901
        %v7640 = vadd.f32 %v7639, %v6905
        %v7641 = vadd.f32 %v7640, %v6909
        %v7642 = vadd.f32 %v7641, %v6913
        %v7643 = vadd.f32 %v7642, %v6917
        %v7644 = vadd.f32 %v7643, %v6921
        %v7645 = vadd.f32 %v7644, %v6925
        %v7646 = vadd.f32 %v7645, %v6929
        %v7647 = vadd.f32 %v7646, %v6933
        %v7648 = vadd.f32 %v7647, %v6937
        %v7649 = vadd.f32 %v7648, %v6941
        %v7650 = vadd.f32 %v7649, %v6945
        %v7651 = vadd.f32 %v7650, %v6949
        %v7652 = vadd.f32 %v7651, %v6953
        %v7653 = vadd.f32 %v7652, %v6957
        %v7654 = vadd.f32 %v7653, %v6961
        %v7655 = vadd.f32 %v7654, %v6965
        %v7656 = vadd.f32 %v7655, %v6969
        %v7657 = vadd.f32 %v7656, %v6973
        %v7658 = vadd.f32 %v7657, %v6977
        %v7659 = vadd.f32 %v7658, %v6981
        %v7660 = vadd.f32 %v7659, %v6985
        %v7661 = vadd.f32 %v7660, %v6989
        %v7662 = vadd.f32 %v7661, %v6993
        %v7663 = vadd.f32 %v7662, %v6997
        %v7664 = vadd.f32 %v7663, %v7001
        %v7665 = vadd.f32 %v7664, %v7005
        %v7666 = vadd.f32 %v7665, %v7009
        %v7667 = vadd.f32 %v7666, %v7013
        %v7668 = vadd.f32 %v7667, %v7017
        %v7669 = vadd.f32 %v7668, %v7021
        %v7670 = vadd.f32 %v7669, %v7025
        %v7671 = vadd.f32 %v7670, %v7029
        %v7672 = vadd.f32 %v7671, %v7033
        %v7673 = vadd.f32 %v7672, %v7037
        %v7674 = vadd.f32 %v7673, %v7041
        %v7675 = vadd.f32 %v7674, %v7045
        %v7676 = vadd.f32 %v7675, %v7049
        %v7677 = vadd.f32 %v7676, %v7053
        %v7678 = vadd.f32 %v7677, %v7057
        %v7679 = vadd.f32 %v7678, %v7061
        %v7680 = vadd.f32 %v7679, %v7065
        %v7681 = vadd.f32 %v7680, %v7069
        %v7682 = vadd.f32 %v7681, %v7073
        %v7683 = vadd.f32 %v7682, %v7077
        %v7684 = vadd.f32 %v7683, %v7081
        %v7685 = vadd.f32 %v7684, %v7085
        %v7686 = vadd.f32 %v7685, %v7089
        %v7687 = vadd.f32 %v7686, %v7093
        %v7688 = vadd.f32 %v7687, %v7097
        %v7689 = vadd.f32 %v7688, %v7101
        %v7690 = vadd.f32 %v7689, %v7105
        %v7691 = vadd.f32 %v7690, %v7109
        %v7692 = vadd.f32 %v7691, %v7113
        %v7693 = vadd.f32 %v7692, %v7117
        %v7694 = vadd.f32 %v7693, %v7121
        %v7695 = vadd.f32 %v7694, %v7125
        %v7696 = vadd.f32 %v7695, %v7129
        %v7697 = vadd.f32 %v7696, %v7133
        %v7698 = vadd.f32 %v7697, %v7137
        %v7699 = vadd.f32 %v7698, %v7141
        %v7700 = vadd.f32 %v7699, %v7145
        %v7701 = vadd.f32 %v7700, %v7149
        %v7702 = vadd.f32 %v7701, %v7153
        %v7703 = vadd.f32 %v7702, %v7157
        %v7704 = vadd.f32 %v7703, %v7161
        %v7705 = vadd.f32 %v7704, %v7165
        %v7706 = vadd.f32 %v7705, %v7169
        %v7707 = vadd.f32 %v7706, %v7173
        %v7708 = vadd.f32 %v7707, %v7177
        %v7709 = vadd.f32 %v7708, %v7181
        %v7710 = vadd.f32 %v7709, %v7185
        %v7711 = vadd.f32 %v7710, %v7189
        %v7712 = vadd.f32 %v7711, %v7193
        %v7713 = vadd.f32 %v7712, %v7197
        %v7714 = vadd.f32 %v6178, %v6182
        %v7715 = vadd.f32 %v7714, %v6186
        %v7716 = vadd.f32 %v7715, %v6190
        %v7717 = vadd.f32 %v7716, %v6194
        %v7718 = vadd.f32 %v7717, %v6198
        %v7719 = vadd.f32 %v7718, %v6202
        %v7720 = vadd.f32 %v7719, %v6206
        %v7721 = vadd.f32 %v7720, %v6210
        %v7722 = vadd.f32 %v7721, %v6214
        %v7723 = vadd.f32 %v7722, %v6218
        %v7724 = vadd.f32 %v7723, %v6222
        %v7725 = vadd.f32 %v7724, %v6226
        %v7726 = vadd.f32 %v7725, %v6230
        %v7727 = vadd.f32 %v7726, %v6234
        %v7728 = vadd.f32 %v7727, %v6238
        %v7729 = vadd.f32 %v7728, %v6242
        %v7730 = vadd.f32 %v7729, %v6246
        %v7731 = vadd.f32 %v7730, %v6250
        %v7732 = vadd.f32 %v7731, %v6254
        %v7733 = vadd.f32 %v7732, %v6258
        %v7734 = vadd.f32 %v7733, %v6262
        %v7735 = vadd.f32 %v7734, %v6266
        %v7736 = vadd.f32 %v7735, %v6270
        %v7737 = vadd.f32 %v7736, %v6274
        %v7738 = vadd.f32 %v7737, %v6278
        %v7739 = vadd.f32 %v7738, %v6282
        %v7740 = vadd.f32 %v7739, %v6286
        %v7741 = vadd.f32 %v7740, %v6290
        %v7742 = vadd.f32 %v7741, %v6294
        %v7743 = vadd.f32 %v7742, %v6298
        %v7744 = vadd.f32 %v7743, %v6302
        %v7745 = vadd.f32 %v7744, %v6306
        %v7746 = vadd.f32 %v7745, %v6310
        %v7747 = vadd.f32 %v7746, %v6314
        %v7748 = vadd.f32 %v7747, %v6318
        %v7749 = vadd.f32 %v7748, %v6322
        %v7750 = vadd.f32 %v7749, %v6326
        %v7751 = vadd.f32 %v7750, %v6330
        %v7752 = vadd.f32 %v7751, %v6334
        %v7753 = vadd.f32 %v7752, %v6338
        %v7754 = vadd.f32 %v7753, %v6342
        %v7755 = vadd.f32 %v7754, %v6346
        %v7756 = vadd.f32 %v7755, %v6350
        %v7757 = vadd.f32 %v7756, %v6354
        %v7758 = vadd.f32 %v7757, %v6358
        %v7759 = vadd.f32 %v7758, %v6362
        %v7760 = vadd.f32 %v7759, %v6366
        %v7761 = vadd.f32 %v7760, %v6370
        %v7762 = vadd.f32 %v7761, %v6374
        %v7763 = vadd.f32 %v7762, %v6378
        %v7764 = vadd.f32 %v7763, %v6382
        %v7765 = vadd.f32 %v7764, %v6386
        %v7766 = vadd.f32 %v7765, %v6390
        %v7767 = vadd.f32 %v7766, %v6394
        %v7768 = vadd.f32 %v7767, %v6398
        %v7769 = vadd.f32 %v7768, %v6402
        %v7770 = vadd.f32 %v7769, %v6406
        %v7771 = vadd.f32 %v7770, %v6410
        %v7772 = vadd.f32 %v7771, %v6414
        %v7773 = vadd.f32 %v7772, %v6418
        %v7774 = vadd.f32 %v7773, %v6422
        %v7775 = vadd.f32 %v7774, %v6426
        %v7776 = vadd.f32 %v7775, %v6430
        %v7777 = vadd.f32 %v7776, %v6434
        %v7778 = vadd.f32 %v7777, %v6438
        %v7779 = vadd.f32 %v7778, %v6442
        %v7780 = vadd.f32 %v7779, %v6446
        %v7781 = vadd.f32 %v7780, %v6450
        %v7782 = vadd.f32 %v7781, %v6454
        %v7783 = vadd.f32 %v7782, %v6458
        %v7784 = vadd.f32 %v7783, %v6462
        %v7785 = vadd.f32 %v7784, %v6466
        %v7786 = vadd.f32 %v7785, %v6470
        %v7787 = vadd.f32 %v7786, %v6474
        %v7788 = vadd.f32 %v7787, %v6478
        %v7789 = vadd.f32 %v7788, %v6482
        %v7790 = vadd.f32 %v7789, %v6486
        %v7791 = vadd.f32 %v7790, %v6490
        %v7792 = vadd.f32 %v7791, %v6494
        %v7793 = vadd.f32 %v7792, %v6498
        %v7794 = vadd.f32 %v7793, %v6502
        %v7795 = vadd.f32 %v7794, %v6506
        %v7796 = vadd.f32 %v7795, %v6510
        %v7797 = vadd.f32 %v7796, %v6514
        %v7798 = vadd.f32 %v7797, %v6518
        %v7799 = vadd.f32 %v7798, %v6522
        %v7800 = vadd.f32 %v7799, %v6526
        %v7801 = vadd.f32 %v7800, %v6530
        %v7802 = vadd.f32 %v7801, %v6534
        %v7803 = vadd.f32 %v7802, %v6538
        %v7804 = vadd.f32 %v7803, %v6542
        %v7805 = vadd.f32 %v7804, %v6546
        %v7806 = vadd.f32 %v7805, %v6550
        %v7807 = vadd.f32 %v7806, %v6554
        %v7808 = vadd.f32 %v7807, %v6558
        %v7809 = vadd.f32 %v7808, %v6562
        %v7810 = vadd.f32 %v7809, %v6566
        %v7811 = vadd.f32 %v7810, %v6570
        %v7812 = vadd.f32 %v7811, %v6574
        %v7813 = vadd.f32 %v7812, %v6578
        %v7814 = vadd.f32 %v7813, %v6582
        %v7815 = vadd.f32 %v7814, %v6586
        %v7816 = vadd.f32 %v7815, %v6590
        %v7817 = vadd.f32 %v7816, %v6594
        %v7818 = vadd.f32 %v7817, %v6598
        %v7819 = vadd.f32 %v7818, %v6602
        %v7820 = vadd.f32 %v7819, %v6606
        %v7821 = vadd.f32 %v7820, %v6610
        %v7822 = vadd.f32 %v7821, %v6614
        %v7823 = vadd.f32 %v7822, %v6618
        %v7824 = vadd.f32 %v7823, %v6622
        %v7825 = vadd.f32 %v7824, %v6626
        %v7826 = vadd.f32 %v7825, %v6630
        %v7827 = vadd.f32 %v7826, %v6634
        %v7828 = vadd.f32 %v7827, %v6638
        %v7829 = vadd.f32 %v7828, %v6642
        %v7830 = vadd.f32 %v7829, %v6646
        %v7831 = vadd.f32 %v7830, %v6650
        %v7832 = vadd.f32 %v7831, %v6654
        %v7833 = vadd.f32 %v7832, %v6658
        %v7834 = vadd.f32 %v7833, %v6662
        %v7835 = vadd.f32 %v7834, %v6666
        %v7836 = vadd.f32 %v7835, %v6670
        %v7837 = vadd.f32 %v7836, %v6674
        %v7838 = vadd.f32 %v7837, %v6678
        %v7839 = vadd.f32 %v7838, %v6682
        %v7840 = vadd.f32 %v7839, %v6686
        %v7841 = vadd.f32 %v7840, %v6690
        %v7842 = vadd.f32 %v7841, %v6694
        %v7843 = vadd.f32 %v7842, %v6698
        %v7844 = vadd.f32 %v7843, %v6702
        %v7845 = vadd.f32 %v7844, %v6706
        %v7846 = vadd.f32 %v7845, %v6710
        %v7847 = vadd.f32 %v7846, %v6714
        %v7848 = vadd.f32 %v7847, %v6718
        %v7849 = vadd.f32 %v7848, %v6722
        %v7850 = vadd.f32 %v7849, %v6726
        %v7851 = vadd.f32 %v7850, %v6730
        %v7852 = vadd.f32 %v7851, %v6734
        %v7853 = vadd.f32 %v7852, %v6738
        %v7854 = vadd.f32 %v7853, %v6742
        %v7855 = vadd.f32 %v7854, %v6746
        %v7856 = vadd.f32 %v7855, %v6750
        %v7857 = vadd.f32 %v7856, %v6754
        %v7858 = vadd.f32 %v7857, %v6758
        %v7859 = vadd.f32 %v7858, %v6762
        %v7860 = vadd.f32 %v7859, %v6766
        %v7861 = vadd.f32 %v7860, %v6770
        %v7862 = vadd.f32 %v7861, %v6774
        %v7863 = vadd.f32 %v7862, %v6778
        %v7864 = vadd.f32 %v7863, %v6782
        %v7865 = vadd.f32 %v7864, %v6786
        %v7866 = vadd.f32 %v7865, %v6790
        %v7867 = vadd.f32 %v7866, %v6794
        %v7868 = vadd.f32 %v7867, %v6798
        %v7869 = vadd.f32 %v7868, %v6802
        %v7870 = vadd.f32 %v7869, %v6806
        %v7871 = vadd.f32 %v7870, %v6810
        %v7872 = vadd.f32 %v7871, %v6814
        %v7873 = vadd.f32 %v7872, %v6818
        %v7874 = vadd.f32 %v7873, %v6822
        %v7875 = vadd.f32 %v7874, %v6826
        %v7876 = vadd.f32 %v7875, %v6830
        %v7877 = vadd.f32 %v7876, %v6834
        %v7878 = vadd.f32 %v7877, %v6838
        %v7879 = vadd.f32 %v7878, %v6842
        %v7880 = vadd.f32 %v7879, %v6846
        %v7881 = vadd.f32 %v7880, %v6850
        %v7882 = vadd.f32 %v7881, %v6854
        %v7883 = vadd.f32 %v7882, %v6858
        %v7884 = vadd.f32 %v7883, %v6862
        %v7885 = vadd.f32 %v7884, %v6866
        %v7886 = vadd.f32 %v7885, %v6870
        %v7887 = vadd.f32 %v7886, %v6874
        %v7888 = vadd.f32 %v7887, %v6878
        %v7889 = vadd.f32 %v7888, %v6882
        %v7890 = vadd.f32 %v7889, %v6886
        %v7891 = vadd.f32 %v7890, %v6890
        %v7892 = vadd.f32 %v7891, %v6894
        %v7893 = vadd.f32 %v7892, %v6898
        %v7894 = vadd.f32 %v7893, %v6902
        %v7895 = vadd.f32 %v7894, %v6906
        %v7896 = vadd.f32 %v7895, %v6910
        %v7897 = vadd.f32 %v7896, %v6914
        %v7898 = vadd.f32 %v7897, %v6918
        %v7899 = vadd.f32 %v7898, %v6922
        %v7900 = vadd.f32 %v7899, %v6926
        %v7901 = vadd.f32 %v7900, %v6930
        %v7902 = vadd.f32 %v7901, %v6934
        %v7903 = vadd.f32 %v7902, %v6938
        %v7904 = vadd.f32 %v7903, %v6942
        %v7905 = vadd.f32 %v7904, %v6946
        %v7906 = vadd.f32 %v7905, %v6950
        %v7907 = vadd.f32 %v7906, %v6954
        %v7908 = vadd.f32 %v7907, %v6958
        %v7909 = vadd.f32 %v7908, %v6962
        %v7910 = vadd.f32 %v7909, %v6966
        %v7911 = vadd.f32 %v7910, %v6970
        %v7912 = vadd.f32 %v7911, %v6974
        %v7913 = vadd.f32 %v7912, %v6978
        %v7914 = vadd.f32 %v7913, %v6982
        %v7915 = vadd.f32 %v7914, %v6986
        %v7916 = vadd.f32 %v7915, %v6990
        %v7917 = vadd.f32 %v7916, %v6994
        %v7918 = vadd.f32 %v7917, %v6998
        %v7919 = vadd.f32 %v7918, %v7002
        %v7920 = vadd.f32 %v7919, %v7006
        %v7921 = vadd.f32 %v7920, %v7010
        %v7922 = vadd.f32 %v7921, %v7014
        %v7923 = vadd.f32 %v7922, %v7018
        %v7924 = vadd.f32 %v7923, %v7022
        %v7925 = vadd.f32 %v7924, %v7026
        %v7926 = vadd.f32 %v7925, %v7030
        %v7927 = vadd.f32 %v7926, %v7034
        %v7928 = vadd.f32 %v7927, %v7038
        %v7929 = vadd.f32 %v7928, %v7042
        %v7930 = vadd.f32 %v7929, %v7046
        %v7931 = vadd.f32 %v7930, %v7050
        %v7932 = vadd.f32 %v7931, %v7054
        %v7933 = vadd.f32 %v7932, %v7058
        %v7934 = vadd.f32 %v7933, %v7062
        %v7935 = vadd.f32 %v7934, %v7066
        %v7936 = vadd.f32 %v7935, %v7070
        %v7937 = vadd.f32 %v7936, %v7074
        %v7938 = vadd.f32 %v7937, %v7078
        %v7939 = vadd.f32 %v7938, %v7082
        %v7940 = vadd.f32 %v7939, %v7086
        %v7941 = vadd.f32 %v7940, %v7090
        %v7942 = vadd.f32 %v7941, %v7094
        %v7943 = vadd.f32 %v7942, %v7098
        %v7944 = vadd.f32 %v7943, %v7102
        %v7945 = vadd.f32 %v7944, %v7106
        %v7946 = vadd.f32 %v7945, %v7110
        %v7947 = vadd.f32 %v7946, %v7114
        %v7948 = vadd.f32 %v7947, %v7118
        %v7949 = vadd.f32 %v7948, %v7122
        %v7950 = vadd.f32 %v7949, %v7126
        %v7951 = vadd.f32 %v7950, %v7130
        %v7952 = vadd.f32 %v7951, %v7134
        %v7953 = vadd.f32 %v7952, %v7138
        %v7954 = vadd.f32 %v7953, %v7142
        %v7955 = vadd.f32 %v7954, %v7146
        %v7956 = vadd.f32 %v7955, %v7150
        %v7957 = vadd.f32 %v7956, %v7154
        %v7958 = vadd.f32 %v7957, %v7158
        %v7959 = vadd.f32 %v7958, %v7162
        %v7960 = vadd.f32 %v7959, %v7166
        %v7961 = vadd.f32 %v7960, %v7170
        %v7962 = vadd.f32 %v7961, %v7174
        %v7963 = vadd.f32 %v7962, %v7178
        %v7964 = vadd.f32 %v7963, %v7182
        %v7965 = vadd.f32 %v7964, %v7186
        %v7966 = vadd.f32 %v7965, %v7190
        %v7967 = vadd.f32 %v7966, %v7194
        %v7968 = vadd.f32 %v7967, %v7198
        %v7969 = vadd.f32 %v6179, %v6183
        %v7970 = vadd.f32 %v7969, %v6187
        %v7971 = vadd.f32 %v7970, %v6191
        %v7972 = vadd.f32 %v7971, %v6195
        %v7973 = vadd.f32 %v7972, %v6199
        %v7974 = vadd.f32 %v7973, %v6203
        %v7975 = vadd.f32 %v7974, %v6207
        %v7976 = vadd.f32 %v7975, %v6211
        %v7977 = vadd.f32 %v7976, %v6215
        %v7978 = vadd.f32 %v7977, %v6219
        %v7979 = vadd.f32 %v7978, %v6223
        %v7980 = vadd.f32 %v7979, %v6227
        %v7981 = vadd.f32 %v7980, %v6231
        %v7982 = vadd.f32 %v7981, %v6235
        %v7983 = vadd.f32 %v7982, %v6239
        %v7984 = vadd.f32 %v7983, %v6243
        %v7985 = vadd.f32 %v7984, %v6247
        %v7986 = vadd.f32 %v7985, %v6251
        %v7987 = vadd.f32 %v7986, %v6255
        %v7988 = vadd.f32 %v7987, %v6259
        %v7989 = vadd.f32 %v7988, %v6263
        %v7990 = vadd.f32 %v7989, %v6267
        %v7991 = vadd.f32 %v7990, %v6271
        %v7992 = vadd.f32 %v7991, %v6275
        %v7993 = vadd.f32 %v7992, %v6279
        %v7994 = vadd.f32 %v7993, %v6283
        %v7995 = vadd.f32 %v7994, %v6287
        %v7996 = vadd.f32 %v7995, %v6291
        %v7997 = vadd.f32 %v7996, %v6295
        %v7998 = vadd.f32 %v7997, %v6299
        %v7999 = vadd.f32 %v7998, %v6303
        %v8000 = vadd.f32 %v7999, %v6307
        %v8001 = vadd.f32 %v8000, %v6311
        %v8002 = vadd.f32 %v8001, %v6315
        %v8003 = vadd.f32 %v8002, %v6319
        %v8004 = vadd.f32 %v8003, %v6323
        %v8005 = vadd.f32 %v8004, %v6327
        %v8006 = vadd.f32 %v8005, %v6331
        %v8007 = vadd.f32 %v8006, %v6335
        %v8008 = vadd.f32 %v8007, %v6339
        %v8009 = vadd.f32 %v8008, %v6343
        %v8010 = vadd.f32 %v8009, %v6347
        %v8011 = vadd.f32 %v8010, %v6351
        %v8012 = vadd.f32 %v8011, %v6355
        %v8013 = vadd.f32 %v8012, %v6359
        %v8014 = vadd.f32 %v8013, %v6363
        %v8015 = vadd.f32 %v8014, %v6367
        %v8016 = vadd.f32 %v8015, %v6371
        %v8017 = vadd.f32 %v8016, %v6375
        %v8018 = vadd.f32 %v8017, %v6379
        %v8019 = vadd.f32 %v8018, %v6383
        %v8020 = vadd.f32 %v8019, %v6387
        %v8021 = vadd.f32 %v8020, %v6391
        %v8022 = vadd.f32 %v8021, %v6395
        %v8023 = vadd.f32 %v8022, %v6399
        %v8024 = vadd.f32 %v8023, %v6403
        %v8025 = vadd.f32 %v8024, %v6407
        %v8026 = vadd.f32 %v8025, %v6411
        %v8027 = vadd.f32 %v8026, %v6415
        %v8028 = vadd.f32 %v8027, %v6419
        %v8029 = vadd.f32 %v8028, %v6423
        %v8030 = vadd.f32 %v8029, %v6427
        %v8031 = vadd.f32 %v8030, %v6431
        %v8032 = vadd.f32 %v8031, %v6435
        %v8033 = vadd.f32 %v8032, %v6439
        %v8034 = vadd.f32 %v8033, %v6443
        %v8035 = vadd.f32 %v8034, %v6447
        %v8036 = vadd.f32 %v8035, %v6451
        %v8037 = vadd.f32 %v8036, %v6455
        %v8038 = vadd.f32 %v8037, %v6459
        %v8039 = vadd.f32 %v8038, %v6463
        %v8040 = vadd.f32 %v8039, %v6467
        %v8041 = vadd.f32 %v8040, %v6471
        %v8042 = vadd.f32 %v8041, %v6475
        %v8043 = vadd.f32 %v8042, %v6479
        %v8044 = vadd.f32 %v8043, %v6483
        %v8045 = vadd.f32 %v8044, %v6487
        %v8046 = vadd.f32 %v8045, %v6491
        %v8047 = vadd.f32 %v8046, %v6495
        %v8048 = vadd.f32 %v8047, %v6499
        %v8049 = vadd.f32 %v8048, %v6503
        %v8050 = vadd.f32 %v8049, %v6507
        %v8051 = vadd.f32 %v8050, %v6511
        %v8052 = vadd.f32 %v8051, %v6515
        %v8053 = vadd.f32 %v8052, %v6519
        %v8054 = vadd.f32 %v8053, %v6523
        %v8055 = vadd.f32 %v8054, %v6527
        %v8056 = vadd.f32 %v8055, %v6531
        %v8057 = vadd.f32 %v8056, %v6535
        %v8058 = vadd.f32 %v8057, %v6539
        %v8059 = vadd.f32 %v8058, %v6543
        %v8060 = vadd.f32 %v8059, %v6547
        %v8061 = vadd.f32 %v8060, %v6551
        %v8062 = vadd.f32 %v8061, %v6555
        %v8063 = vadd.f32 %v8062, %v6559
        %v8064 = vadd.f32 %v8063, %v6563
        %v8065 = vadd.f32 %v8064, %v6567
        %v8066 = vadd.f32 %v8065, %v6571
        %v8067 = vadd.f32 %v8066, %v6575
        %v8068 = vadd.f32 %v8067, %v6579
        %v8069 = vadd.f32 %v8068, %v6583
        %v8070 = vadd.f32 %v8069, %v6587
        %v8071 = vadd.f32 %v8070, %v6591
        %v8072 = vadd.f32 %v8071, %v6595
        %v8073 = vadd.f32 %v8072, %v6599
        %v8074 = vadd.f32 %v8073, %v6603
        %v8075 = vadd.f32 %v8074, %v6607
        %v8076 = vadd.f32 %v8075, %v6611
        %v8077 = vadd.f32 %v8076, %v6615
        %v8078 = vadd.f32 %v8077, %v6619
        %v8079 = vadd.f32 %v8078, %v6623
        %v8080 = vadd.f32 %v8079, %v6627
        %v8081 = vadd.f32 %v8080, %v6631
        %v8082 = vadd.f32 %v8081, %v6635
        %v8083 = vadd.f32 %v8082, %v6639
        %v8084 = vadd.f32 %v8083, %v6643
        %v8085 = vadd.f32 %v8084, %v6647
        %v8086 = vadd.f32 %v8085, %v6651
        %v8087 = vadd.f32 %v8086, %v6655
        %v8088 = vadd.f32 %v8087, %v6659
        %v8089 = vadd.f32 %v8088, %v6663
        %v8090 = vadd.f32 %v8089, %v6667
        %v8091 = vadd.f32 %v8090, %v6671
        %v8092 = vadd.f32 %v8091, %v6675
        %v8093 = vadd.f32 %v8092, %v6679
        %v8094 = vadd.f32 %v8093, %v6683
        %v8095 = vadd.f32 %v8094, %v6687
        %v8096 = vadd.f32 %v8095, %v6691
        %v8097 = vadd.f32 %v8096, %v6695
        %v8098 = vadd.f32 %v8097, %v6699
        %v8099 = vadd.f32 %v8098, %v6703
        %v8100 = vadd.f32 %v8099, %v6707
        %v8101 = vadd.f32 %v8100, %v6711
        %v8102 = vadd.f32 %v8101, %v6715
        %v8103 = vadd.f32 %v8102, %v6719
        %v8104 = vadd.f32 %v8103, %v6723
        %v8105 = vadd.f32 %v8104, %v6727
        %v8106 = vadd.f32 %v8105, %v6731
        %v8107 = vadd.f32 %v8106, %v6735
        %v8108 = vadd.f32 %v8107, %v6739
        %v8109 = vadd.f32 %v8108, %v6743
        %v8110 = vadd.f32 %v8109, %v6747
        %v8111 = vadd.f32 %v8110, %v6751
        %v8112 = vadd.f32 %v8111, %v6755
        %v8113 = vadd.f32 %v8112, %v6759
        %v8114 = vadd.f32 %v8113, %v6763
        %v8115 = vadd.f32 %v8114, %v6767
        %v8116 = vadd.f32 %v8115, %v6771
        %v8117 = vadd.f32 %v8116, %v6775
        %v8118 = vadd.f32 %v8117, %v6779
        %v8119 = vadd.f32 %v8118, %v6783
        %v8120 = vadd.f32 %v8119, %v6787
        %v8121 = vadd.f32 %v8120, %v6791
        %v8122 = vadd.f32 %v8121, %v6795
        %v8123 = vadd.f32 %v8122, %v6799
        %v8124 = vadd.f32 %v8123, %v6803
        %v8125 = vadd.f32 %v8124, %v6807
        %v8126 = vadd.f32 %v8125, %v6811
        %v8127 = vadd.f32 %v8126, %v6815
        %v8128 = vadd.f32 %v8127, %v6819
        %v8129 = vadd.f32 %v8128, %v6823
        %v8130 = vadd.f32 %v8129, %v6827
        %v8131 = vadd.f32 %v8130, %v6831
        %v8132 = vadd.f32 %v8131, %v6835
        %v8133 = vadd.f32 %v8132, %v6839
        %v8134 = vadd.f32 %v8133, %v6843
        %v8135 = vadd.f32 %v8134, %v6847
        %v8136 = vadd.f32 %v8135, %v6851
        %v8137 = vadd.f32 %v8136, %v6855
        %v8138 = vadd.f32 %v8137, %v6859
        %v8139 = vadd.f32 %v8138, %v6863
        %v8140 = vadd.f32 %v8139, %v6867
        %v8141 = vadd.f32 %v8140, %v6871
        %v8142 = vadd.f32 %v8141, %v6875
        %v8143 = vadd.f32 %v8142, %v6879
        %v8144 = vadd.f32 %v8143, %v6883
        %v8145 = vadd.f32 %v8144, %v6887
        %v8146 = vadd.f32 %v8145, %v6891
        %v8147 = vadd.f32 %v8146, %v6895
        %v8148 = vadd.f32 %v8147, %v6899
        %v8149 = vadd.f32 %v8148, %v6903
        %v8150 = vadd.f32 %v8149, %v6907
        %v8151 = vadd.f32 %v8150, %v6911
        %v8152 = vadd.f32 %v8151, %v6915
        %v8153 = vadd.f32 %v8152, %v6919
        %v8154 = vadd.f32 %v8153, %v6923
        %v8155 = vadd.f32 %v8154, %v6927
        %v8156 = vadd.f32 %v8155, %v6931
        %v8157 = vadd.f32 %v8156, %v6935
        %v8158 = vadd.f32 %v8157, %v6939
        %v8159 = vadd.f32 %v8158, %v6943
        %v8160 = vadd.f32 %v8159, %v6947
        %v8161 = vadd.f32 %v8160, %v6951
        %v8162 = vadd.f32 %v8161, %v6955
        %v8163 = vadd.f32 %v8162, %v6959
        %v8164 = vadd.f32 %v8163, %v6963
        %v8165 = vadd.f32 %v8164, %v6967
        %v8166 = vadd.f32 %v8165, %v6971
        %v8167 = vadd.f32 %v8166, %v6975
        %v8168 = vadd.f32 %v8167, %v6979
        %v8169 = vadd.f32 %v8168, %v6983
        %v8170 = vadd.f32 %v8169, %v6987
        %v8171 = vadd.f32 %v8170, %v6991
        %v8172 = vadd.f32 %v8171, %v6995
        %v8173 = vadd.f32 %v8172, %v6999
        %v8174 = vadd.f32 %v8173, %v7003
        %v8175 = vadd.f32 %v8174, %v7007
        %v8176 = vadd.f32 %v8175, %v7011
        %v8177 = vadd.f32 %v8176, %v7015
        %v8178 = vadd.f32 %v8177, %v7019
        %v8179 = vadd.f32 %v8178, %v7023
        %v8180 = vadd.f32 %v8179, %v7027
        %v8181 = vadd.f32 %v8180, %v7031
        %v8182 = vadd.f32 %v8181, %v7035
        %v8183 = vadd.f32 %v8182, %v7039
        %v8184 = vadd.f32 %v8183, %v7043
        %v8185 = vadd.f32 %v8184, %v7047
        %v8186 = vadd.f32 %v8185, %v7051
        %v8187 = vadd.f32 %v8186, %v7055
        %v8188 = vadd.f32 %v8187, %v7059
        %v8189 = vadd.f32 %v8188, %v7063
        %v8190 = vadd.f32 %v8189, %v7067
        %v8191 = vadd.f32 %v8190, %v7071
        %v8192 = vadd.f32 %v8191, %v7075
        %v8193 = vadd.f32 %v8192, %v7079
        %v8194 = vadd.f32 %v8193, %v7083
        %v8195 = vadd.f32 %v8194, %v7087
        %v8196 = vadd.f32 %v8195, %v7091
        %v8197 = vadd.f32 %v8196, %v7095
        %v8198 = vadd.f32 %v8197, %v7099
        %v8199 = vadd.f32 %v8198, %v7103
        %v8200 = vadd.f32 %v8199, %v7107
        %v8201 = vadd.f32 %v8200, %v7111
        %v8202 = vadd.f32 %v8201, %v7115
        %v8203 = vadd.f32 %v8202, %v7119
        %v8204 = vadd.f32 %v8203, %v7123
        %v8205 = vadd.f32 %v8204, %v7127
        %v8206 = vadd.f32 %v8205, %v7131
        %v8207 = vadd.f32 %v8206, %v7135
        %v8208 = vadd.f32 %v8207, %v7139
        %v8209 = vadd.f32 %v8208, %v7143
        %v8210 = vadd.f32 %v8209, %v7147
        %v8211 = vadd.f32 %v8210, %v7151
        %v8212 = vadd.f32 %v8211, %v7155
        %v8213 = vadd.f32 %v8212, %v7159
        %v8214 = vadd.f32 %v8213, %v7163
        %v8215 = vadd.f32 %v8214, %v7167
        %v8216 = vadd.f32 %v8215, %v7171
        %v8217 = vadd.f32 %v8216, %v7175
        %v8218 = vadd.f32 %v8217, %v7179
        %v8219 = vadd.f32 %v8218, %v7183
        %v8220 = vadd.f32 %v8219, %v7187
        %v8221 = vadd.f32 %v8220, %v7191
        %v8222 = vadd.f32 %v8221, %v7195
        %v8223 = vadd.f32 %v8222, %v7199
        %v8224 = vadd.f32 %v7200, %v7458
        %v8225 = vadd.f32 %v7201, %v7713
        %v8226 = vadd.f32 %v7202, %v7968
        %v8227 = vadd.f32 %v7203, %v8223
        %8228 = vst [vmem:[#allocation2] sm:$0xff] %v8224
        %8229 = vst [vmem:[#allocation2 + $0x8] sm:$0xff] %v8225
        %8230 = vst [vmem:[#allocation2 + $0x10] sm:$0xff] %v8226
        %8231 = vst [vmem:[#allocation2 + $0x18] sm:$0xff] %v8227
        %p8232 = scmp.eq.s32.totalorder %s24, 1
        %p8233 = scmp.eq.s32.totalorder %s25, 1
        %p8234 = pnand %p8232, %p8233
        %p8235 = pneg %p8234
        // Predicated region
        $region41: #{tpu_custom_call.1} parent=27 // pred_check
          _
        $region42: #{tpu_custom_call.1} parent=27 // pred_check_branch
          %8237 = sbr.rel (%p8234) target = $region44
        $region43: #{tpu_custom_call.1} parent=27 // pred_region
          %v8238 = vld [vmem:[#allocation2] sm:$0xff]
          %v8239 = vld [vmem:[#allocation2 + $0x8] sm:$0xff]
          %v8240 = vld [vmem:[#allocation2 + $0x10] sm:$0xff]
          %v8241 = vld [vmem:[#allocation2 + $0x18] sm:$0xff]
          %v8242 = vadd.f32 %v8238, %v8239
          %v8243 = vadd.f32 %v8242, %v8240
          %v8244 = vadd.f32 %v8243, %v8241
          %8245 = vadd.xlane.f32.xlu0 %v8244
          %v8246 = vpop.xlane.xlu0 %8245
          %v8247 = vrot.slane %v8246, 4
          %v8248 = vadd.f32 %v8246, %v8247
          %v8249 = vrot.slane %v8248, 2
          %v8250 = vadd.f32 %v8248, %v8249
          %v8251 = vrot.slane %v8250, 1
          %v8252 = vadd.f32 %v8250, %v8251
          %s8253 = vtos %v8252
          %s8254 = scalar_lea.smem [#allocation8], 0
          %8255 = sst [smem:[%s8254]] %s8253
        $region44: #{tpu_custom_call.1} parent=27 // pred_fallthru
          _
        // Predicated region
        $region45: #{tpu_custom_call.1} parent=27 // pred_check
          %p8256 = pneg %p101
        $region46: #{tpu_custom_call.1} parent=27 // pred_check_branch
          %8258 = sbr.rel (%p8256) target = $region48
        $region47: #{tpu_custom_call.1} parent=27 // pred_region
          %8260 = vsyncadd [#allocation5], 0
          %s8262 = sshll.u32 %s2, 4
          %s8263 = int_to_ptr.hbm [resolvable:$true] %s8262
          %8265 = dma.smem_to_hbm [#allocation8], 16, %s8263, [#allocation5]
        $region48: #{tpu_custom_call.1} parent=27 // pred_fallthru
          _
        // Predicated region
        $region49: #{tpu_custom_call.1} parent=27 // pred_check
          %p8266 = pneg %p101
        $region50: #{tpu_custom_call.1} parent=27 // pred_check_branch
          %8268 = sbr.rel (%p8266) target = $region52
        $region51: #{tpu_custom_call.1} parent=27 // pred_region
          %8270 = dma.done [#allocation5], 16
        $region52: #{tpu_custom_call.1} parent=27 // pred_fallthru
          _
        %8271 = sfence
      $region28: #{tpu_custom_call.1} parent=5 // pred_fallthru
        _
      %p8272 = scmp.le.s32.totalorder 2, %s15
      // Predicated region
      $region53: #{tpu_custom_call.1} parent=5 // pred_check
        %p8273 = pneg %p8272
      $region54: #{tpu_custom_call.1} parent=5 // pred_check_branch
        %8275 = sbr.rel (%p8273) target = $region56
      $region55: #{tpu_custom_call.1} parent=5 // pred_region
        %s8276 = ssub.s32 %s15, 2
      $region56: #{tpu_custom_call.1} parent=5 // pred_fallthru
        _
    $region6: #{tpu_custom_call.1} parent=1 // loop_footer
      %s19 = sadd.s32 1, %s15
    $region7: #{tpu_custom_call.1} parent=1 // loop_footer_branch
      %14 = sbr.rel target = $region3
    $region8: #{tpu_custom_call.1} parent=1 // loop_exit
      _
    %8277 = vsyncpa [#allocation4], 1
    %s8278 = scalar_lea.sflag [#allocation4], 1
    %8279 = vsyncpa %s8278, 1
    %8280 = vsyncpa [#allocation7], 1
    %s8281 = scalar_lea.sflag [#allocation7], 1
    %8282 = vsyncpa %s8281, 1
    %8283 = vsyncpa [#allocation5], 1
    %s8284 = scalar_lea.sflag [#allocation5], 1
    %8285 = vsyncpa %s8284, 1

</llo_original>
